<compile_context>
chip_gen: v7x
topology: tpu7x:2x2x1
jax: 0.10.0
libtpu: 0.0.40
codegen_flags: <defaults>
</compile_context>

<pallas_src>
import functools

import jax
import jax.numpy as jnp
from jax.experimental import pallas as pl
from jax.experimental.pallas import tpu as pltpu


def _resblock_kernel(xext_ref, mask_ref, w1_ref, s1_ref, b1_ref,
                     w2_ref, s2_ref, b2_ref, *rest,
                     wp, lim, margin, has_skip):
    """One image per grid step.

    xext_ref : (lim + 2*margin, Cin)  bf16 zero-padded image, rows flattened,
               plus `margin` zero rows on both ends (tap slices stay in-bounds).
    mask_ref : (lim, 1) f32           1.0 on interior rows of the padded grid.
    w*_ref   : (9, Cin|Cout, Cout)    bf16 3x3 weights, tap-major (t = dy*3+dx).
    s*/b*_ref: (1, Cout) f32          folded BatchNorm scale / bias.
    [wsk_ref (Cin, Cout) bf16, bsk_ref (1, Cout) f32]  only if has_skip.
    out_ref  : (lim, Cout)            result on the padded grid (border rows are
                                      don't-care; the wrapper slices interior).
    h1ext_ref: (lim + 2*margin, Cout) bf16 VMEM scratch staging conv1's output.
    """
    if has_skip:
        wsk_ref, bsk_ref, out_ref, h1ext_ref = rest
    else:
        out_ref, h1ext_ref = rest

    mask = mask_ref[...]                                   # (lim, 1) f32

    def conv3x3(src_ref, w_ref):
        # 3x3 conv = 9 shifted (lim, C) @ (C, Cout) bf16 MXU matmuls, f32 acc.
        acc = jnp.zeros((lim, w_ref.shape[-1]), jnp.float32)
        for t in range(9):
            off = (t // 3 - 1) * wp + (t % 3 - 1)          # row offset of tap t
            patch = src_ref[pl.ds(margin + off, lim), :]   # bf16 (lim, C)
            acc = acc + jnp.dot(patch, w_ref[t],
                                preferred_element_type=jnp.float32)
        return acc

    # conv1 -> BN1 -> ReLU (f32 epilogue); padded-grid border rows re-zeroed.
    h1 = jnp.maximum(conv3x3(xext_ref, w1_ref) * s1_ref[...] + b1_ref[...], 0.0)
    h1 = h1 * mask

    # Stage h1 (bf16) with zero margins so conv2's taps see proper zero padding.
    # Only the two margin slices ever need zeroing; the mask already zeroed the
    # border rows inside h1, so no full-scratch zero fill.
    cout = h1ext_ref.shape[-1]
    zeros_margin = jnp.zeros((margin, cout), h1ext_ref.dtype)
    h1ext_ref[pl.ds(0, margin), :] = zeros_margin
    h1ext_ref[pl.ds(margin + lim, margin), :] = zeros_margin
    h1ext_ref[pl.ds(margin, lim), :] = h1.astype(h1ext_ref.dtype)

    # conv2 -> BN2 -> ReLU.
    h2 = jnp.maximum(conv3x3(h1ext_ref, w2_ref) * s2_ref[...] + b2_ref[...], 0.0)

    # Skip path fused into the add.
    xc = xext_ref[pl.ds(margin, lim), :]                   # bf16 (lim, Cin)
    if has_skip:
        skip = jnp.dot(xc, wsk_ref[...],
                       preferred_element_type=jnp.float32) + bsk_ref[...]
    else:
        skip = xc.astype(jnp.float32)                      # Identity: VPU add

    out_ref[...] = (h2 + skip).astype(out_ref.dtype)


def _vmem_padded_bytes(shape, itemsize):
    """Bytes of a VMEM-resident array padded to its native tile."""
    sub = {4: 8, 2: 16, 1: 32}[itemsize]
    dims = list(shape)
    dims[-1] = -(-dims[-1] // 128) * 128
    dims[-2] = -(-dims[-2] // sub) * sub
    n = 1
    for d in dims:
        n *= d
    return n * itemsize


def resblock_forward(x, w1, scale1, bias1, w2, scale2, bias2,
                     skip_w=None, skip_b=None):
    """ResBlock forward, NCHW in / NCHW out (matches the PyTorch module).

    x            : (N, Cin, H, W)
    w1           : (3, 3, Cin, Cout)   conv1 weight (HWIO)
    w2           : (3, 3, Cout, Cout)  conv2 weight (HWIO)
    scale*/bias* : (Cout,)  folded inference BN: scale = gamma/sqrt(var+eps),
                   bias = beta - mean*scale.  (bn=False -> scale=1, bias=conv bias.)
    skip_w/skip_b: (Cin, Cout)/(Cout,) 1x1-conv skip; None -> Identity (Cin==Cout).
    """
    N, Cin, H, W = x.shape
    Cout = w1.shape[-1]
    has_skip = skip_w is not None
    if not has_skip:
        assert Cin == Cout, "Identity skip requires c_in == c_out"

    Hp, Wp = H + 2, W + 2
    lim = Hp * Wp                            # rows of one zero-padded image
    margin = ((Wp + 1 + 15) // 16) * 16      # >= max |tap row offset|, 16-aligned
    lext = lim + 2 * margin

    # NCHW -> NHWC -> zero-pad spatially -> flatten each padded image to rows,
    # with `margin` zero rows at both ends; cast to bf16 for the MXU.
    # TODO(synk): move this padding into the kernel for large activations.
    xn = jnp.transpose(x, (0, 2, 3, 1))
    xp = jnp.pad(xn, ((0, 0), (1, 1), (1, 1), (0, 0)))
    xext = jnp.pad(xp.reshape(N, lim, Cin),
                   ((0, 0), (margin, margin), (0, 0))).astype(jnp.bfloat16)

    # Interior mask of the padded grid (tiny constant input stream).
    # TODO(synk): generate in-kernel from an iota to drop this input entirely.
    yy = jax.lax.broadcasted_iota(jnp.int32, (Hp, Wp), 0)
    xx = jax.lax.broadcasted_iota(jnp.int32, (Hp, Wp), 1)
    interior = (yy >= 1) & (yy <= H) & (xx >= 1) & (xx <= W)
    mask = interior.astype(jnp.float32).reshape(lim, 1)

    w1r = w1.reshape(9, Cin, Cout).astype(jnp.bfloat16)
    w2r = w2.reshape(9, Cout, Cout).astype(jnp.bfloat16)
    s1 = scale1.reshape(1, Cout).astype(jnp.float32)
    b1 = bias1.reshape(1, Cout).astype(jnp.float32)
    s2 = scale2.reshape(1, Cout).astype(jnp.float32)
    b2 = bias2.reshape(1, Cout).astype(jnp.float32)

    inputs = [xext, mask, w1r, s1, b1, w2r, s2, b2]
    in_specs = [
        pl.BlockSpec((None, lext, Cin), lambda n: (n, 0, 0)),   # xext
        pl.BlockSpec((lim, 1), lambda n: (0, 0)),               # mask
        pl.BlockSpec((9, Cin, Cout), lambda n: (0, 0, 0)),      # w1
        pl.BlockSpec((1, Cout), lambda n: (0, 0)),              # s1
        pl.BlockSpec((1, Cout), lambda n: (0, 0)),              # b1
        pl.BlockSpec((9, Cout, Cout), lambda n: (0, 0, 0)),     # w2
        pl.BlockSpec((1, Cout), lambda n: (0, 0)),              # s2
        pl.BlockSpec((1, Cout), lambda n: (0, 0)),              # b2
    ]
    if has_skip:
        wsk = skip_w.reshape(Cin, Cout).astype(jnp.bfloat16)
        bsk = skip_b.reshape(1, Cout).astype(jnp.float32)
        inputs += [wsk, bsk]
        in_specs += [pl.BlockSpec((Cin, Cout), lambda n: (0, 0)),
                     pl.BlockSpec((1, Cout), lambda n: (0, 0))]

    # Scoped-VMEM budget: double-buffered blocks + the persistent scratch.
    blk = (_vmem_padded_bytes((lext, Cin), 2) +            # xext
           _vmem_padded_bytes((lim, 1), 4) +               # mask
           _vmem_padded_bytes((9, Cin, Cout), 2) +         # w1
           _vmem_padded_bytes((9, Cout, Cout), 2) +        # w2
           4 * _vmem_padded_bytes((1, Cout), 4) +          # s1,b1,s2,b2
           _vmem_padded_bytes((lim, Cout), x.dtype.itemsize))   # out
    if has_skip:
        blk += (_vmem_padded_bytes((Cin, Cout), 2) +
                _vmem_padded_bytes((1, Cout), 4))
    scratch_bytes = _vmem_padded_bytes((lext, Cout), 2)
    vmem_limit = min(max(2 * blk + scratch_bytes + (8 << 20), 32 << 20), 96 << 20)

    kernel = functools.partial(_resblock_kernel, wp=Wp, lim=lim,
                               margin=margin, has_skip=has_skip)

    out_flat = pl.pallas_call(
        kernel,
        out_shape=jax.ShapeDtypeStruct((N, lim, Cout), x.dtype),
        grid_spec=pltpu.PrefetchScalarGridSpec(
            num_scalar_prefetch=0,
            grid=(N,),
            in_specs=in_specs,
            out_specs=pl.BlockSpec((None, lim, Cout), lambda n: (n, 0, 0)),
            scratch_shapes=[pltpu.VMEM((lext, Cout), jnp.bfloat16)],
        ),
        compiler_params=pltpu.CompilerParams(
            dimension_semantics=("parallel",),
            vmem_limit_bytes=int(vmem_limit)),
    )(*inputs)

    # TODO(synk): store only interior rows / keep NHWC for the consumer to
    #             avoid this extra writeback + transpose pass.
    out = out_flat.reshape(N, Hp, Wp, Cout)[:, 1:H + 1, 1:W + 1, :]
    return jnp.transpose(out, (0, 3, 1, 2))


def _ref_resblock(x, w1, scale1, bias1, w2, scale2, bias2, skip_w, skip_b):
    """Pure-JAX reference mirroring the kernel's bf16-operand / f32-accum MXU."""
    def b16(a):
        return a.astype(jnp.bfloat16).astype(jnp.float32)

    xn = jnp.transpose(x, (0, 2, 3, 1)).astype(jnp.float32)

    def conv(h, w):
        return jax.lax.conv_general_dilated(
            b16(h), b16(w), window_strides=(1, 1), padding="SAME",
            dimension_numbers=("NHWC", "HWIO", "NHWC"),
            precision=jax.lax.Precision.HIGHEST)

    h = jnp.maximum(conv(xn, w1) * scale1 + bias1, 0.0)
    h = jnp.maximum(conv(h, w2) * scale2 + bias2, 0.0)
    if skip_w is None:
        skip = b16(xn)
    else:
        skip = jnp.einsum("nhwc,co->nhwo", b16(xn), b16(skip_w),
                          precision=jax.lax.Precision.HIGHEST) + skip_b
    return jnp.transpose(h + skip, (0, 3, 1, 2))


if __name__ == "__main__":
    key = jax.random.PRNGKey(0)
    keys = iter(jax.random.split(key, 32))
    nk = lambda: next(keys)

    def fold_bn(c):
        gamma = 1.0 + 0.1 * jax.random.normal(nk(), (c,), jnp.float32)
        beta = 0.1 * jax.random.normal(nk(), (c,), jnp.float32)
        mean = 0.1 * jax.random.normal(nk(), (c,), jnp.float32)
        var = 0.5 + jnp.abs(jax.random.normal(nk(), (c,), jnp.float32))
        scale = gamma * jax.lax.rsqrt(var + 1e-5)
        return scale, beta - mean * scale

    N, H, W = 2, 16, 16

    # --- config 1: c_in != c_out -> skip is a 1x1 conv (with bias) ---
    Cin, Cout = 4, 8
    x = jax.random.normal(nk(), (N, Cin, H, W), jnp.float32)
    w1 = 0.2 * jax.random.normal(nk(), (3, 3, Cin, Cout), jnp.float32)
    w2 = 0.2 * jax.random.normal(nk(), (3, 3, Cout, Cout), jnp.float32)
    s1, b1 = fold_bn(Cout)
    s2, b2 = fold_bn(Cout)
    wsk = 0.2 * jax.random.normal(nk(), (Cin, Cout), jnp.float32)
    bsk = 0.1 * jax.random.normal(nk(), (Cout,), jnp.float32)

    y = resblock_forward(x, w1, s1, b1, w2, s2, b2, wsk, bsk)
    jax.block_until_ready(y)
    y_ref = _ref_resblock(x, w1, s1, b1, w2, s2, b2, wsk, bsk)
    assert y.shape == (N, Cout, H, W) and y.dtype == x.dtype
    assert jnp.allclose(y, y_ref, atol=1e-2, rtol=1e-2), float(
        jnp.max(jnp.abs(y - y_ref)))

    # --- config 2: c_in == c_out -> skip is Identity (specialized, no matmul) ---
    C = 4
    w1b = 0.2 * jax.random.normal(nk(), (3, 3, C, C), jnp.float32)
    w2b = 0.2 * jax.random.normal(nk(), (3, 3, C, C), jnp.float32)
    s1b, b1b = fold_bn(C)
    s2b, b2b = fold_bn(C)

    y2 = resblock_forward(x, w1b, s1b, b1b, w2b, s2b, b2b)   # Identity skip
    jax.block_until_ready(y2)
    y2_ref = _ref_resblock(x, w1b, s1b, b1b, w2b, s2b, b2b, None, None)
    assert y2.shape == (N, C, H, W) and y2.dtype == x.dtype
    assert jnp.allclose(y2, y2_ref, atol=1e-2, rtol=1e-2), float(
        jnp.max(jnp.abs(y2 - y2_ref)))

    print("KERNEL_OK")
</pallas_src>

<mosaic_0001>
module attributes {stable_mosaic.version = 11 : i64} {
  func.func @_resblock_kernel(%arg0: i32, %arg1: memref<1x388x4xbf16, #tpu.memory_space<vmem>>, %arg2: memref<324x1xf32, #tpu.memory_space<vmem>>, %arg3: memref<9x4x8xbf16, #tpu.memory_space<vmem>>, %arg4: memref<1x8xf32, #tpu.memory_space<vmem>>, %arg5: memref<1x8xf32, #tpu.memory_space<vmem>>, %arg6: memref<9x8x8xbf16, #tpu.memory_space<vmem>>, %arg7: memref<1x8xf32, #tpu.memory_space<vmem>>, %arg8: memref<1x8xf32, #tpu.memory_space<vmem>>, %arg9: memref<4x8xbf16, #tpu.memory_space<vmem>>, %arg10: memref<1x8xf32, #tpu.memory_space<vmem>>, %arg11: memref<1x324x8xf32, #tpu.memory_space<vmem>>, %arg12: memref<388x8xbf16, #tpu.memory_space<vmem>>) attributes {dimension_semantics = [#tpu.dimension_semantics<parallel>], iteration_bounds = array<i64: 2>, scalar_prefetch = 0 : i64, scratch_operands = 1 : i64, tpu.core_type = #tpu.core_type<tc>, window_params = [{transform_indices = @transform_0, window_bounds = array<i64: 1, 388, 4>}, {pipeline_mode = #tpu.pipeline_mode<synchronous>, transform_indices = @transform_1, window_bounds = array<i64: 324, 1>}, {pipeline_mode = #tpu.pipeline_mode<synchronous>, transform_indices = @transform_2, window_bounds = array<i64: 9, 4, 8>}, {pipeline_mode = #tpu.pipeline_mode<synchronous>, transform_indices = @transform_3, window_bounds = array<i64: 1, 8>}, {pipeline_mode = #tpu.pipeline_mode<synchronous>, transform_indices = @transform_4, window_bounds = array<i64: 1, 8>}, {pipeline_mode = #tpu.pipeline_mode<synchronous>, transform_indices = @transform_5, window_bounds = array<i64: 9, 8, 8>}, {pipeline_mode = #tpu.pipeline_mode<synchronous>, transform_indices = @transform_6, window_bounds = array<i64: 1, 8>}, {pipeline_mode = #tpu.pipeline_mode<synchronous>, transform_indices = @transform_7, window_bounds = array<i64: 1, 8>}, {pipeline_mode = #tpu.pipeline_mode<synchronous>, transform_indices = @transform_8, window_bounds = array<i64: 4, 8>}, {pipeline_mode = #tpu.pipeline_mode<synchronous>, transform_indices = @transform_9, window_bounds = array<i64: 1, 8>}, {transform_indices = @transform_10, window_bounds = array<i64: 1, 324, 8>}]} {
    %c0 = arith.constant 0 : index
    %c0_0 = arith.constant 0 : index
    %0 = vector.load %arg2[%c0, %c0_0] : memref<324x1xf32, #tpu.memory_space<vmem>>, vector<324x1xf32>
    %cst = arith.constant 0.000000e+00 : f32
    %1 = vector.broadcast %cst : f32 to vector<324x8xf32>
    %c0_1 = arith.constant 0 : index
    %c13 = arith.constant 13 : index
    %c0_2 = arith.constant 0 : index
    %2 = vector.load %arg1[%c0_1, %c13, %c0_2] : memref<1x388x4xbf16, #tpu.memory_space<vmem>>, vector<1x324x4xbf16>
    %3 = vector.shape_cast %2 : vector<1x324x4xbf16> to vector<324x4xbf16>
    %c0_3 = arith.constant 0 : index
    %c0_4 = arith.constant 0 : index
    %c0_5 = arith.constant 0 : index
    %4 = vector.load %arg3[%c0_3, %c0_4, %c0_5] : memref<9x4x8xbf16, #tpu.memory_space<vmem>>, vector<1x4x8xbf16>
    %5 = vector.shape_cast %4 : vector<1x4x8xbf16> to vector<4x8xbf16>
    %cst_6 = arith.constant dense<0.000000e+00> : vector<324x8xf32>
    %6 = tpu.matmul %3, %5, %cst_6 {dimension_numbers = #tpu.dot_dimension_numbers<[1], [0], [0], [1], [0, 0, 1, 1], [], []>} : vector<324x4xbf16>, vector<4x8xbf16>, vector<324x8xf32> -> vector<324x8xf32>
    %7 = arith.addf %1, %6 : vector<324x8xf32>
    %c0_7 = arith.constant 0 : index
    %c14 = arith.constant 14 : index
    %c0_8 = arith.constant 0 : index
    %8 = vector.load %arg1[%c0_7, %c14, %c0_8] : memref<1x388x4xbf16, #tpu.memory_space<vmem>>, vector<1x324x4xbf16>
    %9 = vector.shape_cast %8 : vector<1x324x4xbf16> to vector<324x4xbf16>
    %c1 = arith.constant 1 : index
    %c0_9 = arith.constant 0 : index
    %c0_10 = arith.constant 0 : index
    %10 = vector.load %arg3[%c1, %c0_9, %c0_10] : memref<9x4x8xbf16, #tpu.memory_space<vmem>>, vector<1x4x8xbf16>
    %11 = vector.shape_cast %10 : vector<1x4x8xbf16> to vector<4x8xbf16>
    %cst_11 = arith.constant dense<0.000000e+00> : vector<324x8xf32>
    %12 = tpu.matmul %9, %11, %cst_11 {dimension_numbers = #tpu.dot_dimension_numbers<[1], [0], [0], [1], [0, 0, 1, 1], [], []>} : vector<324x4xbf16>, vector<4x8xbf16>, vector<324x8xf32> -> vector<324x8xf32>
    %13 = arith.addf %7, %12 : vector<324x8xf32>
    %c0_12 = arith.constant 0 : index
    %c15 = arith.constant 15 : index
    %c0_13 = arith.constant 0 : index
    %14 = vector.load %arg1[%c0_12, %c15, %c0_13] : memref<1x388x4xbf16, #tpu.memory_space<vmem>>, vector<1x324x4xbf16>
    %15 = vector.shape_cast %14 : vector<1x324x4xbf16> to vector<324x4xbf16>
    %c2 = arith.constant 2 : index
    %c0_14 = arith.constant 0 : index
    %c0_15 = arith.constant 0 : index
    %16 = vector.load %arg3[%c2, %c0_14, %c0_15] : memref<9x4x8xbf16, #tpu.memory_space<vmem>>, vector<1x4x8xbf16>
    %17 = vector.shape_cast %16 : vector<1x4x8xbf16> to vector<4x8xbf16>
    %cst_16 = arith.constant dense<0.000000e+00> : vector<324x8xf32>
    %18 = tpu.matmul %15, %17, %cst_16 {dimension_numbers = #tpu.dot_dimension_numbers<[1], [0], [0], [1], [0, 0, 1, 1], [], []>} : vector<324x4xbf16>, vector<4x8xbf16>, vector<324x8xf32> -> vector<324x8xf32>
    %19 = arith.addf %13, %18 : vector<324x8xf32>
    %c0_17 = arith.constant 0 : index
    %c31 = arith.constant 31 : index
    %c0_18 = arith.constant 0 : index
    %20 = vector.load %arg1[%c0_17, %c31, %c0_18] : memref<1x388x4xbf16, #tpu.memory_space<vmem>>, vector<1x324x4xbf16>
    %21 = vector.shape_cast %20 : vector<1x324x4xbf16> to vector<324x4xbf16>
    %c3 = arith.constant 3 : index
    %c0_19 = arith.constant 0 : index
    %c0_20 = arith.constant 0 : index
    %22 = vector.load %arg3[%c3, %c0_19, %c0_20] : memref<9x4x8xbf16, #tpu.memory_space<vmem>>, vector<1x4x8xbf16>
    %23 = vector.shape_cast %22 : vector<1x4x8xbf16> to vector<4x8xbf16>
    %cst_21 = arith.constant dense<0.000000e+00> : vector<324x8xf32>
    %24 = tpu.matmul %21, %23, %cst_21 {dimension_numbers = #tpu.dot_dimension_numbers<[1], [0], [0], [1], [0, 0, 1, 1], [], []>} : vector<324x4xbf16>, vector<4x8xbf16>, vector<324x8xf32> -> vector<324x8xf32>
    %25 = arith.addf %19, %24 : vector<324x8xf32>
    %c0_22 = arith.constant 0 : index
    %c32 = arith.constant 32 : index
    %c0_23 = arith.constant 0 : index
    %26 = vector.load %arg1[%c0_22, %c32, %c0_23] : memref<1x388x4xbf16, #tpu.memory_space<vmem>>, vector<1x324x4xbf16>
    %27 = vector.shape_cast %26 : vector<1x324x4xbf16> to vector<324x4xbf16>
    %c4 = arith.constant 4 : index
    %c0_24 = arith.constant 0 : index
    %c0_25 = arith.constant 0 : index
    %28 = vector.load %arg3[%c4, %c0_24, %c0_25] : memref<9x4x8xbf16, #tpu.memory_space<vmem>>, vector<1x4x8xbf16>
    %29 = vector.shape_cast %28 : vector<1x4x8xbf16> to vector<4x8xbf16>
    %cst_26 = arith.constant dense<0.000000e+00> : vector<324x8xf32>
    %30 = tpu.matmul %27, %29, %cst_26 {dimension_numbers = #tpu.dot_dimension_numbers<[1], [0], [0], [1], [0, 0, 1, 1], [], []>} : vector<324x4xbf16>, vector<4x8xbf16>, vector<324x8xf32> -> vector<324x8xf32>
    %31 = arith.addf %25, %30 : vector<324x8xf32>
    %c0_27 = arith.constant 0 : index
    %c33 = arith.constant 33 : index
    %c0_28 = arith.constant 0 : index
    %32 = vector.load %arg1[%c0_27, %c33, %c0_28] : memref<1x388x4xbf16, #tpu.memory_space<vmem>>, vector<1x324x4xbf16>
    %33 = vector.shape_cast %32 : vector<1x324x4xbf16> to vector<324x4xbf16>
    %c5 = arith.constant 5 : index
    %c0_29 = arith.constant 0 : index
    %c0_30 = arith.constant 0 : index
    %34 = vector.load %arg3[%c5, %c0_29, %c0_30] : memref<9x4x8xbf16, #tpu.memory_space<vmem>>, vector<1x4x8xbf16>
    %35 = vector.shape_cast %34 : vector<1x4x8xbf16> to vector<4x8xbf16>
    %cst_31 = arith.constant dense<0.000000e+00> : vector<324x8xf32>
    %36 = tpu.matmul %33, %35, %cst_31 {dimension_numbers = #tpu.dot_dimension_numbers<[1], [0], [0], [1], [0, 0, 1, 1], [], []>} : vector<324x4xbf16>, vector<4x8xbf16>, vector<324x8xf32> -> vector<324x8xf32>
    %37 = arith.addf %31, %36 : vector<324x8xf32>
    %c0_32 = arith.constant 0 : index
    %c49 = arith.constant 49 : index
    %c0_33 = arith.constant 0 : index
    %38 = vector.load %arg1[%c0_32, %c49, %c0_33] : memref<1x388x4xbf16, #tpu.memory_space<vmem>>, vector<1x324x4xbf16>
    %39 = vector.shape_cast %38 : vector<1x324x4xbf16> to vector<324x4xbf16>
    %c6 = arith.constant 6 : index
    %c0_34 = arith.constant 0 : index
    %c0_35 = arith.constant 0 : index
    %40 = vector.load %arg3[%c6, %c0_34, %c0_35] : memref<9x4x8xbf16, #tpu.memory_space<vmem>>, vector<1x4x8xbf16>
    %41 = vector.shape_cast %40 : vector<1x4x8xbf16> to vector<4x8xbf16>
    %cst_36 = arith.constant dense<0.000000e+00> : vector<324x8xf32>
    %42 = tpu.matmul %39, %41, %cst_36 {dimension_numbers = #tpu.dot_dimension_numbers<[1], [0], [0], [1], [0, 0, 1, 1], [], []>} : vector<324x4xbf16>, vector<4x8xbf16>, vector<324x8xf32> -> vector<324x8xf32>
    %43 = arith.addf %37, %42 : vector<324x8xf32>
    %c0_37 = arith.constant 0 : index
    %c50 = arith.constant 50 : index
    %c0_38 = arith.constant 0 : index
    %44 = vector.load %arg1[%c0_37, %c50, %c0_38] : memref<1x388x4xbf16, #tpu.memory_space<vmem>>, vector<1x324x4xbf16>
    %45 = vector.shape_cast %44 : vector<1x324x4xbf16> to vector<324x4xbf16>
    %c7 = arith.constant 7 : index
    %c0_39 = arith.constant 0 : index
    %c0_40 = arith.constant 0 : index
    %46 = vector.load %arg3[%c7, %c0_39, %c0_40] : memref<9x4x8xbf16, #tpu.memory_space<vmem>>, vector<1x4x8xbf16>
    %47 = vector.shape_cast %46 : vector<1x4x8xbf16> to vector<4x8xbf16>
    %cst_41 = arith.constant dense<0.000000e+00> : vector<324x8xf32>
    %48 = tpu.matmul %45, %47, %cst_41 {dimension_numbers = #tpu.dot_dimension_numbers<[1], [0], [0], [1], [0, 0, 1, 1], [], []>} : vector<324x4xbf16>, vector<4x8xbf16>, vector<324x8xf32> -> vector<324x8xf32>
    %49 = arith.addf %43, %48 : vector<324x8xf32>
    %c0_42 = arith.constant 0 : index
    %c51 = arith.constant 51 : index
    %c0_43 = arith.constant 0 : index
    %50 = vector.load %arg1[%c0_42, %c51, %c0_43] : memref<1x388x4xbf16, #tpu.memory_space<vmem>>, vector<1x324x4xbf16>
    %51 = vector.shape_cast %50 : vector<1x324x4xbf16> to vector<324x4xbf16>
    %c8 = arith.constant 8 : index
    %c0_44 = arith.constant 0 : index
    %c0_45 = arith.constant 0 : index
    %52 = vector.load %arg3[%c8, %c0_44, %c0_45] : memref<9x4x8xbf16, #tpu.memory_space<vmem>>, vector<1x4x8xbf16>
    %53 = vector.shape_cast %52 : vector<1x4x8xbf16> to vector<4x8xbf16>
    %cst_46 = arith.constant dense<0.000000e+00> : vector<324x8xf32>
    %54 = tpu.matmul %51, %53, %cst_46 {dimension_numbers = #tpu.dot_dimension_numbers<[1], [0], [0], [1], [0, 0, 1, 1], [], []>} : vector<324x4xbf16>, vector<4x8xbf16>, vector<324x8xf32> -> vector<324x8xf32>
    %55 = arith.addf %49, %54 : vector<324x8xf32>
    %c0_47 = arith.constant 0 : index
    %c0_48 = arith.constant 0 : index
    %56 = vector.load %arg4[%c0_47, %c0_48] : memref<1x8xf32, #tpu.memory_space<vmem>>, vector<1x8xf32>
    %57 = vector.broadcast %56 : vector<1x8xf32> to vector<324x8xf32>
    %58 = arith.mulf %55, %57 : vector<324x8xf32>
    %c0_49 = arith.constant 0 : index
    %c0_50 = arith.constant 0 : index
    %59 = vector.load %arg5[%c0_49, %c0_50] : memref<1x8xf32, #tpu.memory_space<vmem>>, vector<1x8xf32>
    %60 = vector.broadcast %59 : vector<1x8xf32> to vector<324x8xf32>
    %61 = arith.addf %58, %60 : vector<324x8xf32>
    %cst_51 = arith.constant 0.000000e+00 : f32
    %62 = vector.broadcast %cst_51 : f32 to vector<324x8xf32>
    %63 = arith.maximumf %61, %62 : vector<324x8xf32>
    %64 = vector.broadcast %0 : vector<324x1xf32> to vector<324x8xf32>
    %65 = arith.mulf %63, %64 : vector<324x8xf32>
    %cst_52 = arith.constant 0.000000e+00 : bf16
    %66 = vector.broadcast %cst_52 : bf16 to vector<32x8xbf16>
    %c0_53 = arith.constant 0 : index
    %c0_54 = arith.constant 0 : index
    %67 = vector.load %arg12[%c0_53, %c0_54] : memref<388x8xbf16, #tpu.memory_space<vmem>>, vector<32x8xbf16>
    tpu.vector_store %arg12[%c0_53, %c0_54], %66 {strides = array<i32>} : memref<388x8xbf16, #tpu.memory_space<vmem>>, vector<32x8xbf16>,
    %c356 = arith.constant 356 : index
    %c0_55 = arith.constant 0 : index
    %68 = vector.load %arg12[%c356, %c0_55] : memref<388x8xbf16, #tpu.memory_space<vmem>>, vector<32x8xbf16>
    tpu.vector_store %arg12[%c356, %c0_55], %66 {strides = array<i32>} : memref<388x8xbf16, #tpu.memory_space<vmem>>, vector<32x8xbf16>,
    %69 = arith.truncf %65 : vector<324x8xf32> to vector<324x8xbf16>
    %c32_56 = arith.constant 32 : index
    %c0_57 = arith.constant 0 : index
    %70 = vector.load %arg12[%c32_56, %c0_57] : memref<388x8xbf16, #tpu.memory_space<vmem>>, vector<324x8xbf16>
    tpu.vector_store %arg12[%c32_56, %c0_57], %69 {strides = array<i32>} : memref<388x8xbf16, #tpu.memory_space<vmem>>, vector<324x8xbf16>,
    %cst_58 = arith.constant 0.000000e+00 : f32
    %71 = vector.broadcast %cst_58 : f32 to vector<324x8xf32>
    %c13_59 = arith.constant 13 : index
    %c0_60 = arith.constant 0 : index
    %72 = vector.load %arg12[%c13_59, %c0_60] : memref<388x8xbf16, #tpu.memory_space<vmem>>, vector<324x8xbf16>
    %c0_61 = arith.constant 0 : index
    %c0_62 = arith.constant 0 : index
    %c0_63 = arith.constant 0 : index
    %73 = vector.load %arg6[%c0_61, %c0_62, %c0_63] : memref<9x8x8xbf16, #tpu.memory_space<vmem>>, vector<1x8x8xbf16>
    %74 = vector.shape_cast %73 : vector<1x8x8xbf16> to vector<8x8xbf16>
    %cst_64 = arith.constant dense<0.000000e+00> : vector<324x8xf32>
    %75 = tpu.matmul %72, %74, %cst_64 {dimension_numbers = #tpu.dot_dimension_numbers<[1], [0], [0], [1], [0, 0, 1, 1], [], []>} : vector<324x8xbf16>, vector<8x8xbf16>, vector<324x8xf32> -> vector<324x8xf32>
    %76 = arith.addf %71, %75 : vector<324x8xf32>
    %c14_65 = arith.constant 14 : index
    %c0_66 = arith.constant 0 : index
    %77 = vector.load %arg12[%c14_65, %c0_66] : memref<388x8xbf16, #tpu.memory_space<vmem>>, vector<324x8xbf16>
    %c1_67 = arith.constant 1 : index
    %c0_68 = arith.constant 0 : index
    %c0_69 = arith.constant 0 : index
    %78 = vector.load %arg6[%c1_67, %c0_68, %c0_69] : memref<9x8x8xbf16, #tpu.memory_space<vmem>>, vector<1x8x8xbf16>
    %79 = vector.shape_cast %78 : vector<1x8x8xbf16> to vector<8x8xbf16>
    %cst_70 = arith.constant dense<0.000000e+00> : vector<324x8xf32>
    %80 = tpu.matmul %77, %79, %cst_70 {dimension_numbers = #tpu.dot_dimension_numbers<[1], [0], [0], [1], [0, 0, 1, 1], [], []>} : vector<324x8xbf16>, vector<8x8xbf16>, vector<324x8xf32> -> vector<324x8xf32>
    %81 = arith.addf %76, %80 : vector<324x8xf32>
    %c15_71 = arith.constant 15 : index
    %c0_72 = arith.constant 0 : index
    %82 = vector.load %arg12[%c15_71, %c0_72] : memref<388x8xbf16, #tpu.memory_space<vmem>>, vector<324x8xbf16>
    %c2_73 = arith.constant 2 : index
    %c0_74 = arith.constant 0 : index
    %c0_75 = arith.constant 0 : index
    %83 = vector.load %arg6[%c2_73, %c0_74, %c0_75] : memref<9x8x8xbf16, #tpu.memory_space<vmem>>, vector<1x8x8xbf16>
    %84 = vector.shape_cast %83 : vector<1x8x8xbf16> to vector<8x8xbf16>
    %cst_76 = arith.constant dense<0.000000e+00> : vector<324x8xf32>
    %85 = tpu.matmul %82, %84, %cst_76 {dimension_numbers = #tpu.dot_dimension_numbers<[1], [0], [0], [1], [0, 0, 1, 1], [], []>} : vector<324x8xbf16>, vector<8x8xbf16>, vector<324x8xf32> -> vector<324x8xf32>
    %86 = arith.addf %81, %85 : vector<324x8xf32>
    %c31_77 = arith.constant 31 : index
    %c0_78 = arith.constant 0 : index
    %87 = vector.load %arg12[%c31_77, %c0_78] : memref<388x8xbf16, #tpu.memory_space<vmem>>, vector<324x8xbf16>
    %c3_79 = arith.constant 3 : index
    %c0_80 = arith.constant 0 : index
    %c0_81 = arith.constant 0 : index
    %88 = vector.load %arg6[%c3_79, %c0_80, %c0_81] : memref<9x8x8xbf16, #tpu.memory_space<vmem>>, vector<1x8x8xbf16>
    %89 = vector.shape_cast %88 : vector<1x8x8xbf16> to vector<8x8xbf16>
    %cst_82 = arith.constant dense<0.000000e+00> : vector<324x8xf32>
    %90 = tpu.matmul %87, %89, %cst_82 {dimension_numbers = #tpu.dot_dimension_numbers<[1], [0], [0], [1], [0, 0, 1, 1], [], []>} : vector<324x8xbf16>, vector<8x8xbf16>, vector<324x8xf32> -> vector<324x8xf32>
    %91 = arith.addf %86, %90 : vector<324x8xf32>
    %c32_83 = arith.constant 32 : index
    %c0_84 = arith.constant 0 : index
    %92 = vector.load %arg12[%c32_83, %c0_84] : memref<388x8xbf16, #tpu.memory_space<vmem>>, vector<324x8xbf16>
    %c4_85 = arith.constant 4 : index
    %c0_86 = arith.constant 0 : index
    %c0_87 = arith.constant 0 : index
    %93 = vector.load %arg6[%c4_85, %c0_86, %c0_87] : memref<9x8x8xbf16, #tpu.memory_space<vmem>>, vector<1x8x8xbf16>
    %94 = vector.shape_cast %93 : vector<1x8x8xbf16> to vector<8x8xbf16>
    %cst_88 = arith.constant dense<0.000000e+00> : vector<324x8xf32>
    %95 = tpu.matmul %92, %94, %cst_88 {dimension_numbers = #tpu.dot_dimension_numbers<[1], [0], [0], [1], [0, 0, 1, 1], [], []>} : vector<324x8xbf16>, vector<8x8xbf16>, vector<324x8xf32> -> vector<324x8xf32>
    %96 = arith.addf %91, %95 : vector<324x8xf32>
    %c33_89 = arith.constant 33 : index
    %c0_90 = arith.constant 0 : index
    %97 = vector.load %arg12[%c33_89, %c0_90] : memref<388x8xbf16, #tpu.memory_space<vmem>>, vector<324x8xbf16>
    %c5_91 = arith.constant 5 : index
    %c0_92 = arith.constant 0 : index
    %c0_93 = arith.constant 0 : index
    %98 = vector.load %arg6[%c5_91, %c0_92, %c0_93] : memref<9x8x8xbf16, #tpu.memory_space<vmem>>, vector<1x8x8xbf16>
    %99 = vector.shape_cast %98 : vector<1x8x8xbf16> to vector<8x8xbf16>
    %cst_94 = arith.constant dense<0.000000e+00> : vector<324x8xf32>
    %100 = tpu.matmul %97, %99, %cst_94 {dimension_numbers = #tpu.dot_dimension_numbers<[1], [0], [0], [1], [0, 0, 1, 1], [], []>} : vector<324x8xbf16>, vector<8x8xbf16>, vector<324x8xf32> -> vector<324x8xf32>
    %101 = arith.addf %96, %100 : vector<324x8xf32>
    %c49_95 = arith.constant 49 : index
    %c0_96 = arith.constant 0 : index
    %102 = vector.load %arg12[%c49_95, %c0_96] : memref<388x8xbf16, #tpu.memory_space<vmem>>, vector<324x8xbf16>
    %c6_97 = arith.constant 6 : index
    %c0_98 = arith.constant 0 : index
    %c0_99 = arith.constant 0 : index
    %103 = vector.load %arg6[%c6_97, %c0_98, %c0_99] : memref<9x8x8xbf16, #tpu.memory_space<vmem>>, vector<1x8x8xbf16>
    %104 = vector.shape_cast %103 : vector<1x8x8xbf16> to vector<8x8xbf16>
    %cst_100 = arith.constant dense<0.000000e+00> : vector<324x8xf32>
    %105 = tpu.matmul %102, %104, %cst_100 {dimension_numbers = #tpu.dot_dimension_numbers<[1], [0], [0], [1], [0, 0, 1, 1], [], []>} : vector<324x8xbf16>, vector<8x8xbf16>, vector<324x8xf32> -> vector<324x8xf32>
    %106 = arith.addf %101, %105 : vector<324x8xf32>
    %c50_101 = arith.constant 50 : index
    %c0_102 = arith.constant 0 : index
    %107 = vector.load %arg12[%c50_101, %c0_102] : memref<388x8xbf16, #tpu.memory_space<vmem>>, vector<324x8xbf16>
    %c7_103 = arith.constant 7 : index
    %c0_104 = arith.constant 0 : index
    %c0_105 = arith.constant 0 : index
    %108 = vector.load %arg6[%c7_103, %c0_104, %c0_105] : memref<9x8x8xbf16, #tpu.memory_space<vmem>>, vector<1x8x8xbf16>
    %109 = vector.shape_cast %108 : vector<1x8x8xbf16> to vector<8x8xbf16>
    %cst_106 = arith.constant dense<0.000000e+00> : vector<324x8xf32>
    %110 = tpu.matmul %107, %109, %cst_106 {dimension_numbers = #tpu.dot_dimension_numbers<[1], [0], [0], [1], [0, 0, 1, 1], [], []>} : vector<324x8xbf16>, vector<8x8xbf16>, vector<324x8xf32> -> vector<324x8xf32>
    %111 = arith.addf %106, %110 : vector<324x8xf32>
    %c51_107 = arith.constant 51 : index
    %c0_108 = arith.constant 0 : index
    %112 = vector.load %arg12[%c51_107, %c0_108] : memref<388x8xbf16, #tpu.memory_space<vmem>>, vector<324x8xbf16>
    %c8_109 = arith.constant 8 : index
    %c0_110 = arith.constant 0 : index
    %c0_111 = arith.constant 0 : index
    %113 = vector.load %arg6[%c8_109, %c0_110, %c0_111] : memref<9x8x8xbf16, #tpu.memory_space<vmem>>, vector<1x8x8xbf16>
    %114 = vector.shape_cast %113 : vector<1x8x8xbf16> to vector<8x8xbf16>
    %cst_112 = arith.constant dense<0.000000e+00> : vector<324x8xf32>
    %115 = tpu.matmul %112, %114, %cst_112 {dimension_numbers = #tpu.dot_dimension_numbers<[1], [0], [0], [1], [0, 0, 1, 1], [], []>} : vector<324x8xbf16>, vector<8x8xbf16>, vector<324x8xf32> -> vector<324x8xf32>
    %116 = arith.addf %111, %115 : vector<324x8xf32>
    %c0_113 = arith.constant 0 : index
    %c0_114 = arith.constant 0 : index
    %117 = vector.load %arg7[%c0_113, %c0_114] : memref<1x8xf32, #tpu.memory_space<vmem>>, vector<1x8xf32>
    %118 = vector.broadcast %117 : vector<1x8xf32> to vector<324x8xf32>
    %119 = arith.mulf %116, %118 : vector<324x8xf32>
    %c0_115 = arith.constant 0 : index
    %c0_116 = arith.constant 0 : index
    %120 = vector.load %arg8[%c0_115, %c0_116] : memref<1x8xf32, #tpu.memory_space<vmem>>, vector<1x8xf32>
    %121 = vector.broadcast %120 : vector<1x8xf32> to vector<324x8xf32>
    %122 = arith.addf %119, %121 : vector<324x8xf32>
    %cst_117 = arith.constant 0.000000e+00 : f32
    %123 = vector.broadcast %cst_117 : f32 to vector<324x8xf32>
    %124 = arith.maximumf %122, %123 : vector<324x8xf32>
    %c0_118 = arith.constant 0 : index
    %c32_119 = arith.constant 32 : index
    %c0_120 = arith.constant 0 : index
    %125 = vector.load %arg1[%c0_118, %c32_119, %c0_120] : memref<1x388x4xbf16, #tpu.memory_space<vmem>>, vector<1x324x4xbf16>
    %126 = vector.shape_cast %125 : vector<1x324x4xbf16> to vector<324x4xbf16>
    %c0_121 = arith.constant 0 : index
    %c0_122 = arith.constant 0 : index
    %127 = vector.load %arg9[%c0_121, %c0_122] : memref<4x8xbf16, #tpu.memory_space<vmem>>, vector<4x8xbf16>
    %cst_123 = arith.constant dense<0.000000e+00> : vector<324x8xf32>
    %128 = tpu.matmul %126, %127, %cst_123 {dimension_numbers = #tpu.dot_dimension_numbers<[1], [0], [0], [1], [0, 0, 1, 1], [], []>} : vector<324x4xbf16>, vector<4x8xbf16>, vector<324x8xf32> -> vector<324x8xf32>
    %c0_124 = arith.constant 0 : index
    %c0_125 = arith.constant 0 : index
    %129 = vector.load %arg10[%c0_124, %c0_125] : memref<1x8xf32, #tpu.memory_space<vmem>>, vector<1x8xf32>
    %130 = vector.broadcast %129 : vector<1x8xf32> to vector<324x8xf32>
    %131 = arith.addf %128, %130 : vector<324x8xf32>
    %132 = arith.addf %124, %131 : vector<324x8xf32>
    %c0_126 = arith.constant 0 : index
    %c0_127 = arith.constant 0 : index
    %c0_128 = arith.constant 0 : index
    %133 = vector.load %arg11[%c0_126, %c0_127, %c0_128] : memref<1x324x8xf32, #tpu.memory_space<vmem>>, vector<1x324x8xf32>
    %134 = vector.shape_cast %133 : vector<1x324x8xf32> to vector<324x8xf32>
    %135 = vector.shape_cast %132 : vector<324x8xf32> to vector<1x324x8xf32>
    tpu.vector_store %arg11[%c0_126, %c0_127, %c0_128], %135 {strides = array<i32>} : memref<1x324x8xf32, #tpu.memory_space<vmem>>, vector<1x324x8xf32>,
    return
  }
  func.func @transform_0(%arg0: i32) -> (i32, i32, i32) {
    %c0_i32 = arith.constant 0 : i32
    %c0_i32_0 = arith.constant 0 : i32
    %c0_i32_1 = arith.constant 0 : i32
    return %arg0, %c0_i32, %c0_i32_0 : i32, i32, i32
  }
  func.func @transform_1(%arg0: i32) -> (i32, i32) {
    %c0_i32 = arith.constant 0 : i32
    %c0_i32_0 = arith.constant 0 : i32
    %c0_i32_1 = arith.constant 0 : i32
    return %c0_i32, %c0_i32_0 : i32, i32
  }
  func.func @transform_2(%arg0: i32) -> (i32, i32, i32) {
    %c0_i32 = arith.constant 0 : i32
    %c0_i32_0 = arith.constant 0 : i32
    %c0_i32_1 = arith.constant 0 : i32
    %c0_i32_2 = arith.constant 0 : i32
    return %c0_i32, %c0_i32_0, %c0_i32_1 : i32, i32, i32
  }
  func.func @transform_3(%arg0: i32) -> (i32, i32) {
    %c0_i32 = arith.constant 0 : i32
    %c0_i32_0 = arith.constant 0 : i32
    %c0_i32_1 = arith.constant 0 : i32
    return %c0_i32, %c0_i32_0 : i32, i32
  }
  func.func @transform_4(%arg0: i32) -> (i32, i32) {
    %c0_i32 = arith.constant 0 : i32
    %c0_i32_0 = arith.constant 0 : i32
    %c0_i32_1 = arith.constant 0 : i32
    return %c0_i32, %c0_i32_0 : i32, i32
  }
  func.func @transform_5(%arg0: i32) -> (i32, i32, i32) {
    %c0_i32 = arith.constant 0 : i32
    %c0_i32_0 = arith.constant 0 : i32
    %c0_i32_1 = arith.constant 0 : i32
    %c0_i32_2 = arith.constant 0 : i32
    return %c0_i32, %c0_i32_0, %c0_i32_1 : i32, i32, i32
  }
  func.func @transform_6(%arg0: i32) -> (i32, i32) {
    %c0_i32 = arith.constant 0 : i32
    %c0_i32_0 = arith.constant 0 : i32
    %c0_i32_1 = arith.constant 0 : i32
    return %c0_i32, %c0_i32_0 : i32, i32
  }
  func.func @transform_7(%arg0: i32) -> (i32, i32) {
    %c0_i32 = arith.constant 0 : i32
    %c0_i32_0 = arith.constant 0 : i32
    %c0_i32_1 = arith.constant 0 : i32
    return %c0_i32, %c0_i32_0 : i32, i32
  }
  func.func @transform_8(%arg0: i32) -> (i32, i32) {
    %c0_i32 = arith.constant 0 : i32
    %c0_i32_0 = arith.constant 0 : i32
    %c0_i32_1 = arith.constant 0 : i32
    return %c0_i32, %c0_i32_0 : i32, i32
  }
  func.func @transform_9(%arg0: i32) -> (i32, i32) {
    %c0_i32 = arith.constant 0 : i32
    %c0_i32_0 = arith.constant 0 : i32
    %c0_i32_1 = arith.constant 0 : i32
    return %c0_i32, %c0_i32_0 : i32, i32
  }
  func.func @transform_10(%arg0: i32) -> (i32, i32, i32) {
    %c0_i32 = arith.constant 0 : i32
    %c0_i32_0 = arith.constant 0 : i32
    %c0_i32_1 = arith.constant 0 : i32
    return %arg0, %c0_i32, %c0_i32_0 : i32, i32, i32
  }
}

</mosaic_0001>

<llo_original>
// kernel: tpu_custom_call.1
$region0: #{tpu_custom_call.1}
  #allocation0 [shape = 'u32[]', space=smem, size = 0x4, offset = 0x4, fixed_abs, tag = 'smem constant byte address 0x4 - core index']
  #allocation1 [shape = 'u32[144,128]{1,0:T(1,128)}', space=vmem, size = 0x12000, scoped, tag = 'internal scratch']
  #allocation2 [shape = 'bf16[388,8]{1,0:T(8,128)(2,1)}', space=vmem, size = 0x18800, scoped, tag = 'scratch operand']
  %s0 = inlined_call_operand.vmem [shape: bf16[2,388,4], index: 0, kind: input, shape index: {}]
  %s1 = inlined_call_operand.vmem [shape: f32[324,1], index: 1, kind: input, shape index: {}]
  %s2 = inlined_call_operand.vmem [shape: bf16[9,4,8], index: 2, kind: input, shape index: {}]
  %s3 = inlined_call_operand.vmem [shape: f32[1,8], index: 3, kind: input, shape index: {}]
  %s4 = inlined_call_operand.vmem [shape: f32[1,8], index: 4, kind: input, shape index: {}]
  %s5 = inlined_call_operand.vmem [shape: bf16[9,8,8], index: 5, kind: input, shape index: {}]
  %s6 = inlined_call_operand.vmem [shape: f32[1,8], index: 6, kind: input, shape index: {}]
  %s7 = inlined_call_operand.vmem [shape: f32[1,8], index: 7, kind: input, shape index: {}]
  %s8 = inlined_call_operand.vmem [shape: bf16[4,8], index: 8, kind: input, shape index: {}]
  %s9 = inlined_call_operand.vmem [shape: f32[1,8], index: 9, kind: input, shape index: {}]
  %s10 = inlined_call_operand.vmem [shape: f32[2,324,8], index: 10, kind: output, shape index: {}]
  %s11 = sld [smem:[#allocation0]]
  $region73: #{tpu_custom_call.1} parent=0
    _
  %s13 = ssub.s32 1, %s11
  %s14 = scalar_select 0, %s13, %s11
  loop: start=0, step=1, limit=4
  $region2: #{tpu_custom_call.1} parent=0 // loop_pre_header
    _
  $region3: #{tpu_custom_call.1} parent=0 // loop_header
    %s16 = sphi 0, %s20
    %p17 = scmp.ge.s32.totalorder %s16, 4
    %s26 = sphi 0, %s28
    %s29 = sphi 0, %s26
    %s30 = sphi 0, %s29
    %s46 = sphi 0, %s30
    %s50 = sphi 0, %s50
    %s52 = sphi 0, %s50
    %s53 = sphi 0, %s52
    %s67 = sphi 0, %s53
    %s71 = sphi 0, %s71
    %s73 = sphi 0, %s71
    %s74 = sphi 0, %s73
    %s88 = sphi 0, %s74
    %s92 = sphi 0, %s92
    %s94 = sphi 0, %s92
    %s95 = sphi 0, %s94
    %s109 = sphi 0, %s95
    %s113 = sphi 0, %s113
    %s115 = sphi 0, %s113
    %s116 = sphi 0, %s115
    %s130 = sphi 0, %s116
    %s134 = sphi 0, %s134
    %s136 = sphi 0, %s134
    %s137 = sphi 0, %s136
    %s151 = sphi 0, %s137
    %s155 = sphi 0, %s155
    %s157 = sphi 0, %s155
    %s158 = sphi 0, %s157
    %s172 = sphi 0, %s158
    %s176 = sphi 0, %s176
    %s178 = sphi 0, %s176
    %s179 = sphi 0, %s178
    %s193 = sphi 0, %s179
    %s197 = sphi 0, %s197
    %s199 = sphi 0, %s197
    %s200 = sphi 0, %s199
    %s214 = sphi 0, %s200
    %s218 = sphi 0, %s218
    %s220 = sphi 0, %s218
    %s221 = sphi 0, %s220
    %s235 = sphi 0, %s221
    %s241 = sphi 0, %s243
    %s244 = sphi 0, %s241
    %s245 = sphi 0, %s244
    %s261 = sphi 0, %s245
  $region4: #{tpu_custom_call.1} parent=0 // loop_header_branch
    %19 = sbr.rel (%p17) target = $region8
  $region5: #{tpu_custom_call.1} parent=0 // loop_body
    %s21 = ssub.s32 %s16, 1
    %s22 = ssub.s32 %s16, 2
    %s23 = sadd.s32 %s16, 1
    %s24 = ssub.s32 %s16, %s23
    %p25 = scmp.eq.s32.totalorder %s24, 0
    %s27 = sadd.s32 %s26, 1
    %s28 = scalar_select %p25, %s26, %s27
    %p31 = pneg %p25
    %p32 = scmp.eq.s32.totalorder %s16, 1
    %p33 = por %p31, %p32
    %p34 = scmp.ne.s32.totalorder %s26, %s29
    %p35 = scmp.eq.s32.totalorder %s16, 0
    %p36 = por %p34, %p35
    %p37 = scmp.ne.s32.totalorder %s26, %s29
    %p38 = scmp.eq.s32.totalorder %s21, 1
    %p39 = por %p37, %p38
    %p40 = scmp.ne.s32.totalorder %s29, %s30
    %p41 = scmp.eq.s32.totalorder %s21, 0
    %p42 = por %p40, %p41
    %p43 = scmp.ne.s32.totalorder %s29, %s30
    %p44 = scmp.eq.s32.totalorder %s22, 1
    %p45 = por %p43, %p44
    %p47 = scmp.ne.s32.totalorder %s30, %s46
    %p48 = scmp.eq.s32.totalorder %s22, 0
    %p49 = por %p47, %p48
    %s51 = sadd.s32 %s50, 1
    %p54 = scmp.eq.s32.totalorder %s16, 1
    %p55 = scmp.ne.s32.totalorder %s50, %s52
    %p56 = scmp.eq.s32.totalorder %s16, 0
    %p57 = por %p55, %p56
    %p58 = scmp.ne.s32.totalorder %s50, %s52
    %p59 = scmp.eq.s32.totalorder %s21, 1
    %p60 = por %p58, %p59
    %p61 = scmp.ne.s32.totalorder %s52, %s53
    %p62 = scmp.eq.s32.totalorder %s21, 0
    %p63 = por %p61, %p62
    %p64 = scmp.ne.s32.totalorder %s52, %s53
    %p65 = scmp.eq.s32.totalorder %s22, 1
    %p66 = por %p64, %p65
    %p68 = scmp.ne.s32.totalorder %s53, %s67
    %p69 = scmp.eq.s32.totalorder %s22, 0
    %p70 = por %p68, %p69
    %s72 = sadd.s32 %s71, 1
    %p75 = scmp.eq.s32.totalorder %s16, 1
    %p76 = scmp.ne.s32.totalorder %s71, %s73
    %p77 = scmp.eq.s32.totalorder %s16, 0
    %p78 = por %p76, %p77
    %p79 = scmp.ne.s32.totalorder %s71, %s73
    %p80 = scmp.eq.s32.totalorder %s21, 1
    %p81 = por %p79, %p80
    %p82 = scmp.ne.s32.totalorder %s73, %s74
    %p83 = scmp.eq.s32.totalorder %s21, 0
    %p84 = por %p82, %p83
    %p85 = scmp.ne.s32.totalorder %s73, %s74
    %p86 = scmp.eq.s32.totalorder %s22, 1
    %p87 = por %p85, %p86
    %p89 = scmp.ne.s32.totalorder %s74, %s88
    %p90 = scmp.eq.s32.totalorder %s22, 0
    %p91 = por %p89, %p90
    %s93 = sadd.s32 %s92, 1
    %p96 = scmp.eq.s32.totalorder %s16, 1
    %p97 = scmp.ne.s32.totalorder %s92, %s94
    %p98 = scmp.eq.s32.totalorder %s16, 0
    %p99 = por %p97, %p98
    %p100 = scmp.ne.s32.totalorder %s92, %s94
    %p101 = scmp.eq.s32.totalorder %s21, 1
    %p102 = por %p100, %p101
    %p103 = scmp.ne.s32.totalorder %s94, %s95
    %p104 = scmp.eq.s32.totalorder %s21, 0
    %p105 = por %p103, %p104
    %p106 = scmp.ne.s32.totalorder %s94, %s95
    %p107 = scmp.eq.s32.totalorder %s22, 1
    %p108 = por %p106, %p107
    %p110 = scmp.ne.s32.totalorder %s95, %s109
    %p111 = scmp.eq.s32.totalorder %s22, 0
    %p112 = por %p110, %p111
    %s114 = sadd.s32 %s113, 1
    %p117 = scmp.eq.s32.totalorder %s16, 1
    %p118 = scmp.ne.s32.totalorder %s113, %s115
    %p119 = scmp.eq.s32.totalorder %s16, 0
    %p120 = por %p118, %p119
    %p121 = scmp.ne.s32.totalorder %s113, %s115
    %p122 = scmp.eq.s32.totalorder %s21, 1
    %p123 = por %p121, %p122
    %p124 = scmp.ne.s32.totalorder %s115, %s116
    %p125 = scmp.eq.s32.totalorder %s21, 0
    %p126 = por %p124, %p125
    %p127 = scmp.ne.s32.totalorder %s115, %s116
    %p128 = scmp.eq.s32.totalorder %s22, 1
    %p129 = por %p127, %p128
    %p131 = scmp.ne.s32.totalorder %s116, %s130
    %p132 = scmp.eq.s32.totalorder %s22, 0
    %p133 = por %p131, %p132
    %s135 = sadd.s32 %s134, 1
    %p138 = scmp.eq.s32.totalorder %s16, 1
    %p139 = scmp.ne.s32.totalorder %s134, %s136
    %p140 = scmp.eq.s32.totalorder %s16, 0
    %p141 = por %p139, %p140
    %p142 = scmp.ne.s32.totalorder %s134, %s136
    %p143 = scmp.eq.s32.totalorder %s21, 1
    %p144 = por %p142, %p143
    %p145 = scmp.ne.s32.totalorder %s136, %s137
    %p146 = scmp.eq.s32.totalorder %s21, 0
    %p147 = por %p145, %p146
    %p148 = scmp.ne.s32.totalorder %s136, %s137
    %p149 = scmp.eq.s32.totalorder %s22, 1
    %p150 = por %p148, %p149
    %p152 = scmp.ne.s32.totalorder %s137, %s151
    %p153 = scmp.eq.s32.totalorder %s22, 0
    %p154 = por %p152, %p153
    %s156 = sadd.s32 %s155, 1
    %p159 = scmp.eq.s32.totalorder %s16, 1
    %p160 = scmp.ne.s32.totalorder %s155, %s157
    %p161 = scmp.eq.s32.totalorder %s16, 0
    %p162 = por %p160, %p161
    %p163 = scmp.ne.s32.totalorder %s155, %s157
    %p164 = scmp.eq.s32.totalorder %s21, 1
    %p165 = por %p163, %p164
    %p166 = scmp.ne.s32.totalorder %s157, %s158
    %p167 = scmp.eq.s32.totalorder %s21, 0
    %p168 = por %p166, %p167
    %p169 = scmp.ne.s32.totalorder %s157, %s158
    %p170 = scmp.eq.s32.totalorder %s22, 1
    %p171 = por %p169, %p170
    %p173 = scmp.ne.s32.totalorder %s158, %s172
    %p174 = scmp.eq.s32.totalorder %s22, 0
    %p175 = por %p173, %p174
    %s177 = sadd.s32 %s176, 1
    %p180 = scmp.eq.s32.totalorder %s16, 1
    %p181 = scmp.ne.s32.totalorder %s176, %s178
    %p182 = scmp.eq.s32.totalorder %s16, 0
    %p183 = por %p181, %p182
    %p184 = scmp.ne.s32.totalorder %s176, %s178
    %p185 = scmp.eq.s32.totalorder %s21, 1
    %p186 = por %p184, %p185
    %p187 = scmp.ne.s32.totalorder %s178, %s179
    %p188 = scmp.eq.s32.totalorder %s21, 0
    %p189 = por %p187, %p188
    %p190 = scmp.ne.s32.totalorder %s178, %s179
    %p191 = scmp.eq.s32.totalorder %s22, 1
    %p192 = por %p190, %p191
    %p194 = scmp.ne.s32.totalorder %s179, %s193
    %p195 = scmp.eq.s32.totalorder %s22, 0
    %p196 = por %p194, %p195
    %s198 = sadd.s32 %s197, 1
    %p201 = scmp.eq.s32.totalorder %s16, 1
    %p202 = scmp.ne.s32.totalorder %s197, %s199
    %p203 = scmp.eq.s32.totalorder %s16, 0
    %p204 = por %p202, %p203
    %p205 = scmp.ne.s32.totalorder %s197, %s199
    %p206 = scmp.eq.s32.totalorder %s21, 1
    %p207 = por %p205, %p206
    %p208 = scmp.ne.s32.totalorder %s199, %s200
    %p209 = scmp.eq.s32.totalorder %s21, 0
    %p210 = por %p208, %p209
    %p211 = scmp.ne.s32.totalorder %s199, %s200
    %p212 = scmp.eq.s32.totalorder %s22, 1
    %p213 = por %p211, %p212
    %p215 = scmp.ne.s32.totalorder %s200, %s214
    %p216 = scmp.eq.s32.totalorder %s22, 0
    %p217 = por %p215, %p216
    %s219 = sadd.s32 %s218, 1
    %p222 = scmp.eq.s32.totalorder %s16, 1
    %p223 = scmp.ne.s32.totalorder %s218, %s220
    %p224 = scmp.eq.s32.totalorder %s16, 0
    %p225 = por %p223, %p224
    %p226 = scmp.ne.s32.totalorder %s218, %s220
    %p227 = scmp.eq.s32.totalorder %s21, 1
    %p228 = por %p226, %p227
    %p229 = scmp.ne.s32.totalorder %s220, %s221
    %p230 = scmp.eq.s32.totalorder %s21, 0
    %p231 = por %p229, %p230
    %p232 = scmp.ne.s32.totalorder %s220, %s221
    %p233 = scmp.eq.s32.totalorder %s22, 1
    %p234 = por %p232, %p233
    %p236 = scmp.ne.s32.totalorder %s221, %s235
    %p237 = scmp.eq.s32.totalorder %s22, 0
    %p238 = por %p236, %p237
    %s239 = ssub.s32 %s16, %s23
    %p240 = scmp.eq.s32.totalorder %s239, 0
    %s242 = sadd.s32 %s241, 1
    %s243 = scalar_select %p240, %s241, %s242
    %p246 = pneg %p240
    %p247 = scmp.eq.s32.totalorder %s16, 1
    %p248 = por %p246, %p247
    %p249 = scmp.ne.s32.totalorder %s241, %s244
    %p250 = scmp.eq.s32.totalorder %s16, 0
    %p251 = por %p249, %p250
    %p252 = scmp.ne.s32.totalorder %s241, %s244
    %p253 = scmp.eq.s32.totalorder %s21, 1
    %p254 = por %p252, %p253
    %p255 = scmp.ne.s32.totalorder %s244, %s245
    %p256 = scmp.eq.s32.totalorder %s21, 0
    %p257 = por %p255, %p256
    %p258 = scmp.ne.s32.totalorder %s244, %s245
    %p259 = scmp.eq.s32.totalorder %s22, 1
    %p260 = por %p258, %p259
    %p262 = scmp.ne.s32.totalorder %s245, %s261
    %p263 = scmp.eq.s32.totalorder %s22, 0
    %p264 = por %p262, %p263
    %p265 = scmp.le.s32.totalorder 1, %s16
    %p266 = scmp.lt.s32.totalorder %s16, 3
    %p267 = pnand %p265, %p266
    %p268 = pneg %p267
    // Predicated region
    $region9: #{tpu_custom_call.1} parent=5 // pred_check
      _
    $region10: #{tpu_custom_call.1} parent=5 // pred_check_branch
      %270 = sbr.rel (%p267) target = $region12
    $region11: #{tpu_custom_call.1} parent=5 // pred_region
      %s271 = ssub.s32 %s16, 1
      // Predicated region
      $region13: #{tpu_custom_call.1} parent=11 // pred_check
        %p272 = pneg %p63
      $region14: #{tpu_custom_call.1} parent=11 // pred_check_branch
        %274 = sbr.rel (%p272) target = $region16
      $region15: #{tpu_custom_call.1} parent=11 // pred_region
        _
      $region16: #{tpu_custom_call.1} parent=11 // pred_fallthru
        _
      // Predicated region
      $region17: #{tpu_custom_call.1} parent=11 // pred_check
        %p275 = pneg %p84
      $region18: #{tpu_custom_call.1} parent=11 // pred_check_branch
        %277 = sbr.rel (%p275) target = $region20
      $region19: #{tpu_custom_call.1} parent=11 // pred_region
        _
      $region20: #{tpu_custom_call.1} parent=11 // pred_fallthru
        _
      // Predicated region
      $region21: #{tpu_custom_call.1} parent=11 // pred_check
        %p278 = pneg %p105
      $region22: #{tpu_custom_call.1} parent=11 // pred_check_branch
        %280 = sbr.rel (%p278) target = $region24
      $region23: #{tpu_custom_call.1} parent=11 // pred_region
        _
      $region24: #{tpu_custom_call.1} parent=11 // pred_fallthru
        _
      // Predicated region
      $region25: #{tpu_custom_call.1} parent=11 // pred_check
        %p281 = pneg %p126
      $region26: #{tpu_custom_call.1} parent=11 // pred_check_branch
        %283 = sbr.rel (%p281) target = $region28
      $region27: #{tpu_custom_call.1} parent=11 // pred_region
        _
      $region28: #{tpu_custom_call.1} parent=11 // pred_fallthru
        _
      // Predicated region
      $region29: #{tpu_custom_call.1} parent=11 // pred_check
        %p284 = pneg %p147
      $region30: #{tpu_custom_call.1} parent=11 // pred_check_branch
        %286 = sbr.rel (%p284) target = $region32
      $region31: #{tpu_custom_call.1} parent=11 // pred_region
        _
      $region32: #{tpu_custom_call.1} parent=11 // pred_fallthru
        _
      // Predicated region
      $region33: #{tpu_custom_call.1} parent=11 // pred_check
        %p287 = pneg %p168
      $region34: #{tpu_custom_call.1} parent=11 // pred_check_branch
        %289 = sbr.rel (%p287) target = $region36
      $region35: #{tpu_custom_call.1} parent=11 // pred_region
        _
      $region36: #{tpu_custom_call.1} parent=11 // pred_fallthru
        _
      // Predicated region
      $region37: #{tpu_custom_call.1} parent=11 // pred_check
        %p290 = pneg %p189
      $region38: #{tpu_custom_call.1} parent=11 // pred_check_branch
        %292 = sbr.rel (%p290) target = $region40
      $region39: #{tpu_custom_call.1} parent=11 // pred_region
        _
      $region40: #{tpu_custom_call.1} parent=11 // pred_fallthru
        _
      // Predicated region
      $region41: #{tpu_custom_call.1} parent=11 // pred_check
        %p293 = pneg %p210
      $region42: #{tpu_custom_call.1} parent=11 // pred_check_branch
        %295 = sbr.rel (%p293) target = $region44
      $region43: #{tpu_custom_call.1} parent=11 // pred_region
        _
      $region44: #{tpu_custom_call.1} parent=11 // pred_fallthru
        _
      // Predicated region
      $region45: #{tpu_custom_call.1} parent=11 // pred_check
        %p296 = pneg %p231
      $region46: #{tpu_custom_call.1} parent=11 // pred_check_branch
        %298 = sbr.rel (%p296) target = $region48
      $region47: #{tpu_custom_call.1} parent=11 // pred_region
        _
      $region48: #{tpu_custom_call.1} parent=11 // pred_fallthru
        _
    $region12: #{tpu_custom_call.1} parent=5 // pred_fallthru
      _
    %p299 = scmp.lt.s32.totalorder %s16, 2
    // Predicated region
    $region49: #{tpu_custom_call.1} parent=5 // pred_check
      %p300 = pneg %p299
    $region50: #{tpu_custom_call.1} parent=5 // pred_check_branch
      %302 = sbr.rel (%p300) target = $region52
    $region51: #{tpu_custom_call.1} parent=5 // pred_region
      // Predicated region
      $region53: #{tpu_custom_call.1} parent=51 // pred_check
        %p303 = pneg %p36
      $region54: #{tpu_custom_call.1} parent=51 // pred_check_branch
        %305 = sbr.rel (%p303) target = $region56
      $region55: #{tpu_custom_call.1} parent=51 // pred_region
        %p306 = scmp.lt.s32.totalorder %s16, 1
        %s307 = scalar_select %p306, %s16, 1
        %s308 = smul.addr %s307, 49
        %s309 = smul.addr %s308, 4
        %s310 = scalar_lea.vmem %s0, %s309
      $region56: #{tpu_custom_call.1} parent=51 // pred_fallthru
        _
    $region52: #{tpu_custom_call.1} parent=5 // pred_fallthru
      _
    %p311 = scmp.le.s32.totalorder 1, %s16
    %p312 = scmp.lt.s32.totalorder %s16, 3
    %p313 = pnand %p311, %p312
    %p314 = pneg %p313
    // Predicated region
    $region57: #{tpu_custom_call.1} parent=5 // pred_check
      _
    $region58: #{tpu_custom_call.1} parent=5 // pred_check_branch
      %316 = sbr.rel (%p313) target = $region60
    $region59: #{tpu_custom_call.1} parent=5 // pred_region
      %s317 = ssub.s32 %s16, 1
      %p318 = scmp.lt.s32.totalorder %s21, 1
      %s319 = scalar_select %p318, %s21, 1
      %s320 = smul.addr %s319, 49
      %s321 = smul.addr %s320, 4
      %s322 = scalar_lea.vmem %s0, %s321
      %p323 = pneg %p42
      %p324 = pneg %p39
      %p325 = pneg %p63
      %p326 = pneg %p60
      %p327 = pneg %p84
      %p328 = pneg %p81
      %p329 = pneg %p105
      %p330 = pneg %p102
      %p331 = pneg %p126
      %p332 = pneg %p123
      %p333 = pneg %p147
      %p334 = pneg %p144
      %p335 = pneg %p168
      %p336 = pneg %p165
      %p337 = pneg %p189
      %p338 = pneg %p186
      %p339 = pneg %p210
      %p340 = pneg %p207
      %p341 = pneg %p231
      %p342 = pneg %p228
      %p343 = pneg %p257
      %p344 = pneg %p254
      %p345 = scmp.lt.s32.totalorder %s21, 1
      %s346 = scalar_select %p345, %s21, 1
      %s347 = smul.addr %s346, 41
      %s348 = smul.addr %s347, 8
      %s349 = scalar_lea.vmem %s10, %s348
      %p350 = scmp.lt.s32.totalorder %s21, 1
      %s351 = scalar_select %p350, %s21, 1
      %s352 = smul.addr %s351, 49
      %s353 = smul.addr %s352, 4
      %s354 = scalar_lea.vmem %s0, %s353
      %p355 = scmp.lt.s32.totalorder %s21, 1
      %s356 = scalar_select %p355, %s21, 1
      %s357 = smul.addr %s356, 41
      %s358 = smul.addr %s357, 8
      %s359 = scalar_lea.vmem %s10, %s358
      %v361 = vld [vmem:[%s1] sm:$0xff]
      %v362 = vld [vmem:[%s1 + $0x8] sm:$0xff]
      %v363 = vld [vmem:[%s1 + $0x10] sm:$0xff]
      %v364 = vld [vmem:[%s1 + $0x18] sm:$0xff]
      %v365 = vld [vmem:[%s1 + $0x20] sm:$0xff]
      %v366 = vld [vmem:[%s1 + $0x28] sm:$0xff]
      %v367 = vld [vmem:[%s1 + $0x30] sm:$0xff]
      %v368 = vld [vmem:[%s1 + $0x38] sm:$0xff]
      %v369 = vld [vmem:[%s1 + $0x40] sm:$0xff]
      %v370 = vld [vmem:[%s1 + $0x48] sm:$0xff]
      %v371 = vld [vmem:[%s1 + $0x50] sm:$0xff]
      %v372 = vld [vmem:[%s1 + $0x58] sm:$0xff]
      %v373 = vld [vmem:[%s1 + $0x60] sm:$0xff]
      %v374 = vld [vmem:[%s1 + $0x68] sm:$0xff]
      %v375 = vld [vmem:[%s1 + $0x70] sm:$0xff]
      %v376 = vld [vmem:[%s1 + $0x78] sm:$0xff]
      %v377 = vld [vmem:[%s1 + $0x80] sm:$0xff]
      %v378 = vld [vmem:[%s1 + $0x88] sm:$0xff]
      %v379 = vld [vmem:[%s1 + $0x90] sm:$0xff]
      %v380 = vld [vmem:[%s1 + $0x98] sm:$0xff]
      %v381 = vld [vmem:[%s1 + $0xa0] sm:$0xff]
      %v382 = vld [vmem:[%s1 + $0xa8] sm:$0xff]
      %v383 = vld [vmem:[%s1 + $0xb0] sm:$0xff]
      %v384 = vld [vmem:[%s1 + $0xb8] sm:$0xff]
      %v385 = vld [vmem:[%s1 + $0xc0] sm:$0xff]
      %v386 = vld [vmem:[%s1 + $0xc8] sm:$0xff]
      %v387 = vld [vmem:[%s1 + $0xd0] sm:$0xff]
      %v388 = vld [vmem:[%s1 + $0xd8] sm:$0xff]
      %v389 = vld [vmem:[%s1 + $0xe0] sm:$0xff]
      %v390 = vld [vmem:[%s1 + $0xe8] sm:$0xff]
      %v391 = vld [vmem:[%s1 + $0xf0] sm:$0xff]
      %v392 = vld [vmem:[%s1 + $0xf8] sm:$0xff]
      %v393 = vld [vmem:[%s1 + $0x100] sm:$0xff]
      %v394 = vld [vmem:[%s1 + $0x108] sm:$0xff]
      %v395 = vld [vmem:[%s1 + $0x110] sm:$0xff]
      %v396 = vld [vmem:[%s1 + $0x118] sm:$0xff]
      %v397 = vld [vmem:[%s1 + $0x120] sm:$0xff]
      %v398 = vld [vmem:[%s1 + $0x128] sm:$0xff]
      %v399 = vld [vmem:[%s1 + $0x130] sm:$0xff]
      %v400 = vld [vmem:[%s1 + $0x138] sm:$0xff]
      %v401 = vld [vmem:[%s1 + $0x140] sm:$0xf]
      %v402 = vld [vmem:[%s354 + $0x4] sm:$0xc]
      %v403 = vld [vmem:[%s354 + $0x8] sm:$0xf]
      %v404 = vld [vmem:[%s354 + $0xc] sm:$0xf]
      %v405 = vld [vmem:[%s354 + $0x10] sm:$0xf]
      %v406 = vld [vmem:[%s354 + $0x14] sm:$0xf]
      %v407 = vld [vmem:[%s354 + $0x18] sm:$0xf]
      %v408 = vld [vmem:[%s354 + $0x1c] sm:$0xf]
      %v409 = vld [vmem:[%s354 + $0x20] sm:$0xf]
      %v410 = vld [vmem:[%s354 + $0x24] sm:$0xf]
      %v411 = vld [vmem:[%s354 + $0x28] sm:$0xf]
      %v412 = vld [vmem:[%s354 + $0x2c] sm:$0xf]
      %v413 = vld [vmem:[%s354 + $0x30] sm:$0xf]
      %v414 = vld [vmem:[%s354 + $0x34] sm:$0xf]
      %v415 = vld [vmem:[%s354 + $0x38] sm:$0xf]
      %v416 = vld [vmem:[%s354 + $0x3c] sm:$0xf]
      %v417 = vld [vmem:[%s354 + $0x40] sm:$0xf]
      %v418 = vld [vmem:[%s354 + $0x44] sm:$0xf]
      %v419 = vld [vmem:[%s354 + $0x48] sm:$0xf]
      %v420 = vld [vmem:[%s354 + $0x4c] sm:$0xf]
      %v421 = vld [vmem:[%s354 + $0x50] sm:$0xf]
      %v422 = vld [vmem:[%s354 + $0x54] sm:$0xf]
      %v423 = vld [vmem:[%s354 + $0x58] sm:$0xf]
      %v424 = vld [vmem:[%s354 + $0x5c] sm:$0xf]
      %v425 = vld [vmem:[%s354 + $0x60] sm:$0xf]
      %v426 = vld [vmem:[%s354 + $0x64] sm:$0xf]
      %v427 = vld [vmem:[%s354 + $0x68] sm:$0xf]
      %v428 = vld [vmem:[%s354 + $0x6c] sm:$0xf]
      %v429 = vld [vmem:[%s354 + $0x70] sm:$0xf]
      %v430 = vld [vmem:[%s354 + $0x74] sm:$0xf]
      %v431 = vld [vmem:[%s354 + $0x78] sm:$0xf]
      %v432 = vld [vmem:[%s354 + $0x7c] sm:$0xf]
      %v433 = vld [vmem:[%s354 + $0x80] sm:$0xf]
      %v434 = vld [vmem:[%s354 + $0x84] sm:$0xf]
      %v435 = vld [vmem:[%s354 + $0x88] sm:$0xf]
      %v436 = vld [vmem:[%s354 + $0x8c] sm:$0xf]
      %v437 = vld [vmem:[%s354 + $0x90] sm:$0xf]
      %v438 = vld [vmem:[%s354 + $0x94] sm:$0xf]
      %v439 = vld [vmem:[%s354 + $0x98] sm:$0xf]
      %v440 = vld [vmem:[%s354 + $0x9c] sm:$0xf]
      %v441 = vld [vmem:[%s354 + $0xa0] sm:$0xf]
      %v442 = vld [vmem:[%s354 + $0xa4] sm:$0xf]
      %v443 = vld [vmem:[%s354 + $0xa8] sm:$0x1]
      %v444 = vld [vmem:[%s2] sm:$0x3]
      %v445 = vld [vmem:[%s354 + $0x4] sm:$0x8]
      %s446 = scalar_lea.vmem %s2, 2
      %v447 = vld [vmem:[%s446] sm:$0x3]
      %v490 = vunpack.c.l.b16 %v445
      %v491 = vunpack.c.l.b16 %v403
      %v492 = vunpack.c.l.b16 %v404
      %v493 = vunpack.c.l.b16 %v405
      %v494 = vunpack.c.l.b16 %v406
      %v495 = vunpack.c.l.b16 %v407
      %v496 = vunpack.c.l.b16 %v408
      %v497 = vunpack.c.l.b16 %v409
      %v498 = vunpack.c.l.b16 %v410
      %v499 = vunpack.c.l.b16 %v411
      %v500 = vunpack.c.l.b16 %v412
      %v501 = vunpack.c.l.b16 %v413
      %v502 = vunpack.c.l.b16 %v414
      %v503 = vunpack.c.l.b16 %v415
      %v504 = vunpack.c.l.b16 %v416
      %v505 = vunpack.c.l.b16 %v417
      %v506 = vunpack.c.l.b16 %v418
      %v507 = vunpack.c.l.b16 %v419
      %v508 = vunpack.c.l.b16 %v420
      %v509 = vunpack.c.l.b16 %v421
      %v510 = vunpack.c.l.b16 %v422
      %v511 = vunpack.c.l.b16 %v423
      %v512 = vunpack.c.l.b16 %v424
      %v513 = vunpack.c.l.b16 %v425
      %v514 = vunpack.c.l.b16 %v426
      %v515 = vunpack.c.l.b16 %v427
      %v516 = vunpack.c.l.b16 %v428
      %v517 = vunpack.c.l.b16 %v429
      %v518 = vunpack.c.l.b16 %v430
      %v519 = vunpack.c.l.b16 %v431
      %v520 = vunpack.c.l.b16 %v432
      %v521 = vunpack.c.l.b16 %v433
      %v522 = vunpack.c.l.b16 %v434
      %v523 = vunpack.c.l.b16 %v435
      %v524 = vunpack.c.l.b16 %v436
      %v525 = vunpack.c.l.b16 %v437
      %v526 = vunpack.c.l.b16 %v438
      %v527 = vunpack.c.l.b16 %v439
      %v528 = vunpack.c.l.b16 %v440
      %v529 = vunpack.c.l.b16 %v441
      %v530 = vunpack.c.l.b16 %v442
      %v531 = vunpack.c.l.b16 %v443
      %v532 = vpack.c.b16 %v491, %v490
      %v533 = vpack.c.b16 %v493, %v492
      %v534 = vpack.c.b16 %v495, %v494
      %v535 = vpack.c.b16 %v497, %v496
      %v536 = vpack.c.b16 %v499, %v498
      %v537 = vpack.c.b16 %v501, %v500
      %v538 = vpack.c.b16 %v503, %v502
      %v539 = vpack.c.b16 %v505, %v504
      %v540 = vpack.c.b16 %v507, %v506
      %v541 = vpack.c.b16 %v509, %v508
      %v542 = vpack.c.b16 %v511, %v510
      %v543 = vpack.c.b16 %v513, %v512
      %v544 = vpack.c.b16 %v515, %v514
      %v545 = vpack.c.b16 %v517, %v516
      %v546 = vpack.c.b16 %v519, %v518
      %v547 = vpack.c.b16 %v521, %v520
      %v548 = vpack.c.b16 %v523, %v522
      %v549 = vpack.c.b16 %v525, %v524
      %v550 = vpack.c.b16 %v527, %v526
      %v551 = vpack.c.b16 %v529, %v528
      %v552 = vpack.c.b16 %v531, %v530
      %vm553 = vcmask 1044480
      %v554 = vrot.slane %v532, 3
      %v555 = vrot.slane %v533, 3
      %v556 = vsel %vm553, %v554, %v555
      %v557 = vrot.slane %v534, 3
      %v558 = vsel %vm553, %v555, %v557
      %v559 = vrot.slane %v535, 3
      %v560 = vsel %vm553, %v557, %v559
      %v561 = vrot.slane %v536, 3
      %v562 = vsel %vm553, %v559, %v561
      %v563 = vrot.slane %v537, 3
      %v564 = vsel %vm553, %v561, %v563
      %v565 = vrot.slane %v538, 3
      %v566 = vsel %vm553, %v563, %v565
      %v567 = vrot.slane %v539, 3
      %v568 = vsel %vm553, %v565, %v567
      %v569 = vrot.slane %v540, 3
      %v570 = vsel %vm553, %v567, %v569
      %v571 = vrot.slane %v541, 3
      %v572 = vsel %vm553, %v569, %v571
      %v573 = vrot.slane %v542, 3
      %v574 = vsel %vm553, %v571, %v573
      %v575 = vrot.slane %v543, 3
      %v576 = vsel %vm553, %v573, %v575
      %v577 = vrot.slane %v544, 3
      %v578 = vsel %vm553, %v575, %v577
      %v579 = vrot.slane %v545, 3
      %v580 = vsel %vm553, %v577, %v579
      %v581 = vrot.slane %v546, 3
      %v582 = vsel %vm553, %v579, %v581
      %v583 = vrot.slane %v547, 3
      %v584 = vsel %vm553, %v581, %v583
      %v585 = vrot.slane %v548, 3
      %v586 = vsel %vm553, %v583, %v585
      %v587 = vrot.slane %v549, 3
      %v588 = vsel %vm553, %v585, %v587
      %v589 = vrot.slane %v550, 3
      %v590 = vsel %vm553, %v587, %v589
      %v591 = vrot.slane %v551, 3
      %v592 = vsel %vm553, %v589, %v591
      %v593 = vrot.slane %v552, 3
      %v594 = vsel %vm553, %v591, %v593
      %vm595 = vcmask 31744
      %v597 = vsel %vm595, %v556, 0
      %v600 = vsel %vm595, %v558, 0
      %v603 = vsel %vm595, %v560, 0
      %v606 = vsel %vm595, %v562, 0
      %v609 = vsel %vm595, %v564, 0
      %v612 = vsel %vm595, %v566, 0
      %v615 = vsel %vm595, %v568, 0
      %v618 = vsel %vm595, %v570, 0
      %v621 = vsel %vm595, %v572, 0
      %v624 = vsel %vm595, %v574, 0
      %v627 = vsel %vm595, %v576, 0
      %v630 = vsel %vm595, %v578, 0
      %v633 = vsel %vm595, %v580, 0
      %v636 = vsel %vm595, %v582, 0
      %v639 = vsel %vm595, %v584, 0
      %v642 = vsel %vm595, %v586, 0
      %v645 = vsel %vm595, %v588, 0
      %v648 = vsel %vm595, %v590, 0
      %v651 = vsel %vm595, %v592, 0
      %v654 = vsel %vm595, %v594, 0
      %v657 = vsel %vm595, %v593, 0
      %vm659 = vcmask 1041408
      %v661 = vsel %vm659, %v447, 0
      %663 = vmatprep.subr.bf16.mxu0 0
      %664 = vmatpush1.bf16.msra.mxu0 %v661
      %665 = vmatprep.subr.bf16.mxu0 0
      %666 = vmatpush1.bf16.msra.mxu0 0
      %667 = vmatprep.subr.bf16.mxu0 0
      %668 = vmatpush1.bf16.msra.mxu0 0
      %669 = vmatprep.subr.bf16.mxu0 0
      %670 = vmatpush1.bf16.msra.mxu0 0
      %671 = vmatprep.subr.bf16.mxu0 0
      %672 = vmatpush1.bf16.msra.mxu0 0
      %673 = vmatprep.subr.bf16.mxu0 0
      %674 = vmatpush1.bf16.msra.mxu0 0
      %675 = vmatprep.subr.bf16.mxu0 0
      %676 = vmatpush1.bf16.msra.mxu0 0
      %677 = vmatprep.subr.bf16.mxu0 0
      %678 = vmatpush1.bf16.msra.mxu0 0
      %679 = vmatprep.subr.bf16.mxu0 0
      %680 = vmatpush1.bf16.msra.mxu0 0
      %681 = vmatprep.subr.bf16.mxu0 0
      %682 = vmatpush1.bf16.msra.mxu0 0
      %683 = vmatprep.subr.bf16.mxu0 0
      %684 = vmatpush1.bf16.msra.mxu0 0
      %685 = vmatprep.subr.bf16.mxu0 0
      %686 = vmatpush1.bf16.msra.mxu0 0
      %687 = vmatprep.subr.bf16.mxu0 0
      %688 = vmatpush1.bf16.msra.mxu0 0
      %689 = vmatprep.subr.bf16.mxu0 0
      %690 = vmatpush1.bf16.msra.mxu0 0
      %691 = vmatprep.subr.bf16.mxu0 0
      %692 = vmatpush1.bf16.msra.mxu0 0
      %693 = vmatprep.subr.bf16.mxu0 0
      %694 = vmatpush1.bf16.msra.mxu0 0
      %695 = vmatprep.mubr.bf16.mxu0 0
      %696 = vmatmul.mubr.bf16.gmra.mrb[0].mxu0 %v597
      %v697 = vpop.f32.mrb[0].mxu0
      %v698 = vadd.f32 0.0, %v697
      %v699 = vpop.f32.mrb[0].mxu0
      %v700 = vpop.f32.mrb[0].mxu0
      %v701 = vadd.f32 0.0, %v700
      %v702 = vpop.f32.mrb[0].mxu0
      %703 = vmatprep.mubr.bf16.mxu0 0
      %704 = vmatmul.mubr.bf16.gmra.mrb[0].mxu0 %v600
      %v705 = vpop.f32.mrb[0].mxu0
      %v706 = vadd.f32 0.0, %v705
      %v707 = vpop.f32.mrb[0].mxu0
      %v708 = vpop.f32.mrb[0].mxu0
      %v709 = vadd.f32 0.0, %v708
      %v710 = vpop.f32.mrb[0].mxu0
      %711 = vmatprep.mubr.bf16.mxu0 0
      %712 = vmatmul.mubr.bf16.gmra.mrb[0].mxu0 %v603
      %v713 = vpop.f32.mrb[0].mxu0
      %v714 = vadd.f32 0.0, %v713
      %v715 = vpop.f32.mrb[0].mxu0
      %v716 = vpop.f32.mrb[0].mxu0
      %v717 = vadd.f32 0.0, %v716
      %v718 = vpop.f32.mrb[0].mxu0
      %719 = vmatprep.mubr.bf16.mxu0 0
      %720 = vmatmul.mubr.bf16.gmra.mrb[0].mxu0 %v606
      %v721 = vpop.f32.mrb[0].mxu0
      %v722 = vadd.f32 0.0, %v721
      %v723 = vpop.f32.mrb[0].mxu0
      %v724 = vpop.f32.mrb[0].mxu0
      %v725 = vadd.f32 0.0, %v724
      %v726 = vpop.f32.mrb[0].mxu0
      %727 = vmatprep.mubr.bf16.mxu0 0
      %728 = vmatmul.mubr.bf16.gmra.mrb[0].mxu0 %v609
      %v729 = vpop.f32.mrb[0].mxu0
      %v730 = vadd.f32 0.0, %v729
      %v731 = vpop.f32.mrb[0].mxu0
      %v732 = vpop.f32.mrb[0].mxu0
      %v733 = vadd.f32 0.0, %v732
      %v734 = vpop.f32.mrb[0].mxu0
      %735 = vmatprep.mubr.bf16.mxu0 0
      %736 = vmatmul.mubr.bf16.gmra.mrb[0].mxu0 %v612
      %v737 = vpop.f32.mrb[0].mxu0
      %v738 = vadd.f32 0.0, %v737
      %v739 = vpop.f32.mrb[0].mxu0
      %v740 = vpop.f32.mrb[0].mxu0
      %v741 = vadd.f32 0.0, %v740
      %v742 = vpop.f32.mrb[0].mxu0
      %743 = vmatprep.mubr.bf16.mxu0 0
      %744 = vmatmul.mubr.bf16.gmra.mrb[0].mxu0 %v615
      %v745 = vpop.f32.mrb[0].mxu0
      %v746 = vadd.f32 0.0, %v745
      %v747 = vpop.f32.mrb[0].mxu0
      %v748 = vpop.f32.mrb[0].mxu0
      %v749 = vadd.f32 0.0, %v748
      %v750 = vpop.f32.mrb[0].mxu0
      %751 = vmatprep.mubr.bf16.mxu0 0
      %752 = vmatmul.mubr.bf16.gmra.mrb[0].mxu0 %v618
      %v753 = vpop.f32.mrb[0].mxu0
      %v754 = vadd.f32 0.0, %v753
      %v755 = vpop.f32.mrb[0].mxu0
      %v756 = vpop.f32.mrb[0].mxu0
      %v757 = vadd.f32 0.0, %v756
      %v758 = vpop.f32.mrb[0].mxu0
      %759 = vmatprep.mubr.bf16.mxu0 0
      %760 = vmatmul.mubr.bf16.gmra.mrb[0].mxu0 %v621
      %v761 = vpop.f32.mrb[0].mxu0
      %v762 = vadd.f32 0.0, %v761
      %v763 = vpop.f32.mrb[0].mxu0
      %v764 = vpop.f32.mrb[0].mxu0
      %v765 = vadd.f32 0.0, %v764
      %v766 = vpop.f32.mrb[0].mxu0
      %767 = vmatprep.mubr.bf16.mxu0 0
      %768 = vmatmul.mubr.bf16.gmra.mrb[0].mxu0 %v624
      %v769 = vpop.f32.mrb[0].mxu0
      %v770 = vadd.f32 0.0, %v769
      %v771 = vpop.f32.mrb[0].mxu0
      %v772 = vpop.f32.mrb[0].mxu0
      %v773 = vadd.f32 0.0, %v772
      %v774 = vpop.f32.mrb[0].mxu0
      %775 = vmatprep.mubr.bf16.mxu0 0
      %776 = vmatmul.mubr.bf16.gmra.mrb[0].mxu0 %v627
      %v777 = vpop.f32.mrb[0].mxu0
      %v778 = vadd.f32 0.0, %v777
      %v779 = vpop.f32.mrb[0].mxu0
      %v780 = vpop.f32.mrb[0].mxu0
      %v781 = vadd.f32 0.0, %v780
      %v782 = vpop.f32.mrb[0].mxu0
      %783 = vmatprep.mubr.bf16.mxu0 0
      %784 = vmatmul.mubr.bf16.gmra.mrb[0].mxu0 %v630
      %v785 = vpop.f32.mrb[0].mxu0
      %v786 = vadd.f32 0.0, %v785
      %v787 = vpop.f32.mrb[0].mxu0
      %v788 = vpop.f32.mrb[0].mxu0
      %v789 = vadd.f32 0.0, %v788
      %v790 = vpop.f32.mrb[0].mxu0
      %791 = vmatprep.mubr.bf16.mxu0 0
      %792 = vmatmul.mubr.bf16.gmra.mrb[0].mxu0 %v633
      %v793 = vpop.f32.mrb[0].mxu0
      %v794 = vadd.f32 0.0, %v793
      %v795 = vpop.f32.mrb[0].mxu0
      %v796 = vpop.f32.mrb[0].mxu0
      %v797 = vadd.f32 0.0, %v796
      %v798 = vpop.f32.mrb[0].mxu0
      %799 = vmatprep.mubr.bf16.mxu0 0
      %800 = vmatmul.mubr.bf16.gmra.mrb[0].mxu0 %v636
      %v801 = vpop.f32.mrb[0].mxu0
      %v802 = vadd.f32 0.0, %v801
      %v803 = vpop.f32.mrb[0].mxu0
      %v804 = vpop.f32.mrb[0].mxu0
      %v805 = vadd.f32 0.0, %v804
      %v806 = vpop.f32.mrb[0].mxu0
      %807 = vmatprep.mubr.bf16.mxu0 0
      %808 = vmatmul.mubr.bf16.gmra.mrb[0].mxu0 %v639
      %v809 = vpop.f32.mrb[0].mxu0
      %v810 = vadd.f32 0.0, %v809
      %v811 = vpop.f32.mrb[0].mxu0
      %v812 = vpop.f32.mrb[0].mxu0
      %v813 = vadd.f32 0.0, %v812
      %v814 = vpop.f32.mrb[0].mxu0
      %815 = vmatprep.mubr.bf16.mxu0 0
      %816 = vmatmul.mubr.bf16.gmra.mrb[0].mxu0 %v642
      %v817 = vpop.f32.mrb[0].mxu0
      %v818 = vadd.f32 0.0, %v817
      %v819 = vpop.f32.mrb[0].mxu0
      %v820 = vpop.f32.mrb[0].mxu0
      %v821 = vadd.f32 0.0, %v820
      %v822 = vpop.f32.mrb[0].mxu0
      %823 = vmatprep.mubr.bf16.mxu0 0
      %824 = vmatmul.mubr.bf16.gmra.mrb[0].mxu0 %v645
      %v825 = vpop.f32.mrb[0].mxu0
      %v826 = vadd.f32 0.0, %v825
      %v827 = vpop.f32.mrb[0].mxu0
      %v828 = vpop.f32.mrb[0].mxu0
      %v829 = vadd.f32 0.0, %v828
      %v830 = vpop.f32.mrb[0].mxu0
      %831 = vmatprep.mubr.bf16.mxu0 0
      %832 = vmatmul.mubr.bf16.gmra.mrb[0].mxu0 %v648
      %v833 = vpop.f32.mrb[0].mxu0
      %v834 = vadd.f32 0.0, %v833
      %v835 = vpop.f32.mrb[0].mxu0
      %v836 = vpop.f32.mrb[0].mxu0
      %v837 = vadd.f32 0.0, %v836
      %v838 = vpop.f32.mrb[0].mxu0
      %839 = vmatprep.mubr.bf16.mxu0 0
      %840 = vmatmul.mubr.bf16.gmra.mrb[0].mxu0 %v651
      %v841 = vpop.f32.mrb[0].mxu0
      %v842 = vadd.f32 0.0, %v841
      %v843 = vpop.f32.mrb[0].mxu0
      %v844 = vpop.f32.mrb[0].mxu0
      %v845 = vadd.f32 0.0, %v844
      %v846 = vpop.f32.mrb[0].mxu0
      %847 = vmatprep.mubr.bf16.mxu0 0
      %848 = vmatmul.mubr.bf16.gmra.mrb[0].mxu0 %v654
      %v849 = vpop.f32.mrb[0].mxu0
      %v850 = vadd.f32 0.0, %v849
      %v851 = vpop.f32.mrb[0].mxu0
      %v852 = vpop.f32.mrb[0].mxu0
      %v853 = vadd.f32 0.0, %v852
      %v854 = vpop.f32.mrb[0].mxu0
      %855 = vmatprep.mubr.bf16.mxu0 0
      %856 = vmatmul.mubr.bf16.gmra.mrb[0].mxu0 %v657
      %v857 = vpop.f32.mrb[0].mxu0
      %v858 = vadd.f32 0.0, %v857
      %v859 = vpop.f32.mrb[0].mxu0
      %v860 = vpop.f32.mrb[0].mxu0
      %v861 = vpop.f32.mrb[0].mxu0
      %862 = vdwg.mxu0
      %v864 = vunpack.c.l.b16 %v402
      %v865 = vpack.c.b16 %v491, %v864
      %vm866 = vsmask.f32 5376
      %v868 = vshrl.u32 %v865, 16
      %v870 = vrot.slane %v868, 2
      %v871 = vshll.u32 %v865, 16
      %v873 = vrot.slane %v871, 3
      %v874 = vor.u32 %v870, %v873
      %v876 = vshrl.u32 %v533, 16
      %v878 = vrot.slane %v876, 2
      %v879 = vshll.u32 %v533, 16
      %v881 = vrot.slane %v879, 3
      %v882 = vor.u32 %v878, %v881
      %v883 = vsel %vm866, %v874, %v882
      %v885 = vshrl.u32 %v534, 16
      %v887 = vrot.slane %v885, 2
      %v888 = vshll.u32 %v534, 16
      %v890 = vrot.slane %v888, 3
      %v891 = vor.u32 %v887, %v890
      %v892 = vsel %vm866, %v882, %v891
      %v894 = vshrl.u32 %v535, 16
      %v896 = vrot.slane %v894, 2
      %v897 = vshll.u32 %v535, 16
      %v899 = vrot.slane %v897, 3
      %v900 = vor.u32 %v896, %v899
      %v901 = vsel %vm866, %v891, %v900
      %v903 = vshrl.u32 %v536, 16
      %v905 = vrot.slane %v903, 2
      %v906 = vshll.u32 %v536, 16
      %v908 = vrot.slane %v906, 3
      %v909 = vor.u32 %v905, %v908
      %v910 = vsel %vm866, %v900, %v909
      %v912 = vshrl.u32 %v537, 16
      %v914 = vrot.slane %v912, 2
      %v915 = vshll.u32 %v537, 16
      %v917 = vrot.slane %v915, 3
      %v918 = vor.u32 %v914, %v917
      %v919 = vsel %vm866, %v909, %v918
      %v921 = vshrl.u32 %v538, 16
      %v923 = vrot.slane %v921, 2
      %v924 = vshll.u32 %v538, 16
      %v926 = vrot.slane %v924, 3
      %v927 = vor.u32 %v923, %v926
      %v928 = vsel %vm866, %v918, %v927
      %v930 = vshrl.u32 %v539, 16
      %v932 = vrot.slane %v930, 2
      %v933 = vshll.u32 %v539, 16
      %v935 = vrot.slane %v933, 3
      %v936 = vor.u32 %v932, %v935
      %v937 = vsel %vm866, %v927, %v936
      %v939 = vshrl.u32 %v540, 16
      %v941 = vrot.slane %v939, 2
      %v942 = vshll.u32 %v540, 16
      %v944 = vrot.slane %v942, 3
      %v945 = vor.u32 %v941, %v944
      %v946 = vsel %vm866, %v936, %v945
      %v948 = vshrl.u32 %v541, 16
      %v950 = vrot.slane %v948, 2
      %v951 = vshll.u32 %v541, 16
      %v953 = vrot.slane %v951, 3
      %v954 = vor.u32 %v950, %v953
      %v955 = vsel %vm866, %v945, %v954
      %v957 = vshrl.u32 %v542, 16
      %v959 = vrot.slane %v957, 2
      %v960 = vshll.u32 %v542, 16
      %v962 = vrot.slane %v960, 3
      %v963 = vor.u32 %v959, %v962
      %v964 = vsel %vm866, %v954, %v963
      %v966 = vshrl.u32 %v543, 16
      %v968 = vrot.slane %v966, 2
      %v969 = vshll.u32 %v543, 16
      %v971 = vrot.slane %v969, 3
      %v972 = vor.u32 %v968, %v971
      %v973 = vsel %vm866, %v963, %v972
      %v975 = vshrl.u32 %v544, 16
      %v977 = vrot.slane %v975, 2
      %v978 = vshll.u32 %v544, 16
      %v980 = vrot.slane %v978, 3
      %v981 = vor.u32 %v977, %v980
      %v982 = vsel %vm866, %v972, %v981
      %v984 = vshrl.u32 %v545, 16
      %v986 = vrot.slane %v984, 2
      %v987 = vshll.u32 %v545, 16
      %v989 = vrot.slane %v987, 3
      %v990 = vor.u32 %v986, %v989
      %v991 = vsel %vm866, %v981, %v990
      %v993 = vshrl.u32 %v546, 16
      %v995 = vrot.slane %v993, 2
      %v996 = vshll.u32 %v546, 16
      %v998 = vrot.slane %v996, 3
      %v999 = vor.u32 %v995, %v998
      %v1000 = vsel %vm866, %v990, %v999
      %v1002 = vshrl.u32 %v547, 16
      %v1004 = vrot.slane %v1002, 2
      %v1005 = vshll.u32 %v547, 16
      %v1007 = vrot.slane %v1005, 3
      %v1008 = vor.u32 %v1004, %v1007
      %v1009 = vsel %vm866, %v999, %v1008
      %v1011 = vshrl.u32 %v548, 16
      %v1013 = vrot.slane %v1011, 2
      %v1014 = vshll.u32 %v548, 16
      %v1016 = vrot.slane %v1014, 3
      %v1017 = vor.u32 %v1013, %v1016
      %v1018 = vsel %vm866, %v1008, %v1017
      %v1020 = vshrl.u32 %v549, 16
      %v1022 = vrot.slane %v1020, 2
      %v1023 = vshll.u32 %v549, 16
      %v1025 = vrot.slane %v1023, 3
      %v1026 = vor.u32 %v1022, %v1025
      %v1027 = vsel %vm866, %v1017, %v1026
      %v1029 = vshrl.u32 %v550, 16
      %v1031 = vrot.slane %v1029, 2
      %v1032 = vshll.u32 %v550, 16
      %v1034 = vrot.slane %v1032, 3
      %v1035 = vor.u32 %v1031, %v1034
      %v1036 = vsel %vm866, %v1026, %v1035
      %v1038 = vshrl.u32 %v551, 16
      %v1040 = vrot.slane %v1038, 2
      %v1041 = vshll.u32 %v551, 16
      %v1043 = vrot.slane %v1041, 3
      %v1044 = vor.u32 %v1040, %v1043
      %v1045 = vsel %vm866, %v1035, %v1044
      %v1047 = vshrl.u32 %v552, 16
      %v1049 = vrot.slane %v1047, 2
      %v1050 = vshll.u32 %v552, 16
      %v1052 = vrot.slane %v1050, 3
      %v1053 = vor.u32 %v1049, %v1052
      %v1054 = vsel %vm866, %v1044, %v1053
      %v1056 = vsel %vm595, %v883, 0
      %v1059 = vsel %vm595, %v892, 0
      %v1062 = vsel %vm595, %v901, 0
      %v1065 = vsel %vm595, %v910, 0
      %v1068 = vsel %vm595, %v919, 0
      %v1071 = vsel %vm595, %v928, 0
      %v1074 = vsel %vm595, %v937, 0
      %v1077 = vsel %vm595, %v946, 0
      %v1080 = vsel %vm595, %v955, 0
      %v1083 = vsel %vm595, %v964, 0
      %v1086 = vsel %vm595, %v973, 0
      %v1089 = vsel %vm595, %v982, 0
      %v1092 = vsel %vm595, %v991, 0
      %v1095 = vsel %vm595, %v1000, 0
      %v1098 = vsel %vm595, %v1009, 0
      %v1101 = vsel %vm595, %v1018, 0
      %v1104 = vsel %vm595, %v1027, 0
      %v1107 = vsel %vm595, %v1036, 0
      %v1110 = vsel %vm595, %v1045, 0
      %v1113 = vsel %vm595, %v1054, 0
      %v1116 = vsel %vm595, %v1053, 0
      %v1119 = vsel %vm659, %v444, 0
      %1121 = vmatprep.subr.bf16.mxu0 0
      %1122 = vmatpush1.bf16.msra.mxu0 %v1119
      %1123 = vmatprep.subr.bf16.mxu0 0
      %1124 = vmatpush1.bf16.msra.mxu0 0
      %1125 = vmatprep.subr.bf16.mxu0 0
      %1126 = vmatpush1.bf16.msra.mxu0 0
      %1127 = vmatprep.subr.bf16.mxu0 0
      %1128 = vmatpush1.bf16.msra.mxu0 0
      %1129 = vmatprep.subr.bf16.mxu0 0
      %1130 = vmatpush1.bf16.msra.mxu0 0
      %1131 = vmatprep.subr.bf16.mxu0 0
      %1132 = vmatpush1.bf16.msra.mxu0 0
      %1133 = vmatprep.subr.bf16.mxu0 0
      %1134 = vmatpush1.bf16.msra.mxu0 0
      %1135 = vmatprep.subr.bf16.mxu0 0
      %1136 = vmatpush1.bf16.msra.mxu0 0
      %1137 = vmatprep.subr.bf16.mxu0 0
      %1138 = vmatpush1.bf16.msra.mxu0 0
      %1139 = vmatprep.subr.bf16.mxu0 0
      %1140 = vmatpush1.bf16.msra.mxu0 0
      %1141 = vmatprep.subr.bf16.mxu0 0
      %1142 = vmatpush1.bf16.msra.mxu0 0
      %1143 = vmatprep.subr.bf16.mxu0 0
      %1144 = vmatpush1.bf16.msra.mxu0 0
      %1145 = vmatprep.subr.bf16.mxu0 0
      %1146 = vmatpush1.bf16.msra.mxu0 0
      %1147 = vmatprep.subr.bf16.mxu0 0
      %1148 = vmatpush1.bf16.msra.mxu0 0
      %1149 = vmatprep.subr.bf16.mxu0 0
      %1150 = vmatpush1.bf16.msra.mxu0 0
      %1151 = vmatprep.subr.bf16.mxu0 0
      %1152 = vmatpush1.bf16.msra.mxu0 0
      %1153 = vmatprep.mubr.bf16.mxu0 0
      %1154 = vmatmul.mubr.bf16.gmra.mrb[0].mxu0 %v1056
      %v1155 = vpop.f32.mrb[0].mxu0
      %v1156 = vadd.f32 %v698, %v1155
      %v1157 = vpop.f32.mrb[0].mxu0
      %v1158 = vpop.f32.mrb[0].mxu0
      %v1159 = vadd.f32 %v701, %v1158
      %v1160 = vpop.f32.mrb[0].mxu0
      %1161 = vmatprep.mubr.bf16.mxu0 0
      %1162 = vmatmul.mubr.bf16.gmra.mrb[0].mxu0 %v1059
      %v1163 = vpop.f32.mrb[0].mxu0
      %v1164 = vadd.f32 %v706, %v1163
      %v1165 = vpop.f32.mrb[0].mxu0
      %v1166 = vpop.f32.mrb[0].mxu0
      %v1167 = vadd.f32 %v709, %v1166
      %v1168 = vpop.f32.mrb[0].mxu0
      %1169 = vmatprep.mubr.bf16.mxu0 0
      %1170 = vmatmul.mubr.bf16.gmra.mrb[0].mxu0 %v1062
      %v1171 = vpop.f32.mrb[0].mxu0
      %v1172 = vadd.f32 %v714, %v1171
      %v1173 = vpop.f32.mrb[0].mxu0
      %v1174 = vpop.f32.mrb[0].mxu0
      %v1175 = vadd.f32 %v717, %v1174
      %v1176 = vpop.f32.mrb[0].mxu0
      %1177 = vmatprep.mubr.bf16.mxu0 0
      %1178 = vmatmul.mubr.bf16.gmra.mrb[0].mxu0 %v1065
      %v1179 = vpop.f32.mrb[0].mxu0
      %v1180 = vadd.f32 %v722, %v1179
      %v1181 = vpop.f32.mrb[0].mxu0
      %v1182 = vpop.f32.mrb[0].mxu0
      %v1183 = vadd.f32 %v725, %v1182
      %v1184 = vpop.f32.mrb[0].mxu0
      %1185 = vmatprep.mubr.bf16.mxu0 0
      %1186 = vmatmul.mubr.bf16.gmra.mrb[0].mxu0 %v1068
      %v1187 = vpop.f32.mrb[0].mxu0
      %v1188 = vadd.f32 %v730, %v1187
      %v1189 = vpop.f32.mrb[0].mxu0
      %v1190 = vpop.f32.mrb[0].mxu0
      %v1191 = vadd.f32 %v733, %v1190
      %v1192 = vpop.f32.mrb[0].mxu0
      %1193 = vmatprep.mubr.bf16.mxu0 0
      %1194 = vmatmul.mubr.bf16.gmra.mrb[0].mxu0 %v1071
      %v1195 = vpop.f32.mrb[0].mxu0
      %v1196 = vadd.f32 %v738, %v1195
      %v1197 = vpop.f32.mrb[0].mxu0
      %v1198 = vpop.f32.mrb[0].mxu0
      %v1199 = vadd.f32 %v741, %v1198
      %v1200 = vpop.f32.mrb[0].mxu0
      %1201 = vmatprep.mubr.bf16.mxu0 0
      %1202 = vmatmul.mubr.bf16.gmra.mrb[0].mxu0 %v1074
      %v1203 = vpop.f32.mrb[0].mxu0
      %v1204 = vadd.f32 %v746, %v1203
      %v1205 = vpop.f32.mrb[0].mxu0
      %v1206 = vpop.f32.mrb[0].mxu0
      %v1207 = vadd.f32 %v749, %v1206
      %v1208 = vpop.f32.mrb[0].mxu0
      %1209 = vmatprep.mubr.bf16.mxu0 0
      %1210 = vmatmul.mubr.bf16.gmra.mrb[0].mxu0 %v1077
      %v1211 = vpop.f32.mrb[0].mxu0
      %v1212 = vadd.f32 %v754, %v1211
      %v1213 = vpop.f32.mrb[0].mxu0
      %v1214 = vpop.f32.mrb[0].mxu0
      %v1215 = vadd.f32 %v757, %v1214
      %v1216 = vpop.f32.mrb[0].mxu0
      %1217 = vmatprep.mubr.bf16.mxu0 0
      %1218 = vmatmul.mubr.bf16.gmra.mrb[0].mxu0 %v1080
      %v1219 = vpop.f32.mrb[0].mxu0
      %v1220 = vadd.f32 %v762, %v1219
      %v1221 = vpop.f32.mrb[0].mxu0
      %v1222 = vpop.f32.mrb[0].mxu0
      %v1223 = vadd.f32 %v765, %v1222
      %v1224 = vpop.f32.mrb[0].mxu0
      %1225 = vmatprep.mubr.bf16.mxu0 0
      %1226 = vmatmul.mubr.bf16.gmra.mrb[0].mxu0 %v1083
      %v1227 = vpop.f32.mrb[0].mxu0
      %v1228 = vadd.f32 %v770, %v1227
      %v1229 = vpop.f32.mrb[0].mxu0
      %v1230 = vpop.f32.mrb[0].mxu0
      %v1231 = vadd.f32 %v773, %v1230
      %v1232 = vpop.f32.mrb[0].mxu0
      %1233 = vmatprep.mubr.bf16.mxu0 0
      %1234 = vmatmul.mubr.bf16.gmra.mrb[0].mxu0 %v1086
      %v1235 = vpop.f32.mrb[0].mxu0
      %v1236 = vadd.f32 %v778, %v1235
      %v1237 = vpop.f32.mrb[0].mxu0
      %v1238 = vpop.f32.mrb[0].mxu0
      %v1239 = vadd.f32 %v781, %v1238
      %v1240 = vpop.f32.mrb[0].mxu0
      %1241 = vmatprep.mubr.bf16.mxu0 0
      %1242 = vmatmul.mubr.bf16.gmra.mrb[0].mxu0 %v1089
      %v1243 = vpop.f32.mrb[0].mxu0
      %v1244 = vadd.f32 %v786, %v1243
      %v1245 = vpop.f32.mrb[0].mxu0
      %v1246 = vpop.f32.mrb[0].mxu0
      %v1247 = vadd.f32 %v789, %v1246
      %v1248 = vpop.f32.mrb[0].mxu0
      %1249 = vmatprep.mubr.bf16.mxu0 0
      %1250 = vmatmul.mubr.bf16.gmra.mrb[0].mxu0 %v1092
      %v1251 = vpop.f32.mrb[0].mxu0
      %v1252 = vadd.f32 %v794, %v1251
      %v1253 = vpop.f32.mrb[0].mxu0
      %v1254 = vpop.f32.mrb[0].mxu0
      %v1255 = vadd.f32 %v797, %v1254
      %v1256 = vpop.f32.mrb[0].mxu0
      %1257 = vmatprep.mubr.bf16.mxu0 0
      %1258 = vmatmul.mubr.bf16.gmra.mrb[0].mxu0 %v1095
      %v1259 = vpop.f32.mrb[0].mxu0
      %v1260 = vadd.f32 %v802, %v1259
      %v1261 = vpop.f32.mrb[0].mxu0
      %v1262 = vpop.f32.mrb[0].mxu0
      %v1263 = vadd.f32 %v805, %v1262
      %v1264 = vpop.f32.mrb[0].mxu0
      %1265 = vmatprep.mubr.bf16.mxu0 0
      %1266 = vmatmul.mubr.bf16.gmra.mrb[0].mxu0 %v1098
      %v1267 = vpop.f32.mrb[0].mxu0
      %v1268 = vadd.f32 %v810, %v1267
      %v1269 = vpop.f32.mrb[0].mxu0
      %v1270 = vpop.f32.mrb[0].mxu0
      %v1271 = vadd.f32 %v813, %v1270
      %v1272 = vpop.f32.mrb[0].mxu0
      %1273 = vmatprep.mubr.bf16.mxu0 0
      %1274 = vmatmul.mubr.bf16.gmra.mrb[0].mxu0 %v1101
      %v1275 = vpop.f32.mrb[0].mxu0
      %v1276 = vadd.f32 %v818, %v1275
      %v1277 = vpop.f32.mrb[0].mxu0
      %v1278 = vpop.f32.mrb[0].mxu0
      %v1279 = vadd.f32 %v821, %v1278
      %v1280 = vpop.f32.mrb[0].mxu0
      %1281 = vmatprep.mubr.bf16.mxu0 0
      %1282 = vmatmul.mubr.bf16.gmra.mrb[0].mxu0 %v1104
      %v1283 = vpop.f32.mrb[0].mxu0
      %v1284 = vadd.f32 %v826, %v1283
      %v1285 = vpop.f32.mrb[0].mxu0
      %v1286 = vpop.f32.mrb[0].mxu0
      %v1287 = vadd.f32 %v829, %v1286
      %v1288 = vpop.f32.mrb[0].mxu0
      %1289 = vmatprep.mubr.bf16.mxu0 0
      %1290 = vmatmul.mubr.bf16.gmra.mrb[0].mxu0 %v1107
      %v1291 = vpop.f32.mrb[0].mxu0
      %v1292 = vadd.f32 %v834, %v1291
      %v1293 = vpop.f32.mrb[0].mxu0
      %v1294 = vpop.f32.mrb[0].mxu0
      %v1295 = vadd.f32 %v837, %v1294
      %v1296 = vpop.f32.mrb[0].mxu0
      %1297 = vmatprep.mubr.bf16.mxu0 0
      %1298 = vmatmul.mubr.bf16.gmra.mrb[0].mxu0 %v1110
      %v1299 = vpop.f32.mrb[0].mxu0
      %v1300 = vadd.f32 %v842, %v1299
      %v1301 = vpop.f32.mrb[0].mxu0
      %v1302 = vpop.f32.mrb[0].mxu0
      %v1303 = vadd.f32 %v845, %v1302
      %v1304 = vpop.f32.mrb[0].mxu0
      %1305 = vmatprep.mubr.bf16.mxu0 0
      %1306 = vmatmul.mubr.bf16.gmra.mrb[0].mxu0 %v1113
      %v1307 = vpop.f32.mrb[0].mxu0
      %v1308 = vadd.f32 %v850, %v1307
      %v1309 = vpop.f32.mrb[0].mxu0
      %v1310 = vpop.f32.mrb[0].mxu0
      %v1311 = vadd.f32 %v853, %v1310
      %v1312 = vpop.f32.mrb[0].mxu0
      %1313 = vmatprep.mubr.bf16.mxu0 0
      %1314 = vmatmul.mubr.bf16.gmra.mrb[0].mxu0 %v1116
      %v1315 = vpop.f32.mrb[0].mxu0
      %v1316 = vadd.f32 %v858, %v1315
      %v1317 = vpop.f32.mrb[0].mxu0
      %v1318 = vpop.f32.mrb[0].mxu0
      %v1319 = vpop.f32.mrb[0].mxu0
      %1320 = vdwg.mxu0
      %v1321 = vld [vmem:[%s354 + $0xa8] sm:$0x3]
      %s1322 = scalar_lea.vmem %s2, 4
      %v1323 = vld [vmem:[%s1322] sm:$0x3]
      %v1325 = vunpack.c.l.b16 %v1321
      %v1326 = vpack.c.b16 %v1325, %v530
      %vm1327 = vsmask.f32 4352
      %v1329 = vshrl.u32 %v532, 16
      %v1331 = vrot.slane %v1329, 3
      %v1332 = vshll.u32 %v532, 16
      %v1334 = vrot.slane %v1332, 4
      %v1335 = vor.u32 %v1331, %v1334
      %v1336 = vrot.slane %v876, 3
      %v1337 = vrot.slane %v879, 4
      %v1338 = vor.u32 %v1336, %v1337
      %v1339 = vsel %vm1327, %v1335, %v1338
      %v1340 = vrot.slane %v885, 3
      %v1341 = vrot.slane %v888, 4
      %v1342 = vor.u32 %v1340, %v1341
      %v1343 = vsel %vm1327, %v1338, %v1342
      %v1344 = vrot.slane %v894, 3
      %v1345 = vrot.slane %v897, 4
      %v1346 = vor.u32 %v1344, %v1345
      %v1347 = vsel %vm1327, %v1342, %v1346
      %v1348 = vrot.slane %v903, 3
      %v1349 = vrot.slane %v906, 4
      %v1350 = vor.u32 %v1348, %v1349
      %v1351 = vsel %vm1327, %v1346, %v1350
      %v1352 = vrot.slane %v912, 3
      %v1353 = vrot.slane %v915, 4
      %v1354 = vor.u32 %v1352, %v1353
      %v1355 = vsel %vm1327, %v1350, %v1354
      %v1356 = vrot.slane %v921, 3
      %v1357 = vrot.slane %v924, 4
      %v1358 = vor.u32 %v1356, %v1357
      %v1359 = vsel %vm1327, %v1354, %v1358
      %v1360 = vrot.slane %v930, 3
      %v1361 = vrot.slane %v933, 4
      %v1362 = vor.u32 %v1360, %v1361
      %v1363 = vsel %vm1327, %v1358, %v1362
      %v1364 = vrot.slane %v939, 3
      %v1365 = vrot.slane %v942, 4
      %v1366 = vor.u32 %v1364, %v1365
      %v1367 = vsel %vm1327, %v1362, %v1366
      %v1368 = vrot.slane %v948, 3
      %v1369 = vrot.slane %v951, 4
      %v1370 = vor.u32 %v1368, %v1369
      %v1371 = vsel %vm1327, %v1366, %v1370
      %v1372 = vrot.slane %v957, 3
      %v1373 = vrot.slane %v960, 4
      %v1374 = vor.u32 %v1372, %v1373
      %v1375 = vsel %vm1327, %v1370, %v1374
      %v1376 = vrot.slane %v966, 3
      %v1377 = vrot.slane %v969, 4
      %v1378 = vor.u32 %v1376, %v1377
      %v1379 = vsel %vm1327, %v1374, %v1378
      %v1380 = vrot.slane %v975, 3
      %v1381 = vrot.slane %v978, 4
      %v1382 = vor.u32 %v1380, %v1381
      %v1383 = vsel %vm1327, %v1378, %v1382
      %v1384 = vrot.slane %v984, 3
      %v1385 = vrot.slane %v987, 4
      %v1386 = vor.u32 %v1384, %v1385
      %v1387 = vsel %vm1327, %v1382, %v1386
      %v1388 = vrot.slane %v993, 3
      %v1389 = vrot.slane %v996, 4
      %v1390 = vor.u32 %v1388, %v1389
      %v1391 = vsel %vm1327, %v1386, %v1390
      %v1392 = vrot.slane %v1002, 3
      %v1393 = vrot.slane %v1005, 4
      %v1394 = vor.u32 %v1392, %v1393
      %v1395 = vsel %vm1327, %v1390, %v1394
      %v1396 = vrot.slane %v1011, 3
      %v1397 = vrot.slane %v1014, 4
      %v1398 = vor.u32 %v1396, %v1397
      %v1399 = vsel %vm1327, %v1394, %v1398
      %v1400 = vrot.slane %v1020, 3
      %v1401 = vrot.slane %v1023, 4
      %v1402 = vor.u32 %v1400, %v1401
      %v1403 = vsel %vm1327, %v1398, %v1402
      %v1404 = vrot.slane %v1029, 3
      %v1405 = vrot.slane %v1032, 4
      %v1406 = vor.u32 %v1404, %v1405
      %v1407 = vsel %vm1327, %v1402, %v1406
      %v1408 = vrot.slane %v1038, 3
      %v1409 = vrot.slane %v1041, 4
      %v1410 = vor.u32 %v1408, %v1409
      %v1411 = vsel %vm1327, %v1406, %v1410
      %v1413 = vshrl.u32 %v1326, 16
      %v1415 = vrot.slane %v1413, 3
      %v1416 = vshll.u32 %v1326, 16
      %v1418 = vrot.slane %v1416, 4
      %v1419 = vor.u32 %v1415, %v1418
      %v1420 = vsel %vm1327, %v1410, %v1419
      %v1422 = vsel %vm595, %v1339, 0
      %v1425 = vsel %vm595, %v1343, 0
      %v1428 = vsel %vm595, %v1347, 0
      %v1431 = vsel %vm595, %v1351, 0
      %v1434 = vsel %vm595, %v1355, 0
      %v1437 = vsel %vm595, %v1359, 0
      %v1440 = vsel %vm595, %v1363, 0
      %v1443 = vsel %vm595, %v1367, 0
      %v1446 = vsel %vm595, %v1371, 0
      %v1449 = vsel %vm595, %v1375, 0
      %v1452 = vsel %vm595, %v1379, 0
      %v1455 = vsel %vm595, %v1383, 0
      %v1458 = vsel %vm595, %v1387, 0
      %v1461 = vsel %vm595, %v1391, 0
      %v1464 = vsel %vm595, %v1395, 0
      %v1467 = vsel %vm595, %v1399, 0
      %v1470 = vsel %vm595, %v1403, 0
      %v1473 = vsel %vm595, %v1407, 0
      %v1476 = vsel %vm595, %v1411, 0
      %v1479 = vsel %vm595, %v1420, 0
      %v1482 = vsel %vm595, %v1419, 0
      %v1485 = vsel %vm659, %v1323, 0
      %1487 = vmatprep.subr.bf16.mxu0 0
      %1488 = vmatpush1.bf16.msra.mxu0 %v1485
      %1489 = vmatprep.subr.bf16.mxu0 0
      %1490 = vmatpush1.bf16.msra.mxu0 0
      %1491 = vmatprep.subr.bf16.mxu0 0
      %1492 = vmatpush1.bf16.msra.mxu0 0
      %1493 = vmatprep.subr.bf16.mxu0 0
      %1494 = vmatpush1.bf16.msra.mxu0 0
      %1495 = vmatprep.subr.bf16.mxu0 0
      %1496 = vmatpush1.bf16.msra.mxu0 0
      %1497 = vmatprep.subr.bf16.mxu0 0
      %1498 = vmatpush1.bf16.msra.mxu0 0
      %1499 = vmatprep.subr.bf16.mxu0 0
      %1500 = vmatpush1.bf16.msra.mxu0 0
      %1501 = vmatprep.subr.bf16.mxu0 0
      %1502 = vmatpush1.bf16.msra.mxu0 0
      %1503 = vmatprep.subr.bf16.mxu0 0
      %1504 = vmatpush1.bf16.msra.mxu0 0
      %1505 = vmatprep.subr.bf16.mxu0 0
      %1506 = vmatpush1.bf16.msra.mxu0 0
      %1507 = vmatprep.subr.bf16.mxu0 0
      %1508 = vmatpush1.bf16.msra.mxu0 0
      %1509 = vmatprep.subr.bf16.mxu0 0
      %1510 = vmatpush1.bf16.msra.mxu0 0
      %1511 = vmatprep.subr.bf16.mxu0 0
      %1512 = vmatpush1.bf16.msra.mxu0 0
      %1513 = vmatprep.subr.bf16.mxu0 0
      %1514 = vmatpush1.bf16.msra.mxu0 0
      %1515 = vmatprep.subr.bf16.mxu0 0
      %1516 = vmatpush1.bf16.msra.mxu0 0
      %1517 = vmatprep.subr.bf16.mxu0 0
      %1518 = vmatpush1.bf16.msra.mxu0 0
      %1519 = vmatprep.mubr.bf16.mxu0 0
      %1520 = vmatmul.mubr.bf16.gmra.mrb[0].mxu0 %v1422
      %v1521 = vpop.f32.mrb[0].mxu0
      %v1522 = vadd.f32 0.0, %v1521
      %v1523 = vpop.f32.mrb[0].mxu0
      %v1524 = vpop.f32.mrb[0].mxu0
      %v1525 = vadd.f32 0.0, %v1524
      %v1526 = vpop.f32.mrb[0].mxu0
      %1527 = vmatprep.mubr.bf16.mxu0 0
      %1528 = vmatmul.mubr.bf16.gmra.mrb[0].mxu0 %v1425
      %v1529 = vpop.f32.mrb[0].mxu0
      %v1530 = vadd.f32 0.0, %v1529
      %v1531 = vpop.f32.mrb[0].mxu0
      %v1532 = vpop.f32.mrb[0].mxu0
      %v1533 = vadd.f32 0.0, %v1532
      %v1534 = vpop.f32.mrb[0].mxu0
      %1535 = vmatprep.mubr.bf16.mxu0 0
      %1536 = vmatmul.mubr.bf16.gmra.mrb[0].mxu0 %v1428
      %v1537 = vpop.f32.mrb[0].mxu0
      %v1538 = vadd.f32 0.0, %v1537
      %v1539 = vpop.f32.mrb[0].mxu0
      %v1540 = vpop.f32.mrb[0].mxu0
      %v1541 = vadd.f32 0.0, %v1540
      %v1542 = vpop.f32.mrb[0].mxu0
      %1543 = vmatprep.mubr.bf16.mxu0 0
      %1544 = vmatmul.mubr.bf16.gmra.mrb[0].mxu0 %v1431
      %v1545 = vpop.f32.mrb[0].mxu0
      %v1546 = vadd.f32 0.0, %v1545
      %v1547 = vpop.f32.mrb[0].mxu0
      %v1548 = vpop.f32.mrb[0].mxu0
      %v1549 = vadd.f32 0.0, %v1548
      %v1550 = vpop.f32.mrb[0].mxu0
      %1551 = vmatprep.mubr.bf16.mxu0 0
      %1552 = vmatmul.mubr.bf16.gmra.mrb[0].mxu0 %v1434
      %v1553 = vpop.f32.mrb[0].mxu0
      %v1554 = vadd.f32 0.0, %v1553
      %v1555 = vpop.f32.mrb[0].mxu0
      %v1556 = vpop.f32.mrb[0].mxu0
      %v1557 = vadd.f32 0.0, %v1556
      %v1558 = vpop.f32.mrb[0].mxu0
      %1559 = vmatprep.mubr.bf16.mxu0 0
      %1560 = vmatmul.mubr.bf16.gmra.mrb[0].mxu0 %v1437
      %v1561 = vpop.f32.mrb[0].mxu0
      %v1562 = vadd.f32 0.0, %v1561
      %v1563 = vpop.f32.mrb[0].mxu0
      %v1564 = vpop.f32.mrb[0].mxu0
      %v1565 = vadd.f32 0.0, %v1564
      %v1566 = vpop.f32.mrb[0].mxu0
      %1567 = vmatprep.mubr.bf16.mxu0 0
      %1568 = vmatmul.mubr.bf16.gmra.mrb[0].mxu0 %v1440
      %v1569 = vpop.f32.mrb[0].mxu0
      %v1570 = vadd.f32 0.0, %v1569
      %v1571 = vpop.f32.mrb[0].mxu0
      %v1572 = vpop.f32.mrb[0].mxu0
      %v1573 = vadd.f32 0.0, %v1572
      %v1574 = vpop.f32.mrb[0].mxu0
      %1575 = vmatprep.mubr.bf16.mxu0 0
      %1576 = vmatmul.mubr.bf16.gmra.mrb[0].mxu0 %v1443
      %v1577 = vpop.f32.mrb[0].mxu0
      %v1578 = vadd.f32 0.0, %v1577
      %v1579 = vpop.f32.mrb[0].mxu0
      %v1580 = vpop.f32.mrb[0].mxu0
      %v1581 = vadd.f32 0.0, %v1580
      %v1582 = vpop.f32.mrb[0].mxu0
      %1583 = vmatprep.mubr.bf16.mxu0 0
      %1584 = vmatmul.mubr.bf16.gmra.mrb[0].mxu0 %v1446
      %v1585 = vpop.f32.mrb[0].mxu0
      %v1586 = vadd.f32 0.0, %v1585
      %v1587 = vpop.f32.mrb[0].mxu0
      %v1588 = vpop.f32.mrb[0].mxu0
      %v1589 = vadd.f32 0.0, %v1588
      %v1590 = vpop.f32.mrb[0].mxu0
      %1591 = vmatprep.mubr.bf16.mxu0 0
      %1592 = vmatmul.mubr.bf16.gmra.mrb[0].mxu0 %v1449
      %v1593 = vpop.f32.mrb[0].mxu0
      %v1594 = vadd.f32 0.0, %v1593
      %v1595 = vpop.f32.mrb[0].mxu0
      %v1596 = vpop.f32.mrb[0].mxu0
      %v1597 = vadd.f32 0.0, %v1596
      %v1598 = vpop.f32.mrb[0].mxu0
      %1599 = vmatprep.mubr.bf16.mxu0 0
      %1600 = vmatmul.mubr.bf16.gmra.mrb[0].mxu0 %v1452
      %v1601 = vpop.f32.mrb[0].mxu0
      %v1602 = vadd.f32 0.0, %v1601
      %v1603 = vpop.f32.mrb[0].mxu0
      %v1604 = vpop.f32.mrb[0].mxu0
      %v1605 = vadd.f32 0.0, %v1604
      %v1606 = vpop.f32.mrb[0].mxu0
      %1607 = vmatprep.mubr.bf16.mxu0 0
      %1608 = vmatmul.mubr.bf16.gmra.mrb[0].mxu0 %v1455
      %v1609 = vpop.f32.mrb[0].mxu0
      %v1610 = vadd.f32 0.0, %v1609
      %v1611 = vpop.f32.mrb[0].mxu0
      %v1612 = vpop.f32.mrb[0].mxu0
      %v1613 = vadd.f32 0.0, %v1612
      %v1614 = vpop.f32.mrb[0].mxu0
      %1615 = vmatprep.mubr.bf16.mxu0 0
      %1616 = vmatmul.mubr.bf16.gmra.mrb[0].mxu0 %v1458
      %v1617 = vpop.f32.mrb[0].mxu0
      %v1618 = vadd.f32 0.0, %v1617
      %v1619 = vpop.f32.mrb[0].mxu0
      %v1620 = vpop.f32.mrb[0].mxu0
      %v1621 = vadd.f32 0.0, %v1620
      %v1622 = vpop.f32.mrb[0].mxu0
      %1623 = vmatprep.mubr.bf16.mxu0 0
      %1624 = vmatmul.mubr.bf16.gmra.mrb[0].mxu0 %v1461
      %v1625 = vpop.f32.mrb[0].mxu0
      %v1626 = vadd.f32 0.0, %v1625
      %v1627 = vpop.f32.mrb[0].mxu0
      %v1628 = vpop.f32.mrb[0].mxu0
      %v1629 = vadd.f32 0.0, %v1628
      %v1630 = vpop.f32.mrb[0].mxu0
      %1631 = vmatprep.mubr.bf16.mxu0 0
      %1632 = vmatmul.mubr.bf16.gmra.mrb[0].mxu0 %v1464
      %v1633 = vpop.f32.mrb[0].mxu0
      %v1634 = vadd.f32 0.0, %v1633
      %v1635 = vpop.f32.mrb[0].mxu0
      %v1636 = vpop.f32.mrb[0].mxu0
      %v1637 = vadd.f32 0.0, %v1636
      %v1638 = vpop.f32.mrb[0].mxu0
      %1639 = vmatprep.mubr.bf16.mxu0 0
      %1640 = vmatmul.mubr.bf16.gmra.mrb[0].mxu0 %v1467
      %v1641 = vpop.f32.mrb[0].mxu0
      %v1642 = vadd.f32 0.0, %v1641
      %v1643 = vpop.f32.mrb[0].mxu0
      %v1644 = vpop.f32.mrb[0].mxu0
      %v1645 = vadd.f32 0.0, %v1644
      %v1646 = vpop.f32.mrb[0].mxu0
      %1647 = vmatprep.mubr.bf16.mxu0 0
      %1648 = vmatmul.mubr.bf16.gmra.mrb[0].mxu0 %v1470
      %v1649 = vpop.f32.mrb[0].mxu0
      %v1650 = vadd.f32 0.0, %v1649
      %v1651 = vpop.f32.mrb[0].mxu0
      %v1652 = vpop.f32.mrb[0].mxu0
      %v1653 = vadd.f32 0.0, %v1652
      %v1654 = vpop.f32.mrb[0].mxu0
      %1655 = vmatprep.mubr.bf16.mxu0 0
      %1656 = vmatmul.mubr.bf16.gmra.mrb[0].mxu0 %v1473
      %v1657 = vpop.f32.mrb[0].mxu0
      %v1658 = vadd.f32 0.0, %v1657
      %v1659 = vpop.f32.mrb[0].mxu0
      %v1660 = vpop.f32.mrb[0].mxu0
      %v1661 = vadd.f32 0.0, %v1660
      %v1662 = vpop.f32.mrb[0].mxu0
      %1663 = vmatprep.mubr.bf16.mxu0 0
      %1664 = vmatmul.mubr.bf16.gmra.mrb[0].mxu0 %v1476
      %v1665 = vpop.f32.mrb[0].mxu0
      %v1666 = vadd.f32 0.0, %v1665
      %v1667 = vpop.f32.mrb[0].mxu0
      %v1668 = vpop.f32.mrb[0].mxu0
      %v1669 = vadd.f32 0.0, %v1668
      %v1670 = vpop.f32.mrb[0].mxu0
      %1671 = vmatprep.mubr.bf16.mxu0 0
      %1672 = vmatmul.mubr.bf16.gmra.mrb[0].mxu0 %v1479
      %v1673 = vpop.f32.mrb[0].mxu0
      %v1674 = vadd.f32 0.0, %v1673
      %v1675 = vpop.f32.mrb[0].mxu0
      %v1676 = vpop.f32.mrb[0].mxu0
      %v1677 = vadd.f32 0.0, %v1676
      %v1678 = vpop.f32.mrb[0].mxu0
      %1679 = vmatprep.mubr.bf16.mxu0 0
      %1680 = vmatmul.mubr.bf16.gmra.mrb[0].mxu0 %v1482
      %v1681 = vpop.f32.mrb[0].mxu0
      %v1682 = vadd.f32 0.0, %v1681
      %v1683 = vpop.f32.mrb[0].mxu0
      %v1684 = vpop.f32.mrb[0].mxu0
      %v1685 = vpop.f32.mrb[0].mxu0
      %1686 = vdwg.mxu0
      %v1687 = vadd.f32 %v1156, %v1522
      %v1688 = vadd.f32 %v1159, %v1525
      %v1689 = vadd.f32 %v1164, %v1530
      %v1690 = vadd.f32 %v1167, %v1533
      %v1691 = vadd.f32 %v1172, %v1538
      %v1692 = vadd.f32 %v1175, %v1541
      %v1693 = vadd.f32 %v1180, %v1546
      %v1694 = vadd.f32 %v1183, %v1549
      %v1695 = vadd.f32 %v1188, %v1554
      %v1696 = vadd.f32 %v1191, %v1557
      %v1697 = vadd.f32 %v1196, %v1562
      %v1698 = vadd.f32 %v1199, %v1565
      %v1699 = vadd.f32 %v1204, %v1570
      %v1700 = vadd.f32 %v1207, %v1573
      %v1701 = vadd.f32 %v1212, %v1578
      %v1702 = vadd.f32 %v1215, %v1581
      %v1703 = vadd.f32 %v1220, %v1586
      %v1704 = vadd.f32 %v1223, %v1589
      %v1705 = vadd.f32 %v1228, %v1594
      %v1706 = vadd.f32 %v1231, %v1597
      %v1707 = vadd.f32 %v1236, %v1602
      %v1708 = vadd.f32 %v1239, %v1605
      %v1709 = vadd.f32 %v1244, %v1610
      %v1710 = vadd.f32 %v1247, %v1613
      %v1711 = vadd.f32 %v1252, %v1618
      %v1712 = vadd.f32 %v1255, %v1621
      %v1713 = vadd.f32 %v1260, %v1626
      %v1714 = vadd.f32 %v1263, %v1629
      %v1715 = vadd.f32 %v1268, %v1634
      %v1716 = vadd.f32 %v1271, %v1637
      %v1717 = vadd.f32 %v1276, %v1642
      %v1718 = vadd.f32 %v1279, %v1645
      %v1719 = vadd.f32 %v1284, %v1650
      %v1720 = vadd.f32 %v1287, %v1653
      %v1721 = vadd.f32 %v1292, %v1658
      %v1722 = vadd.f32 %v1295, %v1661
      %v1723 = vadd.f32 %v1300, %v1666
      %v1724 = vadd.f32 %v1303, %v1669
      %v1725 = vadd.f32 %v1308, %v1674
      %v1726 = vadd.f32 %v1311, %v1677
      %v1727 = vadd.f32 %v1316, %v1682
      %v1728 = vld [vmem:[%s354 + $0xc] sm:$0x8]
      %v1729 = vld [vmem:[%s354 + $0x10] sm:$0xf]
      %v1730 = vld [vmem:[%s354 + $0x14] sm:$0xf]
      %v1731 = vld [vmem:[%s354 + $0x18] sm:$0xf]
      %v1732 = vld [vmem:[%s354 + $0x1c] sm:$0xf]
      %v1733 = vld [vmem:[%s354 + $0x20] sm:$0xf]
      %v1734 = vld [vmem:[%s354 + $0x24] sm:$0xf]
      %v1735 = vld [vmem:[%s354 + $0x28] sm:$0xf]
      %v1736 = vld [vmem:[%s354 + $0x2c] sm:$0xf]
      %v1737 = vld [vmem:[%s354 + $0x30] sm:$0xf]
      %v1738 = vld [vmem:[%s354 + $0x34] sm:$0xf]
      %v1739 = vld [vmem:[%s354 + $0x38] sm:$0xf]
      %v1740 = vld [vmem:[%s354 + $0x3c] sm:$0xf]
      %v1741 = vld [vmem:[%s354 + $0x40] sm:$0xf]
      %v1742 = vld [vmem:[%s354 + $0x44] sm:$0xf]
      %v1743 = vld [vmem:[%s354 + $0x48] sm:$0xf]
      %v1744 = vld [vmem:[%s354 + $0x4c] sm:$0xf]
      %v1745 = vld [vmem:[%s354 + $0x50] sm:$0xf]
      %v1746 = vld [vmem:[%s354 + $0x54] sm:$0xf]
      %v1747 = vld [vmem:[%s354 + $0x58] sm:$0xf]
      %v1748 = vld [vmem:[%s354 + $0x5c] sm:$0xf]
      %v1749 = vld [vmem:[%s354 + $0x60] sm:$0xf]
      %v1750 = vld [vmem:[%s354 + $0x64] sm:$0xf]
      %v1751 = vld [vmem:[%s354 + $0x68] sm:$0xf]
      %v1752 = vld [vmem:[%s354 + $0x6c] sm:$0xf]
      %v1753 = vld [vmem:[%s354 + $0x70] sm:$0xf]
      %v1754 = vld [vmem:[%s354 + $0x74] sm:$0xf]
      %v1755 = vld [vmem:[%s354 + $0x78] sm:$0xf]
      %v1756 = vld [vmem:[%s354 + $0x7c] sm:$0xf]
      %v1757 = vld [vmem:[%s354 + $0x80] sm:$0xf]
      %v1758 = vld [vmem:[%s354 + $0x84] sm:$0xf]
      %v1759 = vld [vmem:[%s354 + $0x88] sm:$0xf]
      %v1760 = vld [vmem:[%s354 + $0x8c] sm:$0xf]
      %v1761 = vld [vmem:[%s354 + $0x90] sm:$0xf]
      %v1762 = vld [vmem:[%s354 + $0x94] sm:$0xf]
      %v1763 = vld [vmem:[%s354 + $0x98] sm:$0xf]
      %v1764 = vld [vmem:[%s354 + $0x9c] sm:$0xf]
      %v1765 = vld [vmem:[%s354 + $0xa0] sm:$0xf]
      %v1766 = vld [vmem:[%s354 + $0xa4] sm:$0xf]
      %v1767 = vld [vmem:[%s354 + $0xa8] sm:$0xf]
      %v1768 = vld [vmem:[%s354 + $0xac] sm:$0xf]
      %v1769 = vld [vmem:[%s354 + $0xb0] sm:$0x3]
      %s1770 = scalar_lea.vmem %s2, 6
      %v1771 = vld [vmem:[%s1770] sm:$0x3]
      %v1814 = vunpack.c.l.b16 %v1728
      %v1815 = vunpack.c.l.b16 %v1729
      %v1816 = vunpack.c.l.b16 %v1730
      %v1817 = vunpack.c.l.b16 %v1731
      %v1818 = vunpack.c.l.b16 %v1732
      %v1819 = vunpack.c.l.b16 %v1733
      %v1820 = vunpack.c.l.b16 %v1734
      %v1821 = vunpack.c.l.b16 %v1735
      %v1822 = vunpack.c.l.b16 %v1736
      %v1823 = vunpack.c.l.b16 %v1737
      %v1824 = vunpack.c.l.b16 %v1738
      %v1825 = vunpack.c.l.b16 %v1739
      %v1826 = vunpack.c.l.b16 %v1740
      %v1827 = vunpack.c.l.b16 %v1741
      %v1828 = vunpack.c.l.b16 %v1742
      %v1829 = vunpack.c.l.b16 %v1743
      %v1830 = vunpack.c.l.b16 %v1744
      %v1831 = vunpack.c.l.b16 %v1745
      %v1832 = vunpack.c.l.b16 %v1746
      %v1833 = vunpack.c.l.b16 %v1747
      %v1834 = vunpack.c.l.b16 %v1748
      %v1835 = vunpack.c.l.b16 %v1749
      %v1836 = vunpack.c.l.b16 %v1750
      %v1837 = vunpack.c.l.b16 %v1751
      %v1838 = vunpack.c.l.b16 %v1752
      %v1839 = vunpack.c.l.b16 %v1753
      %v1840 = vunpack.c.l.b16 %v1754
      %v1841 = vunpack.c.l.b16 %v1755
      %v1842 = vunpack.c.l.b16 %v1756
      %v1843 = vunpack.c.l.b16 %v1757
      %v1844 = vunpack.c.l.b16 %v1758
      %v1845 = vunpack.c.l.b16 %v1759
      %v1846 = vunpack.c.l.b16 %v1760
      %v1847 = vunpack.c.l.b16 %v1761
      %v1848 = vunpack.c.l.b16 %v1762
      %v1849 = vunpack.c.l.b16 %v1763
      %v1850 = vunpack.c.l.b16 %v1764
      %v1851 = vunpack.c.l.b16 %v1765
      %v1852 = vunpack.c.l.b16 %v1766
      %v1853 = vunpack.c.l.b16 %v1767
      %v1854 = vunpack.c.l.b16 %v1768
      %v1855 = vunpack.c.l.b16 %v1769
      %v1856 = vpack.c.b16 %v1815, %v1814
      %v1857 = vpack.c.b16 %v1817, %v1816
      %v1858 = vpack.c.b16 %v1819, %v1818
      %v1859 = vpack.c.b16 %v1821, %v1820
      %v1860 = vpack.c.b16 %v1823, %v1822
      %v1861 = vpack.c.b16 %v1825, %v1824
      %v1862 = vpack.c.b16 %v1827, %v1826
      %v1863 = vpack.c.b16 %v1829, %v1828
      %v1864 = vpack.c.b16 %v1831, %v1830
      %v1865 = vpack.c.b16 %v1833, %v1832
      %v1866 = vpack.c.b16 %v1835, %v1834
      %v1867 = vpack.c.b16 %v1837, %v1836
      %v1868 = vpack.c.b16 %v1839, %v1838
      %v1869 = vpack.c.b16 %v1841, %v1840
      %v1870 = vpack.c.b16 %v1843, %v1842
      %v1871 = vpack.c.b16 %v1845, %v1844
      %v1872 = vpack.c.b16 %v1847, %v1846
      %v1873 = vpack.c.b16 %v1849, %v1848
      %v1874 = vpack.c.b16 %v1851, %v1850
      %v1875 = vpack.c.b16 %v1853, %v1852
      %v1876 = vpack.c.b16 %v1855, %v1854
      %v1878 = vshrl.u32 %v1856, 16
      %v1880 = vrot.slane %v1878, 3
      %v1881 = vshll.u32 %v1856, 16
      %v1883 = vrot.slane %v1881, 4
      %v1884 = vor.u32 %v1880, %v1883
      %v1886 = vshrl.u32 %v1857, 16
      %v1888 = vrot.slane %v1886, 3
      %v1889 = vshll.u32 %v1857, 16
      %v1891 = vrot.slane %v1889, 4
      %v1892 = vor.u32 %v1888, %v1891
      %v1893 = vsel %vm1327, %v1884, %v1892
      %v1895 = vshrl.u32 %v1858, 16
      %v1897 = vrot.slane %v1895, 3
      %v1898 = vshll.u32 %v1858, 16
      %v1900 = vrot.slane %v1898, 4
      %v1901 = vor.u32 %v1897, %v1900
      %v1902 = vsel %vm1327, %v1892, %v1901
      %v1904 = vshrl.u32 %v1859, 16
      %v1906 = vrot.slane %v1904, 3
      %v1907 = vshll.u32 %v1859, 16
      %v1909 = vrot.slane %v1907, 4
      %v1910 = vor.u32 %v1906, %v1909
      %v1911 = vsel %vm1327, %v1901, %v1910
      %v1913 = vshrl.u32 %v1860, 16
      %v1915 = vrot.slane %v1913, 3
      %v1916 = vshll.u32 %v1860, 16
      %v1918 = vrot.slane %v1916, 4
      %v1919 = vor.u32 %v1915, %v1918
      %v1920 = vsel %vm1327, %v1910, %v1919
      %v1922 = vshrl.u32 %v1861, 16
      %v1924 = vrot.slane %v1922, 3
      %v1925 = vshll.u32 %v1861, 16
      %v1927 = vrot.slane %v1925, 4
      %v1928 = vor.u32 %v1924, %v1927
      %v1929 = vsel %vm1327, %v1919, %v1928
      %v1931 = vshrl.u32 %v1862, 16
      %v1933 = vrot.slane %v1931, 3
      %v1934 = vshll.u32 %v1862, 16
      %v1936 = vrot.slane %v1934, 4
      %v1937 = vor.u32 %v1933, %v1936
      %v1938 = vsel %vm1327, %v1928, %v1937
      %v1940 = vshrl.u32 %v1863, 16
      %v1942 = vrot.slane %v1940, 3
      %v1943 = vshll.u32 %v1863, 16
      %v1945 = vrot.slane %v1943, 4
      %v1946 = vor.u32 %v1942, %v1945
      %v1947 = vsel %vm1327, %v1937, %v1946
      %v1949 = vshrl.u32 %v1864, 16
      %v1951 = vrot.slane %v1949, 3
      %v1952 = vshll.u32 %v1864, 16
      %v1954 = vrot.slane %v1952, 4
      %v1955 = vor.u32 %v1951, %v1954
      %v1956 = vsel %vm1327, %v1946, %v1955
      %v1958 = vshrl.u32 %v1865, 16
      %v1960 = vrot.slane %v1958, 3
      %v1961 = vshll.u32 %v1865, 16
      %v1963 = vrot.slane %v1961, 4
      %v1964 = vor.u32 %v1960, %v1963
      %v1965 = vsel %vm1327, %v1955, %v1964
      %v1967 = vshrl.u32 %v1866, 16
      %v1969 = vrot.slane %v1967, 3
      %v1970 = vshll.u32 %v1866, 16
      %v1972 = vrot.slane %v1970, 4
      %v1973 = vor.u32 %v1969, %v1972
      %v1974 = vsel %vm1327, %v1964, %v1973
      %v1976 = vshrl.u32 %v1867, 16
      %v1978 = vrot.slane %v1976, 3
      %v1979 = vshll.u32 %v1867, 16
      %v1981 = vrot.slane %v1979, 4
      %v1982 = vor.u32 %v1978, %v1981
      %v1983 = vsel %vm1327, %v1973, %v1982
      %v1985 = vshrl.u32 %v1868, 16
      %v1987 = vrot.slane %v1985, 3
      %v1988 = vshll.u32 %v1868, 16
      %v1990 = vrot.slane %v1988, 4
      %v1991 = vor.u32 %v1987, %v1990
      %v1992 = vsel %vm1327, %v1982, %v1991
      %v1994 = vshrl.u32 %v1869, 16
      %v1996 = vrot.slane %v1994, 3
      %v1997 = vshll.u32 %v1869, 16
      %v1999 = vrot.slane %v1997, 4
      %v2000 = vor.u32 %v1996, %v1999
      %v2001 = vsel %vm1327, %v1991, %v2000
      %v2003 = vshrl.u32 %v1870, 16
      %v2005 = vrot.slane %v2003, 3
      %v2006 = vshll.u32 %v1870, 16
      %v2008 = vrot.slane %v2006, 4
      %v2009 = vor.u32 %v2005, %v2008
      %v2010 = vsel %vm1327, %v2000, %v2009
      %v2012 = vshrl.u32 %v1871, 16
      %v2014 = vrot.slane %v2012, 3
      %v2015 = vshll.u32 %v1871, 16
      %v2017 = vrot.slane %v2015, 4
      %v2018 = vor.u32 %v2014, %v2017
      %v2019 = vsel %vm1327, %v2009, %v2018
      %v2021 = vshrl.u32 %v1872, 16
      %v2023 = vrot.slane %v2021, 3
      %v2024 = vshll.u32 %v1872, 16
      %v2026 = vrot.slane %v2024, 4
      %v2027 = vor.u32 %v2023, %v2026
      %v2028 = vsel %vm1327, %v2018, %v2027
      %v2030 = vshrl.u32 %v1873, 16
      %v2032 = vrot.slane %v2030, 3
      %v2033 = vshll.u32 %v1873, 16
      %v2035 = vrot.slane %v2033, 4
      %v2036 = vor.u32 %v2032, %v2035
      %v2037 = vsel %vm1327, %v2027, %v2036
      %v2039 = vshrl.u32 %v1874, 16
      %v2041 = vrot.slane %v2039, 3
      %v2042 = vshll.u32 %v1874, 16
      %v2044 = vrot.slane %v2042, 4
      %v2045 = vor.u32 %v2041, %v2044
      %v2046 = vsel %vm1327, %v2036, %v2045
      %v2048 = vshrl.u32 %v1875, 16
      %v2050 = vrot.slane %v2048, 3
      %v2051 = vshll.u32 %v1875, 16
      %v2053 = vrot.slane %v2051, 4
      %v2054 = vor.u32 %v2050, %v2053
      %v2055 = vsel %vm1327, %v2045, %v2054
      %v2057 = vshrl.u32 %v1876, 16
      %v2059 = vrot.slane %v2057, 3
      %v2060 = vshll.u32 %v1876, 16
      %v2062 = vrot.slane %v2060, 4
      %v2063 = vor.u32 %v2059, %v2062
      %v2064 = vsel %vm1327, %v2054, %v2063
      %v2066 = vsel %vm595, %v1893, 0
      %v2069 = vsel %vm595, %v1902, 0
      %v2072 = vsel %vm595, %v1911, 0
      %v2075 = vsel %vm595, %v1920, 0
      %v2078 = vsel %vm595, %v1929, 0
      %v2081 = vsel %vm595, %v1938, 0
      %v2084 = vsel %vm595, %v1947, 0
      %v2087 = vsel %vm595, %v1956, 0
      %v2090 = vsel %vm595, %v1965, 0
      %v2093 = vsel %vm595, %v1974, 0
      %v2096 = vsel %vm595, %v1983, 0
      %v2099 = vsel %vm595, %v1992, 0
      %v2102 = vsel %vm595, %v2001, 0
      %v2105 = vsel %vm595, %v2010, 0
      %v2108 = vsel %vm595, %v2019, 0
      %v2111 = vsel %vm595, %v2028, 0
      %v2114 = vsel %vm595, %v2037, 0
      %v2117 = vsel %vm595, %v2046, 0
      %v2120 = vsel %vm595, %v2055, 0
      %v2123 = vsel %vm595, %v2064, 0
      %v2126 = vsel %vm595, %v2063, 0
      %v2129 = vsel %vm659, %v1771, 0
      %2131 = vmatprep.subr.bf16.mxu0 0
      %2132 = vmatpush1.bf16.msra.mxu0 %v2129
      %2133 = vmatprep.subr.bf16.mxu0 0
      %2134 = vmatpush1.bf16.msra.mxu0 0
      %2135 = vmatprep.subr.bf16.mxu0 0
      %2136 = vmatpush1.bf16.msra.mxu0 0
      %2137 = vmatprep.subr.bf16.mxu0 0
      %2138 = vmatpush1.bf16.msra.mxu0 0
      %2139 = vmatprep.subr.bf16.mxu0 0
      %2140 = vmatpush1.bf16.msra.mxu0 0
      %2141 = vmatprep.subr.bf16.mxu0 0
      %2142 = vmatpush1.bf16.msra.mxu0 0
      %2143 = vmatprep.subr.bf16.mxu0 0
      %2144 = vmatpush1.bf16.msra.mxu0 0
      %2145 = vmatprep.subr.bf16.mxu0 0
      %2146 = vmatpush1.bf16.msra.mxu0 0
      %2147 = vmatprep.subr.bf16.mxu0 0
      %2148 = vmatpush1.bf16.msra.mxu0 0
      %2149 = vmatprep.subr.bf16.mxu0 0
      %2150 = vmatpush1.bf16.msra.mxu0 0
      %2151 = vmatprep.subr.bf16.mxu0 0
      %2152 = vmatpush1.bf16.msra.mxu0 0
      %2153 = vmatprep.subr.bf16.mxu0 0
      %2154 = vmatpush1.bf16.msra.mxu0 0
      %2155 = vmatprep.subr.bf16.mxu0 0
      %2156 = vmatpush1.bf16.msra.mxu0 0
      %2157 = vmatprep.subr.bf16.mxu0 0
      %2158 = vmatpush1.bf16.msra.mxu0 0
      %2159 = vmatprep.subr.bf16.mxu0 0
      %2160 = vmatpush1.bf16.msra.mxu0 0
      %2161 = vmatprep.subr.bf16.mxu0 0
      %2162 = vmatpush1.bf16.msra.mxu0 0
      %2163 = vmatprep.mubr.bf16.mxu0 0
      %2164 = vmatmul.mubr.bf16.gmra.mrb[0].mxu0 %v2066
      %v2165 = vpop.f32.mrb[0].mxu0
      %v2166 = vadd.f32 0.0, %v2165
      %v2167 = vpop.f32.mrb[0].mxu0
      %v2168 = vpop.f32.mrb[0].mxu0
      %v2169 = vadd.f32 0.0, %v2168
      %v2170 = vpop.f32.mrb[0].mxu0
      %2171 = vmatprep.mubr.bf16.mxu0 0
      %2172 = vmatmul.mubr.bf16.gmra.mrb[0].mxu0 %v2069
      %v2173 = vpop.f32.mrb[0].mxu0
      %v2174 = vadd.f32 0.0, %v2173
      %v2175 = vpop.f32.mrb[0].mxu0
      %v2176 = vpop.f32.mrb[0].mxu0
      %v2177 = vadd.f32 0.0, %v2176
      %v2178 = vpop.f32.mrb[0].mxu0
      %2179 = vmatprep.mubr.bf16.mxu0 0
      %2180 = vmatmul.mubr.bf16.gmra.mrb[0].mxu0 %v2072
      %v2181 = vpop.f32.mrb[0].mxu0
      %v2182 = vadd.f32 0.0, %v2181
      %v2183 = vpop.f32.mrb[0].mxu0
      %v2184 = vpop.f32.mrb[0].mxu0
      %v2185 = vadd.f32 0.0, %v2184
      %v2186 = vpop.f32.mrb[0].mxu0
      %2187 = vmatprep.mubr.bf16.mxu0 0
      %2188 = vmatmul.mubr.bf16.gmra.mrb[0].mxu0 %v2075
      %v2189 = vpop.f32.mrb[0].mxu0
      %v2190 = vadd.f32 0.0, %v2189
      %v2191 = vpop.f32.mrb[0].mxu0
      %v2192 = vpop.f32.mrb[0].mxu0
      %v2193 = vadd.f32 0.0, %v2192
      %v2194 = vpop.f32.mrb[0].mxu0
      %2195 = vmatprep.mubr.bf16.mxu0 0
      %2196 = vmatmul.mubr.bf16.gmra.mrb[0].mxu0 %v2078
      %v2197 = vpop.f32.mrb[0].mxu0
      %v2198 = vadd.f32 0.0, %v2197
      %v2199 = vpop.f32.mrb[0].mxu0
      %v2200 = vpop.f32.mrb[0].mxu0
      %v2201 = vadd.f32 0.0, %v2200
      %v2202 = vpop.f32.mrb[0].mxu0
      %2203 = vmatprep.mubr.bf16.mxu0 0
      %2204 = vmatmul.mubr.bf16.gmra.mrb[0].mxu0 %v2081
      %v2205 = vpop.f32.mrb[0].mxu0
      %v2206 = vadd.f32 0.0, %v2205
      %v2207 = vpop.f32.mrb[0].mxu0
      %v2208 = vpop.f32.mrb[0].mxu0
      %v2209 = vadd.f32 0.0, %v2208
      %v2210 = vpop.f32.mrb[0].mxu0
      %2211 = vmatprep.mubr.bf16.mxu0 0
      %2212 = vmatmul.mubr.bf16.gmra.mrb[0].mxu0 %v2084
      %v2213 = vpop.f32.mrb[0].mxu0
      %v2214 = vadd.f32 0.0, %v2213
      %v2215 = vpop.f32.mrb[0].mxu0
      %v2216 = vpop.f32.mrb[0].mxu0
      %v2217 = vadd.f32 0.0, %v2216
      %v2218 = vpop.f32.mrb[0].mxu0
      %2219 = vmatprep.mubr.bf16.mxu0 0
      %2220 = vmatmul.mubr.bf16.gmra.mrb[0].mxu0 %v2087
      %v2221 = vpop.f32.mrb[0].mxu0
      %v2222 = vadd.f32 0.0, %v2221
      %v2223 = vpop.f32.mrb[0].mxu0
      %v2224 = vpop.f32.mrb[0].mxu0
      %v2225 = vadd.f32 0.0, %v2224
      %v2226 = vpop.f32.mrb[0].mxu0
      %2227 = vmatprep.mubr.bf16.mxu0 0
      %2228 = vmatmul.mubr.bf16.gmra.mrb[0].mxu0 %v2090
      %v2229 = vpop.f32.mrb[0].mxu0
      %v2230 = vadd.f32 0.0, %v2229
      %v2231 = vpop.f32.mrb[0].mxu0
      %v2232 = vpop.f32.mrb[0].mxu0
      %v2233 = vadd.f32 0.0, %v2232
      %v2234 = vpop.f32.mrb[0].mxu0
      %2235 = vmatprep.mubr.bf16.mxu0 0
      %2236 = vmatmul.mubr.bf16.gmra.mrb[0].mxu0 %v2093
      %v2237 = vpop.f32.mrb[0].mxu0
      %v2238 = vadd.f32 0.0, %v2237
      %v2239 = vpop.f32.mrb[0].mxu0
      %v2240 = vpop.f32.mrb[0].mxu0
      %v2241 = vadd.f32 0.0, %v2240
      %v2242 = vpop.f32.mrb[0].mxu0
      %2243 = vmatprep.mubr.bf16.mxu0 0
      %2244 = vmatmul.mubr.bf16.gmra.mrb[0].mxu0 %v2096
      %v2245 = vpop.f32.mrb[0].mxu0
      %v2246 = vadd.f32 0.0, %v2245
      %v2247 = vpop.f32.mrb[0].mxu0
      %v2248 = vpop.f32.mrb[0].mxu0
      %v2249 = vadd.f32 0.0, %v2248
      %v2250 = vpop.f32.mrb[0].mxu0
      %2251 = vmatprep.mubr.bf16.mxu0 0
      %2252 = vmatmul.mubr.bf16.gmra.mrb[0].mxu0 %v2099
      %v2253 = vpop.f32.mrb[0].mxu0
      %v2254 = vadd.f32 0.0, %v2253
      %v2255 = vpop.f32.mrb[0].mxu0
      %v2256 = vpop.f32.mrb[0].mxu0
      %v2257 = vadd.f32 0.0, %v2256
      %v2258 = vpop.f32.mrb[0].mxu0
      %2259 = vmatprep.mubr.bf16.mxu0 0
      %2260 = vmatmul.mubr.bf16.gmra.mrb[0].mxu0 %v2102
      %v2261 = vpop.f32.mrb[0].mxu0
      %v2262 = vadd.f32 0.0, %v2261
      %v2263 = vpop.f32.mrb[0].mxu0
      %v2264 = vpop.f32.mrb[0].mxu0
      %v2265 = vadd.f32 0.0, %v2264
      %v2266 = vpop.f32.mrb[0].mxu0
      %2267 = vmatprep.mubr.bf16.mxu0 0
      %2268 = vmatmul.mubr.bf16.gmra.mrb[0].mxu0 %v2105
      %v2269 = vpop.f32.mrb[0].mxu0
      %v2270 = vadd.f32 0.0, %v2269
      %v2271 = vpop.f32.mrb[0].mxu0
      %v2272 = vpop.f32.mrb[0].mxu0
      %v2273 = vadd.f32 0.0, %v2272
      %v2274 = vpop.f32.mrb[0].mxu0
      %2275 = vmatprep.mubr.bf16.mxu0 0
      %2276 = vmatmul.mubr.bf16.gmra.mrb[0].mxu0 %v2108
      %v2277 = vpop.f32.mrb[0].mxu0
      %v2278 = vadd.f32 0.0, %v2277
      %v2279 = vpop.f32.mrb[0].mxu0
      %v2280 = vpop.f32.mrb[0].mxu0
      %v2281 = vadd.f32 0.0, %v2280
      %v2282 = vpop.f32.mrb[0].mxu0
      %2283 = vmatprep.mubr.bf16.mxu0 0
      %2284 = vmatmul.mubr.bf16.gmra.mrb[0].mxu0 %v2111
      %v2285 = vpop.f32.mrb[0].mxu0
      %v2286 = vadd.f32 0.0, %v2285
      %v2287 = vpop.f32.mrb[0].mxu0
      %v2288 = vpop.f32.mrb[0].mxu0
      %v2289 = vadd.f32 0.0, %v2288
      %v2290 = vpop.f32.mrb[0].mxu0
      %2291 = vmatprep.mubr.bf16.mxu0 0
      %2292 = vmatmul.mubr.bf16.gmra.mrb[0].mxu0 %v2114
      %v2293 = vpop.f32.mrb[0].mxu0
      %v2294 = vadd.f32 0.0, %v2293
      %v2295 = vpop.f32.mrb[0].mxu0
      %v2296 = vpop.f32.mrb[0].mxu0
      %v2297 = vadd.f32 0.0, %v2296
      %v2298 = vpop.f32.mrb[0].mxu0
      %2299 = vmatprep.mubr.bf16.mxu0 0
      %2300 = vmatmul.mubr.bf16.gmra.mrb[0].mxu0 %v2117
      %v2301 = vpop.f32.mrb[0].mxu0
      %v2302 = vadd.f32 0.0, %v2301
      %v2303 = vpop.f32.mrb[0].mxu0
      %v2304 = vpop.f32.mrb[0].mxu0
      %v2305 = vadd.f32 0.0, %v2304
      %v2306 = vpop.f32.mrb[0].mxu0
      %2307 = vmatprep.mubr.bf16.mxu0 0
      %2308 = vmatmul.mubr.bf16.gmra.mrb[0].mxu0 %v2120
      %v2309 = vpop.f32.mrb[0].mxu0
      %v2310 = vadd.f32 0.0, %v2309
      %v2311 = vpop.f32.mrb[0].mxu0
      %v2312 = vpop.f32.mrb[0].mxu0
      %v2313 = vadd.f32 0.0, %v2312
      %v2314 = vpop.f32.mrb[0].mxu0
      %2315 = vmatprep.mubr.bf16.mxu0 0
      %2316 = vmatmul.mubr.bf16.gmra.mrb[0].mxu0 %v2123
      %v2317 = vpop.f32.mrb[0].mxu0
      %v2318 = vadd.f32 0.0, %v2317
      %v2319 = vpop.f32.mrb[0].mxu0
      %v2320 = vpop.f32.mrb[0].mxu0
      %v2321 = vadd.f32 0.0, %v2320
      %v2322 = vpop.f32.mrb[0].mxu0
      %2323 = vmatprep.mubr.bf16.mxu0 0
      %2324 = vmatmul.mubr.bf16.gmra.mrb[0].mxu0 %v2126
      %v2325 = vpop.f32.mrb[0].mxu0
      %v2326 = vadd.f32 0.0, %v2325
      %v2327 = vpop.f32.mrb[0].mxu0
      %v2328 = vpop.f32.mrb[0].mxu0
      %v2329 = vpop.f32.mrb[0].mxu0
      %2330 = vdwg.mxu0
      %v2331 = vadd.f32 %v1687, %v2166
      %v2332 = vadd.f32 %v1688, %v2169
      %v2333 = vadd.f32 %v1689, %v2174
      %v2334 = vadd.f32 %v1690, %v2177
      %v2335 = vadd.f32 %v1691, %v2182
      %v2336 = vadd.f32 %v1692, %v2185
      %v2337 = vadd.f32 %v1693, %v2190
      %v2338 = vadd.f32 %v1694, %v2193
      %v2339 = vadd.f32 %v1695, %v2198
      %v2340 = vadd.f32 %v1696, %v2201
      %v2341 = vadd.f32 %v1697, %v2206
      %v2342 = vadd.f32 %v1698, %v2209
      %v2343 = vadd.f32 %v1699, %v2214
      %v2344 = vadd.f32 %v1700, %v2217
      %v2345 = vadd.f32 %v1701, %v2222
      %v2346 = vadd.f32 %v1702, %v2225
      %v2347 = vadd.f32 %v1703, %v2230
      %v2348 = vadd.f32 %v1704, %v2233
      %v2349 = vadd.f32 %v1705, %v2238
      %v2350 = vadd.f32 %v1706, %v2241
      %v2351 = vadd.f32 %v1707, %v2246
      %v2352 = vadd.f32 %v1708, %v2249
      %v2353 = vadd.f32 %v1709, %v2254
      %v2354 = vadd.f32 %v1710, %v2257
      %v2355 = vadd.f32 %v1711, %v2262
      %v2356 = vadd.f32 %v1712, %v2265
      %v2357 = vadd.f32 %v1713, %v2270
      %v2358 = vadd.f32 %v1714, %v2273
      %v2359 = vadd.f32 %v1715, %v2278
      %v2360 = vadd.f32 %v1716, %v2281
      %v2361 = vadd.f32 %v1717, %v2286
      %v2362 = vadd.f32 %v1718, %v2289
      %v2363 = vadd.f32 %v1719, %v2294
      %v2364 = vadd.f32 %v1720, %v2297
      %v2365 = vadd.f32 %v1721, %v2302
      %v2366 = vadd.f32 %v1722, %v2305
      %v2367 = vadd.f32 %v1723, %v2310
      %v2368 = vadd.f32 %v1724, %v2313
      %v2369 = vadd.f32 %v1725, %v2318
      %v2370 = vadd.f32 %v1726, %v2321
      %v2371 = vadd.f32 %v1727, %v2326
      %s2372 = scalar_lea.vmem %s2, 8
      %v2373 = vld [vmem:[%s2372] sm:$0x3]
      %v2374 = vpack.c.b16 %v1816, %v1815
      %v2375 = vpack.c.b16 %v1818, %v1817
      %v2376 = vpack.c.b16 %v1820, %v1819
      %v2377 = vpack.c.b16 %v1822, %v1821
      %v2378 = vpack.c.b16 %v1824, %v1823
      %v2379 = vpack.c.b16 %v1826, %v1825
      %v2380 = vpack.c.b16 %v1828, %v1827
      %v2381 = vpack.c.b16 %v1830, %v1829
      %v2382 = vpack.c.b16 %v1832, %v1831
      %v2383 = vpack.c.b16 %v1834, %v1833
      %v2384 = vpack.c.b16 %v1836, %v1835
      %v2385 = vpack.c.b16 %v1838, %v1837
      %v2386 = vpack.c.b16 %v1840, %v1839
      %v2387 = vpack.c.b16 %v1842, %v1841
      %v2388 = vpack.c.b16 %v1844, %v1843
      %v2389 = vpack.c.b16 %v1846, %v1845
      %v2390 = vpack.c.b16 %v1848, %v1847
      %v2391 = vpack.c.b16 %v1850, %v1849
      %v2392 = vpack.c.b16 %v1852, %v1851
      %v2393 = vpack.c.b16 %v1854, %v1853
      %v2394 = vpack.c.b16 %v1855, %v1855
      %v2396 = vsel %vm595, %v2374, 0
      %v2399 = vsel %vm595, %v2375, 0
      %v2402 = vsel %vm595, %v2376, 0
      %v2405 = vsel %vm595, %v2377, 0
      %v2408 = vsel %vm595, %v2378, 0
      %v2411 = vsel %vm595, %v2379, 0
      %v2414 = vsel %vm595, %v2380, 0
      %v2417 = vsel %vm595, %v2381, 0
      %v2420 = vsel %vm595, %v2382, 0
      %v2423 = vsel %vm595, %v2383, 0
      %v2426 = vsel %vm595, %v2384, 0
      %v2429 = vsel %vm595, %v2385, 0
      %v2432 = vsel %vm595, %v2386, 0
      %v2435 = vsel %vm595, %v2387, 0
      %v2438 = vsel %vm595, %v2388, 0
      %v2441 = vsel %vm595, %v2389, 0
      %v2444 = vsel %vm595, %v2390, 0
      %v2447 = vsel %vm595, %v2391, 0
      %v2450 = vsel %vm595, %v2392, 0
      %v2453 = vsel %vm595, %v2393, 0
      %v2456 = vsel %vm595, %v2394, 0
      %v2459 = vsel %vm659, %v2373, 0
      %2461 = vmatprep.subr.bf16.mxu0 0
      %2462 = vmatpush1.bf16.msra.mxu0 %v2459
      %2463 = vmatprep.subr.bf16.mxu0 0
      %2464 = vmatpush1.bf16.msra.mxu0 0
      %2465 = vmatprep.subr.bf16.mxu0 0
      %2466 = vmatpush1.bf16.msra.mxu0 0
      %2467 = vmatprep.subr.bf16.mxu0 0
      %2468 = vmatpush1.bf16.msra.mxu0 0
      %2469 = vmatprep.subr.bf16.mxu0 0
      %2470 = vmatpush1.bf16.msra.mxu0 0
      %2471 = vmatprep.subr.bf16.mxu0 0
      %2472 = vmatpush1.bf16.msra.mxu0 0
      %2473 = vmatprep.subr.bf16.mxu0 0
      %2474 = vmatpush1.bf16.msra.mxu0 0
      %2475 = vmatprep.subr.bf16.mxu0 0
      %2476 = vmatpush1.bf16.msra.mxu0 0
      %2477 = vmatprep.subr.bf16.mxu0 0
      %2478 = vmatpush1.bf16.msra.mxu0 0
      %2479 = vmatprep.subr.bf16.mxu0 0
      %2480 = vmatpush1.bf16.msra.mxu0 0
      %2481 = vmatprep.subr.bf16.mxu0 0
      %2482 = vmatpush1.bf16.msra.mxu0 0
      %2483 = vmatprep.subr.bf16.mxu0 0
      %2484 = vmatpush1.bf16.msra.mxu0 0
      %2485 = vmatprep.subr.bf16.mxu0 0
      %2486 = vmatpush1.bf16.msra.mxu0 0
      %2487 = vmatprep.subr.bf16.mxu0 0
      %2488 = vmatpush1.bf16.msra.mxu0 0
      %2489 = vmatprep.subr.bf16.mxu0 0
      %2490 = vmatpush1.bf16.msra.mxu0 0
      %2491 = vmatprep.subr.bf16.mxu0 0
      %2492 = vmatpush1.bf16.msra.mxu0 0
      %2493 = vmatprep.mubr.bf16.mxu0 0
      %2494 = vmatmul.mubr.bf16.gmra.mrb[0].mxu0 %v2396
      %v2495 = vpop.f32.mrb[0].mxu0
      %v2496 = vadd.f32 0.0, %v2495
      %v2497 = vpop.f32.mrb[0].mxu0
      %v2498 = vpop.f32.mrb[0].mxu0
      %v2499 = vadd.f32 0.0, %v2498
      %v2500 = vpop.f32.mrb[0].mxu0
      %2501 = vmatprep.mubr.bf16.mxu0 0
      %2502 = vmatmul.mubr.bf16.gmra.mrb[0].mxu0 %v2399
      %v2503 = vpop.f32.mrb[0].mxu0
      %v2504 = vadd.f32 0.0, %v2503
      %v2505 = vpop.f32.mrb[0].mxu0
      %v2506 = vpop.f32.mrb[0].mxu0
      %v2507 = vadd.f32 0.0, %v2506
      %v2508 = vpop.f32.mrb[0].mxu0
      %2509 = vmatprep.mubr.bf16.mxu0 0
      %2510 = vmatmul.mubr.bf16.gmra.mrb[0].mxu0 %v2402
      %v2511 = vpop.f32.mrb[0].mxu0
      %v2512 = vadd.f32 0.0, %v2511
      %v2513 = vpop.f32.mrb[0].mxu0
      %v2514 = vpop.f32.mrb[0].mxu0
      %v2515 = vadd.f32 0.0, %v2514
      %v2516 = vpop.f32.mrb[0].mxu0
      %2517 = vmatprep.mubr.bf16.mxu0 0
      %2518 = vmatmul.mubr.bf16.gmra.mrb[0].mxu0 %v2405
      %v2519 = vpop.f32.mrb[0].mxu0
      %v2520 = vadd.f32 0.0, %v2519
      %v2521 = vpop.f32.mrb[0].mxu0
      %v2522 = vpop.f32.mrb[0].mxu0
      %v2523 = vadd.f32 0.0, %v2522
      %v2524 = vpop.f32.mrb[0].mxu0
      %2525 = vmatprep.mubr.bf16.mxu0 0
      %2526 = vmatmul.mubr.bf16.gmra.mrb[0].mxu0 %v2408
      %v2527 = vpop.f32.mrb[0].mxu0
      %v2528 = vadd.f32 0.0, %v2527
      %v2529 = vpop.f32.mrb[0].mxu0
      %v2530 = vpop.f32.mrb[0].mxu0
      %v2531 = vadd.f32 0.0, %v2530
      %v2532 = vpop.f32.mrb[0].mxu0
      %2533 = vmatprep.mubr.bf16.mxu0 0
      %2534 = vmatmul.mubr.bf16.gmra.mrb[0].mxu0 %v2411
      %v2535 = vpop.f32.mrb[0].mxu0
      %v2536 = vadd.f32 0.0, %v2535
      %v2537 = vpop.f32.mrb[0].mxu0
      %v2538 = vpop.f32.mrb[0].mxu0
      %v2539 = vadd.f32 0.0, %v2538
      %v2540 = vpop.f32.mrb[0].mxu0
      %2541 = vmatprep.mubr.bf16.mxu0 0
      %2542 = vmatmul.mubr.bf16.gmra.mrb[0].mxu0 %v2414
      %v2543 = vpop.f32.mrb[0].mxu0
      %v2544 = vadd.f32 0.0, %v2543
      %v2545 = vpop.f32.mrb[0].mxu0
      %v2546 = vpop.f32.mrb[0].mxu0
      %v2547 = vadd.f32 0.0, %v2546
      %v2548 = vpop.f32.mrb[0].mxu0
      %2549 = vmatprep.mubr.bf16.mxu0 0
      %2550 = vmatmul.mubr.bf16.gmra.mrb[0].mxu0 %v2417
      %v2551 = vpop.f32.mrb[0].mxu0
      %v2552 = vadd.f32 0.0, %v2551
      %v2553 = vpop.f32.mrb[0].mxu0
      %v2554 = vpop.f32.mrb[0].mxu0
      %v2555 = vadd.f32 0.0, %v2554
      %v2556 = vpop.f32.mrb[0].mxu0
      %2557 = vmatprep.mubr.bf16.mxu0 0
      %2558 = vmatmul.mubr.bf16.gmra.mrb[0].mxu0 %v2420
      %v2559 = vpop.f32.mrb[0].mxu0
      %v2560 = vadd.f32 0.0, %v2559
      %v2561 = vpop.f32.mrb[0].mxu0
      %v2562 = vpop.f32.mrb[0].mxu0
      %v2563 = vadd.f32 0.0, %v2562
      %v2564 = vpop.f32.mrb[0].mxu0
      %2565 = vmatprep.mubr.bf16.mxu0 0
      %2566 = vmatmul.mubr.bf16.gmra.mrb[0].mxu0 %v2423
      %v2567 = vpop.f32.mrb[0].mxu0
      %v2568 = vadd.f32 0.0, %v2567
      %v2569 = vpop.f32.mrb[0].mxu0
      %v2570 = vpop.f32.mrb[0].mxu0
      %v2571 = vadd.f32 0.0, %v2570
      %v2572 = vpop.f32.mrb[0].mxu0
      %2573 = vmatprep.mubr.bf16.mxu0 0
      %2574 = vmatmul.mubr.bf16.gmra.mrb[0].mxu0 %v2426
      %v2575 = vpop.f32.mrb[0].mxu0
      %v2576 = vadd.f32 0.0, %v2575
      %v2577 = vpop.f32.mrb[0].mxu0
      %v2578 = vpop.f32.mrb[0].mxu0
      %v2579 = vadd.f32 0.0, %v2578
      %v2580 = vpop.f32.mrb[0].mxu0
      %2581 = vmatprep.mubr.bf16.mxu0 0
      %2582 = vmatmul.mubr.bf16.gmra.mrb[0].mxu0 %v2429
      %v2583 = vpop.f32.mrb[0].mxu0
      %v2584 = vadd.f32 0.0, %v2583
      %v2585 = vpop.f32.mrb[0].mxu0
      %v2586 = vpop.f32.mrb[0].mxu0
      %v2587 = vadd.f32 0.0, %v2586
      %v2588 = vpop.f32.mrb[0].mxu0
      %2589 = vmatprep.mubr.bf16.mxu0 0
      %2590 = vmatmul.mubr.bf16.gmra.mrb[0].mxu0 %v2432
      %v2591 = vpop.f32.mrb[0].mxu0
      %v2592 = vadd.f32 0.0, %v2591
      %v2593 = vpop.f32.mrb[0].mxu0
      %v2594 = vpop.f32.mrb[0].mxu0
      %v2595 = vadd.f32 0.0, %v2594
      %v2596 = vpop.f32.mrb[0].mxu0
      %2597 = vmatprep.mubr.bf16.mxu0 0
      %2598 = vmatmul.mubr.bf16.gmra.mrb[0].mxu0 %v2435
      %v2599 = vpop.f32.mrb[0].mxu0
      %v2600 = vadd.f32 0.0, %v2599
      %v2601 = vpop.f32.mrb[0].mxu0
      %v2602 = vpop.f32.mrb[0].mxu0
      %v2603 = vadd.f32 0.0, %v2602
      %v2604 = vpop.f32.mrb[0].mxu0
      %2605 = vmatprep.mubr.bf16.mxu0 0
      %2606 = vmatmul.mubr.bf16.gmra.mrb[0].mxu0 %v2438
      %v2607 = vpop.f32.mrb[0].mxu0
      %v2608 = vadd.f32 0.0, %v2607
      %v2609 = vpop.f32.mrb[0].mxu0
      %v2610 = vpop.f32.mrb[0].mxu0
      %v2611 = vadd.f32 0.0, %v2610
      %v2612 = vpop.f32.mrb[0].mxu0
      %2613 = vmatprep.mubr.bf16.mxu0 0
      %2614 = vmatmul.mubr.bf16.gmra.mrb[0].mxu0 %v2441
      %v2615 = vpop.f32.mrb[0].mxu0
      %v2616 = vadd.f32 0.0, %v2615
      %v2617 = vpop.f32.mrb[0].mxu0
      %v2618 = vpop.f32.mrb[0].mxu0
      %v2619 = vadd.f32 0.0, %v2618
      %v2620 = vpop.f32.mrb[0].mxu0
      %2621 = vmatprep.mubr.bf16.mxu0 0
      %2622 = vmatmul.mubr.bf16.gmra.mrb[0].mxu0 %v2444
      %v2623 = vpop.f32.mrb[0].mxu0
      %v2624 = vadd.f32 0.0, %v2623
      %v2625 = vpop.f32.mrb[0].mxu0
      %v2626 = vpop.f32.mrb[0].mxu0
      %v2627 = vadd.f32 0.0, %v2626
      %v2628 = vpop.f32.mrb[0].mxu0
      %2629 = vmatprep.mubr.bf16.mxu0 0
      %2630 = vmatmul.mubr.bf16.gmra.mrb[0].mxu0 %v2447
      %v2631 = vpop.f32.mrb[0].mxu0
      %v2632 = vadd.f32 0.0, %v2631
      %v2633 = vpop.f32.mrb[0].mxu0
      %v2634 = vpop.f32.mrb[0].mxu0
      %v2635 = vadd.f32 0.0, %v2634
      %v2636 = vpop.f32.mrb[0].mxu0
      %2637 = vmatprep.mubr.bf16.mxu0 0
      %2638 = vmatmul.mubr.bf16.gmra.mrb[0].mxu0 %v2450
      %v2639 = vpop.f32.mrb[0].mxu0
      %v2640 = vadd.f32 0.0, %v2639
      %v2641 = vpop.f32.mrb[0].mxu0
      %v2642 = vpop.f32.mrb[0].mxu0
      %v2643 = vadd.f32 0.0, %v2642
      %v2644 = vpop.f32.mrb[0].mxu0
      %2645 = vmatprep.mubr.bf16.mxu0 0
      %2646 = vmatmul.mubr.bf16.gmra.mrb[0].mxu0 %v2453
      %v2647 = vpop.f32.mrb[0].mxu0
      %v2648 = vadd.f32 0.0, %v2647
      %v2649 = vpop.f32.mrb[0].mxu0
      %v2650 = vpop.f32.mrb[0].mxu0
      %v2651 = vadd.f32 0.0, %v2650
      %v2652 = vpop.f32.mrb[0].mxu0
      %2653 = vmatprep.mubr.bf16.mxu0 0
      %2654 = vmatmul.mubr.bf16.gmra.mrb[0].mxu0 %v2456
      %v2655 = vpop.f32.mrb[0].mxu0
      %v2656 = vadd.f32 0.0, %v2655
      %v2657 = vpop.f32.mrb[0].mxu0
      %v2658 = vpop.f32.mrb[0].mxu0
      %v2659 = vpop.f32.mrb[0].mxu0
      %2660 = vdwg.mxu0
      %v2661 = vadd.f32 %v2331, %v2496
      %v2662 = vadd.f32 %v2332, %v2499
      %v2663 = vadd.f32 %v2333, %v2504
      %v2664 = vadd.f32 %v2334, %v2507
      %v2665 = vadd.f32 %v2335, %v2512
      %v2666 = vadd.f32 %v2336, %v2515
      %v2667 = vadd.f32 %v2337, %v2520
      %v2668 = vadd.f32 %v2338, %v2523
      %v2669 = vadd.f32 %v2339, %v2528
      %v2670 = vadd.f32 %v2340, %v2531
      %v2671 = vadd.f32 %v2341, %v2536
      %v2672 = vadd.f32 %v2342, %v2539
      %v2673 = vadd.f32 %v2343, %v2544
      %v2674 = vadd.f32 %v2344, %v2547
      %v2675 = vadd.f32 %v2345, %v2552
      %v2676 = vadd.f32 %v2346, %v2555
      %v2677 = vadd.f32 %v2347, %v2560
      %v2678 = vadd.f32 %v2348, %v2563
      %v2679 = vadd.f32 %v2349, %v2568
      %v2680 = vadd.f32 %v2350, %v2571
      %v2681 = vadd.f32 %v2351, %v2576
      %v2682 = vadd.f32 %v2352, %v2579
      %v2683 = vadd.f32 %v2353, %v2584
      %v2684 = vadd.f32 %v2354, %v2587
      %v2685 = vadd.f32 %v2355, %v2592
      %v2686 = vadd.f32 %v2356, %v2595
      %v2687 = vadd.f32 %v2357, %v2600
      %v2688 = vadd.f32 %v2358, %v2603
      %v2689 = vadd.f32 %v2359, %v2608
      %v2690 = vadd.f32 %v2360, %v2611
      %v2691 = vadd.f32 %v2361, %v2616
      %v2692 = vadd.f32 %v2362, %v2619
      %v2693 = vadd.f32 %v2363, %v2624
      %v2694 = vadd.f32 %v2364, %v2627
      %v2695 = vadd.f32 %v2365, %v2632
      %v2696 = vadd.f32 %v2366, %v2635
      %v2697 = vadd.f32 %v2367, %v2640
      %v2698 = vadd.f32 %v2368, %v2643
      %v2699 = vadd.f32 %v2369, %v2648
      %v2700 = vadd.f32 %v2370, %v2651
      %v2701 = vadd.f32 %v2371, %v2656
      %v2702 = vld [vmem:[%s354 + $0xb0] sm:$0x7]
      %s2703 = scalar_lea.vmem %s2, 10
      %v2704 = vld [vmem:[%s2703] sm:$0x3]
      %v2706 = vunpack.c.l.b16 %v2702
      %v2707 = vpack.c.b16 %v2706, %v2706
      %vm2708 = vsmask.f32 7424
      %v2709 = vshrl.u32 %v2374, 16
      %v2711 = vshll.u32 %v2374, 16
      %v2713 = vrot.slane %v2711, 1
      %v2714 = vor.u32 %v2709, %v2713
      %v2715 = vshll.u32 %v2375, 16
      %v2717 = vrot.slane %v2715, 1
      %v2718 = vsel %vm2708, %v2714, %v2717
      %v2719 = vshrl.u32 %v2375, 16
      %v2721 = vor.u32 %v2719, %v2717
      %v2722 = vshll.u32 %v2376, 16
      %v2724 = vrot.slane %v2722, 1
      %v2725 = vsel %vm2708, %v2721, %v2724
      %v2726 = vshrl.u32 %v2376, 16
      %v2728 = vor.u32 %v2726, %v2724
      %v2729 = vshll.u32 %v2377, 16
      %v2731 = vrot.slane %v2729, 1
      %v2732 = vsel %vm2708, %v2728, %v2731
      %v2733 = vshrl.u32 %v2377, 16
      %v2735 = vor.u32 %v2733, %v2731
      %v2736 = vshll.u32 %v2378, 16
      %v2738 = vrot.slane %v2736, 1
      %v2739 = vsel %vm2708, %v2735, %v2738
      %v2740 = vshrl.u32 %v2378, 16
      %v2742 = vor.u32 %v2740, %v2738
      %v2743 = vshll.u32 %v2379, 16
      %v2745 = vrot.slane %v2743, 1
      %v2746 = vsel %vm2708, %v2742, %v2745
      %v2747 = vshrl.u32 %v2379, 16
      %v2749 = vor.u32 %v2747, %v2745
      %v2750 = vshll.u32 %v2380, 16
      %v2752 = vrot.slane %v2750, 1
      %v2753 = vsel %vm2708, %v2749, %v2752
      %v2754 = vshrl.u32 %v2380, 16
      %v2756 = vor.u32 %v2754, %v2752
      %v2757 = vshll.u32 %v2381, 16
      %v2759 = vrot.slane %v2757, 1
      %v2760 = vsel %vm2708, %v2756, %v2759
      %v2761 = vshrl.u32 %v2381, 16
      %v2763 = vor.u32 %v2761, %v2759
      %v2764 = vshll.u32 %v2382, 16
      %v2766 = vrot.slane %v2764, 1
      %v2767 = vsel %vm2708, %v2763, %v2766
      %v2768 = vshrl.u32 %v2382, 16
      %v2770 = vor.u32 %v2768, %v2766
      %v2771 = vshll.u32 %v2383, 16
      %v2773 = vrot.slane %v2771, 1
      %v2774 = vsel %vm2708, %v2770, %v2773
      %v2775 = vshrl.u32 %v2383, 16
      %v2777 = vor.u32 %v2775, %v2773
      %v2778 = vshll.u32 %v2384, 16
      %v2780 = vrot.slane %v2778, 1
      %v2781 = vsel %vm2708, %v2777, %v2780
      %v2782 = vshrl.u32 %v2384, 16
      %v2784 = vor.u32 %v2782, %v2780
      %v2785 = vshll.u32 %v2385, 16
      %v2787 = vrot.slane %v2785, 1
      %v2788 = vsel %vm2708, %v2784, %v2787
      %v2789 = vshrl.u32 %v2385, 16
      %v2791 = vor.u32 %v2789, %v2787
      %v2792 = vshll.u32 %v2386, 16
      %v2794 = vrot.slane %v2792, 1
      %v2795 = vsel %vm2708, %v2791, %v2794
      %v2796 = vshrl.u32 %v2386, 16
      %v2798 = vor.u32 %v2796, %v2794
      %v2799 = vshll.u32 %v2387, 16
      %v2801 = vrot.slane %v2799, 1
      %v2802 = vsel %vm2708, %v2798, %v2801
      %v2803 = vshrl.u32 %v2387, 16
      %v2805 = vor.u32 %v2803, %v2801
      %v2806 = vshll.u32 %v2388, 16
      %v2808 = vrot.slane %v2806, 1
      %v2809 = vsel %vm2708, %v2805, %v2808
      %v2810 = vshrl.u32 %v2388, 16
      %v2812 = vor.u32 %v2810, %v2808
      %v2813 = vshll.u32 %v2389, 16
      %v2815 = vrot.slane %v2813, 1
      %v2816 = vsel %vm2708, %v2812, %v2815
      %v2817 = vshrl.u32 %v2389, 16
      %v2819 = vor.u32 %v2817, %v2815
      %v2820 = vshll.u32 %v2390, 16
      %v2822 = vrot.slane %v2820, 1
      %v2823 = vsel %vm2708, %v2819, %v2822
      %v2824 = vshrl.u32 %v2390, 16
      %v2826 = vor.u32 %v2824, %v2822
      %v2827 = vshll.u32 %v2391, 16
      %v2829 = vrot.slane %v2827, 1
      %v2830 = vsel %vm2708, %v2826, %v2829
      %v2831 = vshrl.u32 %v2391, 16
      %v2833 = vor.u32 %v2831, %v2829
      %v2834 = vshll.u32 %v2392, 16
      %v2836 = vrot.slane %v2834, 1
      %v2837 = vsel %vm2708, %v2833, %v2836
      %v2838 = vshrl.u32 %v2392, 16
      %v2840 = vor.u32 %v2838, %v2836
      %v2841 = vshll.u32 %v2393, 16
      %v2843 = vrot.slane %v2841, 1
      %v2844 = vsel %vm2708, %v2840, %v2843
      %v2845 = vshrl.u32 %v2393, 16
      %v2847 = vor.u32 %v2845, %v2843
      %v2849 = vshll.u32 %v2707, 16
      %v2851 = vrot.slane %v2849, 1
      %v2852 = vsel %vm2708, %v2847, %v2851
      %v2853 = vshrl.u32 %v2707, 16
      %v2855 = vor.u32 %v2853, %v2851
      %v2857 = vsel %vm595, %v2718, 0
      %v2860 = vsel %vm595, %v2725, 0
      %v2863 = vsel %vm595, %v2732, 0
      %v2866 = vsel %vm595, %v2739, 0
      %v2869 = vsel %vm595, %v2746, 0
      %v2872 = vsel %vm595, %v2753, 0
      %v2875 = vsel %vm595, %v2760, 0
      %v2878 = vsel %vm595, %v2767, 0
      %v2881 = vsel %vm595, %v2774, 0
      %v2884 = vsel %vm595, %v2781, 0
      %v2887 = vsel %vm595, %v2788, 0
      %v2890 = vsel %vm595, %v2795, 0
      %v2893 = vsel %vm595, %v2802, 0
      %v2896 = vsel %vm595, %v2809, 0
      %v2899 = vsel %vm595, %v2816, 0
      %v2902 = vsel %vm595, %v2823, 0
      %v2905 = vsel %vm595, %v2830, 0
      %v2908 = vsel %vm595, %v2837, 0
      %v2911 = vsel %vm595, %v2844, 0
      %v2914 = vsel %vm595, %v2852, 0
      %v2917 = vsel %vm595, %v2855, 0
      %v2920 = vsel %vm659, %v2704, 0
      %2922 = vmatprep.subr.bf16.mxu0 0
      %2923 = vmatpush1.bf16.msra.mxu0 %v2920
      %2924 = vmatprep.subr.bf16.mxu0 0
      %2925 = vmatpush1.bf16.msra.mxu0 0
      %2926 = vmatprep.subr.bf16.mxu0 0
      %2927 = vmatpush1.bf16.msra.mxu0 0
      %2928 = vmatprep.subr.bf16.mxu0 0
      %2929 = vmatpush1.bf16.msra.mxu0 0
      %2930 = vmatprep.subr.bf16.mxu0 0
      %2931 = vmatpush1.bf16.msra.mxu0 0
      %2932 = vmatprep.subr.bf16.mxu0 0
      %2933 = vmatpush1.bf16.msra.mxu0 0
      %2934 = vmatprep.subr.bf16.mxu0 0
      %2935 = vmatpush1.bf16.msra.mxu0 0
      %2936 = vmatprep.subr.bf16.mxu0 0
      %2937 = vmatpush1.bf16.msra.mxu0 0
      %2938 = vmatprep.subr.bf16.mxu0 0
      %2939 = vmatpush1.bf16.msra.mxu0 0
      %2940 = vmatprep.subr.bf16.mxu0 0
      %2941 = vmatpush1.bf16.msra.mxu0 0
      %2942 = vmatprep.subr.bf16.mxu0 0
      %2943 = vmatpush1.bf16.msra.mxu0 0
      %2944 = vmatprep.subr.bf16.mxu0 0
      %2945 = vmatpush1.bf16.msra.mxu0 0
      %2946 = vmatprep.subr.bf16.mxu0 0
      %2947 = vmatpush1.bf16.msra.mxu0 0
      %2948 = vmatprep.subr.bf16.mxu0 0
      %2949 = vmatpush1.bf16.msra.mxu0 0
      %2950 = vmatprep.subr.bf16.mxu0 0
      %2951 = vmatpush1.bf16.msra.mxu0 0
      %2952 = vmatprep.subr.bf16.mxu0 0
      %2953 = vmatpush1.bf16.msra.mxu0 0
      %2954 = vmatprep.mubr.bf16.mxu0 0
      %2955 = vmatmul.mubr.bf16.gmra.mrb[0].mxu0 %v2857
      %v2956 = vpop.f32.mrb[0].mxu0
      %v2957 = vadd.f32 0.0, %v2956
      %v2958 = vpop.f32.mrb[0].mxu0
      %v2959 = vpop.f32.mrb[0].mxu0
      %v2960 = vadd.f32 0.0, %v2959
      %v2961 = vpop.f32.mrb[0].mxu0
      %2962 = vmatprep.mubr.bf16.mxu0 0
      %2963 = vmatmul.mubr.bf16.gmra.mrb[0].mxu0 %v2860
      %v2964 = vpop.f32.mrb[0].mxu0
      %v2965 = vadd.f32 0.0, %v2964
      %v2966 = vpop.f32.mrb[0].mxu0
      %v2967 = vpop.f32.mrb[0].mxu0
      %v2968 = vadd.f32 0.0, %v2967
      %v2969 = vpop.f32.mrb[0].mxu0
      %2970 = vmatprep.mubr.bf16.mxu0 0
      %2971 = vmatmul.mubr.bf16.gmra.mrb[0].mxu0 %v2863
      %v2972 = vpop.f32.mrb[0].mxu0
      %v2973 = vadd.f32 0.0, %v2972
      %v2974 = vpop.f32.mrb[0].mxu0
      %v2975 = vpop.f32.mrb[0].mxu0
      %v2976 = vadd.f32 0.0, %v2975
      %v2977 = vpop.f32.mrb[0].mxu0
      %2978 = vmatprep.mubr.bf16.mxu0 0
      %2979 = vmatmul.mubr.bf16.gmra.mrb[0].mxu0 %v2866
      %v2980 = vpop.f32.mrb[0].mxu0
      %v2981 = vadd.f32 0.0, %v2980
      %v2982 = vpop.f32.mrb[0].mxu0
      %v2983 = vpop.f32.mrb[0].mxu0
      %v2984 = vadd.f32 0.0, %v2983
      %v2985 = vpop.f32.mrb[0].mxu0
      %2986 = vmatprep.mubr.bf16.mxu0 0
      %2987 = vmatmul.mubr.bf16.gmra.mrb[0].mxu0 %v2869
      %v2988 = vpop.f32.mrb[0].mxu0
      %v2989 = vadd.f32 0.0, %v2988
      %v2990 = vpop.f32.mrb[0].mxu0
      %v2991 = vpop.f32.mrb[0].mxu0
      %v2992 = vadd.f32 0.0, %v2991
      %v2993 = vpop.f32.mrb[0].mxu0
      %2994 = vmatprep.mubr.bf16.mxu0 0
      %2995 = vmatmul.mubr.bf16.gmra.mrb[0].mxu0 %v2872
      %v2996 = vpop.f32.mrb[0].mxu0
      %v2997 = vadd.f32 0.0, %v2996
      %v2998 = vpop.f32.mrb[0].mxu0
      %v2999 = vpop.f32.mrb[0].mxu0
      %v3000 = vadd.f32 0.0, %v2999
      %v3001 = vpop.f32.mrb[0].mxu0
      %3002 = vmatprep.mubr.bf16.mxu0 0
      %3003 = vmatmul.mubr.bf16.gmra.mrb[0].mxu0 %v2875
      %v3004 = vpop.f32.mrb[0].mxu0
      %v3005 = vadd.f32 0.0, %v3004
      %v3006 = vpop.f32.mrb[0].mxu0
      %v3007 = vpop.f32.mrb[0].mxu0
      %v3008 = vadd.f32 0.0, %v3007
      %v3009 = vpop.f32.mrb[0].mxu0
      %3010 = vmatprep.mubr.bf16.mxu0 0
      %3011 = vmatmul.mubr.bf16.gmra.mrb[0].mxu0 %v2878
      %v3012 = vpop.f32.mrb[0].mxu0
      %v3013 = vadd.f32 0.0, %v3012
      %v3014 = vpop.f32.mrb[0].mxu0
      %v3015 = vpop.f32.mrb[0].mxu0
      %v3016 = vadd.f32 0.0, %v3015
      %v3017 = vpop.f32.mrb[0].mxu0
      %3018 = vmatprep.mubr.bf16.mxu0 0
      %3019 = vmatmul.mubr.bf16.gmra.mrb[0].mxu0 %v2881
      %v3020 = vpop.f32.mrb[0].mxu0
      %v3021 = vadd.f32 0.0, %v3020
      %v3022 = vpop.f32.mrb[0].mxu0
      %v3023 = vpop.f32.mrb[0].mxu0
      %v3024 = vadd.f32 0.0, %v3023
      %v3025 = vpop.f32.mrb[0].mxu0
      %3026 = vmatprep.mubr.bf16.mxu0 0
      %3027 = vmatmul.mubr.bf16.gmra.mrb[0].mxu0 %v2884
      %v3028 = vpop.f32.mrb[0].mxu0
      %v3029 = vadd.f32 0.0, %v3028
      %v3030 = vpop.f32.mrb[0].mxu0
      %v3031 = vpop.f32.mrb[0].mxu0
      %v3032 = vadd.f32 0.0, %v3031
      %v3033 = vpop.f32.mrb[0].mxu0
      %3034 = vmatprep.mubr.bf16.mxu0 0
      %3035 = vmatmul.mubr.bf16.gmra.mrb[0].mxu0 %v2887
      %v3036 = vpop.f32.mrb[0].mxu0
      %v3037 = vadd.f32 0.0, %v3036
      %v3038 = vpop.f32.mrb[0].mxu0
      %v3039 = vpop.f32.mrb[0].mxu0
      %v3040 = vadd.f32 0.0, %v3039
      %v3041 = vpop.f32.mrb[0].mxu0
      %3042 = vmatprep.mubr.bf16.mxu0 0
      %3043 = vmatmul.mubr.bf16.gmra.mrb[0].mxu0 %v2890
      %v3044 = vpop.f32.mrb[0].mxu0
      %v3045 = vadd.f32 0.0, %v3044
      %v3046 = vpop.f32.mrb[0].mxu0
      %v3047 = vpop.f32.mrb[0].mxu0
      %v3048 = vadd.f32 0.0, %v3047
      %v3049 = vpop.f32.mrb[0].mxu0
      %3050 = vmatprep.mubr.bf16.mxu0 0
      %3051 = vmatmul.mubr.bf16.gmra.mrb[0].mxu0 %v2893
      %v3052 = vpop.f32.mrb[0].mxu0
      %v3053 = vadd.f32 0.0, %v3052
      %v3054 = vpop.f32.mrb[0].mxu0
      %v3055 = vpop.f32.mrb[0].mxu0
      %v3056 = vadd.f32 0.0, %v3055
      %v3057 = vpop.f32.mrb[0].mxu0
      %3058 = vmatprep.mubr.bf16.mxu0 0
      %3059 = vmatmul.mubr.bf16.gmra.mrb[0].mxu0 %v2896
      %v3060 = vpop.f32.mrb[0].mxu0
      %v3061 = vadd.f32 0.0, %v3060
      %v3062 = vpop.f32.mrb[0].mxu0
      %v3063 = vpop.f32.mrb[0].mxu0
      %v3064 = vadd.f32 0.0, %v3063
      %v3065 = vpop.f32.mrb[0].mxu0
      %3066 = vmatprep.mubr.bf16.mxu0 0
      %3067 = vmatmul.mubr.bf16.gmra.mrb[0].mxu0 %v2899
      %v3068 = vpop.f32.mrb[0].mxu0
      %v3069 = vadd.f32 0.0, %v3068
      %v3070 = vpop.f32.mrb[0].mxu0
      %v3071 = vpop.f32.mrb[0].mxu0
      %v3072 = vadd.f32 0.0, %v3071
      %v3073 = vpop.f32.mrb[0].mxu0
      %3074 = vmatprep.mubr.bf16.mxu0 0
      %3075 = vmatmul.mubr.bf16.gmra.mrb[0].mxu0 %v2902
      %v3076 = vpop.f32.mrb[0].mxu0
      %v3077 = vadd.f32 0.0, %v3076
      %v3078 = vpop.f32.mrb[0].mxu0
      %v3079 = vpop.f32.mrb[0].mxu0
      %v3080 = vadd.f32 0.0, %v3079
      %v3081 = vpop.f32.mrb[0].mxu0
      %3082 = vmatprep.mubr.bf16.mxu0 0
      %3083 = vmatmul.mubr.bf16.gmra.mrb[0].mxu0 %v2905
      %v3084 = vpop.f32.mrb[0].mxu0
      %v3085 = vadd.f32 0.0, %v3084
      %v3086 = vpop.f32.mrb[0].mxu0
      %v3087 = vpop.f32.mrb[0].mxu0
      %v3088 = vadd.f32 0.0, %v3087
      %v3089 = vpop.f32.mrb[0].mxu0
      %3090 = vmatprep.mubr.bf16.mxu0 0
      %3091 = vmatmul.mubr.bf16.gmra.mrb[0].mxu0 %v2908
      %v3092 = vpop.f32.mrb[0].mxu0
      %v3093 = vadd.f32 0.0, %v3092
      %v3094 = vpop.f32.mrb[0].mxu0
      %v3095 = vpop.f32.mrb[0].mxu0
      %v3096 = vadd.f32 0.0, %v3095
      %v3097 = vpop.f32.mrb[0].mxu0
      %3098 = vmatprep.mubr.bf16.mxu0 0
      %3099 = vmatmul.mubr.bf16.gmra.mrb[0].mxu0 %v2911
      %v3100 = vpop.f32.mrb[0].mxu0
      %v3101 = vadd.f32 0.0, %v3100
      %v3102 = vpop.f32.mrb[0].mxu0
      %v3103 = vpop.f32.mrb[0].mxu0
      %v3104 = vadd.f32 0.0, %v3103
      %v3105 = vpop.f32.mrb[0].mxu0
      %3106 = vmatprep.mubr.bf16.mxu0 0
      %3107 = vmatmul.mubr.bf16.gmra.mrb[0].mxu0 %v2914
      %v3108 = vpop.f32.mrb[0].mxu0
      %v3109 = vadd.f32 0.0, %v3108
      %v3110 = vpop.f32.mrb[0].mxu0
      %v3111 = vpop.f32.mrb[0].mxu0
      %v3112 = vadd.f32 0.0, %v3111
      %v3113 = vpop.f32.mrb[0].mxu0
      %3114 = vmatprep.mubr.bf16.mxu0 0
      %3115 = vmatmul.mubr.bf16.gmra.mrb[0].mxu0 %v2917
      %v3116 = vpop.f32.mrb[0].mxu0
      %v3117 = vadd.f32 0.0, %v3116
      %v3118 = vpop.f32.mrb[0].mxu0
      %v3119 = vpop.f32.mrb[0].mxu0
      %v3120 = vpop.f32.mrb[0].mxu0
      %3121 = vdwg.mxu0
      %v3122 = vadd.f32 %v2661, %v2957
      %v3123 = vadd.f32 %v2662, %v2960
      %v3124 = vadd.f32 %v2663, %v2965
      %v3125 = vadd.f32 %v2664, %v2968
      %v3126 = vadd.f32 %v2665, %v2973
      %v3127 = vadd.f32 %v2666, %v2976
      %v3128 = vadd.f32 %v2667, %v2981
      %v3129 = vadd.f32 %v2668, %v2984
      %v3130 = vadd.f32 %v2669, %v2989
      %v3131 = vadd.f32 %v2670, %v2992
      %v3132 = vadd.f32 %v2671, %v2997
      %v3133 = vadd.f32 %v2672, %v3000
      %v3134 = vadd.f32 %v2673, %v3005
      %v3135 = vadd.f32 %v2674, %v3008
      %v3136 = vadd.f32 %v2675, %v3013
      %v3137 = vadd.f32 %v2676, %v3016
      %v3138 = vadd.f32 %v2677, %v3021
      %v3139 = vadd.f32 %v2678, %v3024
      %v3140 = vadd.f32 %v2679, %v3029
      %v3141 = vadd.f32 %v2680, %v3032
      %v3142 = vadd.f32 %v2681, %v3037
      %v3143 = vadd.f32 %v2682, %v3040
      %v3144 = vadd.f32 %v2683, %v3045
      %v3145 = vadd.f32 %v2684, %v3048
      %v3146 = vadd.f32 %v2685, %v3053
      %v3147 = vadd.f32 %v2686, %v3056
      %v3148 = vadd.f32 %v2687, %v3061
      %v3149 = vadd.f32 %v2688, %v3064
      %v3150 = vadd.f32 %v2689, %v3069
      %v3151 = vadd.f32 %v2690, %v3072
      %v3152 = vadd.f32 %v2691, %v3077
      %v3153 = vadd.f32 %v2692, %v3080
      %v3154 = vadd.f32 %v2693, %v3085
      %v3155 = vadd.f32 %v2694, %v3088
      %v3156 = vadd.f32 %v2695, %v3093
      %v3157 = vadd.f32 %v2696, %v3096
      %v3158 = vadd.f32 %v2697, %v3101
      %v3159 = vadd.f32 %v2698, %v3104
      %v3160 = vadd.f32 %v2699, %v3109
      %v3161 = vadd.f32 %v2700, %v3112
      %v3162 = vadd.f32 %v2701, %v3117
      %v3163 = vld [vmem:[%s354 + $0x18] sm:$0xf]
      %v3164 = vld [vmem:[%s354 + $0x1c] sm:$0xf]
      %v3165 = vld [vmem:[%s354 + $0x20] sm:$0xf]
      %v3166 = vld [vmem:[%s354 + $0x24] sm:$0xf]
      %v3167 = vld [vmem:[%s354 + $0x28] sm:$0xf]
      %v3168 = vld [vmem:[%s354 + $0x2c] sm:$0xf]
      %v3169 = vld [vmem:[%s354 + $0x30] sm:$0xf]
      %v3170 = vld [vmem:[%s354 + $0x34] sm:$0xf]
      %v3171 = vld [vmem:[%s354 + $0x38] sm:$0xf]
      %v3172 = vld [vmem:[%s354 + $0x3c] sm:$0xf]
      %v3173 = vld [vmem:[%s354 + $0x40] sm:$0xf]
      %v3174 = vld [vmem:[%s354 + $0x44] sm:$0xf]
      %v3175 = vld [vmem:[%s354 + $0x48] sm:$0xf]
      %v3176 = vld [vmem:[%s354 + $0x4c] sm:$0xf]
      %v3177 = vld [vmem:[%s354 + $0x50] sm:$0xf]
      %v3178 = vld [vmem:[%s354 + $0x54] sm:$0xf]
      %v3179 = vld [vmem:[%s354 + $0x58] sm:$0xf]
      %v3180 = vld [vmem:[%s354 + $0x5c] sm:$0xf]
      %v3181 = vld [vmem:[%s354 + $0x60] sm:$0xf]
      %v3182 = vld [vmem:[%s354 + $0x64] sm:$0xf]
      %v3183 = vld [vmem:[%s354 + $0x68] sm:$0xf]
      %v3184 = vld [vmem:[%s354 + $0x6c] sm:$0xf]
      %v3185 = vld [vmem:[%s354 + $0x70] sm:$0xf]
      %v3186 = vld [vmem:[%s354 + $0x74] sm:$0xf]
      %v3187 = vld [vmem:[%s354 + $0x78] sm:$0xf]
      %v3188 = vld [vmem:[%s354 + $0x7c] sm:$0xf]
      %v3189 = vld [vmem:[%s354 + $0x80] sm:$0xf]
      %v3190 = vld [vmem:[%s354 + $0x84] sm:$0xf]
      %v3191 = vld [vmem:[%s354 + $0x88] sm:$0xf]
      %v3192 = vld [vmem:[%s354 + $0x8c] sm:$0xf]
      %v3193 = vld [vmem:[%s354 + $0x90] sm:$0xf]
      %v3194 = vld [vmem:[%s354 + $0x94] sm:$0xf]
      %v3195 = vld [vmem:[%s354 + $0x98] sm:$0xf]
      %v3196 = vld [vmem:[%s354 + $0x9c] sm:$0xf]
      %v3197 = vld [vmem:[%s354 + $0xa0] sm:$0xf]
      %v3198 = vld [vmem:[%s354 + $0xa4] sm:$0xf]
      %v3199 = vld [vmem:[%s354 + $0xa8] sm:$0xf]
      %v3200 = vld [vmem:[%s354 + $0xac] sm:$0xf]
      %v3201 = vld [vmem:[%s354 + $0xb0] sm:$0xf]
      %v3202 = vld [vmem:[%s354 + $0xb4] sm:$0xf]
      %v3203 = vld [vmem:[%s354 + $0xb8] sm:$0x7]
      %s3204 = scalar_lea.vmem %s2, 12
      %v3205 = vld [vmem:[%s3204] sm:$0x3]
      %v3247 = vunpack.c.l.b16 %v3163
      %v3248 = vunpack.c.l.b16 %v3164
      %v3249 = vunpack.c.l.b16 %v3165
      %v3250 = vunpack.c.l.b16 %v3166
      %v3251 = vunpack.c.l.b16 %v3167
      %v3252 = vunpack.c.l.b16 %v3168
      %v3253 = vunpack.c.l.b16 %v3169
      %v3254 = vunpack.c.l.b16 %v3170
      %v3255 = vunpack.c.l.b16 %v3171
      %v3256 = vunpack.c.l.b16 %v3172
      %v3257 = vunpack.c.l.b16 %v3173
      %v3258 = vunpack.c.l.b16 %v3174
      %v3259 = vunpack.c.l.b16 %v3175
      %v3260 = vunpack.c.l.b16 %v3176
      %v3261 = vunpack.c.l.b16 %v3177
      %v3262 = vunpack.c.l.b16 %v3178
      %v3263 = vunpack.c.l.b16 %v3179
      %v3264 = vunpack.c.l.b16 %v3180
      %v3265 = vunpack.c.l.b16 %v3181
      %v3266 = vunpack.c.l.b16 %v3182
      %v3267 = vunpack.c.l.b16 %v3183
      %v3268 = vunpack.c.l.b16 %v3184
      %v3269 = vunpack.c.l.b16 %v3185
      %v3270 = vunpack.c.l.b16 %v3186
      %v3271 = vunpack.c.l.b16 %v3187
      %v3272 = vunpack.c.l.b16 %v3188
      %v3273 = vunpack.c.l.b16 %v3189
      %v3274 = vunpack.c.l.b16 %v3190
      %v3275 = vunpack.c.l.b16 %v3191
      %v3276 = vunpack.c.l.b16 %v3192
      %v3277 = vunpack.c.l.b16 %v3193
      %v3278 = vunpack.c.l.b16 %v3194
      %v3279 = vunpack.c.l.b16 %v3195
      %v3280 = vunpack.c.l.b16 %v3196
      %v3281 = vunpack.c.l.b16 %v3197
      %v3282 = vunpack.c.l.b16 %v3198
      %v3283 = vunpack.c.l.b16 %v3199
      %v3284 = vunpack.c.l.b16 %v3200
      %v3285 = vunpack.c.l.b16 %v3201
      %v3286 = vunpack.c.l.b16 %v3202
      %v3287 = vunpack.c.l.b16 %v3203
      %v3288 = vpack.c.b16 %v3248, %v3247
      %v3289 = vpack.c.b16 %v3250, %v3249
      %v3290 = vpack.c.b16 %v3252, %v3251
      %v3291 = vpack.c.b16 %v3254, %v3253
      %v3292 = vpack.c.b16 %v3256, %v3255
      %v3293 = vpack.c.b16 %v3258, %v3257
      %v3294 = vpack.c.b16 %v3260, %v3259
      %v3295 = vpack.c.b16 %v3262, %v3261
      %v3296 = vpack.c.b16 %v3264, %v3263
      %v3297 = vpack.c.b16 %v3266, %v3265
      %v3298 = vpack.c.b16 %v3268, %v3267
      %v3299 = vpack.c.b16 %v3270, %v3269
      %v3300 = vpack.c.b16 %v3272, %v3271
      %v3301 = vpack.c.b16 %v3274, %v3273
      %v3302 = vpack.c.b16 %v3276, %v3275
      %v3303 = vpack.c.b16 %v3278, %v3277
      %v3304 = vpack.c.b16 %v3280, %v3279
      %v3305 = vpack.c.b16 %v3282, %v3281
      %v3306 = vpack.c.b16 %v3284, %v3283
      %v3307 = vpack.c.b16 %v3286, %v3285
      %v3308 = vpack.c.b16 %v3287, %v3287
      %v3310 = vshrl.u32 %v3288, 16
      %v3312 = vshll.u32 %v3288, 16
      %v3314 = vrot.slane %v3312, 1
      %v3315 = vor.u32 %v3310, %v3314
      %v3317 = vshll.u32 %v3289, 16
      %v3319 = vrot.slane %v3317, 1
      %v3320 = vsel %vm2708, %v3315, %v3319
      %v3321 = vshrl.u32 %v3289, 16
      %v3323 = vor.u32 %v3321, %v3319
      %v3325 = vshll.u32 %v3290, 16
      %v3327 = vrot.slane %v3325, 1
      %v3328 = vsel %vm2708, %v3323, %v3327
      %v3329 = vshrl.u32 %v3290, 16
      %v3331 = vor.u32 %v3329, %v3327
      %v3333 = vshll.u32 %v3291, 16
      %v3335 = vrot.slane %v3333, 1
      %v3336 = vsel %vm2708, %v3331, %v3335
      %v3337 = vshrl.u32 %v3291, 16
      %v3339 = vor.u32 %v3337, %v3335
      %v3341 = vshll.u32 %v3292, 16
      %v3343 = vrot.slane %v3341, 1
      %v3344 = vsel %vm2708, %v3339, %v3343
      %v3345 = vshrl.u32 %v3292, 16
      %v3347 = vor.u32 %v3345, %v3343
      %v3349 = vshll.u32 %v3293, 16
      %v3351 = vrot.slane %v3349, 1
      %v3352 = vsel %vm2708, %v3347, %v3351
      %v3353 = vshrl.u32 %v3293, 16
      %v3355 = vor.u32 %v3353, %v3351
      %v3357 = vshll.u32 %v3294, 16
      %v3359 = vrot.slane %v3357, 1
      %v3360 = vsel %vm2708, %v3355, %v3359
      %v3361 = vshrl.u32 %v3294, 16
      %v3363 = vor.u32 %v3361, %v3359
      %v3365 = vshll.u32 %v3295, 16
      %v3367 = vrot.slane %v3365, 1
      %v3368 = vsel %vm2708, %v3363, %v3367
      %v3369 = vshrl.u32 %v3295, 16
      %v3371 = vor.u32 %v3369, %v3367
      %v3373 = vshll.u32 %v3296, 16
      %v3375 = vrot.slane %v3373, 1
      %v3376 = vsel %vm2708, %v3371, %v3375
      %v3377 = vshrl.u32 %v3296, 16
      %v3379 = vor.u32 %v3377, %v3375
      %v3381 = vshll.u32 %v3297, 16
      %v3383 = vrot.slane %v3381, 1
      %v3384 = vsel %vm2708, %v3379, %v3383
      %v3385 = vshrl.u32 %v3297, 16
      %v3387 = vor.u32 %v3385, %v3383
      %v3389 = vshll.u32 %v3298, 16
      %v3391 = vrot.slane %v3389, 1
      %v3392 = vsel %vm2708, %v3387, %v3391
      %v3393 = vshrl.u32 %v3298, 16
      %v3395 = vor.u32 %v3393, %v3391
      %v3397 = vshll.u32 %v3299, 16
      %v3399 = vrot.slane %v3397, 1
      %v3400 = vsel %vm2708, %v3395, %v3399
      %v3401 = vshrl.u32 %v3299, 16
      %v3403 = vor.u32 %v3401, %v3399
      %v3405 = vshll.u32 %v3300, 16
      %v3407 = vrot.slane %v3405, 1
      %v3408 = vsel %vm2708, %v3403, %v3407
      %v3409 = vshrl.u32 %v3300, 16
      %v3411 = vor.u32 %v3409, %v3407
      %v3413 = vshll.u32 %v3301, 16
      %v3415 = vrot.slane %v3413, 1
      %v3416 = vsel %vm2708, %v3411, %v3415
      %v3417 = vshrl.u32 %v3301, 16
      %v3419 = vor.u32 %v3417, %v3415
      %v3421 = vshll.u32 %v3302, 16
      %v3423 = vrot.slane %v3421, 1
      %v3424 = vsel %vm2708, %v3419, %v3423
      %v3425 = vshrl.u32 %v3302, 16
      %v3427 = vor.u32 %v3425, %v3423
      %v3429 = vshll.u32 %v3303, 16
      %v3431 = vrot.slane %v3429, 1
      %v3432 = vsel %vm2708, %v3427, %v3431
      %v3433 = vshrl.u32 %v3303, 16
      %v3435 = vor.u32 %v3433, %v3431
      %v3437 = vshll.u32 %v3304, 16
      %v3439 = vrot.slane %v3437, 1
      %v3440 = vsel %vm2708, %v3435, %v3439
      %v3441 = vshrl.u32 %v3304, 16
      %v3443 = vor.u32 %v3441, %v3439
      %v3445 = vshll.u32 %v3305, 16
      %v3447 = vrot.slane %v3445, 1
      %v3448 = vsel %vm2708, %v3443, %v3447
      %v3449 = vshrl.u32 %v3305, 16
      %v3451 = vor.u32 %v3449, %v3447
      %v3453 = vshll.u32 %v3306, 16
      %v3455 = vrot.slane %v3453, 1
      %v3456 = vsel %vm2708, %v3451, %v3455
      %v3457 = vshrl.u32 %v3306, 16
      %v3459 = vor.u32 %v3457, %v3455
      %v3461 = vshll.u32 %v3307, 16
      %v3463 = vrot.slane %v3461, 1
      %v3464 = vsel %vm2708, %v3459, %v3463
      %v3465 = vshrl.u32 %v3307, 16
      %v3467 = vor.u32 %v3465, %v3463
      %v3469 = vshll.u32 %v3308, 16
      %v3471 = vrot.slane %v3469, 1
      %v3472 = vsel %vm2708, %v3467, %v3471
      %v3473 = vshrl.u32 %v3308, 16
      %v3475 = vor.u32 %v3473, %v3471
      %v3477 = vsel %vm595, %v3320, 0
      %v3480 = vsel %vm595, %v3328, 0
      %v3483 = vsel %vm595, %v3336, 0
      %v3486 = vsel %vm595, %v3344, 0
      %v3489 = vsel %vm595, %v3352, 0
      %v3492 = vsel %vm595, %v3360, 0
      %v3495 = vsel %vm595, %v3368, 0
      %v3498 = vsel %vm595, %v3376, 0
      %v3501 = vsel %vm595, %v3384, 0
      %v3504 = vsel %vm595, %v3392, 0
      %v3507 = vsel %vm595, %v3400, 0
      %v3510 = vsel %vm595, %v3408, 0
      %v3513 = vsel %vm595, %v3416, 0
      %v3516 = vsel %vm595, %v3424, 0
      %v3519 = vsel %vm595, %v3432, 0
      %v3522 = vsel %vm595, %v3440, 0
      %v3525 = vsel %vm595, %v3448, 0
      %v3528 = vsel %vm595, %v3456, 0
      %v3531 = vsel %vm595, %v3464, 0
      %v3534 = vsel %vm595, %v3472, 0
      %v3537 = vsel %vm595, %v3475, 0
      %v3540 = vsel %vm659, %v3205, 0
      %3542 = vmatprep.subr.bf16.mxu0 0
      %3543 = vmatpush1.bf16.msra.mxu0 %v3540
      %3544 = vmatprep.subr.bf16.mxu0 0
      %3545 = vmatpush1.bf16.msra.mxu0 0
      %3546 = vmatprep.subr.bf16.mxu0 0
      %3547 = vmatpush1.bf16.msra.mxu0 0
      %3548 = vmatprep.subr.bf16.mxu0 0
      %3549 = vmatpush1.bf16.msra.mxu0 0
      %3550 = vmatprep.subr.bf16.mxu0 0
      %3551 = vmatpush1.bf16.msra.mxu0 0
      %3552 = vmatprep.subr.bf16.mxu0 0
      %3553 = vmatpush1.bf16.msra.mxu0 0
      %3554 = vmatprep.subr.bf16.mxu0 0
      %3555 = vmatpush1.bf16.msra.mxu0 0
      %3556 = vmatprep.subr.bf16.mxu0 0
      %3557 = vmatpush1.bf16.msra.mxu0 0
      %3558 = vmatprep.subr.bf16.mxu0 0
      %3559 = vmatpush1.bf16.msra.mxu0 0
      %3560 = vmatprep.subr.bf16.mxu0 0
      %3561 = vmatpush1.bf16.msra.mxu0 0
      %3562 = vmatprep.subr.bf16.mxu0 0
      %3563 = vmatpush1.bf16.msra.mxu0 0
      %3564 = vmatprep.subr.bf16.mxu0 0
      %3565 = vmatpush1.bf16.msra.mxu0 0
      %3566 = vmatprep.subr.bf16.mxu0 0
      %3567 = vmatpush1.bf16.msra.mxu0 0
      %3568 = vmatprep.subr.bf16.mxu0 0
      %3569 = vmatpush1.bf16.msra.mxu0 0
      %3570 = vmatprep.subr.bf16.mxu0 0
      %3571 = vmatpush1.bf16.msra.mxu0 0
      %3572 = vmatprep.subr.bf16.mxu0 0
      %3573 = vmatpush1.bf16.msra.mxu0 0
      %3574 = vmatprep.mubr.bf16.mxu0 0
      %3575 = vmatmul.mubr.bf16.gmra.mrb[0].mxu0 %v3477
      %v3576 = vpop.f32.mrb[0].mxu0
      %v3577 = vadd.f32 0.0, %v3576
      %v3578 = vpop.f32.mrb[0].mxu0
      %v3579 = vpop.f32.mrb[0].mxu0
      %v3580 = vadd.f32 0.0, %v3579
      %v3581 = vpop.f32.mrb[0].mxu0
      %3582 = vmatprep.mubr.bf16.mxu0 0
      %3583 = vmatmul.mubr.bf16.gmra.mrb[0].mxu0 %v3480
      %v3584 = vpop.f32.mrb[0].mxu0
      %v3585 = vadd.f32 0.0, %v3584
      %v3586 = vpop.f32.mrb[0].mxu0
      %v3587 = vpop.f32.mrb[0].mxu0
      %v3588 = vadd.f32 0.0, %v3587
      %v3589 = vpop.f32.mrb[0].mxu0
      %3590 = vmatprep.mubr.bf16.mxu0 0
      %3591 = vmatmul.mubr.bf16.gmra.mrb[0].mxu0 %v3483
      %v3592 = vpop.f32.mrb[0].mxu0
      %v3593 = vadd.f32 0.0, %v3592
      %v3594 = vpop.f32.mrb[0].mxu0
      %v3595 = vpop.f32.mrb[0].mxu0
      %v3596 = vadd.f32 0.0, %v3595
      %v3597 = vpop.f32.mrb[0].mxu0
      %3598 = vmatprep.mubr.bf16.mxu0 0
      %3599 = vmatmul.mubr.bf16.gmra.mrb[0].mxu0 %v3486
      %v3600 = vpop.f32.mrb[0].mxu0
      %v3601 = vadd.f32 0.0, %v3600
      %v3602 = vpop.f32.mrb[0].mxu0
      %v3603 = vpop.f32.mrb[0].mxu0
      %v3604 = vadd.f32 0.0, %v3603
      %v3605 = vpop.f32.mrb[0].mxu0
      %3606 = vmatprep.mubr.bf16.mxu0 0
      %3607 = vmatmul.mubr.bf16.gmra.mrb[0].mxu0 %v3489
      %v3608 = vpop.f32.mrb[0].mxu0
      %v3609 = vadd.f32 0.0, %v3608
      %v3610 = vpop.f32.mrb[0].mxu0
      %v3611 = vpop.f32.mrb[0].mxu0
      %v3612 = vadd.f32 0.0, %v3611
      %v3613 = vpop.f32.mrb[0].mxu0
      %3614 = vmatprep.mubr.bf16.mxu0 0
      %3615 = vmatmul.mubr.bf16.gmra.mrb[0].mxu0 %v3492
      %v3616 = vpop.f32.mrb[0].mxu0
      %v3617 = vadd.f32 0.0, %v3616
      %v3618 = vpop.f32.mrb[0].mxu0
      %v3619 = vpop.f32.mrb[0].mxu0
      %v3620 = vadd.f32 0.0, %v3619
      %v3621 = vpop.f32.mrb[0].mxu0
      %3622 = vmatprep.mubr.bf16.mxu0 0
      %3623 = vmatmul.mubr.bf16.gmra.mrb[0].mxu0 %v3495
      %v3624 = vpop.f32.mrb[0].mxu0
      %v3625 = vadd.f32 0.0, %v3624
      %v3626 = vpop.f32.mrb[0].mxu0
      %v3627 = vpop.f32.mrb[0].mxu0
      %v3628 = vadd.f32 0.0, %v3627
      %v3629 = vpop.f32.mrb[0].mxu0
      %3630 = vmatprep.mubr.bf16.mxu0 0
      %3631 = vmatmul.mubr.bf16.gmra.mrb[0].mxu0 %v3498
      %v3632 = vpop.f32.mrb[0].mxu0
      %v3633 = vadd.f32 0.0, %v3632
      %v3634 = vpop.f32.mrb[0].mxu0
      %v3635 = vpop.f32.mrb[0].mxu0
      %v3636 = vadd.f32 0.0, %v3635
      %v3637 = vpop.f32.mrb[0].mxu0
      %3638 = vmatprep.mubr.bf16.mxu0 0
      %3639 = vmatmul.mubr.bf16.gmra.mrb[0].mxu0 %v3501
      %v3640 = vpop.f32.mrb[0].mxu0
      %v3641 = vadd.f32 0.0, %v3640
      %v3642 = vpop.f32.mrb[0].mxu0
      %v3643 = vpop.f32.mrb[0].mxu0
      %v3644 = vadd.f32 0.0, %v3643
      %v3645 = vpop.f32.mrb[0].mxu0
      %3646 = vmatprep.mubr.bf16.mxu0 0
      %3647 = vmatmul.mubr.bf16.gmra.mrb[0].mxu0 %v3504
      %v3648 = vpop.f32.mrb[0].mxu0
      %v3649 = vadd.f32 0.0, %v3648
      %v3650 = vpop.f32.mrb[0].mxu0
      %v3651 = vpop.f32.mrb[0].mxu0
      %v3652 = vadd.f32 0.0, %v3651
      %v3653 = vpop.f32.mrb[0].mxu0
      %3654 = vmatprep.mubr.bf16.mxu0 0
      %3655 = vmatmul.mubr.bf16.gmra.mrb[0].mxu0 %v3507
      %v3656 = vpop.f32.mrb[0].mxu0
      %v3657 = vadd.f32 0.0, %v3656
      %v3658 = vpop.f32.mrb[0].mxu0
      %v3659 = vpop.f32.mrb[0].mxu0
      %v3660 = vadd.f32 0.0, %v3659
      %v3661 = vpop.f32.mrb[0].mxu0
      %3662 = vmatprep.mubr.bf16.mxu0 0
      %3663 = vmatmul.mubr.bf16.gmra.mrb[0].mxu0 %v3510
      %v3664 = vpop.f32.mrb[0].mxu0
      %v3665 = vadd.f32 0.0, %v3664
      %v3666 = vpop.f32.mrb[0].mxu0
      %v3667 = vpop.f32.mrb[0].mxu0
      %v3668 = vadd.f32 0.0, %v3667
      %v3669 = vpop.f32.mrb[0].mxu0
      %3670 = vmatprep.mubr.bf16.mxu0 0
      %3671 = vmatmul.mubr.bf16.gmra.mrb[0].mxu0 %v3513
      %v3672 = vpop.f32.mrb[0].mxu0
      %v3673 = vadd.f32 0.0, %v3672
      %v3674 = vpop.f32.mrb[0].mxu0
      %v3675 = vpop.f32.mrb[0].mxu0
      %v3676 = vadd.f32 0.0, %v3675
      %v3677 = vpop.f32.mrb[0].mxu0
      %3678 = vmatprep.mubr.bf16.mxu0 0
      %3679 = vmatmul.mubr.bf16.gmra.mrb[0].mxu0 %v3516
      %v3680 = vpop.f32.mrb[0].mxu0
      %v3681 = vadd.f32 0.0, %v3680
      %v3682 = vpop.f32.mrb[0].mxu0
      %v3683 = vpop.f32.mrb[0].mxu0
      %v3684 = vadd.f32 0.0, %v3683
      %v3685 = vpop.f32.mrb[0].mxu0
      %3686 = vmatprep.mubr.bf16.mxu0 0
      %3687 = vmatmul.mubr.bf16.gmra.mrb[0].mxu0 %v3519
      %v3688 = vpop.f32.mrb[0].mxu0
      %v3689 = vadd.f32 0.0, %v3688
      %v3690 = vpop.f32.mrb[0].mxu0
      %v3691 = vpop.f32.mrb[0].mxu0
      %v3692 = vadd.f32 0.0, %v3691
      %v3693 = vpop.f32.mrb[0].mxu0
      %3694 = vmatprep.mubr.bf16.mxu0 0
      %3695 = vmatmul.mubr.bf16.gmra.mrb[0].mxu0 %v3522
      %v3696 = vpop.f32.mrb[0].mxu0
      %v3697 = vadd.f32 0.0, %v3696
      %v3698 = vpop.f32.mrb[0].mxu0
      %v3699 = vpop.f32.mrb[0].mxu0
      %v3700 = vadd.f32 0.0, %v3699
      %v3701 = vpop.f32.mrb[0].mxu0
      %3702 = vmatprep.mubr.bf16.mxu0 0
      %3703 = vmatmul.mubr.bf16.gmra.mrb[0].mxu0 %v3525
      %v3704 = vpop.f32.mrb[0].mxu0
      %v3705 = vadd.f32 0.0, %v3704
      %v3706 = vpop.f32.mrb[0].mxu0
      %v3707 = vpop.f32.mrb[0].mxu0
      %v3708 = vadd.f32 0.0, %v3707
      %v3709 = vpop.f32.mrb[0].mxu0
      %3710 = vmatprep.mubr.bf16.mxu0 0
      %3711 = vmatmul.mubr.bf16.gmra.mrb[0].mxu0 %v3528
      %v3712 = vpop.f32.mrb[0].mxu0
      %v3713 = vadd.f32 0.0, %v3712
      %v3714 = vpop.f32.mrb[0].mxu0
      %v3715 = vpop.f32.mrb[0].mxu0
      %v3716 = vadd.f32 0.0, %v3715
      %v3717 = vpop.f32.mrb[0].mxu0
      %3718 = vmatprep.mubr.bf16.mxu0 0
      %3719 = vmatmul.mubr.bf16.gmra.mrb[0].mxu0 %v3531
      %v3720 = vpop.f32.mrb[0].mxu0
      %v3721 = vadd.f32 0.0, %v3720
      %v3722 = vpop.f32.mrb[0].mxu0
      %v3723 = vpop.f32.mrb[0].mxu0
      %v3724 = vadd.f32 0.0, %v3723
      %v3725 = vpop.f32.mrb[0].mxu0
      %3726 = vmatprep.mubr.bf16.mxu0 0
      %3727 = vmatmul.mubr.bf16.gmra.mrb[0].mxu0 %v3534
      %v3728 = vpop.f32.mrb[0].mxu0
      %v3729 = vadd.f32 0.0, %v3728
      %v3730 = vpop.f32.mrb[0].mxu0
      %v3731 = vpop.f32.mrb[0].mxu0
      %v3732 = vadd.f32 0.0, %v3731
      %v3733 = vpop.f32.mrb[0].mxu0
      %3734 = vmatprep.mubr.bf16.mxu0 0
      %3735 = vmatmul.mubr.bf16.gmra.mrb[0].mxu0 %v3537
      %v3736 = vpop.f32.mrb[0].mxu0
      %v3737 = vadd.f32 0.0, %v3736
      %v3738 = vpop.f32.mrb[0].mxu0
      %v3739 = vpop.f32.mrb[0].mxu0
      %v3740 = vpop.f32.mrb[0].mxu0
      %3741 = vdwg.mxu0
      %v3742 = vadd.f32 %v3122, %v3577
      %v3743 = vadd.f32 %v3123, %v3580
      %v3744 = vadd.f32 %v3124, %v3585
      %v3745 = vadd.f32 %v3125, %v3588
      %v3746 = vadd.f32 %v3126, %v3593
      %v3747 = vadd.f32 %v3127, %v3596
      %v3748 = vadd.f32 %v3128, %v3601
      %v3749 = vadd.f32 %v3129, %v3604
      %v3750 = vadd.f32 %v3130, %v3609
      %v3751 = vadd.f32 %v3131, %v3612
      %v3752 = vadd.f32 %v3132, %v3617
      %v3753 = vadd.f32 %v3133, %v3620
      %v3754 = vadd.f32 %v3134, %v3625
      %v3755 = vadd.f32 %v3135, %v3628
      %v3756 = vadd.f32 %v3136, %v3633
      %v3757 = vadd.f32 %v3137, %v3636
      %v3758 = vadd.f32 %v3138, %v3641
      %v3759 = vadd.f32 %v3139, %v3644
      %v3760 = vadd.f32 %v3140, %v3649
      %v3761 = vadd.f32 %v3141, %v3652
      %v3762 = vadd.f32 %v3142, %v3657
      %v3763 = vadd.f32 %v3143, %v3660
      %v3764 = vadd.f32 %v3144, %v3665
      %v3765 = vadd.f32 %v3145, %v3668
      %v3766 = vadd.f32 %v3146, %v3673
      %v3767 = vadd.f32 %v3147, %v3676
      %v3768 = vadd.f32 %v3148, %v3681
      %v3769 = vadd.f32 %v3149, %v3684
      %v3770 = vadd.f32 %v3150, %v3689
      %v3771 = vadd.f32 %v3151, %v3692
      %v3772 = vadd.f32 %v3152, %v3697
      %v3773 = vadd.f32 %v3153, %v3700
      %v3774 = vadd.f32 %v3154, %v3705
      %v3775 = vadd.f32 %v3155, %v3708
      %v3776 = vadd.f32 %v3156, %v3713
      %v3777 = vadd.f32 %v3157, %v3716
      %v3778 = vadd.f32 %v3158, %v3721
      %v3779 = vadd.f32 %v3159, %v3724
      %v3780 = vadd.f32 %v3160, %v3729
      %v3781 = vadd.f32 %v3161, %v3732
      %v3782 = vadd.f32 %v3162, %v3737
      %v3783 = vld [vmem:[%s354 + $0x18] sm:$0xe]
      %s3784 = scalar_lea.vmem %s2, 14
      %v3785 = vld [vmem:[%s3784] sm:$0x3]
      %v3787 = vunpack.c.l.b16 %v3783
      %v3788 = vpack.c.b16 %v3248, %v3787
      %vm3789 = vcmask 1046528
      %v3790 = vrot.slane %v3788, 1
      %v3791 = vrot.slane %v3289, 1
      %v3792 = vsel %vm3789, %v3790, %v3791
      %v3793 = vrot.slane %v3290, 1
      %v3794 = vsel %vm3789, %v3791, %v3793
      %v3795 = vrot.slane %v3291, 1
      %v3796 = vsel %vm3789, %v3793, %v3795
      %v3797 = vrot.slane %v3292, 1
      %v3798 = vsel %vm3789, %v3795, %v3797
      %v3799 = vrot.slane %v3293, 1
      %v3800 = vsel %vm3789, %v3797, %v3799
      %v3801 = vrot.slane %v3294, 1
      %v3802 = vsel %vm3789, %v3799, %v3801
      %v3803 = vrot.slane %v3295, 1
      %v3804 = vsel %vm3789, %v3801, %v3803
      %v3805 = vrot.slane %v3296, 1
      %v3806 = vsel %vm3789, %v3803, %v3805
      %v3807 = vrot.slane %v3297, 1
      %v3808 = vsel %vm3789, %v3805, %v3807
      %v3809 = vrot.slane %v3298, 1
      %v3810 = vsel %vm3789, %v3807, %v3809
      %v3811 = vrot.slane %v3299, 1
      %v3812 = vsel %vm3789, %v3809, %v3811
      %v3813 = vrot.slane %v3300, 1
      %v3814 = vsel %vm3789, %v3811, %v3813
      %v3815 = vrot.slane %v3301, 1
      %v3816 = vsel %vm3789, %v3813, %v3815
      %v3817 = vrot.slane %v3302, 1
      %v3818 = vsel %vm3789, %v3815, %v3817
      %v3819 = vrot.slane %v3303, 1
      %v3820 = vsel %vm3789, %v3817, %v3819
      %v3821 = vrot.slane %v3304, 1
      %v3822 = vsel %vm3789, %v3819, %v3821
      %v3823 = vrot.slane %v3305, 1
      %v3824 = vsel %vm3789, %v3821, %v3823
      %v3825 = vrot.slane %v3306, 1
      %v3826 = vsel %vm3789, %v3823, %v3825
      %v3827 = vrot.slane %v3307, 1
      %v3828 = vsel %vm3789, %v3825, %v3827
      %v3829 = vrot.slane %v3308, 1
      %v3830 = vsel %vm3789, %v3827, %v3829
      %v3832 = vsel %vm595, %v3792, 0
      %v3835 = vsel %vm595, %v3794, 0
      %v3838 = vsel %vm595, %v3796, 0
      %v3841 = vsel %vm595, %v3798, 0
      %v3844 = vsel %vm595, %v3800, 0
      %v3847 = vsel %vm595, %v3802, 0
      %v3850 = vsel %vm595, %v3804, 0
      %v3853 = vsel %vm595, %v3806, 0
      %v3856 = vsel %vm595, %v3808, 0
      %v3859 = vsel %vm595, %v3810, 0
      %v3862 = vsel %vm595, %v3812, 0
      %v3865 = vsel %vm595, %v3814, 0
      %v3868 = vsel %vm595, %v3816, 0
      %v3871 = vsel %vm595, %v3818, 0
      %v3874 = vsel %vm595, %v3820, 0
      %v3877 = vsel %vm595, %v3822, 0
      %v3880 = vsel %vm595, %v3824, 0
      %v3883 = vsel %vm595, %v3826, 0
      %v3886 = vsel %vm595, %v3828, 0
      %v3889 = vsel %vm595, %v3830, 0
      %v3892 = vsel %vm595, %v3829, 0
      %v3895 = vsel %vm659, %v3785, 0
      %3897 = vmatprep.subr.bf16.mxu0 0
      %3898 = vmatpush1.bf16.msra.mxu0 %v3895
      %3899 = vmatprep.subr.bf16.mxu0 0
      %3900 = vmatpush1.bf16.msra.mxu0 0
      %3901 = vmatprep.subr.bf16.mxu0 0
      %3902 = vmatpush1.bf16.msra.mxu0 0
      %3903 = vmatprep.subr.bf16.mxu0 0
      %3904 = vmatpush1.bf16.msra.mxu0 0
      %3905 = vmatprep.subr.bf16.mxu0 0
      %3906 = vmatpush1.bf16.msra.mxu0 0
      %3907 = vmatprep.subr.bf16.mxu0 0
      %3908 = vmatpush1.bf16.msra.mxu0 0
      %3909 = vmatprep.subr.bf16.mxu0 0
      %3910 = vmatpush1.bf16.msra.mxu0 0
      %3911 = vmatprep.subr.bf16.mxu0 0
      %3912 = vmatpush1.bf16.msra.mxu0 0
      %3913 = vmatprep.subr.bf16.mxu0 0
      %3914 = vmatpush1.bf16.msra.mxu0 0
      %3915 = vmatprep.subr.bf16.mxu0 0
      %3916 = vmatpush1.bf16.msra.mxu0 0
      %3917 = vmatprep.subr.bf16.mxu0 0
      %3918 = vmatpush1.bf16.msra.mxu0 0
      %3919 = vmatprep.subr.bf16.mxu0 0
      %3920 = vmatpush1.bf16.msra.mxu0 0
      %3921 = vmatprep.subr.bf16.mxu0 0
      %3922 = vmatpush1.bf16.msra.mxu0 0
      %3923 = vmatprep.subr.bf16.mxu0 0
      %3924 = vmatpush1.bf16.msra.mxu0 0
      %3925 = vmatprep.subr.bf16.mxu0 0
      %3926 = vmatpush1.bf16.msra.mxu0 0
      %3927 = vmatprep.subr.bf16.mxu0 0
      %3928 = vmatpush1.bf16.msra.mxu0 0
      %3929 = vmatprep.mubr.bf16.mxu0 0
      %3930 = vmatmul.mubr.bf16.gmra.mrb[0].mxu0 %v3832
      %v3931 = vpop.f32.mrb[0].mxu0
      %v3932 = vadd.f32 0.0, %v3931
      %v3933 = vpop.f32.mrb[0].mxu0
      %v3934 = vpop.f32.mrb[0].mxu0
      %v3935 = vadd.f32 0.0, %v3934
      %v3936 = vpop.f32.mrb[0].mxu0
      %3937 = vmatprep.mubr.bf16.mxu0 0
      %3938 = vmatmul.mubr.bf16.gmra.mrb[0].mxu0 %v3835
      %v3939 = vpop.f32.mrb[0].mxu0
      %v3940 = vadd.f32 0.0, %v3939
      %v3941 = vpop.f32.mrb[0].mxu0
      %v3942 = vpop.f32.mrb[0].mxu0
      %v3943 = vadd.f32 0.0, %v3942
      %v3944 = vpop.f32.mrb[0].mxu0
      %3945 = vmatprep.mubr.bf16.mxu0 0
      %3946 = vmatmul.mubr.bf16.gmra.mrb[0].mxu0 %v3838
      %v3947 = vpop.f32.mrb[0].mxu0
      %v3948 = vadd.f32 0.0, %v3947
      %v3949 = vpop.f32.mrb[0].mxu0
      %v3950 = vpop.f32.mrb[0].mxu0
      %v3951 = vadd.f32 0.0, %v3950
      %v3952 = vpop.f32.mrb[0].mxu0
      %3953 = vmatprep.mubr.bf16.mxu0 0
      %3954 = vmatmul.mubr.bf16.gmra.mrb[0].mxu0 %v3841
      %v3955 = vpop.f32.mrb[0].mxu0
      %v3956 = vadd.f32 0.0, %v3955
      %v3957 = vpop.f32.mrb[0].mxu0
      %v3958 = vpop.f32.mrb[0].mxu0
      %v3959 = vadd.f32 0.0, %v3958
      %v3960 = vpop.f32.mrb[0].mxu0
      %3961 = vmatprep.mubr.bf16.mxu0 0
      %3962 = vmatmul.mubr.bf16.gmra.mrb[0].mxu0 %v3844
      %v3963 = vpop.f32.mrb[0].mxu0
      %v3964 = vadd.f32 0.0, %v3963
      %v3965 = vpop.f32.mrb[0].mxu0
      %v3966 = vpop.f32.mrb[0].mxu0
      %v3967 = vadd.f32 0.0, %v3966
      %v3968 = vpop.f32.mrb[0].mxu0
      %3969 = vmatprep.mubr.bf16.mxu0 0
      %3970 = vmatmul.mubr.bf16.gmra.mrb[0].mxu0 %v3847
      %v3971 = vpop.f32.mrb[0].mxu0
      %v3972 = vadd.f32 0.0, %v3971
      %v3973 = vpop.f32.mrb[0].mxu0
      %v3974 = vpop.f32.mrb[0].mxu0
      %v3975 = vadd.f32 0.0, %v3974
      %v3976 = vpop.f32.mrb[0].mxu0
      %3977 = vmatprep.mubr.bf16.mxu0 0
      %3978 = vmatmul.mubr.bf16.gmra.mrb[0].mxu0 %v3850
      %v3979 = vpop.f32.mrb[0].mxu0
      %v3980 = vadd.f32 0.0, %v3979
      %v3981 = vpop.f32.mrb[0].mxu0
      %v3982 = vpop.f32.mrb[0].mxu0
      %v3983 = vadd.f32 0.0, %v3982
      %v3984 = vpop.f32.mrb[0].mxu0
      %3985 = vmatprep.mubr.bf16.mxu0 0
      %3986 = vmatmul.mubr.bf16.gmra.mrb[0].mxu0 %v3853
      %v3987 = vpop.f32.mrb[0].mxu0
      %v3988 = vadd.f32 0.0, %v3987
      %v3989 = vpop.f32.mrb[0].mxu0
      %v3990 = vpop.f32.mrb[0].mxu0
      %v3991 = vadd.f32 0.0, %v3990
      %v3992 = vpop.f32.mrb[0].mxu0
      %3993 = vmatprep.mubr.bf16.mxu0 0
      %3994 = vmatmul.mubr.bf16.gmra.mrb[0].mxu0 %v3856
      %v3995 = vpop.f32.mrb[0].mxu0
      %v3996 = vadd.f32 0.0, %v3995
      %v3997 = vpop.f32.mrb[0].mxu0
      %v3998 = vpop.f32.mrb[0].mxu0
      %v3999 = vadd.f32 0.0, %v3998
      %v4000 = vpop.f32.mrb[0].mxu0
      %4001 = vmatprep.mubr.bf16.mxu0 0
      %4002 = vmatmul.mubr.bf16.gmra.mrb[0].mxu0 %v3859
      %v4003 = vpop.f32.mrb[0].mxu0
      %v4004 = vadd.f32 0.0, %v4003
      %v4005 = vpop.f32.mrb[0].mxu0
      %v4006 = vpop.f32.mrb[0].mxu0
      %v4007 = vadd.f32 0.0, %v4006
      %v4008 = vpop.f32.mrb[0].mxu0
      %4009 = vmatprep.mubr.bf16.mxu0 0
      %4010 = vmatmul.mubr.bf16.gmra.mrb[0].mxu0 %v3862
      %v4011 = vpop.f32.mrb[0].mxu0
      %v4012 = vadd.f32 0.0, %v4011
      %v4013 = vpop.f32.mrb[0].mxu0
      %v4014 = vpop.f32.mrb[0].mxu0
      %v4015 = vadd.f32 0.0, %v4014
      %v4016 = vpop.f32.mrb[0].mxu0
      %4017 = vmatprep.mubr.bf16.mxu0 0
      %4018 = vmatmul.mubr.bf16.gmra.mrb[0].mxu0 %v3865
      %v4019 = vpop.f32.mrb[0].mxu0
      %v4020 = vadd.f32 0.0, %v4019
      %v4021 = vpop.f32.mrb[0].mxu0
      %v4022 = vpop.f32.mrb[0].mxu0
      %v4023 = vadd.f32 0.0, %v4022
      %v4024 = vpop.f32.mrb[0].mxu0
      %4025 = vmatprep.mubr.bf16.mxu0 0
      %4026 = vmatmul.mubr.bf16.gmra.mrb[0].mxu0 %v3868
      %v4027 = vpop.f32.mrb[0].mxu0
      %v4028 = vadd.f32 0.0, %v4027
      %v4029 = vpop.f32.mrb[0].mxu0
      %v4030 = vpop.f32.mrb[0].mxu0
      %v4031 = vadd.f32 0.0, %v4030
      %v4032 = vpop.f32.mrb[0].mxu0
      %4033 = vmatprep.mubr.bf16.mxu0 0
      %4034 = vmatmul.mubr.bf16.gmra.mrb[0].mxu0 %v3871
      %v4035 = vpop.f32.mrb[0].mxu0
      %v4036 = vadd.f32 0.0, %v4035
      %v4037 = vpop.f32.mrb[0].mxu0
      %v4038 = vpop.f32.mrb[0].mxu0
      %v4039 = vadd.f32 0.0, %v4038
      %v4040 = vpop.f32.mrb[0].mxu0
      %4041 = vmatprep.mubr.bf16.mxu0 0
      %4042 = vmatmul.mubr.bf16.gmra.mrb[0].mxu0 %v3874
      %v4043 = vpop.f32.mrb[0].mxu0
      %v4044 = vadd.f32 0.0, %v4043
      %v4045 = vpop.f32.mrb[0].mxu0
      %v4046 = vpop.f32.mrb[0].mxu0
      %v4047 = vadd.f32 0.0, %v4046
      %v4048 = vpop.f32.mrb[0].mxu0
      %4049 = vmatprep.mubr.bf16.mxu0 0
      %4050 = vmatmul.mubr.bf16.gmra.mrb[0].mxu0 %v3877
      %v4051 = vpop.f32.mrb[0].mxu0
      %v4052 = vadd.f32 0.0, %v4051
      %v4053 = vpop.f32.mrb[0].mxu0
      %v4054 = vpop.f32.mrb[0].mxu0
      %v4055 = vadd.f32 0.0, %v4054
      %v4056 = vpop.f32.mrb[0].mxu0
      %4057 = vmatprep.mubr.bf16.mxu0 0
      %4058 = vmatmul.mubr.bf16.gmra.mrb[0].mxu0 %v3880
      %v4059 = vpop.f32.mrb[0].mxu0
      %v4060 = vadd.f32 0.0, %v4059
      %v4061 = vpop.f32.mrb[0].mxu0
      %v4062 = vpop.f32.mrb[0].mxu0
      %v4063 = vadd.f32 0.0, %v4062
      %v4064 = vpop.f32.mrb[0].mxu0
      %4065 = vmatprep.mubr.bf16.mxu0 0
      %4066 = vmatmul.mubr.bf16.gmra.mrb[0].mxu0 %v3883
      %v4067 = vpop.f32.mrb[0].mxu0
      %v4068 = vadd.f32 0.0, %v4067
      %v4069 = vpop.f32.mrb[0].mxu0
      %v4070 = vpop.f32.mrb[0].mxu0
      %v4071 = vadd.f32 0.0, %v4070
      %v4072 = vpop.f32.mrb[0].mxu0
      %4073 = vmatprep.mubr.bf16.mxu0 0
      %4074 = vmatmul.mubr.bf16.gmra.mrb[0].mxu0 %v3886
      %v4075 = vpop.f32.mrb[0].mxu0
      %v4076 = vadd.f32 0.0, %v4075
      %v4077 = vpop.f32.mrb[0].mxu0
      %v4078 = vpop.f32.mrb[0].mxu0
      %v4079 = vadd.f32 0.0, %v4078
      %v4080 = vpop.f32.mrb[0].mxu0
      %4081 = vmatprep.mubr.bf16.mxu0 0
      %4082 = vmatmul.mubr.bf16.gmra.mrb[0].mxu0 %v3889
      %v4083 = vpop.f32.mrb[0].mxu0
      %v4084 = vadd.f32 0.0, %v4083
      %v4085 = vpop.f32.mrb[0].mxu0
      %v4086 = vpop.f32.mrb[0].mxu0
      %v4087 = vadd.f32 0.0, %v4086
      %v4088 = vpop.f32.mrb[0].mxu0
      %4089 = vmatprep.mubr.bf16.mxu0 0
      %4090 = vmatmul.mubr.bf16.gmra.mrb[0].mxu0 %v3892
      %v4091 = vpop.f32.mrb[0].mxu0
      %v4092 = vadd.f32 0.0, %v4091
      %v4093 = vpop.f32.mrb[0].mxu0
      %v4094 = vpop.f32.mrb[0].mxu0
      %v4095 = vpop.f32.mrb[0].mxu0
      %4096 = vdwg.mxu0
      %v4097 = vadd.f32 %v3742, %v3932
      %v4098 = vadd.f32 %v3743, %v3935
      %v4099 = vadd.f32 %v3744, %v3940
      %v4100 = vadd.f32 %v3745, %v3943
      %v4101 = vadd.f32 %v3746, %v3948
      %v4102 = vadd.f32 %v3747, %v3951
      %v4103 = vadd.f32 %v3748, %v3956
      %v4104 = vadd.f32 %v3749, %v3959
      %v4105 = vadd.f32 %v3750, %v3964
      %v4106 = vadd.f32 %v3751, %v3967
      %v4107 = vadd.f32 %v3752, %v3972
      %v4108 = vadd.f32 %v3753, %v3975
      %v4109 = vadd.f32 %v3754, %v3980
      %v4110 = vadd.f32 %v3755, %v3983
      %v4111 = vadd.f32 %v3756, %v3988
      %v4112 = vadd.f32 %v3757, %v3991
      %v4113 = vadd.f32 %v3758, %v3996
      %v4114 = vadd.f32 %v3759, %v3999
      %v4115 = vadd.f32 %v3760, %v4004
      %v4116 = vadd.f32 %v3761, %v4007
      %v4117 = vadd.f32 %v3762, %v4012
      %v4118 = vadd.f32 %v3763, %v4015
      %v4119 = vadd.f32 %v3764, %v4020
      %v4120 = vadd.f32 %v3765, %v4023
      %v4121 = vadd.f32 %v3766, %v4028
      %v4122 = vadd.f32 %v3767, %v4031
      %v4123 = vadd.f32 %v3768, %v4036
      %v4124 = vadd.f32 %v3769, %v4039
      %v4125 = vadd.f32 %v3770, %v4044
      %v4126 = vadd.f32 %v3771, %v4047
      %v4127 = vadd.f32 %v3772, %v4052
      %v4128 = vadd.f32 %v3773, %v4055
      %v4129 = vadd.f32 %v3774, %v4060
      %v4130 = vadd.f32 %v3775, %v4063
      %v4131 = vadd.f32 %v3776, %v4068
      %v4132 = vadd.f32 %v3777, %v4071
      %v4133 = vadd.f32 %v3778, %v4076
      %v4134 = vadd.f32 %v3779, %v4079
      %v4135 = vadd.f32 %v3780, %v4084
      %v4136 = vadd.f32 %v3781, %v4087
      %v4137 = vadd.f32 %v3782, %v4092
      %v4138 = vld [vmem:[%s354 + $0xb8] sm:$0xf]
      %s4139 = scalar_lea.vmem %s2, 16
      %v4140 = vld [vmem:[%s4139] sm:$0x3]
      %v4142 = vunpack.c.l.b16 %v4138
      %v4143 = vpack.c.b16 %v4142, %v4142
      %vm4144 = vsmask.f32 6400
      %v4146 = vshrl.u32 %v3788, 16
      %v4148 = vrot.slane %v4146, 1
      %v4149 = vshll.u32 %v3788, 16
      %v4151 = vrot.slane %v4149, 2
      %v4152 = vor.u32 %v4148, %v4151
      %v4153 = vrot.slane %v3321, 1
      %v4154 = vrot.slane %v3317, 2
      %v4155 = vor.u32 %v4153, %v4154
      %v4156 = vsel %vm4144, %v4152, %v4155
      %v4157 = vrot.slane %v3329, 1
      %v4158 = vrot.slane %v3325, 2
      %v4159 = vor.u32 %v4157, %v4158
      %v4160 = vsel %vm4144, %v4155, %v4159
      %v4161 = vrot.slane %v3337, 1
      %v4162 = vrot.slane %v3333, 2
      %v4163 = vor.u32 %v4161, %v4162
      %v4164 = vsel %vm4144, %v4159, %v4163
      %v4165 = vrot.slane %v3345, 1
      %v4166 = vrot.slane %v3341, 2
      %v4167 = vor.u32 %v4165, %v4166
      %v4168 = vsel %vm4144, %v4163, %v4167
      %v4169 = vrot.slane %v3353, 1
      %v4170 = vrot.slane %v3349, 2
      %v4171 = vor.u32 %v4169, %v4170
      %v4172 = vsel %vm4144, %v4167, %v4171
      %v4173 = vrot.slane %v3361, 1
      %v4174 = vrot.slane %v3357, 2
      %v4175 = vor.u32 %v4173, %v4174
      %v4176 = vsel %vm4144, %v4171, %v4175
      %v4177 = vrot.slane %v3369, 1
      %v4178 = vrot.slane %v3365, 2
      %v4179 = vor.u32 %v4177, %v4178
      %v4180 = vsel %vm4144, %v4175, %v4179
      %v4181 = vrot.slane %v3377, 1
      %v4182 = vrot.slane %v3373, 2
      %v4183 = vor.u32 %v4181, %v4182
      %v4184 = vsel %vm4144, %v4179, %v4183
      %v4185 = vrot.slane %v3385, 1
      %v4186 = vrot.slane %v3381, 2
      %v4187 = vor.u32 %v4185, %v4186
      %v4188 = vsel %vm4144, %v4183, %v4187
      %v4189 = vrot.slane %v3393, 1
      %v4190 = vrot.slane %v3389, 2
      %v4191 = vor.u32 %v4189, %v4190
      %v4192 = vsel %vm4144, %v4187, %v4191
      %v4193 = vrot.slane %v3401, 1
      %v4194 = vrot.slane %v3397, 2
      %v4195 = vor.u32 %v4193, %v4194
      %v4196 = vsel %vm4144, %v4191, %v4195
      %v4197 = vrot.slane %v3409, 1
      %v4198 = vrot.slane %v3405, 2
      %v4199 = vor.u32 %v4197, %v4198
      %v4200 = vsel %vm4144, %v4195, %v4199
      %v4201 = vrot.slane %v3417, 1
      %v4202 = vrot.slane %v3413, 2
      %v4203 = vor.u32 %v4201, %v4202
      %v4204 = vsel %vm4144, %v4199, %v4203
      %v4205 = vrot.slane %v3425, 1
      %v4206 = vrot.slane %v3421, 2
      %v4207 = vor.u32 %v4205, %v4206
      %v4208 = vsel %vm4144, %v4203, %v4207
      %v4209 = vrot.slane %v3433, 1
      %v4210 = vrot.slane %v3429, 2
      %v4211 = vor.u32 %v4209, %v4210
      %v4212 = vsel %vm4144, %v4207, %v4211
      %v4213 = vrot.slane %v3441, 1
      %v4214 = vrot.slane %v3437, 2
      %v4215 = vor.u32 %v4213, %v4214
      %v4216 = vsel %vm4144, %v4211, %v4215
      %v4217 = vrot.slane %v3449, 1
      %v4218 = vrot.slane %v3445, 2
      %v4219 = vor.u32 %v4217, %v4218
      %v4220 = vsel %vm4144, %v4215, %v4219
      %v4221 = vrot.slane %v3457, 1
      %v4222 = vrot.slane %v3453, 2
      %v4223 = vor.u32 %v4221, %v4222
      %v4224 = vsel %vm4144, %v4219, %v4223
      %v4225 = vrot.slane %v3465, 1
      %v4226 = vrot.slane %v3461, 2
      %v4227 = vor.u32 %v4225, %v4226
      %v4228 = vsel %vm4144, %v4223, %v4227
      %v4230 = vshrl.u32 %v4143, 16
      %v4232 = vrot.slane %v4230, 1
      %v4233 = vshll.u32 %v4143, 16
      %v4235 = vrot.slane %v4233, 2
      %v4236 = vor.u32 %v4232, %v4235
      %v4237 = vsel %vm4144, %v4227, %v4236
      %v4239 = vsel %vm595, %v4156, 0
      %v4242 = vsel %vm595, %v4160, 0
      %v4245 = vsel %vm595, %v4164, 0
      %v4248 = vsel %vm595, %v4168, 0
      %v4251 = vsel %vm595, %v4172, 0
      %v4254 = vsel %vm595, %v4176, 0
      %v4257 = vsel %vm595, %v4180, 0
      %v4260 = vsel %vm595, %v4184, 0
      %v4263 = vsel %vm595, %v4188, 0
      %v4266 = vsel %vm595, %v4192, 0
      %v4269 = vsel %vm595, %v4196, 0
      %v4272 = vsel %vm595, %v4200, 0
      %v4275 = vsel %vm595, %v4204, 0
      %v4278 = vsel %vm595, %v4208, 0
      %v4281 = vsel %vm595, %v4212, 0
      %v4284 = vsel %vm595, %v4216, 0
      %v4287 = vsel %vm595, %v4220, 0
      %v4290 = vsel %vm595, %v4224, 0
      %v4293 = vsel %vm595, %v4228, 0
      %v4296 = vsel %vm595, %v4237, 0
      %v4299 = vsel %vm595, %v4236, 0
      %v4302 = vsel %vm659, %v4140, 0
      %4304 = vmatprep.subr.bf16.mxu0 0
      %4305 = vmatpush1.bf16.msra.mxu0 %v4302
      %4306 = vmatprep.subr.bf16.mxu0 0
      %4307 = vmatpush1.bf16.msra.mxu0 0
      %4308 = vmatprep.subr.bf16.mxu0 0
      %4309 = vmatpush1.bf16.msra.mxu0 0
      %4310 = vmatprep.subr.bf16.mxu0 0
      %4311 = vmatpush1.bf16.msra.mxu0 0
      %4312 = vmatprep.subr.bf16.mxu0 0
      %4313 = vmatpush1.bf16.msra.mxu0 0
      %4314 = vmatprep.subr.bf16.mxu0 0
      %4315 = vmatpush1.bf16.msra.mxu0 0
      %4316 = vmatprep.subr.bf16.mxu0 0
      %4317 = vmatpush1.bf16.msra.mxu0 0
      %4318 = vmatprep.subr.bf16.mxu0 0
      %4319 = vmatpush1.bf16.msra.mxu0 0
      %4320 = vmatprep.subr.bf16.mxu0 0
      %4321 = vmatpush1.bf16.msra.mxu0 0
      %4322 = vmatprep.subr.bf16.mxu0 0
      %4323 = vmatpush1.bf16.msra.mxu0 0
      %4324 = vmatprep.subr.bf16.mxu0 0
      %4325 = vmatpush1.bf16.msra.mxu0 0
      %4326 = vmatprep.subr.bf16.mxu0 0
      %4327 = vmatpush1.bf16.msra.mxu0 0
      %4328 = vmatprep.subr.bf16.mxu0 0
      %4329 = vmatpush1.bf16.msra.mxu0 0
      %4330 = vmatprep.subr.bf16.mxu0 0
      %4331 = vmatpush1.bf16.msra.mxu0 0
      %4332 = vmatprep.subr.bf16.mxu0 0
      %4333 = vmatpush1.bf16.msra.mxu0 0
      %4334 = vmatprep.subr.bf16.mxu0 0
      %4335 = vmatpush1.bf16.msra.mxu0 0
      %4336 = vmatprep.mubr.bf16.mxu0 0
      %4337 = vmatmul.mubr.bf16.gmra.mrb[0].mxu0 %v4239
      %v4338 = vpop.f32.mrb[0].mxu0
      %v4339 = vadd.f32 0.0, %v4338
      %v4340 = vpop.f32.mrb[0].mxu0
      %v4341 = vpop.f32.mrb[0].mxu0
      %v4342 = vadd.f32 0.0, %v4341
      %v4343 = vpop.f32.mrb[0].mxu0
      %4344 = vmatprep.mubr.bf16.mxu0 0
      %4345 = vmatmul.mubr.bf16.gmra.mrb[0].mxu0 %v4242
      %v4346 = vpop.f32.mrb[0].mxu0
      %v4347 = vadd.f32 0.0, %v4346
      %v4348 = vpop.f32.mrb[0].mxu0
      %v4349 = vpop.f32.mrb[0].mxu0
      %v4350 = vadd.f32 0.0, %v4349
      %v4351 = vpop.f32.mrb[0].mxu0
      %4352 = vmatprep.mubr.bf16.mxu0 0
      %4353 = vmatmul.mubr.bf16.gmra.mrb[0].mxu0 %v4245
      %v4354 = vpop.f32.mrb[0].mxu0
      %v4355 = vadd.f32 0.0, %v4354
      %v4356 = vpop.f32.mrb[0].mxu0
      %v4357 = vpop.f32.mrb[0].mxu0
      %v4358 = vadd.f32 0.0, %v4357
      %v4359 = vpop.f32.mrb[0].mxu0
      %4360 = vmatprep.mubr.bf16.mxu0 0
      %4361 = vmatmul.mubr.bf16.gmra.mrb[0].mxu0 %v4248
      %v4362 = vpop.f32.mrb[0].mxu0
      %v4363 = vadd.f32 0.0, %v4362
      %v4364 = vpop.f32.mrb[0].mxu0
      %v4365 = vpop.f32.mrb[0].mxu0
      %v4366 = vadd.f32 0.0, %v4365
      %v4367 = vpop.f32.mrb[0].mxu0
      %4368 = vmatprep.mubr.bf16.mxu0 0
      %4369 = vmatmul.mubr.bf16.gmra.mrb[0].mxu0 %v4251
      %v4370 = vpop.f32.mrb[0].mxu0
      %v4371 = vadd.f32 0.0, %v4370
      %v4372 = vpop.f32.mrb[0].mxu0
      %v4373 = vpop.f32.mrb[0].mxu0
      %v4374 = vadd.f32 0.0, %v4373
      %v4375 = vpop.f32.mrb[0].mxu0
      %4376 = vmatprep.mubr.bf16.mxu0 0
      %4377 = vmatmul.mubr.bf16.gmra.mrb[0].mxu0 %v4254
      %v4378 = vpop.f32.mrb[0].mxu0
      %v4379 = vadd.f32 0.0, %v4378
      %v4380 = vpop.f32.mrb[0].mxu0
      %v4381 = vpop.f32.mrb[0].mxu0
      %v4382 = vadd.f32 0.0, %v4381
      %v4383 = vpop.f32.mrb[0].mxu0
      %4384 = vmatprep.mubr.bf16.mxu0 0
      %4385 = vmatmul.mubr.bf16.gmra.mrb[0].mxu0 %v4257
      %v4386 = vpop.f32.mrb[0].mxu0
      %v4387 = vadd.f32 0.0, %v4386
      %v4388 = vpop.f32.mrb[0].mxu0
      %v4389 = vpop.f32.mrb[0].mxu0
      %v4390 = vadd.f32 0.0, %v4389
      %v4391 = vpop.f32.mrb[0].mxu0
      %4392 = vmatprep.mubr.bf16.mxu0 0
      %4393 = vmatmul.mubr.bf16.gmra.mrb[0].mxu0 %v4260
      %v4394 = vpop.f32.mrb[0].mxu0
      %v4395 = vadd.f32 0.0, %v4394
      %v4396 = vpop.f32.mrb[0].mxu0
      %v4397 = vpop.f32.mrb[0].mxu0
      %v4398 = vadd.f32 0.0, %v4397
      %v4399 = vpop.f32.mrb[0].mxu0
      %4400 = vmatprep.mubr.bf16.mxu0 0
      %4401 = vmatmul.mubr.bf16.gmra.mrb[0].mxu0 %v4263
      %v4402 = vpop.f32.mrb[0].mxu0
      %v4403 = vadd.f32 0.0, %v4402
      %v4404 = vpop.f32.mrb[0].mxu0
      %v4405 = vpop.f32.mrb[0].mxu0
      %v4406 = vadd.f32 0.0, %v4405
      %v4407 = vpop.f32.mrb[0].mxu0
      %4408 = vmatprep.mubr.bf16.mxu0 0
      %4409 = vmatmul.mubr.bf16.gmra.mrb[0].mxu0 %v4266
      %v4410 = vpop.f32.mrb[0].mxu0
      %v4411 = vadd.f32 0.0, %v4410
      %v4412 = vpop.f32.mrb[0].mxu0
      %v4413 = vpop.f32.mrb[0].mxu0
      %v4414 = vadd.f32 0.0, %v4413
      %v4415 = vpop.f32.mrb[0].mxu0
      %4416 = vmatprep.mubr.bf16.mxu0 0
      %4417 = vmatmul.mubr.bf16.gmra.mrb[0].mxu0 %v4269
      %v4418 = vpop.f32.mrb[0].mxu0
      %v4419 = vadd.f32 0.0, %v4418
      %v4420 = vpop.f32.mrb[0].mxu0
      %v4421 = vpop.f32.mrb[0].mxu0
      %v4422 = vadd.f32 0.0, %v4421
      %v4423 = vpop.f32.mrb[0].mxu0
      %4424 = vmatprep.mubr.bf16.mxu0 0
      %4425 = vmatmul.mubr.bf16.gmra.mrb[0].mxu0 %v4272
      %v4426 = vpop.f32.mrb[0].mxu0
      %v4427 = vadd.f32 0.0, %v4426
      %v4428 = vpop.f32.mrb[0].mxu0
      %v4429 = vpop.f32.mrb[0].mxu0
      %v4430 = vadd.f32 0.0, %v4429
      %v4431 = vpop.f32.mrb[0].mxu0
      %4432 = vmatprep.mubr.bf16.mxu0 0
      %4433 = vmatmul.mubr.bf16.gmra.mrb[0].mxu0 %v4275
      %v4434 = vpop.f32.mrb[0].mxu0
      %v4435 = vadd.f32 0.0, %v4434
      %v4436 = vpop.f32.mrb[0].mxu0
      %v4437 = vpop.f32.mrb[0].mxu0
      %v4438 = vadd.f32 0.0, %v4437
      %v4439 = vpop.f32.mrb[0].mxu0
      %4440 = vmatprep.mubr.bf16.mxu0 0
      %4441 = vmatmul.mubr.bf16.gmra.mrb[0].mxu0 %v4278
      %v4442 = vpop.f32.mrb[0].mxu0
      %v4443 = vadd.f32 0.0, %v4442
      %v4444 = vpop.f32.mrb[0].mxu0
      %v4445 = vpop.f32.mrb[0].mxu0
      %v4446 = vadd.f32 0.0, %v4445
      %v4447 = vpop.f32.mrb[0].mxu0
      %4448 = vmatprep.mubr.bf16.mxu0 0
      %4449 = vmatmul.mubr.bf16.gmra.mrb[0].mxu0 %v4281
      %v4450 = vpop.f32.mrb[0].mxu0
      %v4451 = vadd.f32 0.0, %v4450
      %v4452 = vpop.f32.mrb[0].mxu0
      %v4453 = vpop.f32.mrb[0].mxu0
      %v4454 = vadd.f32 0.0, %v4453
      %v4455 = vpop.f32.mrb[0].mxu0
      %4456 = vmatprep.mubr.bf16.mxu0 0
      %4457 = vmatmul.mubr.bf16.gmra.mrb[0].mxu0 %v4284
      %v4458 = vpop.f32.mrb[0].mxu0
      %v4459 = vadd.f32 0.0, %v4458
      %v4460 = vpop.f32.mrb[0].mxu0
      %v4461 = vpop.f32.mrb[0].mxu0
      %v4462 = vadd.f32 0.0, %v4461
      %v4463 = vpop.f32.mrb[0].mxu0
      %4464 = vmatprep.mubr.bf16.mxu0 0
      %4465 = vmatmul.mubr.bf16.gmra.mrb[0].mxu0 %v4287
      %v4466 = vpop.f32.mrb[0].mxu0
      %v4467 = vadd.f32 0.0, %v4466
      %v4468 = vpop.f32.mrb[0].mxu0
      %v4469 = vpop.f32.mrb[0].mxu0
      %v4470 = vadd.f32 0.0, %v4469
      %v4471 = vpop.f32.mrb[0].mxu0
      %4472 = vmatprep.mubr.bf16.mxu0 0
      %4473 = vmatmul.mubr.bf16.gmra.mrb[0].mxu0 %v4290
      %v4474 = vpop.f32.mrb[0].mxu0
      %v4475 = vadd.f32 0.0, %v4474
      %v4476 = vpop.f32.mrb[0].mxu0
      %v4477 = vpop.f32.mrb[0].mxu0
      %v4478 = vadd.f32 0.0, %v4477
      %v4479 = vpop.f32.mrb[0].mxu0
      %4480 = vmatprep.mubr.bf16.mxu0 0
      %4481 = vmatmul.mubr.bf16.gmra.mrb[0].mxu0 %v4293
      %v4482 = vpop.f32.mrb[0].mxu0
      %v4483 = vadd.f32 0.0, %v4482
      %v4484 = vpop.f32.mrb[0].mxu0
      %v4485 = vpop.f32.mrb[0].mxu0
      %v4486 = vadd.f32 0.0, %v4485
      %v4487 = vpop.f32.mrb[0].mxu0
      %4488 = vmatprep.mubr.bf16.mxu0 0
      %4489 = vmatmul.mubr.bf16.gmra.mrb[0].mxu0 %v4296
      %v4490 = vpop.f32.mrb[0].mxu0
      %v4491 = vadd.f32 0.0, %v4490
      %v4492 = vpop.f32.mrb[0].mxu0
      %v4493 = vpop.f32.mrb[0].mxu0
      %v4494 = vadd.f32 0.0, %v4493
      %v4495 = vpop.f32.mrb[0].mxu0
      %4496 = vmatprep.mubr.bf16.mxu0 0
      %4497 = vmatmul.mubr.bf16.gmra.mrb[0].mxu0 %v4299
      %v4498 = vpop.f32.mrb[0].mxu0
      %v4499 = vadd.f32 0.0, %v4498
      %v4500 = vpop.f32.mrb[0].mxu0
      %v4501 = vpop.f32.mrb[0].mxu0
      %v4502 = vpop.f32.mrb[0].mxu0
      %4503 = vdwg.mxu0
      %v4504 = vadd.f32 %v4097, %v4339
      %v4505 = vadd.f32 %v4098, %v4342
      %v4506 = vadd.f32 %v4099, %v4347
      %v4507 = vadd.f32 %v4100, %v4350
      %v4508 = vadd.f32 %v4101, %v4355
      %v4509 = vadd.f32 %v4102, %v4358
      %v4510 = vadd.f32 %v4103, %v4363
      %v4511 = vadd.f32 %v4104, %v4366
      %v4512 = vadd.f32 %v4105, %v4371
      %v4513 = vadd.f32 %v4106, %v4374
      %v4514 = vadd.f32 %v4107, %v4379
      %v4515 = vadd.f32 %v4108, %v4382
      %v4516 = vadd.f32 %v4109, %v4387
      %v4517 = vadd.f32 %v4110, %v4390
      %v4518 = vadd.f32 %v4111, %v4395
      %v4519 = vadd.f32 %v4112, %v4398
      %v4520 = vadd.f32 %v4113, %v4403
      %v4521 = vadd.f32 %v4114, %v4406
      %v4522 = vadd.f32 %v4115, %v4411
      %v4523 = vadd.f32 %v4116, %v4414
      %v4524 = vadd.f32 %v4117, %v4419
      %v4525 = vadd.f32 %v4118, %v4422
      %v4526 = vadd.f32 %v4119, %v4427
      %v4527 = vadd.f32 %v4120, %v4430
      %v4528 = vadd.f32 %v4121, %v4435
      %v4529 = vadd.f32 %v4122, %v4438
      %v4530 = vadd.f32 %v4123, %v4443
      %v4531 = vadd.f32 %v4124, %v4446
      %v4532 = vadd.f32 %v4125, %v4451
      %v4533 = vadd.f32 %v4126, %v4454
      %v4534 = vadd.f32 %v4127, %v4459
      %v4535 = vadd.f32 %v4128, %v4462
      %v4536 = vadd.f32 %v4129, %v4467
      %v4537 = vadd.f32 %v4130, %v4470
      %v4538 = vadd.f32 %v4131, %v4475
      %v4539 = vadd.f32 %v4132, %v4478
      %v4540 = vadd.f32 %v4133, %v4483
      %v4541 = vadd.f32 %v4134, %v4486
      %v4542 = vadd.f32 %v4135, %v4491
      %v4543 = vadd.f32 %v4136, %v4494
      %v4544 = vadd.f32 %v4137, %v4499
      %v4545 = vld [vmem:[%s3] sm:$0x1]
      %v4547 = vlaneseq
      %v4548 = vshrl.u32 %v4547, 7
      %v4549 = vsub.s32 0, %v4548
      %v4550 = vrot.slane %v4545, %v4549
      %v4552 = vmul.f32 %v4504, %v4550
      %v4553 = vmul.f32 %v4505, %v4550
      %v4554 = vmul.f32 %v4506, %v4550
      %v4555 = vmul.f32 %v4507, %v4550
      %v4556 = vmul.f32 %v4508, %v4550
      %v4557 = vmul.f32 %v4509, %v4550
      %v4558 = vmul.f32 %v4510, %v4550
      %v4559 = vmul.f32 %v4511, %v4550
      %v4560 = vmul.f32 %v4512, %v4550
      %v4561 = vmul.f32 %v4513, %v4550
      %v4562 = vmul.f32 %v4514, %v4550
      %v4563 = vmul.f32 %v4515, %v4550
      %v4564 = vmul.f32 %v4516, %v4550
      %v4565 = vmul.f32 %v4517, %v4550
      %v4566 = vmul.f32 %v4518, %v4550
      %v4567 = vmul.f32 %v4519, %v4550
      %v4568 = vmul.f32 %v4520, %v4550
      %v4569 = vmul.f32 %v4521, %v4550
      %v4570 = vmul.f32 %v4522, %v4550
      %v4571 = vmul.f32 %v4523, %v4550
      %v4572 = vmul.f32 %v4524, %v4550
      %v4573 = vmul.f32 %v4525, %v4550
      %v4574 = vmul.f32 %v4526, %v4550
      %v4575 = vmul.f32 %v4527, %v4550
      %v4576 = vmul.f32 %v4528, %v4550
      %v4577 = vmul.f32 %v4529, %v4550
      %v4578 = vmul.f32 %v4530, %v4550
      %v4579 = vmul.f32 %v4531, %v4550
      %v4580 = vmul.f32 %v4532, %v4550
      %v4581 = vmul.f32 %v4533, %v4550
      %v4582 = vmul.f32 %v4534, %v4550
      %v4583 = vmul.f32 %v4535, %v4550
      %v4584 = vmul.f32 %v4536, %v4550
      %v4585 = vmul.f32 %v4537, %v4550
      %v4586 = vmul.f32 %v4538, %v4550
      %v4587 = vmul.f32 %v4539, %v4550
      %v4588 = vmul.f32 %v4540, %v4550
      %v4589 = vmul.f32 %v4541, %v4550
      %v4590 = vmul.f32 %v4542, %v4550
      %v4591 = vmul.f32 %v4543, %v4550
      %v4592 = vmul.f32 %v4544, %v4550
      %v4593 = vld [vmem:[%s4] sm:$0x1]
      %v4595 = vlaneseq
      %v4596 = vshrl.u32 %v4595, 7
      %v4597 = vsub.s32 0, %v4596
      %v4598 = vrot.slane %v4593, %v4597
      %v4600 = vadd.f32 %v4552, %v4598
      %v4601 = vadd.f32 %v4553, %v4598
      %v4602 = vadd.f32 %v4554, %v4598
      %v4603 = vadd.f32 %v4555, %v4598
      %v4604 = vadd.f32 %v4556, %v4598
      %v4605 = vadd.f32 %v4557, %v4598
      %v4606 = vadd.f32 %v4558, %v4598
      %v4607 = vadd.f32 %v4559, %v4598
      %v4608 = vadd.f32 %v4560, %v4598
      %v4609 = vadd.f32 %v4561, %v4598
      %v4610 = vadd.f32 %v4562, %v4598
      %v4611 = vadd.f32 %v4563, %v4598
      %v4612 = vadd.f32 %v4564, %v4598
      %v4613 = vadd.f32 %v4565, %v4598
      %v4614 = vadd.f32 %v4566, %v4598
      %v4615 = vadd.f32 %v4567, %v4598
      %v4616 = vadd.f32 %v4568, %v4598
      %v4617 = vadd.f32 %v4569, %v4598
      %v4618 = vadd.f32 %v4570, %v4598
      %v4619 = vadd.f32 %v4571, %v4598
      %v4620 = vadd.f32 %v4572, %v4598
      %v4621 = vadd.f32 %v4573, %v4598
      %v4622 = vadd.f32 %v4574, %v4598
      %v4623 = vadd.f32 %v4575, %v4598
      %v4624 = vadd.f32 %v4576, %v4598
      %v4625 = vadd.f32 %v4577, %v4598
      %v4626 = vadd.f32 %v4578, %v4598
      %v4627 = vadd.f32 %v4579, %v4598
      %v4628 = vadd.f32 %v4580, %v4598
      %v4629 = vadd.f32 %v4581, %v4598
      %v4630 = vadd.f32 %v4582, %v4598
      %v4631 = vadd.f32 %v4583, %v4598
      %v4632 = vadd.f32 %v4584, %v4598
      %v4633 = vadd.f32 %v4585, %v4598
      %v4634 = vadd.f32 %v4586, %v4598
      %v4635 = vadd.f32 %v4587, %v4598
      %v4636 = vadd.f32 %v4588, %v4598
      %v4637 = vadd.f32 %v4589, %v4598
      %v4638 = vadd.f32 %v4590, %v4598
      %v4639 = vadd.f32 %v4591, %v4598
      %v4640 = vadd.f32 %v4592, %v4598
      %v4641 = vmax.f32 %v4600, 0.0
      %v4642 = vmax.f32 %v4601, 0.0
      %v4643 = vmax.f32 %v4602, 0.0
      %v4644 = vmax.f32 %v4603, 0.0
      %v4645 = vmax.f32 %v4604, 0.0
      %v4646 = vmax.f32 %v4605, 0.0
      %v4647 = vmax.f32 %v4606, 0.0
      %v4648 = vmax.f32 %v4607, 0.0
      %v4649 = vmax.f32 %v4608, 0.0
      %v4650 = vmax.f32 %v4609, 0.0
      %v4651 = vmax.f32 %v4610, 0.0
      %v4652 = vmax.f32 %v4611, 0.0
      %v4653 = vmax.f32 %v4612, 0.0
      %v4654 = vmax.f32 %v4613, 0.0
      %v4655 = vmax.f32 %v4614, 0.0
      %v4656 = vmax.f32 %v4615, 0.0
      %v4657 = vmax.f32 %v4616, 0.0
      %v4658 = vmax.f32 %v4617, 0.0
      %v4659 = vmax.f32 %v4618, 0.0
      %v4660 = vmax.f32 %v4619, 0.0
      %v4661 = vmax.f32 %v4620, 0.0
      %v4662 = vmax.f32 %v4621, 0.0
      %v4663 = vmax.f32 %v4622, 0.0
      %v4664 = vmax.f32 %v4623, 0.0
      %v4665 = vmax.f32 %v4624, 0.0
      %v4666 = vmax.f32 %v4625, 0.0
      %v4667 = vmax.f32 %v4626, 0.0
      %v4668 = vmax.f32 %v4627, 0.0
      %v4669 = vmax.f32 %v4628, 0.0
      %v4670 = vmax.f32 %v4629, 0.0
      %v4671 = vmax.f32 %v4630, 0.0
      %v4672 = vmax.f32 %v4631, 0.0
      %v4673 = vmax.f32 %v4632, 0.0
      %v4674 = vmax.f32 %v4633, 0.0
      %v4675 = vmax.f32 %v4634, 0.0
      %v4676 = vmax.f32 %v4635, 0.0
      %v4677 = vmax.f32 %v4636, 0.0
      %v4678 = vmax.f32 %v4637, 0.0
      %v4679 = vmax.f32 %v4638, 0.0
      %v4680 = vmax.f32 %v4639, 0.0
      %v4681 = vmax.f32 %v4640, 0.0
      %4683 = vset.pattern.permute.xlu0 0
      %4684 = vperm.xlu0 %4683, %v361
      %v4685 = vpop.permute.xlu0 %4684
      %4688 = vset.pattern.permute.xlu0 0
      %4689 = vperm.xlu0 %4688, %v362
      %v4690 = vpop.permute.xlu0 %4689
      %4693 = vset.pattern.permute.xlu0 0
      %4694 = vperm.xlu0 %4693, %v363
      %v4695 = vpop.permute.xlu0 %4694
      %4698 = vset.pattern.permute.xlu0 0
      %4699 = vperm.xlu0 %4698, %v364
      %v4700 = vpop.permute.xlu0 %4699
      %4703 = vset.pattern.permute.xlu0 0
      %4704 = vperm.xlu0 %4703, %v365
      %v4705 = vpop.permute.xlu0 %4704
      %4708 = vset.pattern.permute.xlu0 0
      %4709 = vperm.xlu0 %4708, %v366
      %v4710 = vpop.permute.xlu0 %4709
      %4713 = vset.pattern.permute.xlu0 0
      %4714 = vperm.xlu0 %4713, %v367
      %v4715 = vpop.permute.xlu0 %4714
      %4718 = vset.pattern.permute.xlu0 0
      %4719 = vperm.xlu0 %4718, %v368
      %v4720 = vpop.permute.xlu0 %4719
      %4723 = vset.pattern.permute.xlu0 0
      %4724 = vperm.xlu0 %4723, %v369
      %v4725 = vpop.permute.xlu0 %4724
      %4728 = vset.pattern.permute.xlu0 0
      %4729 = vperm.xlu0 %4728, %v370
      %v4730 = vpop.permute.xlu0 %4729
      %4733 = vset.pattern.permute.xlu0 0
      %4734 = vperm.xlu0 %4733, %v371
      %v4735 = vpop.permute.xlu0 %4734
      %4738 = vset.pattern.permute.xlu0 0
      %4739 = vperm.xlu0 %4738, %v372
      %v4740 = vpop.permute.xlu0 %4739
      %4743 = vset.pattern.permute.xlu0 0
      %4744 = vperm.xlu0 %4743, %v373
      %v4745 = vpop.permute.xlu0 %4744
      %4748 = vset.pattern.permute.xlu0 0
      %4749 = vperm.xlu0 %4748, %v374
      %v4750 = vpop.permute.xlu0 %4749
      %4753 = vset.pattern.permute.xlu0 0
      %4754 = vperm.xlu0 %4753, %v375
      %v4755 = vpop.permute.xlu0 %4754
      %4758 = vset.pattern.permute.xlu0 0
      %4759 = vperm.xlu0 %4758, %v376
      %v4760 = vpop.permute.xlu0 %4759
      %4763 = vset.pattern.permute.xlu0 0
      %4764 = vperm.xlu0 %4763, %v377
      %v4765 = vpop.permute.xlu0 %4764
      %4768 = vset.pattern.permute.xlu0 0
      %4769 = vperm.xlu0 %4768, %v378
      %v4770 = vpop.permute.xlu0 %4769
      %4773 = vset.pattern.permute.xlu0 0
      %4774 = vperm.xlu0 %4773, %v379
      %v4775 = vpop.permute.xlu0 %4774
      %4778 = vset.pattern.permute.xlu0 0
      %4779 = vperm.xlu0 %4778, %v380
      %v4780 = vpop.permute.xlu0 %4779
      %4783 = vset.pattern.permute.xlu0 0
      %4784 = vperm.xlu0 %4783, %v381
      %v4785 = vpop.permute.xlu0 %4784
      %4788 = vset.pattern.permute.xlu0 0
      %4789 = vperm.xlu0 %4788, %v382
      %v4790 = vpop.permute.xlu0 %4789
      %4793 = vset.pattern.permute.xlu0 0
      %4794 = vperm.xlu0 %4793, %v383
      %v4795 = vpop.permute.xlu0 %4794
      %4798 = vset.pattern.permute.xlu0 0
      %4799 = vperm.xlu0 %4798, %v384
      %v4800 = vpop.permute.xlu0 %4799
      %4803 = vset.pattern.permute.xlu0 0
      %4804 = vperm.xlu0 %4803, %v385
      %v4805 = vpop.permute.xlu0 %4804
      %4808 = vset.pattern.permute.xlu0 0
      %4809 = vperm.xlu0 %4808, %v386
      %v4810 = vpop.permute.xlu0 %4809
      %4813 = vset.pattern.permute.xlu0 0
      %4814 = vperm.xlu0 %4813, %v387
      %v4815 = vpop.permute.xlu0 %4814
      %4818 = vset.pattern.permute.xlu0 0
      %4819 = vperm.xlu0 %4818, %v388
      %v4820 = vpop.permute.xlu0 %4819
      %4823 = vset.pattern.permute.xlu0 0
      %4824 = vperm.xlu0 %4823, %v389
      %v4825 = vpop.permute.xlu0 %4824
      %4828 = vset.pattern.permute.xlu0 0
      %4829 = vperm.xlu0 %4828, %v390
      %v4830 = vpop.permute.xlu0 %4829
      %4833 = vset.pattern.permute.xlu0 0
      %4834 = vperm.xlu0 %4833, %v391
      %v4835 = vpop.permute.xlu0 %4834
      %4838 = vset.pattern.permute.xlu0 0
      %4839 = vperm.xlu0 %4838, %v392
      %v4840 = vpop.permute.xlu0 %4839
      %4843 = vset.pattern.permute.xlu0 0
      %4844 = vperm.xlu0 %4843, %v393
      %v4845 = vpop.permute.xlu0 %4844
      %4848 = vset.pattern.permute.xlu0 0
      %4849 = vperm.xlu0 %4848, %v394
      %v4850 = vpop.permute.xlu0 %4849
      %4853 = vset.pattern.permute.xlu0 0
      %4854 = vperm.xlu0 %4853, %v395
      %v4855 = vpop.permute.xlu0 %4854
      %4858 = vset.pattern.permute.xlu0 0
      %4859 = vperm.xlu0 %4858, %v396
      %v4860 = vpop.permute.xlu0 %4859
      %4863 = vset.pattern.permute.xlu0 0
      %4864 = vperm.xlu0 %4863, %v397
      %v4865 = vpop.permute.xlu0 %4864
      %4868 = vset.pattern.permute.xlu0 0
      %4869 = vperm.xlu0 %4868, %v398
      %v4870 = vpop.permute.xlu0 %4869
      %4873 = vset.pattern.permute.xlu0 0
      %4874 = vperm.xlu0 %4873, %v399
      %v4875 = vpop.permute.xlu0 %4874
      %4878 = vset.pattern.permute.xlu0 0
      %4879 = vperm.xlu0 %4878, %v400
      %v4880 = vpop.permute.xlu0 %4879
      %4883 = vset.pattern.permute.xlu0 0
      %4884 = vperm.xlu0 %4883, %v401
      %v4885 = vpop.permute.xlu0 %4884
      %v4887 = vmul.f32 %v4641, %v4685
      %v4888 = vmul.f32 %v4642, %v4690
      %v4889 = vmul.f32 %v4643, %v4695
      %v4890 = vmul.f32 %v4644, %v4700
      %v4891 = vmul.f32 %v4645, %v4705
      %v4892 = vmul.f32 %v4646, %v4710
      %v4893 = vmul.f32 %v4647, %v4715
      %v4894 = vmul.f32 %v4648, %v4720
      %v4895 = vmul.f32 %v4649, %v4725
      %v4896 = vmul.f32 %v4650, %v4730
      %v4897 = vmul.f32 %v4651, %v4735
      %v4898 = vmul.f32 %v4652, %v4740
      %v4899 = vmul.f32 %v4653, %v4745
      %v4900 = vmul.f32 %v4654, %v4750
      %v4901 = vmul.f32 %v4655, %v4755
      %v4902 = vmul.f32 %v4656, %v4760
      %v4903 = vmul.f32 %v4657, %v4765
      %v4904 = vmul.f32 %v4658, %v4770
      %v4905 = vmul.f32 %v4659, %v4775
      %v4906 = vmul.f32 %v4660, %v4780
      %v4907 = vmul.f32 %v4661, %v4785
      %v4908 = vmul.f32 %v4662, %v4790
      %v4909 = vmul.f32 %v4663, %v4795
      %v4910 = vmul.f32 %v4664, %v4800
      %v4911 = vmul.f32 %v4665, %v4805
      %v4912 = vmul.f32 %v4666, %v4810
      %v4913 = vmul.f32 %v4667, %v4815
      %v4914 = vmul.f32 %v4668, %v4820
      %v4915 = vmul.f32 %v4669, %v4825
      %v4916 = vmul.f32 %v4670, %v4830
      %v4917 = vmul.f32 %v4671, %v4835
      %v4918 = vmul.f32 %v4672, %v4840
      %v4919 = vmul.f32 %v4673, %v4845
      %v4920 = vmul.f32 %v4674, %v4850
      %v4921 = vmul.f32 %v4675, %v4855
      %v4922 = vmul.f32 %v4676, %v4860
      %v4923 = vmul.f32 %v4677, %v4865
      %v4924 = vmul.f32 %v4678, %v4870
      %v4925 = vmul.f32 %v4679, %v4875
      %v4926 = vmul.f32 %v4680, %v4880
      %v4927 = vmul.f32 %v4681, %v4885
      %vm4928 = vcmask 60416
      %4929 = vst.msk [vmem:[#allocation2] sm:$0xf] %vm4928, 0
      %4930 = vst.msk [vmem:[#allocation2 + $0x4] sm:$0xf] %vm4928, 0
      %4931 = vst.msk [vmem:[#allocation2 + $0x8] sm:$0xf] %vm4928, 0
      %4932 = vst.msk [vmem:[#allocation2 + $0xc] sm:$0xf] %vm4928, 0
      %vm4933 = vcmask 60418
      %4934 = vst.msk [vmem:[#allocation2 + $0xb0] sm:$0xc] %vm4933, 0
      %4935 = vst.msk [vmem:[#allocation2 + $0xb4] sm:$0xf] %vm4928, 0
      %4936 = vst.msk [vmem:[#allocation2 + $0xb8] sm:$0xf] %vm4928, 0
      %4937 = vst.msk [vmem:[#allocation2 + $0xbc] sm:$0xf] %vm4928, 0
      %vm4938 = vcmask 58368
      %4939 = vst.msk [vmem:[#allocation2 + $0xc0] sm:$0x3] %vm4938, 0
      %v4940 = vpack.c.bf16 %v4888, %v4887
      %v4941 = vpack.c.bf16 %v4890, %v4889
      %v4942 = vpack.c.bf16 %v4892, %v4891
      %v4943 = vpack.c.bf16 %v4894, %v4893
      %v4944 = vpack.c.bf16 %v4896, %v4895
      %v4945 = vpack.c.bf16 %v4898, %v4897
      %v4946 = vpack.c.bf16 %v4900, %v4899
      %v4947 = vpack.c.bf16 %v4902, %v4901
      %v4948 = vpack.c.bf16 %v4904, %v4903
      %v4949 = vpack.c.bf16 %v4906, %v4905
      %v4950 = vpack.c.bf16 %v4908, %v4907
      %v4951 = vpack.c.bf16 %v4910, %v4909
      %v4952 = vpack.c.bf16 %v4912, %v4911
      %v4953 = vpack.c.bf16 %v4914, %v4913
      %v4954 = vpack.c.bf16 %v4916, %v4915
      %v4955 = vpack.c.bf16 %v4918, %v4917
      %v4956 = vpack.c.bf16 %v4920, %v4919
      %v4957 = vpack.c.bf16 %v4922, %v4921
      %v4958 = vpack.c.bf16 %v4924, %v4923
      %v4959 = vpack.c.bf16 %v4926, %v4925
      %v4960 = vpack.c.bf16 %v4927, %v4927
      %v4982 = vunpack.c.l.b16 %v4940
      %v4983 = vunpack.c.h.b16 %v4940
      %v4984 = vunpack.c.l.b16 %v4941
      %v4985 = vunpack.c.h.b16 %v4941
      %v4986 = vunpack.c.l.b16 %v4942
      %v4987 = vunpack.c.h.b16 %v4942
      %v4988 = vunpack.c.l.b16 %v4943
      %v4989 = vunpack.c.h.b16 %v4943
      %v4990 = vunpack.c.l.b16 %v4944
      %v4991 = vunpack.c.h.b16 %v4944
      %v4992 = vunpack.c.l.b16 %v4945
      %v4993 = vunpack.c.h.b16 %v4945
      %v4994 = vunpack.c.l.b16 %v4946
      %v4995 = vunpack.c.h.b16 %v4946
      %v4996 = vunpack.c.l.b16 %v4947
      %v4997 = vunpack.c.h.b16 %v4947
      %v4998 = vunpack.c.l.b16 %v4948
      %v4999 = vunpack.c.h.b16 %v4948
      %v5000 = vunpack.c.l.b16 %v4949
      %v5001 = vunpack.c.h.b16 %v4949
      %v5002 = vunpack.c.l.b16 %v4950
      %v5003 = vunpack.c.h.b16 %v4950
      %v5004 = vunpack.c.l.b16 %v4951
      %v5005 = vunpack.c.h.b16 %v4951
      %v5006 = vunpack.c.l.b16 %v4952
      %v5007 = vunpack.c.h.b16 %v4952
      %v5008 = vunpack.c.l.b16 %v4953
      %v5009 = vunpack.c.h.b16 %v4953
      %v5010 = vunpack.c.l.b16 %v4954
      %v5011 = vunpack.c.h.b16 %v4954
      %v5012 = vunpack.c.l.b16 %v4955
      %v5013 = vunpack.c.h.b16 %v4955
      %v5014 = vunpack.c.l.b16 %v4956
      %v5015 = vunpack.c.h.b16 %v4956
      %v5016 = vunpack.c.l.b16 %v4957
      %v5017 = vunpack.c.h.b16 %v4957
      %v5018 = vunpack.c.l.b16 %v4958
      %v5019 = vunpack.c.h.b16 %v4958
      %v5020 = vunpack.c.l.b16 %v4959
      %v5021 = vunpack.c.h.b16 %v4959
      %v5022 = vunpack.c.l.b16 %v4960
      %v5023 = vpack.c.b16 %v4982, %v4982
      %v5024 = vpack.c.b16 %v4983, %v4983
      %v5025 = vpack.c.b16 %v4984, %v4984
      %v5026 = vpack.c.b16 %v4985, %v4985
      %v5027 = vpack.c.b16 %v4986, %v4986
      %v5028 = vpack.c.b16 %v4987, %v4987
      %v5029 = vpack.c.b16 %v4988, %v4988
      %v5030 = vpack.c.b16 %v4989, %v4989
      %v5031 = vpack.c.b16 %v4990, %v4990
      %v5032 = vpack.c.b16 %v4991, %v4991
      %v5033 = vpack.c.b16 %v4992, %v4992
      %v5034 = vpack.c.b16 %v4993, %v4993
      %v5035 = vpack.c.b16 %v4994, %v4994
      %v5036 = vpack.c.b16 %v4995, %v4995
      %v5037 = vpack.c.b16 %v4996, %v4996
      %v5038 = vpack.c.b16 %v4997, %v4997
      %v5039 = vpack.c.b16 %v4998, %v4998
      %v5040 = vpack.c.b16 %v4999, %v4999
      %v5041 = vpack.c.b16 %v5000, %v5000
      %v5042 = vpack.c.b16 %v5001, %v5001
      %v5043 = vpack.c.b16 %v5002, %v5002
      %v5044 = vpack.c.b16 %v5003, %v5003
      %v5045 = vpack.c.b16 %v5004, %v5004
      %v5046 = vpack.c.b16 %v5005, %v5005
      %v5047 = vpack.c.b16 %v5006, %v5006
      %v5048 = vpack.c.b16 %v5007, %v5007
      %v5049 = vpack.c.b16 %v5008, %v5008
      %v5050 = vpack.c.b16 %v5009, %v5009
      %v5051 = vpack.c.b16 %v5010, %v5010
      %v5052 = vpack.c.b16 %v5011, %v5011
      %v5053 = vpack.c.b16 %v5012, %v5012
      %v5054 = vpack.c.b16 %v5013, %v5013
      %v5055 = vpack.c.b16 %v5014, %v5014
      %v5056 = vpack.c.b16 %v5015, %v5015
      %v5057 = vpack.c.b16 %v5016, %v5016
      %v5058 = vpack.c.b16 %v5017, %v5017
      %v5059 = vpack.c.b16 %v5018, %v5018
      %v5060 = vpack.c.b16 %v5019, %v5019
      %v5061 = vpack.c.b16 %v5020, %v5020
      %v5062 = vpack.c.b16 %v5021, %v5021
      %v5063 = vpack.c.b16 %v5022, %v5022
      %5105 = vst.msk [vmem:[#allocation2 + $0x10] sm:$0xf] %vm4928, %v5023
      %5106 = vst.msk [vmem:[#allocation2 + $0x14] sm:$0xf] %vm4928, %v5024
      %5107 = vst.msk [vmem:[#allocation2 + $0x18] sm:$0xf] %vm4928, %v5025
      %5108 = vst.msk [vmem:[#allocation2 + $0x1c] sm:$0xf] %vm4928, %v5026
      %5109 = vst.msk [vmem:[#allocation2 + $0x20] sm:$0xf] %vm4928, %v5027
      %5110 = vst.msk [vmem:[#allocation2 + $0x24] sm:$0xf] %vm4928, %v5028
      %5111 = vst.msk [vmem:[#allocation2 + $0x28] sm:$0xf] %vm4928, %v5029
      %5112 = vst.msk [vmem:[#allocation2 + $0x2c] sm:$0xf] %vm4928, %v5030
      %5113 = vst.msk [vmem:[#allocation2 + $0x30] sm:$0xf] %vm4928, %v5031
      %5114 = vst.msk [vmem:[#allocation2 + $0x34] sm:$0xf] %vm4928, %v5032
      %5115 = vst.msk [vmem:[#allocation2 + $0x38] sm:$0xf] %vm4928, %v5033
      %5116 = vst.msk [vmem:[#allocation2 + $0x3c] sm:$0xf] %vm4928, %v5034
      %5117 = vst.msk [vmem:[#allocation2 + $0x40] sm:$0xf] %vm4928, %v5035
      %5118 = vst.msk [vmem:[#allocation2 + $0x44] sm:$0xf] %vm4928, %v5036
      %5119 = vst.msk [vmem:[#allocation2 + $0x48] sm:$0xf] %vm4928, %v5037
      %5120 = vst.msk [vmem:[#allocation2 + $0x4c] sm:$0xf] %vm4928, %v5038
      %5121 = vst.msk [vmem:[#allocation2 + $0x50] sm:$0xf] %vm4928, %v5039
      %5122 = vst.msk [vmem:[#allocation2 + $0x54] sm:$0xf] %vm4928, %v5040
      %5123 = vst.msk [vmem:[#allocation2 + $0x58] sm:$0xf] %vm4928, %v5041
      %5124 = vst.msk [vmem:[#allocation2 + $0x5c] sm:$0xf] %vm4928, %v5042
      %5125 = vst.msk [vmem:[#allocation2 + $0x60] sm:$0xf] %vm4928, %v5043
      %5126 = vst.msk [vmem:[#allocation2 + $0x64] sm:$0xf] %vm4928, %v5044
      %5127 = vst.msk [vmem:[#allocation2 + $0x68] sm:$0xf] %vm4928, %v5045
      %5128 = vst.msk [vmem:[#allocation2 + $0x6c] sm:$0xf] %vm4928, %v5046
      %5129 = vst.msk [vmem:[#allocation2 + $0x70] sm:$0xf] %vm4928, %v5047
      %5130 = vst.msk [vmem:[#allocation2 + $0x74] sm:$0xf] %vm4928, %v5048
      %5131 = vst.msk [vmem:[#allocation2 + $0x78] sm:$0xf] %vm4928, %v5049
      %5132 = vst.msk [vmem:[#allocation2 + $0x7c] sm:$0xf] %vm4928, %v5050
      %5133 = vst.msk [vmem:[#allocation2 + $0x80] sm:$0xf] %vm4928, %v5051
      %5134 = vst.msk [vmem:[#allocation2 + $0x84] sm:$0xf] %vm4928, %v5052
      %5135 = vst.msk [vmem:[#allocation2 + $0x88] sm:$0xf] %vm4928, %v5053
      %5136 = vst.msk [vmem:[#allocation2 + $0x8c] sm:$0xf] %vm4928, %v5054
      %5137 = vst.msk [vmem:[#allocation2 + $0x90] sm:$0xf] %vm4928, %v5055
      %5138 = vst.msk [vmem:[#allocation2 + $0x94] sm:$0xf] %vm4928, %v5056
      %5139 = vst.msk [vmem:[#allocation2 + $0x98] sm:$0xf] %vm4928, %v5057
      %5140 = vst.msk [vmem:[#allocation2 + $0x9c] sm:$0xf] %vm4928, %v5058
      %5141 = vst.msk [vmem:[#allocation2 + $0xa0] sm:$0xf] %vm4928, %v5059
      %5142 = vst.msk [vmem:[#allocation2 + $0xa4] sm:$0xf] %vm4928, %v5060
      %5143 = vst.msk [vmem:[#allocation2 + $0xa8] sm:$0xf] %vm4928, %v5061
      %5144 = vst.msk [vmem:[#allocation2 + $0xac] sm:$0xf] %vm4928, %v5062
      %5145 = vst.msk [vmem:[#allocation2 + $0xb0] sm:$0x3] %vm4938, %v5063
      %v5146 = vld [vmem:[#allocation2 + $0x4] sm:$0xc]
      %v5147 = vld [vmem:[#allocation2 + $0x8] sm:$0xf]
      %v5148 = vld [vmem:[#allocation2 + $0xc] sm:$0xf]
      %v5149 = vld [vmem:[#allocation2 + $0x10] sm:$0xf]
      %v5150 = vld [vmem:[#allocation2 + $0x14] sm:$0xf]
      %v5151 = vld [vmem:[#allocation2 + $0x18] sm:$0xf]
      %v5152 = vld [vmem:[#allocation2 + $0x1c] sm:$0xf]
      %v5153 = vld [vmem:[#allocation2 + $0x20] sm:$0xf]
      %v5154 = vld [vmem:[#allocation2 + $0x24] sm:$0xf]
      %v5155 = vld [vmem:[#allocation2 + $0x28] sm:$0xf]
      %v5156 = vld [vmem:[#allocation2 + $0x2c] sm:$0xf]
      %v5157 = vld [vmem:[#allocation2 + $0x30] sm:$0xf]
      %v5158 = vld [vmem:[#allocation2 + $0x34] sm:$0xf]
      %v5159 = vld [vmem:[#allocation2 + $0x38] sm:$0xf]
      %v5160 = vld [vmem:[#allocation2 + $0x3c] sm:$0xf]
      %v5161 = vld [vmem:[#allocation2 + $0x40] sm:$0xf]
      %v5162 = vld [vmem:[#allocation2 + $0x44] sm:$0xf]
      %v5163 = vld [vmem:[#allocation2 + $0x48] sm:$0xf]
      %v5164 = vld [vmem:[#allocation2 + $0x4c] sm:$0xf]
      %v5165 = vld [vmem:[#allocation2 + $0x50] sm:$0xf]
      %v5166 = vld [vmem:[#allocation2 + $0x54] sm:$0xf]
      %v5167 = vld [vmem:[#allocation2 + $0x58] sm:$0xf]
      %v5168 = vld [vmem:[#allocation2 + $0x5c] sm:$0xf]
      %v5169 = vld [vmem:[#allocation2 + $0x60] sm:$0xf]
      %v5170 = vld [vmem:[#allocation2 + $0x64] sm:$0xf]
      %v5171 = vld [vmem:[#allocation2 + $0x68] sm:$0xf]
      %v5172 = vld [vmem:[#allocation2 + $0x6c] sm:$0xf]
      %v5173 = vld [vmem:[#allocation2 + $0x70] sm:$0xf]
      %v5174 = vld [vmem:[#allocation2 + $0x74] sm:$0xf]
      %v5175 = vld [vmem:[#allocation2 + $0x78] sm:$0xf]
      %v5176 = vld [vmem:[#allocation2 + $0x7c] sm:$0xf]
      %v5177 = vld [vmem:[#allocation2 + $0x80] sm:$0xf]
      %v5178 = vld [vmem:[#allocation2 + $0x84] sm:$0xf]
      %v5179 = vld [vmem:[#allocation2 + $0x88] sm:$0xf]
      %v5180 = vld [vmem:[#allocation2 + $0x8c] sm:$0xf]
      %v5181 = vld [vmem:[#allocation2 + $0x90] sm:$0xf]
      %v5182 = vld [vmem:[#allocation2 + $0x94] sm:$0xf]
      %v5183 = vld [vmem:[#allocation2 + $0x98] sm:$0xf]
      %v5184 = vld [vmem:[#allocation2 + $0x9c] sm:$0xf]
      %v5185 = vld [vmem:[#allocation2 + $0xa0] sm:$0xf]
      %v5186 = vld [vmem:[#allocation2 + $0xa4] sm:$0xf]
      %v5187 = vld [vmem:[#allocation2 + $0xa8] sm:$0x1]
      %v5188 = vld [vmem:[%s5] sm:$0xf]
      %v5189 = vld [vmem:[#allocation2 + $0x4] sm:$0x8]
      %s5190 = scalar_lea.vmem %s5, 4
      %v5191 = vld [vmem:[%s5190] sm:$0xf]
      %v5234 = vunpack.c.l.b16 %v5189
      %v5235 = vunpack.c.l.b16 %v5147
      %v5236 = vunpack.c.l.b16 %v5148
      %v5237 = vunpack.c.l.b16 %v5149
      %v5238 = vunpack.c.l.b16 %v5150
      %v5239 = vunpack.c.l.b16 %v5151
      %v5240 = vunpack.c.l.b16 %v5152
      %v5241 = vunpack.c.l.b16 %v5153
      %v5242 = vunpack.c.l.b16 %v5154
      %v5243 = vunpack.c.l.b16 %v5155
      %v5244 = vunpack.c.l.b16 %v5156
      %v5245 = vunpack.c.l.b16 %v5157
      %v5246 = vunpack.c.l.b16 %v5158
      %v5247 = vunpack.c.l.b16 %v5159
      %v5248 = vunpack.c.l.b16 %v5160
      %v5249 = vunpack.c.l.b16 %v5161
      %v5250 = vunpack.c.l.b16 %v5162
      %v5251 = vunpack.c.l.b16 %v5163
      %v5252 = vunpack.c.l.b16 %v5164
      %v5253 = vunpack.c.l.b16 %v5165
      %v5254 = vunpack.c.l.b16 %v5166
      %v5255 = vunpack.c.l.b16 %v5167
      %v5256 = vunpack.c.l.b16 %v5168
      %v5257 = vunpack.c.l.b16 %v5169
      %v5258 = vunpack.c.l.b16 %v5170
      %v5259 = vunpack.c.l.b16 %v5171
      %v5260 = vunpack.c.l.b16 %v5172
      %v5261 = vunpack.c.l.b16 %v5173
      %v5262 = vunpack.c.l.b16 %v5174
      %v5263 = vunpack.c.l.b16 %v5175
      %v5264 = vunpack.c.l.b16 %v5176
      %v5265 = vunpack.c.l.b16 %v5177
      %v5266 = vunpack.c.l.b16 %v5178
      %v5267 = vunpack.c.l.b16 %v5179
      %v5268 = vunpack.c.l.b16 %v5180
      %v5269 = vunpack.c.l.b16 %v5181
      %v5270 = vunpack.c.l.b16 %v5182
      %v5271 = vunpack.c.l.b16 %v5183
      %v5272 = vunpack.c.l.b16 %v5184
      %v5273 = vunpack.c.l.b16 %v5185
      %v5274 = vunpack.c.l.b16 %v5186
      %v5275 = vunpack.c.l.b16 %v5187
      %v5276 = vpack.c.b16 %v5235, %v5234
      %v5277 = vpack.c.b16 %v5237, %v5236
      %v5278 = vpack.c.b16 %v5239, %v5238
      %v5279 = vpack.c.b16 %v5241, %v5240
      %v5280 = vpack.c.b16 %v5243, %v5242
      %v5281 = vpack.c.b16 %v5245, %v5244
      %v5282 = vpack.c.b16 %v5247, %v5246
      %v5283 = vpack.c.b16 %v5249, %v5248
      %v5284 = vpack.c.b16 %v5251, %v5250
      %v5285 = vpack.c.b16 %v5253, %v5252
      %v5286 = vpack.c.b16 %v5255, %v5254
      %v5287 = vpack.c.b16 %v5257, %v5256
      %v5288 = vpack.c.b16 %v5259, %v5258
      %v5289 = vpack.c.b16 %v5261, %v5260
      %v5290 = vpack.c.b16 %v5263, %v5262
      %v5291 = vpack.c.b16 %v5265, %v5264
      %v5292 = vpack.c.b16 %v5267, %v5266
      %v5293 = vpack.c.b16 %v5269, %v5268
      %v5294 = vpack.c.b16 %v5271, %v5270
      %v5295 = vpack.c.b16 %v5273, %v5272
      %v5296 = vpack.c.b16 %v5275, %v5274
      %v5297 = vrot.slane %v5276, 3
      %v5298 = vrot.slane %v5277, 3
      %v5299 = vsel %vm553, %v5297, %v5298
      %v5300 = vrot.slane %v5278, 3
      %v5301 = vsel %vm553, %v5298, %v5300
      %v5302 = vrot.slane %v5279, 3
      %v5303 = vsel %vm553, %v5300, %v5302
      %v5304 = vrot.slane %v5280, 3
      %v5305 = vsel %vm553, %v5302, %v5304
      %v5306 = vrot.slane %v5281, 3
      %v5307 = vsel %vm553, %v5304, %v5306
      %v5308 = vrot.slane %v5282, 3
      %v5309 = vsel %vm553, %v5306, %v5308
      %v5310 = vrot.slane %v5283, 3
      %v5311 = vsel %vm553, %v5308, %v5310
      %v5312 = vrot.slane %v5284, 3
      %v5313 = vsel %vm553, %v5310, %v5312
      %v5314 = vrot.slane %v5285, 3
      %v5315 = vsel %vm553, %v5312, %v5314
      %v5316 = vrot.slane %v5286, 3
      %v5317 = vsel %vm553, %v5314, %v5316
      %v5318 = vrot.slane %v5287, 3
      %v5319 = vsel %vm553, %v5316, %v5318
      %v5320 = vrot.slane %v5288, 3
      %v5321 = vsel %vm553, %v5318, %v5320
      %v5322 = vrot.slane %v5289, 3
      %v5323 = vsel %vm553, %v5320, %v5322
      %v5324 = vrot.slane %v5290, 3
      %v5325 = vsel %vm553, %v5322, %v5324
      %v5326 = vrot.slane %v5291, 3
      %v5327 = vsel %vm553, %v5324, %v5326
      %v5328 = vrot.slane %v5292, 3
      %v5329 = vsel %vm553, %v5326, %v5328
      %v5330 = vrot.slane %v5293, 3
      %v5331 = vsel %vm553, %v5328, %v5330
      %v5332 = vrot.slane %v5294, 3
      %v5333 = vsel %vm553, %v5330, %v5332
      %v5334 = vrot.slane %v5295, 3
      %v5335 = vsel %vm553, %v5332, %v5334
      %v5336 = vrot.slane %v5296, 3
      %v5337 = vsel %vm553, %v5334, %v5336
      %vm5338 = vcmask 64512
      %v5340 = vsel %vm5338, %v5299, 0
      %v5343 = vsel %vm5338, %v5301, 0
      %v5346 = vsel %vm5338, %v5303, 0
      %v5349 = vsel %vm5338, %v5305, 0
      %v5352 = vsel %vm5338, %v5307, 0
      %v5355 = vsel %vm5338, %v5309, 0
      %v5358 = vsel %vm5338, %v5311, 0
      %v5361 = vsel %vm5338, %v5313, 0
      %v5364 = vsel %vm5338, %v5315, 0
      %v5367 = vsel %vm5338, %v5317, 0
      %v5370 = vsel %vm5338, %v5319, 0
      %v5373 = vsel %vm5338, %v5321, 0
      %v5376 = vsel %vm5338, %v5323, 0
      %v5379 = vsel %vm5338, %v5325, 0
      %v5382 = vsel %vm5338, %v5327, 0
      %v5385 = vsel %vm5338, %v5329, 0
      %v5388 = vsel %vm5338, %v5331, 0
      %v5391 = vsel %vm5338, %v5333, 0
      %v5394 = vsel %vm5338, %v5335, 0
      %v5397 = vsel %vm5338, %v5337, 0
      %v5400 = vsel %vm5338, %v5336, 0
      %vm5402 = vcmask 1043456
      %v5404 = vsel %vm5402, %v5191, 0
      %5406 = vmatprep.subr.bf16.mxu0 0
      %5407 = vmatpush1.bf16.msra.mxu0 %v5404
      %5408 = vmatprep.subr.bf16.mxu0 0
      %5409 = vmatpush1.bf16.msra.mxu0 0
      %5410 = vmatprep.subr.bf16.mxu0 0
      %5411 = vmatpush1.bf16.msra.mxu0 0
      %5412 = vmatprep.subr.bf16.mxu0 0
      %5413 = vmatpush1.bf16.msra.mxu0 0
      %5414 = vmatprep.subr.bf16.mxu0 0
      %5415 = vmatpush1.bf16.msra.mxu0 0
      %5416 = vmatprep.subr.bf16.mxu0 0
      %5417 = vmatpush1.bf16.msra.mxu0 0
      %5418 = vmatprep.subr.bf16.mxu0 0
      %5419 = vmatpush1.bf16.msra.mxu0 0
      %5420 = vmatprep.subr.bf16.mxu0 0
      %5421 = vmatpush1.bf16.msra.mxu0 0
      %5422 = vmatprep.subr.bf16.mxu0 0
      %5423 = vmatpush1.bf16.msra.mxu0 0
      %5424 = vmatprep.subr.bf16.mxu0 0
      %5425 = vmatpush1.bf16.msra.mxu0 0
      %5426 = vmatprep.subr.bf16.mxu0 0
      %5427 = vmatpush1.bf16.msra.mxu0 0
      %5428 = vmatprep.subr.bf16.mxu0 0
      %5429 = vmatpush1.bf16.msra.mxu0 0
      %5430 = vmatprep.subr.bf16.mxu0 0
      %5431 = vmatpush1.bf16.msra.mxu0 0
      %5432 = vmatprep.subr.bf16.mxu0 0
      %5433 = vmatpush1.bf16.msra.mxu0 0
      %5434 = vmatprep.subr.bf16.mxu0 0
      %5435 = vmatpush1.bf16.msra.mxu0 0
      %5436 = vmatprep.subr.bf16.mxu0 0
      %5437 = vmatpush1.bf16.msra.mxu0 0
      %5438 = vmatprep.mubr.bf16.mxu0 0
      %5439 = vmatmul.mubr.bf16.gmra.mrb[0].mxu0 %v5340
      %v5440 = vpop.f32.mrb[0].mxu0
      %v5441 = vadd.f32 0.0, %v5440
      %v5442 = vpop.f32.mrb[0].mxu0
      %v5443 = vpop.f32.mrb[0].mxu0
      %v5444 = vadd.f32 0.0, %v5443
      %v5445 = vpop.f32.mrb[0].mxu0
      %5446 = vmatprep.mubr.bf16.mxu0 0
      %5447 = vmatmul.mubr.bf16.gmra.mrb[0].mxu0 %v5343
      %v5448 = vpop.f32.mrb[0].mxu0
      %v5449 = vadd.f32 0.0, %v5448
      %v5450 = vpop.f32.mrb[0].mxu0
      %v5451 = vpop.f32.mrb[0].mxu0
      %v5452 = vadd.f32 0.0, %v5451
      %v5453 = vpop.f32.mrb[0].mxu0
      %5454 = vmatprep.mubr.bf16.mxu0 0
      %5455 = vmatmul.mubr.bf16.gmra.mrb[0].mxu0 %v5346
      %v5456 = vpop.f32.mrb[0].mxu0
      %v5457 = vadd.f32 0.0, %v5456
      %v5458 = vpop.f32.mrb[0].mxu0
      %v5459 = vpop.f32.mrb[0].mxu0
      %v5460 = vadd.f32 0.0, %v5459
      %v5461 = vpop.f32.mrb[0].mxu0
      %5462 = vmatprep.mubr.bf16.mxu0 0
      %5463 = vmatmul.mubr.bf16.gmra.mrb[0].mxu0 %v5349
      %v5464 = vpop.f32.mrb[0].mxu0
      %v5465 = vadd.f32 0.0, %v5464
      %v5466 = vpop.f32.mrb[0].mxu0
      %v5467 = vpop.f32.mrb[0].mxu0
      %v5468 = vadd.f32 0.0, %v5467
      %v5469 = vpop.f32.mrb[0].mxu0
      %5470 = vmatprep.mubr.bf16.mxu0 0
      %5471 = vmatmul.mubr.bf16.gmra.mrb[0].mxu0 %v5352
      %v5472 = vpop.f32.mrb[0].mxu0
      %v5473 = vadd.f32 0.0, %v5472
      %v5474 = vpop.f32.mrb[0].mxu0
      %v5475 = vpop.f32.mrb[0].mxu0
      %v5476 = vadd.f32 0.0, %v5475
      %v5477 = vpop.f32.mrb[0].mxu0
      %5478 = vmatprep.mubr.bf16.mxu0 0
      %5479 = vmatmul.mubr.bf16.gmra.mrb[0].mxu0 %v5355
      %v5480 = vpop.f32.mrb[0].mxu0
      %v5481 = vadd.f32 0.0, %v5480
      %v5482 = vpop.f32.mrb[0].mxu0
      %v5483 = vpop.f32.mrb[0].mxu0
      %v5484 = vadd.f32 0.0, %v5483
      %v5485 = vpop.f32.mrb[0].mxu0
      %5486 = vmatprep.mubr.bf16.mxu0 0
      %5487 = vmatmul.mubr.bf16.gmra.mrb[0].mxu0 %v5358
      %v5488 = vpop.f32.mrb[0].mxu0
      %v5489 = vadd.f32 0.0, %v5488
      %v5490 = vpop.f32.mrb[0].mxu0
      %v5491 = vpop.f32.mrb[0].mxu0
      %v5492 = vadd.f32 0.0, %v5491
      %v5493 = vpop.f32.mrb[0].mxu0
      %5494 = vmatprep.mubr.bf16.mxu0 0
      %5495 = vmatmul.mubr.bf16.gmra.mrb[0].mxu0 %v5361
      %v5496 = vpop.f32.mrb[0].mxu0
      %v5497 = vadd.f32 0.0, %v5496
      %v5498 = vpop.f32.mrb[0].mxu0
      %v5499 = vpop.f32.mrb[0].mxu0
      %v5500 = vadd.f32 0.0, %v5499
      %v5501 = vpop.f32.mrb[0].mxu0
      %5502 = vmatprep.mubr.bf16.mxu0 0
      %5503 = vmatmul.mubr.bf16.gmra.mrb[0].mxu0 %v5364
      %v5504 = vpop.f32.mrb[0].mxu0
      %v5505 = vadd.f32 0.0, %v5504
      %v5506 = vpop.f32.mrb[0].mxu0
      %v5507 = vpop.f32.mrb[0].mxu0
      %v5508 = vadd.f32 0.0, %v5507
      %v5509 = vpop.f32.mrb[0].mxu0
      %5510 = vmatprep.mubr.bf16.mxu0 0
      %5511 = vmatmul.mubr.bf16.gmra.mrb[0].mxu0 %v5367
      %v5512 = vpop.f32.mrb[0].mxu0
      %v5513 = vadd.f32 0.0, %v5512
      %v5514 = vpop.f32.mrb[0].mxu0
      %v5515 = vpop.f32.mrb[0].mxu0
      %v5516 = vadd.f32 0.0, %v5515
      %v5517 = vpop.f32.mrb[0].mxu0
      %5518 = vmatprep.mubr.bf16.mxu0 0
      %5519 = vmatmul.mubr.bf16.gmra.mrb[0].mxu0 %v5370
      %v5520 = vpop.f32.mrb[0].mxu0
      %v5521 = vadd.f32 0.0, %v5520
      %v5522 = vpop.f32.mrb[0].mxu0
      %v5523 = vpop.f32.mrb[0].mxu0
      %v5524 = vadd.f32 0.0, %v5523
      %v5525 = vpop.f32.mrb[0].mxu0
      %5526 = vmatprep.mubr.bf16.mxu0 0
      %5527 = vmatmul.mubr.bf16.gmra.mrb[0].mxu0 %v5373
      %v5528 = vpop.f32.mrb[0].mxu0
      %v5529 = vadd.f32 0.0, %v5528
      %v5530 = vpop.f32.mrb[0].mxu0
      %v5531 = vpop.f32.mrb[0].mxu0
      %v5532 = vadd.f32 0.0, %v5531
      %v5533 = vpop.f32.mrb[0].mxu0
      %5534 = vmatprep.mubr.bf16.mxu0 0
      %5535 = vmatmul.mubr.bf16.gmra.mrb[0].mxu0 %v5376
      %v5536 = vpop.f32.mrb[0].mxu0
      %v5537 = vadd.f32 0.0, %v5536
      %v5538 = vpop.f32.mrb[0].mxu0
      %v5539 = vpop.f32.mrb[0].mxu0
      %v5540 = vadd.f32 0.0, %v5539
      %v5541 = vpop.f32.mrb[0].mxu0
      %5542 = vmatprep.mubr.bf16.mxu0 0
      %5543 = vmatmul.mubr.bf16.gmra.mrb[0].mxu0 %v5379
      %v5544 = vpop.f32.mrb[0].mxu0
      %v5545 = vadd.f32 0.0, %v5544
      %v5546 = vpop.f32.mrb[0].mxu0
      %v5547 = vpop.f32.mrb[0].mxu0
      %v5548 = vadd.f32 0.0, %v5547
      %v5549 = vpop.f32.mrb[0].mxu0
      %5550 = vmatprep.mubr.bf16.mxu0 0
      %5551 = vmatmul.mubr.bf16.gmra.mrb[0].mxu0 %v5382
      %v5552 = vpop.f32.mrb[0].mxu0
      %v5553 = vadd.f32 0.0, %v5552
      %v5554 = vpop.f32.mrb[0].mxu0
      %v5555 = vpop.f32.mrb[0].mxu0
      %v5556 = vadd.f32 0.0, %v5555
      %v5557 = vpop.f32.mrb[0].mxu0
      %5558 = vmatprep.mubr.bf16.mxu0 0
      %5559 = vmatmul.mubr.bf16.gmra.mrb[0].mxu0 %v5385
      %v5560 = vpop.f32.mrb[0].mxu0
      %v5561 = vadd.f32 0.0, %v5560
      %v5562 = vpop.f32.mrb[0].mxu0
      %v5563 = vpop.f32.mrb[0].mxu0
      %v5564 = vadd.f32 0.0, %v5563
      %v5565 = vpop.f32.mrb[0].mxu0
      %5566 = vmatprep.mubr.bf16.mxu0 0
      %5567 = vmatmul.mubr.bf16.gmra.mrb[0].mxu0 %v5388
      %v5568 = vpop.f32.mrb[0].mxu0
      %v5569 = vadd.f32 0.0, %v5568
      %v5570 = vpop.f32.mrb[0].mxu0
      %v5571 = vpop.f32.mrb[0].mxu0
      %v5572 = vadd.f32 0.0, %v5571
      %v5573 = vpop.f32.mrb[0].mxu0
      %5574 = vmatprep.mubr.bf16.mxu0 0
      %5575 = vmatmul.mubr.bf16.gmra.mrb[0].mxu0 %v5391
      %v5576 = vpop.f32.mrb[0].mxu0
      %v5577 = vadd.f32 0.0, %v5576
      %v5578 = vpop.f32.mrb[0].mxu0
      %v5579 = vpop.f32.mrb[0].mxu0
      %v5580 = vadd.f32 0.0, %v5579
      %v5581 = vpop.f32.mrb[0].mxu0
      %5582 = vmatprep.mubr.bf16.mxu0 0
      %5583 = vmatmul.mubr.bf16.gmra.mrb[0].mxu0 %v5394
      %v5584 = vpop.f32.mrb[0].mxu0
      %v5585 = vadd.f32 0.0, %v5584
      %v5586 = vpop.f32.mrb[0].mxu0
      %v5587 = vpop.f32.mrb[0].mxu0
      %v5588 = vadd.f32 0.0, %v5587
      %v5589 = vpop.f32.mrb[0].mxu0
      %5590 = vmatprep.mubr.bf16.mxu0 0
      %5591 = vmatmul.mubr.bf16.gmra.mrb[0].mxu0 %v5397
      %v5592 = vpop.f32.mrb[0].mxu0
      %v5593 = vadd.f32 0.0, %v5592
      %v5594 = vpop.f32.mrb[0].mxu0
      %v5595 = vpop.f32.mrb[0].mxu0
      %v5596 = vadd.f32 0.0, %v5595
      %v5597 = vpop.f32.mrb[0].mxu0
      %5598 = vmatprep.mubr.bf16.mxu0 0
      %5599 = vmatmul.mubr.bf16.gmra.mrb[0].mxu0 %v5400
      %v5600 = vpop.f32.mrb[0].mxu0
      %v5601 = vadd.f32 0.0, %v5600
      %v5602 = vpop.f32.mrb[0].mxu0
      %v5603 = vpop.f32.mrb[0].mxu0
      %v5604 = vpop.f32.mrb[0].mxu0
      %5605 = vdwg.mxu0
      %v5607 = vunpack.c.l.b16 %v5146
      %v5608 = vpack.c.b16 %v5235, %v5607
      %v5610 = vshrl.u32 %v5608, 16
      %v5612 = vrot.slane %v5610, 2
      %v5613 = vshll.u32 %v5608, 16
      %v5615 = vrot.slane %v5613, 3
      %v5616 = vor.u32 %v5612, %v5615
      %v5618 = vshrl.u32 %v5277, 16
      %v5620 = vrot.slane %v5618, 2
      %v5621 = vshll.u32 %v5277, 16
      %v5623 = vrot.slane %v5621, 3
      %v5624 = vor.u32 %v5620, %v5623
      %v5625 = vsel %vm866, %v5616, %v5624
      %v5627 = vshrl.u32 %v5278, 16
      %v5629 = vrot.slane %v5627, 2
      %v5630 = vshll.u32 %v5278, 16
      %v5632 = vrot.slane %v5630, 3
      %v5633 = vor.u32 %v5629, %v5632
      %v5634 = vsel %vm866, %v5624, %v5633
      %v5636 = vshrl.u32 %v5279, 16
      %v5638 = vrot.slane %v5636, 2
      %v5639 = vshll.u32 %v5279, 16
      %v5641 = vrot.slane %v5639, 3
      %v5642 = vor.u32 %v5638, %v5641
      %v5643 = vsel %vm866, %v5633, %v5642
      %v5645 = vshrl.u32 %v5280, 16
      %v5647 = vrot.slane %v5645, 2
      %v5648 = vshll.u32 %v5280, 16
      %v5650 = vrot.slane %v5648, 3
      %v5651 = vor.u32 %v5647, %v5650
      %v5652 = vsel %vm866, %v5642, %v5651
      %v5654 = vshrl.u32 %v5281, 16
      %v5656 = vrot.slane %v5654, 2
      %v5657 = vshll.u32 %v5281, 16
      %v5659 = vrot.slane %v5657, 3
      %v5660 = vor.u32 %v5656, %v5659
      %v5661 = vsel %vm866, %v5651, %v5660
      %v5663 = vshrl.u32 %v5282, 16
      %v5665 = vrot.slane %v5663, 2
      %v5666 = vshll.u32 %v5282, 16
      %v5668 = vrot.slane %v5666, 3
      %v5669 = vor.u32 %v5665, %v5668
      %v5670 = vsel %vm866, %v5660, %v5669
      %v5672 = vshrl.u32 %v5283, 16
      %v5674 = vrot.slane %v5672, 2
      %v5675 = vshll.u32 %v5283, 16
      %v5677 = vrot.slane %v5675, 3
      %v5678 = vor.u32 %v5674, %v5677
      %v5679 = vsel %vm866, %v5669, %v5678
      %v5681 = vshrl.u32 %v5284, 16
      %v5683 = vrot.slane %v5681, 2
      %v5684 = vshll.u32 %v5284, 16
      %v5686 = vrot.slane %v5684, 3
      %v5687 = vor.u32 %v5683, %v5686
      %v5688 = vsel %vm866, %v5678, %v5687
      %v5690 = vshrl.u32 %v5285, 16
      %v5692 = vrot.slane %v5690, 2
      %v5693 = vshll.u32 %v5285, 16
      %v5695 = vrot.slane %v5693, 3
      %v5696 = vor.u32 %v5692, %v5695
      %v5697 = vsel %vm866, %v5687, %v5696
      %v5699 = vshrl.u32 %v5286, 16
      %v5701 = vrot.slane %v5699, 2
      %v5702 = vshll.u32 %v5286, 16
      %v5704 = vrot.slane %v5702, 3
      %v5705 = vor.u32 %v5701, %v5704
      %v5706 = vsel %vm866, %v5696, %v5705
      %v5708 = vshrl.u32 %v5287, 16
      %v5710 = vrot.slane %v5708, 2
      %v5711 = vshll.u32 %v5287, 16
      %v5713 = vrot.slane %v5711, 3
      %v5714 = vor.u32 %v5710, %v5713
      %v5715 = vsel %vm866, %v5705, %v5714
      %v5717 = vshrl.u32 %v5288, 16
      %v5719 = vrot.slane %v5717, 2
      %v5720 = vshll.u32 %v5288, 16
      %v5722 = vrot.slane %v5720, 3
      %v5723 = vor.u32 %v5719, %v5722
      %v5724 = vsel %vm866, %v5714, %v5723
      %v5726 = vshrl.u32 %v5289, 16
      %v5728 = vrot.slane %v5726, 2
      %v5729 = vshll.u32 %v5289, 16
      %v5731 = vrot.slane %v5729, 3
      %v5732 = vor.u32 %v5728, %v5731
      %v5733 = vsel %vm866, %v5723, %v5732
      %v5735 = vshrl.u32 %v5290, 16
      %v5737 = vrot.slane %v5735, 2
      %v5738 = vshll.u32 %v5290, 16
      %v5740 = vrot.slane %v5738, 3
      %v5741 = vor.u32 %v5737, %v5740
      %v5742 = vsel %vm866, %v5732, %v5741
      %v5744 = vshrl.u32 %v5291, 16
      %v5746 = vrot.slane %v5744, 2
      %v5747 = vshll.u32 %v5291, 16
      %v5749 = vrot.slane %v5747, 3
      %v5750 = vor.u32 %v5746, %v5749
      %v5751 = vsel %vm866, %v5741, %v5750
      %v5753 = vshrl.u32 %v5292, 16
      %v5755 = vrot.slane %v5753, 2
      %v5756 = vshll.u32 %v5292, 16
      %v5758 = vrot.slane %v5756, 3
      %v5759 = vor.u32 %v5755, %v5758
      %v5760 = vsel %vm866, %v5750, %v5759
      %v5762 = vshrl.u32 %v5293, 16
      %v5764 = vrot.slane %v5762, 2
      %v5765 = vshll.u32 %v5293, 16
      %v5767 = vrot.slane %v5765, 3
      %v5768 = vor.u32 %v5764, %v5767
      %v5769 = vsel %vm866, %v5759, %v5768
      %v5771 = vshrl.u32 %v5294, 16
      %v5773 = vrot.slane %v5771, 2
      %v5774 = vshll.u32 %v5294, 16
      %v5776 = vrot.slane %v5774, 3
      %v5777 = vor.u32 %v5773, %v5776
      %v5778 = vsel %vm866, %v5768, %v5777
      %v5780 = vshrl.u32 %v5295, 16
      %v5782 = vrot.slane %v5780, 2
      %v5783 = vshll.u32 %v5295, 16
      %v5785 = vrot.slane %v5783, 3
      %v5786 = vor.u32 %v5782, %v5785
      %v5787 = vsel %vm866, %v5777, %v5786
      %v5789 = vshrl.u32 %v5296, 16
      %v5791 = vrot.slane %v5789, 2
      %v5792 = vshll.u32 %v5296, 16
      %v5794 = vrot.slane %v5792, 3
      %v5795 = vor.u32 %v5791, %v5794
      %v5796 = vsel %vm866, %v5786, %v5795
      %v5798 = vsel %vm5338, %v5625, 0
      %v5801 = vsel %vm5338, %v5634, 0
      %v5804 = vsel %vm5338, %v5643, 0
      %v5807 = vsel %vm5338, %v5652, 0
      %v5810 = vsel %vm5338, %v5661, 0
      %v5813 = vsel %vm5338, %v5670, 0
      %v5816 = vsel %vm5338, %v5679, 0
      %v5819 = vsel %vm5338, %v5688, 0
      %v5822 = vsel %vm5338, %v5697, 0
      %v5825 = vsel %vm5338, %v5706, 0
      %v5828 = vsel %vm5338, %v5715, 0
      %v5831 = vsel %vm5338, %v5724, 0
      %v5834 = vsel %vm5338, %v5733, 0
      %v5837 = vsel %vm5338, %v5742, 0
      %v5840 = vsel %vm5338, %v5751, 0
      %v5843 = vsel %vm5338, %v5760, 0
      %v5846 = vsel %vm5338, %v5769, 0
      %v5849 = vsel %vm5338, %v5778, 0
      %v5852 = vsel %vm5338, %v5787, 0
      %v5855 = vsel %vm5338, %v5796, 0
      %v5858 = vsel %vm5338, %v5795, 0
      %v5861 = vsel %vm5402, %v5188, 0
      %5863 = vmatprep.subr.bf16.mxu0 0
      %5864 = vmatpush1.bf16.msra.mxu0 %v5861
      %5865 = vmatprep.subr.bf16.mxu0 0
      %5866 = vmatpush1.bf16.msra.mxu0 0
      %5867 = vmatprep.subr.bf16.mxu0 0
      %5868 = vmatpush1.bf16.msra.mxu0 0
      %5869 = vmatprep.subr.bf16.mxu0 0
      %5870 = vmatpush1.bf16.msra.mxu0 0
      %5871 = vmatprep.subr.bf16.mxu0 0
      %5872 = vmatpush1.bf16.msra.mxu0 0
      %5873 = vmatprep.subr.bf16.mxu0 0
      %5874 = vmatpush1.bf16.msra.mxu0 0
      %5875 = vmatprep.subr.bf16.mxu0 0
      %5876 = vmatpush1.bf16.msra.mxu0 0
      %5877 = vmatprep.subr.bf16.mxu0 0
      %5878 = vmatpush1.bf16.msra.mxu0 0
      %5879 = vmatprep.subr.bf16.mxu0 0
      %5880 = vmatpush1.bf16.msra.mxu0 0
      %5881 = vmatprep.subr.bf16.mxu0 0
      %5882 = vmatpush1.bf16.msra.mxu0 0
      %5883 = vmatprep.subr.bf16.mxu0 0
      %5884 = vmatpush1.bf16.msra.mxu0 0
      %5885 = vmatprep.subr.bf16.mxu0 0
      %5886 = vmatpush1.bf16.msra.mxu0 0
      %5887 = vmatprep.subr.bf16.mxu0 0
      %5888 = vmatpush1.bf16.msra.mxu0 0
      %5889 = vmatprep.subr.bf16.mxu0 0
      %5890 = vmatpush1.bf16.msra.mxu0 0
      %5891 = vmatprep.subr.bf16.mxu0 0
      %5892 = vmatpush1.bf16.msra.mxu0 0
      %5893 = vmatprep.subr.bf16.mxu0 0
      %5894 = vmatpush1.bf16.msra.mxu0 0
      %5895 = vmatprep.mubr.bf16.mxu0 0
      %5896 = vmatmul.mubr.bf16.gmra.mrb[0].mxu0 %v5798
      %v5897 = vpop.f32.mrb[0].mxu0
      %v5898 = vadd.f32 %v5441, %v5897
      %v5899 = vpop.f32.mrb[0].mxu0
      %v5900 = vpop.f32.mrb[0].mxu0
      %v5901 = vadd.f32 %v5444, %v5900
      %v5902 = vpop.f32.mrb[0].mxu0
      %5903 = vmatprep.mubr.bf16.mxu0 0
      %5904 = vmatmul.mubr.bf16.gmra.mrb[0].mxu0 %v5801
      %v5905 = vpop.f32.mrb[0].mxu0
      %v5906 = vadd.f32 %v5449, %v5905
      %v5907 = vpop.f32.mrb[0].mxu0
      %v5908 = vpop.f32.mrb[0].mxu0
      %v5909 = vadd.f32 %v5452, %v5908
      %v5910 = vpop.f32.mrb[0].mxu0
      %5911 = vmatprep.mubr.bf16.mxu0 0
      %5912 = vmatmul.mubr.bf16.gmra.mrb[0].mxu0 %v5804
      %v5913 = vpop.f32.mrb[0].mxu0
      %v5914 = vadd.f32 %v5457, %v5913
      %v5915 = vpop.f32.mrb[0].mxu0
      %v5916 = vpop.f32.mrb[0].mxu0
      %v5917 = vadd.f32 %v5460, %v5916
      %v5918 = vpop.f32.mrb[0].mxu0
      %5919 = vmatprep.mubr.bf16.mxu0 0
      %5920 = vmatmul.mubr.bf16.gmra.mrb[0].mxu0 %v5807
      %v5921 = vpop.f32.mrb[0].mxu0
      %v5922 = vadd.f32 %v5465, %v5921
      %v5923 = vpop.f32.mrb[0].mxu0
      %v5924 = vpop.f32.mrb[0].mxu0
      %v5925 = vadd.f32 %v5468, %v5924
      %v5926 = vpop.f32.mrb[0].mxu0
      %5927 = vmatprep.mubr.bf16.mxu0 0
      %5928 = vmatmul.mubr.bf16.gmra.mrb[0].mxu0 %v5810
      %v5929 = vpop.f32.mrb[0].mxu0
      %v5930 = vadd.f32 %v5473, %v5929
      %v5931 = vpop.f32.mrb[0].mxu0
      %v5932 = vpop.f32.mrb[0].mxu0
      %v5933 = vadd.f32 %v5476, %v5932
      %v5934 = vpop.f32.mrb[0].mxu0
      %5935 = vmatprep.mubr.bf16.mxu0 0
      %5936 = vmatmul.mubr.bf16.gmra.mrb[0].mxu0 %v5813
      %v5937 = vpop.f32.mrb[0].mxu0
      %v5938 = vadd.f32 %v5481, %v5937
      %v5939 = vpop.f32.mrb[0].mxu0
      %v5940 = vpop.f32.mrb[0].mxu0
      %v5941 = vadd.f32 %v5484, %v5940
      %v5942 = vpop.f32.mrb[0].mxu0
      %5943 = vmatprep.mubr.bf16.mxu0 0
      %5944 = vmatmul.mubr.bf16.gmra.mrb[0].mxu0 %v5816
      %v5945 = vpop.f32.mrb[0].mxu0
      %v5946 = vadd.f32 %v5489, %v5945
      %v5947 = vpop.f32.mrb[0].mxu0
      %v5948 = vpop.f32.mrb[0].mxu0
      %v5949 = vadd.f32 %v5492, %v5948
      %v5950 = vpop.f32.mrb[0].mxu0
      %5951 = vmatprep.mubr.bf16.mxu0 0
      %5952 = vmatmul.mubr.bf16.gmra.mrb[0].mxu0 %v5819
      %v5953 = vpop.f32.mrb[0].mxu0
      %v5954 = vadd.f32 %v5497, %v5953
      %v5955 = vpop.f32.mrb[0].mxu0
      %v5956 = vpop.f32.mrb[0].mxu0
      %v5957 = vadd.f32 %v5500, %v5956
      %v5958 = vpop.f32.mrb[0].mxu0
      %5959 = vmatprep.mubr.bf16.mxu0 0
      %5960 = vmatmul.mubr.bf16.gmra.mrb[0].mxu0 %v5822
      %v5961 = vpop.f32.mrb[0].mxu0
      %v5962 = vadd.f32 %v5505, %v5961
      %v5963 = vpop.f32.mrb[0].mxu0
      %v5964 = vpop.f32.mrb[0].mxu0
      %v5965 = vadd.f32 %v5508, %v5964
      %v5966 = vpop.f32.mrb[0].mxu0
      %5967 = vmatprep.mubr.bf16.mxu0 0
      %5968 = vmatmul.mubr.bf16.gmra.mrb[0].mxu0 %v5825
      %v5969 = vpop.f32.mrb[0].mxu0
      %v5970 = vadd.f32 %v5513, %v5969
      %v5971 = vpop.f32.mrb[0].mxu0
      %v5972 = vpop.f32.mrb[0].mxu0
      %v5973 = vadd.f32 %v5516, %v5972
      %v5974 = vpop.f32.mrb[0].mxu0
      %5975 = vmatprep.mubr.bf16.mxu0 0
      %5976 = vmatmul.mubr.bf16.gmra.mrb[0].mxu0 %v5828
      %v5977 = vpop.f32.mrb[0].mxu0
      %v5978 = vadd.f32 %v5521, %v5977
      %v5979 = vpop.f32.mrb[0].mxu0
      %v5980 = vpop.f32.mrb[0].mxu0
      %v5981 = vadd.f32 %v5524, %v5980
      %v5982 = vpop.f32.mrb[0].mxu0
      %5983 = vmatprep.mubr.bf16.mxu0 0
      %5984 = vmatmul.mubr.bf16.gmra.mrb[0].mxu0 %v5831
      %v5985 = vpop.f32.mrb[0].mxu0
      %v5986 = vadd.f32 %v5529, %v5985
      %v5987 = vpop.f32.mrb[0].mxu0
      %v5988 = vpop.f32.mrb[0].mxu0
      %v5989 = vadd.f32 %v5532, %v5988
      %v5990 = vpop.f32.mrb[0].mxu0
      %5991 = vmatprep.mubr.bf16.mxu0 0
      %5992 = vmatmul.mubr.bf16.gmra.mrb[0].mxu0 %v5834
      %v5993 = vpop.f32.mrb[0].mxu0
      %v5994 = vadd.f32 %v5537, %v5993
      %v5995 = vpop.f32.mrb[0].mxu0
      %v5996 = vpop.f32.mrb[0].mxu0
      %v5997 = vadd.f32 %v5540, %v5996
      %v5998 = vpop.f32.mrb[0].mxu0
      %5999 = vmatprep.mubr.bf16.mxu0 0
      %6000 = vmatmul.mubr.bf16.gmra.mrb[0].mxu0 %v5837
      %v6001 = vpop.f32.mrb[0].mxu0
      %v6002 = vadd.f32 %v5545, %v6001
      %v6003 = vpop.f32.mrb[0].mxu0
      %v6004 = vpop.f32.mrb[0].mxu0
      %v6005 = vadd.f32 %v5548, %v6004
      %v6006 = vpop.f32.mrb[0].mxu0
      %6007 = vmatprep.mubr.bf16.mxu0 0
      %6008 = vmatmul.mubr.bf16.gmra.mrb[0].mxu0 %v5840
      %v6009 = vpop.f32.mrb[0].mxu0
      %v6010 = vadd.f32 %v5553, %v6009
      %v6011 = vpop.f32.mrb[0].mxu0
      %v6012 = vpop.f32.mrb[0].mxu0
      %v6013 = vadd.f32 %v5556, %v6012
      %v6014 = vpop.f32.mrb[0].mxu0
      %6015 = vmatprep.mubr.bf16.mxu0 0
      %6016 = vmatmul.mubr.bf16.gmra.mrb[0].mxu0 %v5843
      %v6017 = vpop.f32.mrb[0].mxu0
      %v6018 = vadd.f32 %v5561, %v6017
      %v6019 = vpop.f32.mrb[0].mxu0
      %v6020 = vpop.f32.mrb[0].mxu0
      %v6021 = vadd.f32 %v5564, %v6020
      %v6022 = vpop.f32.mrb[0].mxu0
      %6023 = vmatprep.mubr.bf16.mxu0 0
      %6024 = vmatmul.mubr.bf16.gmra.mrb[0].mxu0 %v5846
      %v6025 = vpop.f32.mrb[0].mxu0
      %v6026 = vadd.f32 %v5569, %v6025
      %v6027 = vpop.f32.mrb[0].mxu0
      %v6028 = vpop.f32.mrb[0].mxu0
      %v6029 = vadd.f32 %v5572, %v6028
      %v6030 = vpop.f32.mrb[0].mxu0
      %6031 = vmatprep.mubr.bf16.mxu0 0
      %6032 = vmatmul.mubr.bf16.gmra.mrb[0].mxu0 %v5849
      %v6033 = vpop.f32.mrb[0].mxu0
      %v6034 = vadd.f32 %v5577, %v6033
      %v6035 = vpop.f32.mrb[0].mxu0
      %v6036 = vpop.f32.mrb[0].mxu0
      %v6037 = vadd.f32 %v5580, %v6036
      %v6038 = vpop.f32.mrb[0].mxu0
      %6039 = vmatprep.mubr.bf16.mxu0 0
      %6040 = vmatmul.mubr.bf16.gmra.mrb[0].mxu0 %v5852
      %v6041 = vpop.f32.mrb[0].mxu0
      %v6042 = vadd.f32 %v5585, %v6041
      %v6043 = vpop.f32.mrb[0].mxu0
      %v6044 = vpop.f32.mrb[0].mxu0
      %v6045 = vadd.f32 %v5588, %v6044
      %v6046 = vpop.f32.mrb[0].mxu0
      %6047 = vmatprep.mubr.bf16.mxu0 0
      %6048 = vmatmul.mubr.bf16.gmra.mrb[0].mxu0 %v5855
      %v6049 = vpop.f32.mrb[0].mxu0
      %v6050 = vadd.f32 %v5593, %v6049
      %v6051 = vpop.f32.mrb[0].mxu0
      %v6052 = vpop.f32.mrb[0].mxu0
      %v6053 = vadd.f32 %v5596, %v6052
      %v6054 = vpop.f32.mrb[0].mxu0
      %6055 = vmatprep.mubr.bf16.mxu0 0
      %6056 = vmatmul.mubr.bf16.gmra.mrb[0].mxu0 %v5858
      %v6057 = vpop.f32.mrb[0].mxu0
      %v6058 = vadd.f32 %v5601, %v6057
      %v6059 = vpop.f32.mrb[0].mxu0
      %v6060 = vpop.f32.mrb[0].mxu0
      %v6061 = vpop.f32.mrb[0].mxu0
      %6062 = vdwg.mxu0
      %v6063 = vld [vmem:[#allocation2 + $0xa8] sm:$0x3]
      %s6064 = scalar_lea.vmem %s5, 8
      %v6065 = vld [vmem:[%s6064] sm:$0xf]
      %v6067 = vunpack.c.l.b16 %v6063
      %v6068 = vpack.c.b16 %v6067, %v5274
      %v6070 = vshrl.u32 %v5276, 16
      %v6072 = vrot.slane %v6070, 3
      %v6073 = vshll.u32 %v5276, 16
      %v6075 = vrot.slane %v6073, 4
      %v6076 = vor.u32 %v6072, %v6075
      %v6077 = vrot.slane %v5618, 3
      %v6078 = vrot.slane %v5621, 4
      %v6079 = vor.u32 %v6077, %v6078
      %v6080 = vsel %vm1327, %v6076, %v6079
      %v6081 = vrot.slane %v5627, 3
      %v6082 = vrot.slane %v5630, 4
      %v6083 = vor.u32 %v6081, %v6082
      %v6084 = vsel %vm1327, %v6079, %v6083
      %v6085 = vrot.slane %v5636, 3
      %v6086 = vrot.slane %v5639, 4
      %v6087 = vor.u32 %v6085, %v6086
      %v6088 = vsel %vm1327, %v6083, %v6087
      %v6089 = vrot.slane %v5645, 3
      %v6090 = vrot.slane %v5648, 4
      %v6091 = vor.u32 %v6089, %v6090
      %v6092 = vsel %vm1327, %v6087, %v6091
      %v6093 = vrot.slane %v5654, 3
      %v6094 = vrot.slane %v5657, 4
      %v6095 = vor.u32 %v6093, %v6094
      %v6096 = vsel %vm1327, %v6091, %v6095
      %v6097 = vrot.slane %v5663, 3
      %v6098 = vrot.slane %v5666, 4
      %v6099 = vor.u32 %v6097, %v6098
      %v6100 = vsel %vm1327, %v6095, %v6099
      %v6101 = vrot.slane %v5672, 3
      %v6102 = vrot.slane %v5675, 4
      %v6103 = vor.u32 %v6101, %v6102
      %v6104 = vsel %vm1327, %v6099, %v6103
      %v6105 = vrot.slane %v5681, 3
      %v6106 = vrot.slane %v5684, 4
      %v6107 = vor.u32 %v6105, %v6106
      %v6108 = vsel %vm1327, %v6103, %v6107
      %v6109 = vrot.slane %v5690, 3
      %v6110 = vrot.slane %v5693, 4
      %v6111 = vor.u32 %v6109, %v6110
      %v6112 = vsel %vm1327, %v6107, %v6111
      %v6113 = vrot.slane %v5699, 3
      %v6114 = vrot.slane %v5702, 4
      %v6115 = vor.u32 %v6113, %v6114
      %v6116 = vsel %vm1327, %v6111, %v6115
      %v6117 = vrot.slane %v5708, 3
      %v6118 = vrot.slane %v5711, 4
      %v6119 = vor.u32 %v6117, %v6118
      %v6120 = vsel %vm1327, %v6115, %v6119
      %v6121 = vrot.slane %v5717, 3
      %v6122 = vrot.slane %v5720, 4
      %v6123 = vor.u32 %v6121, %v6122
      %v6124 = vsel %vm1327, %v6119, %v6123
      %v6125 = vrot.slane %v5726, 3
      %v6126 = vrot.slane %v5729, 4
      %v6127 = vor.u32 %v6125, %v6126
      %v6128 = vsel %vm1327, %v6123, %v6127
      %v6129 = vrot.slane %v5735, 3
      %v6130 = vrot.slane %v5738, 4
      %v6131 = vor.u32 %v6129, %v6130
      %v6132 = vsel %vm1327, %v6127, %v6131
      %v6133 = vrot.slane %v5744, 3
      %v6134 = vrot.slane %v5747, 4
      %v6135 = vor.u32 %v6133, %v6134
      %v6136 = vsel %vm1327, %v6131, %v6135
      %v6137 = vrot.slane %v5753, 3
      %v6138 = vrot.slane %v5756, 4
      %v6139 = vor.u32 %v6137, %v6138
      %v6140 = vsel %vm1327, %v6135, %v6139
      %v6141 = vrot.slane %v5762, 3
      %v6142 = vrot.slane %v5765, 4
      %v6143 = vor.u32 %v6141, %v6142
      %v6144 = vsel %vm1327, %v6139, %v6143
      %v6145 = vrot.slane %v5771, 3
      %v6146 = vrot.slane %v5774, 4
      %v6147 = vor.u32 %v6145, %v6146
      %v6148 = vsel %vm1327, %v6143, %v6147
      %v6149 = vrot.slane %v5780, 3
      %v6150 = vrot.slane %v5783, 4
      %v6151 = vor.u32 %v6149, %v6150
      %v6152 = vsel %vm1327, %v6147, %v6151
      %v6154 = vshrl.u32 %v6068, 16
      %v6156 = vrot.slane %v6154, 3
      %v6157 = vshll.u32 %v6068, 16
      %v6159 = vrot.slane %v6157, 4
      %v6160 = vor.u32 %v6156, %v6159
      %v6161 = vsel %vm1327, %v6151, %v6160
      %v6163 = vsel %vm5338, %v6080, 0
      %v6166 = vsel %vm5338, %v6084, 0
      %v6169 = vsel %vm5338, %v6088, 0
      %v6172 = vsel %vm5338, %v6092, 0
      %v6175 = vsel %vm5338, %v6096, 0
      %v6178 = vsel %vm5338, %v6100, 0
      %v6181 = vsel %vm5338, %v6104, 0
      %v6184 = vsel %vm5338, %v6108, 0
      %v6187 = vsel %vm5338, %v6112, 0
      %v6190 = vsel %vm5338, %v6116, 0
      %v6193 = vsel %vm5338, %v6120, 0
      %v6196 = vsel %vm5338, %v6124, 0
      %v6199 = vsel %vm5338, %v6128, 0
      %v6202 = vsel %vm5338, %v6132, 0
      %v6205 = vsel %vm5338, %v6136, 0
      %v6208 = vsel %vm5338, %v6140, 0
      %v6211 = vsel %vm5338, %v6144, 0
      %v6214 = vsel %vm5338, %v6148, 0
      %v6217 = vsel %vm5338, %v6152, 0
      %v6220 = vsel %vm5338, %v6161, 0
      %v6223 = vsel %vm5338, %v6160, 0
      %v6226 = vsel %vm5402, %v6065, 0
      %6228 = vmatprep.subr.bf16.mxu0 0
      %6229 = vmatpush1.bf16.msra.mxu0 %v6226
      %6230 = vmatprep.subr.bf16.mxu0 0
      %6231 = vmatpush1.bf16.msra.mxu0 0
      %6232 = vmatprep.subr.bf16.mxu0 0
      %6233 = vmatpush1.bf16.msra.mxu0 0
      %6234 = vmatprep.subr.bf16.mxu0 0
      %6235 = vmatpush1.bf16.msra.mxu0 0
      %6236 = vmatprep.subr.bf16.mxu0 0
      %6237 = vmatpush1.bf16.msra.mxu0 0
      %6238 = vmatprep.subr.bf16.mxu0 0
      %6239 = vmatpush1.bf16.msra.mxu0 0
      %6240 = vmatprep.subr.bf16.mxu0 0
      %6241 = vmatpush1.bf16.msra.mxu0 0
      %6242 = vmatprep.subr.bf16.mxu0 0
      %6243 = vmatpush1.bf16.msra.mxu0 0
      %6244 = vmatprep.subr.bf16.mxu0 0
      %6245 = vmatpush1.bf16.msra.mxu0 0
      %6246 = vmatprep.subr.bf16.mxu0 0
      %6247 = vmatpush1.bf16.msra.mxu0 0
      %6248 = vmatprep.subr.bf16.mxu0 0
      %6249 = vmatpush1.bf16.msra.mxu0 0
      %6250 = vmatprep.subr.bf16.mxu0 0
      %6251 = vmatpush1.bf16.msra.mxu0 0
      %6252 = vmatprep.subr.bf16.mxu0 0
      %6253 = vmatpush1.bf16.msra.mxu0 0
      %6254 = vmatprep.subr.bf16.mxu0 0
      %6255 = vmatpush1.bf16.msra.mxu0 0
      %6256 = vmatprep.subr.bf16.mxu0 0
      %6257 = vmatpush1.bf16.msra.mxu0 0
      %6258 = vmatprep.subr.bf16.mxu0 0
      %6259 = vmatpush1.bf16.msra.mxu0 0
      %6260 = vmatprep.mubr.bf16.mxu0 0
      %6261 = vmatmul.mubr.bf16.gmra.mrb[0].mxu0 %v6163
      %v6262 = vpop.f32.mrb[0].mxu0
      %v6263 = vadd.f32 0.0, %v6262
      %v6264 = vpop.f32.mrb[0].mxu0
      %v6265 = vpop.f32.mrb[0].mxu0
      %v6266 = vadd.f32 0.0, %v6265
      %v6267 = vpop.f32.mrb[0].mxu0
      %6268 = vmatprep.mubr.bf16.mxu0 0
      %6269 = vmatmul.mubr.bf16.gmra.mrb[0].mxu0 %v6166
      %v6270 = vpop.f32.mrb[0].mxu0
      %v6271 = vadd.f32 0.0, %v6270
      %v6272 = vpop.f32.mrb[0].mxu0
      %v6273 = vpop.f32.mrb[0].mxu0
      %v6274 = vadd.f32 0.0, %v6273
      %v6275 = vpop.f32.mrb[0].mxu0
      %6276 = vmatprep.mubr.bf16.mxu0 0
      %6277 = vmatmul.mubr.bf16.gmra.mrb[0].mxu0 %v6169
      %v6278 = vpop.f32.mrb[0].mxu0
      %v6279 = vadd.f32 0.0, %v6278
      %v6280 = vpop.f32.mrb[0].mxu0
      %v6281 = vpop.f32.mrb[0].mxu0
      %v6282 = vadd.f32 0.0, %v6281
      %v6283 = vpop.f32.mrb[0].mxu0
      %6284 = vmatprep.mubr.bf16.mxu0 0
      %6285 = vmatmul.mubr.bf16.gmra.mrb[0].mxu0 %v6172
      %v6286 = vpop.f32.mrb[0].mxu0
      %v6287 = vadd.f32 0.0, %v6286
      %v6288 = vpop.f32.mrb[0].mxu0
      %v6289 = vpop.f32.mrb[0].mxu0
      %v6290 = vadd.f32 0.0, %v6289
      %v6291 = vpop.f32.mrb[0].mxu0
      %6292 = vmatprep.mubr.bf16.mxu0 0
      %6293 = vmatmul.mubr.bf16.gmra.mrb[0].mxu0 %v6175
      %v6294 = vpop.f32.mrb[0].mxu0
      %v6295 = vadd.f32 0.0, %v6294
      %v6296 = vpop.f32.mrb[0].mxu0
      %v6297 = vpop.f32.mrb[0].mxu0
      %v6298 = vadd.f32 0.0, %v6297
      %v6299 = vpop.f32.mrb[0].mxu0
      %6300 = vmatprep.mubr.bf16.mxu0 0
      %6301 = vmatmul.mubr.bf16.gmra.mrb[0].mxu0 %v6178
      %v6302 = vpop.f32.mrb[0].mxu0
      %v6303 = vadd.f32 0.0, %v6302
      %v6304 = vpop.f32.mrb[0].mxu0
      %v6305 = vpop.f32.mrb[0].mxu0
      %v6306 = vadd.f32 0.0, %v6305
      %v6307 = vpop.f32.mrb[0].mxu0
      %6308 = vmatprep.mubr.bf16.mxu0 0
      %6309 = vmatmul.mubr.bf16.gmra.mrb[0].mxu0 %v6181
      %v6310 = vpop.f32.mrb[0].mxu0
      %v6311 = vadd.f32 0.0, %v6310
      %v6312 = vpop.f32.mrb[0].mxu0
      %v6313 = vpop.f32.mrb[0].mxu0
      %v6314 = vadd.f32 0.0, %v6313
      %v6315 = vpop.f32.mrb[0].mxu0
      %6316 = vmatprep.mubr.bf16.mxu0 0
      %6317 = vmatmul.mubr.bf16.gmra.mrb[0].mxu0 %v6184
      %v6318 = vpop.f32.mrb[0].mxu0
      %v6319 = vadd.f32 0.0, %v6318
      %v6320 = vpop.f32.mrb[0].mxu0
      %v6321 = vpop.f32.mrb[0].mxu0
      %v6322 = vadd.f32 0.0, %v6321
      %v6323 = vpop.f32.mrb[0].mxu0
      %6324 = vmatprep.mubr.bf16.mxu0 0
      %6325 = vmatmul.mubr.bf16.gmra.mrb[0].mxu0 %v6187
      %v6326 = vpop.f32.mrb[0].mxu0
      %v6327 = vadd.f32 0.0, %v6326
      %v6328 = vpop.f32.mrb[0].mxu0
      %v6329 = vpop.f32.mrb[0].mxu0
      %v6330 = vadd.f32 0.0, %v6329
      %v6331 = vpop.f32.mrb[0].mxu0
      %6332 = vmatprep.mubr.bf16.mxu0 0
      %6333 = vmatmul.mubr.bf16.gmra.mrb[0].mxu0 %v6190
      %v6334 = vpop.f32.mrb[0].mxu0
      %v6335 = vadd.f32 0.0, %v6334
      %v6336 = vpop.f32.mrb[0].mxu0
      %v6337 = vpop.f32.mrb[0].mxu0
      %v6338 = vadd.f32 0.0, %v6337
      %v6339 = vpop.f32.mrb[0].mxu0
      %6340 = vmatprep.mubr.bf16.mxu0 0
      %6341 = vmatmul.mubr.bf16.gmra.mrb[0].mxu0 %v6193
      %v6342 = vpop.f32.mrb[0].mxu0
      %v6343 = vadd.f32 0.0, %v6342
      %v6344 = vpop.f32.mrb[0].mxu0
      %v6345 = vpop.f32.mrb[0].mxu0
      %v6346 = vadd.f32 0.0, %v6345
      %v6347 = vpop.f32.mrb[0].mxu0
      %6348 = vmatprep.mubr.bf16.mxu0 0
      %6349 = vmatmul.mubr.bf16.gmra.mrb[0].mxu0 %v6196
      %v6350 = vpop.f32.mrb[0].mxu0
      %v6351 = vadd.f32 0.0, %v6350
      %v6352 = vpop.f32.mrb[0].mxu0
      %v6353 = vpop.f32.mrb[0].mxu0
      %v6354 = vadd.f32 0.0, %v6353
      %v6355 = vpop.f32.mrb[0].mxu0
      %6356 = vmatprep.mubr.bf16.mxu0 0
      %6357 = vmatmul.mubr.bf16.gmra.mrb[0].mxu0 %v6199
      %v6358 = vpop.f32.mrb[0].mxu0
      %v6359 = vadd.f32 0.0, %v6358
      %v6360 = vpop.f32.mrb[0].mxu0
      %v6361 = vpop.f32.mrb[0].mxu0
      %v6362 = vadd.f32 0.0, %v6361
      %v6363 = vpop.f32.mrb[0].mxu0
      %6364 = vmatprep.mubr.bf16.mxu0 0
      %6365 = vmatmul.mubr.bf16.gmra.mrb[0].mxu0 %v6202
      %v6366 = vpop.f32.mrb[0].mxu0
      %v6367 = vadd.f32 0.0, %v6366
      %v6368 = vpop.f32.mrb[0].mxu0
      %v6369 = vpop.f32.mrb[0].mxu0
      %v6370 = vadd.f32 0.0, %v6369
      %v6371 = vpop.f32.mrb[0].mxu0
      %6372 = vmatprep.mubr.bf16.mxu0 0
      %6373 = vmatmul.mubr.bf16.gmra.mrb[0].mxu0 %v6205
      %v6374 = vpop.f32.mrb[0].mxu0
      %v6375 = vadd.f32 0.0, %v6374
      %v6376 = vpop.f32.mrb[0].mxu0
      %v6377 = vpop.f32.mrb[0].mxu0
      %v6378 = vadd.f32 0.0, %v6377
      %v6379 = vpop.f32.mrb[0].mxu0
      %6380 = vmatprep.mubr.bf16.mxu0 0
      %6381 = vmatmul.mubr.bf16.gmra.mrb[0].mxu0 %v6208
      %v6382 = vpop.f32.mrb[0].mxu0
      %v6383 = vadd.f32 0.0, %v6382
      %v6384 = vpop.f32.mrb[0].mxu0
      %v6385 = vpop.f32.mrb[0].mxu0
      %v6386 = vadd.f32 0.0, %v6385
      %v6387 = vpop.f32.mrb[0].mxu0
      %6388 = vmatprep.mubr.bf16.mxu0 0
      %6389 = vmatmul.mubr.bf16.gmra.mrb[0].mxu0 %v6211
      %v6390 = vpop.f32.mrb[0].mxu0
      %v6391 = vadd.f32 0.0, %v6390
      %v6392 = vpop.f32.mrb[0].mxu0
      %v6393 = vpop.f32.mrb[0].mxu0
      %v6394 = vadd.f32 0.0, %v6393
      %v6395 = vpop.f32.mrb[0].mxu0
      %6396 = vmatprep.mubr.bf16.mxu0 0
      %6397 = vmatmul.mubr.bf16.gmra.mrb[0].mxu0 %v6214
      %v6398 = vpop.f32.mrb[0].mxu0
      %v6399 = vadd.f32 0.0, %v6398
      %v6400 = vpop.f32.mrb[0].mxu0
      %v6401 = vpop.f32.mrb[0].mxu0
      %v6402 = vadd.f32 0.0, %v6401
      %v6403 = vpop.f32.mrb[0].mxu0
      %6404 = vmatprep.mubr.bf16.mxu0 0
      %6405 = vmatmul.mubr.bf16.gmra.mrb[0].mxu0 %v6217
      %v6406 = vpop.f32.mrb[0].mxu0
      %v6407 = vadd.f32 0.0, %v6406
      %v6408 = vpop.f32.mrb[0].mxu0
      %v6409 = vpop.f32.mrb[0].mxu0
      %v6410 = vadd.f32 0.0, %v6409
      %v6411 = vpop.f32.mrb[0].mxu0
      %6412 = vmatprep.mubr.bf16.mxu0 0
      %6413 = vmatmul.mubr.bf16.gmra.mrb[0].mxu0 %v6220
      %v6414 = vpop.f32.mrb[0].mxu0
      %v6415 = vadd.f32 0.0, %v6414
      %v6416 = vpop.f32.mrb[0].mxu0
      %v6417 = vpop.f32.mrb[0].mxu0
      %v6418 = vadd.f32 0.0, %v6417
      %v6419 = vpop.f32.mrb[0].mxu0
      %6420 = vmatprep.mubr.bf16.mxu0 0
      %6421 = vmatmul.mubr.bf16.gmra.mrb[0].mxu0 %v6223
      %v6422 = vpop.f32.mrb[0].mxu0
      %v6423 = vadd.f32 0.0, %v6422
      %v6424 = vpop.f32.mrb[0].mxu0
      %v6425 = vpop.f32.mrb[0].mxu0
      %v6426 = vpop.f32.mrb[0].mxu0
      %6427 = vdwg.mxu0
      %v6428 = vadd.f32 %v5898, %v6263
      %v6429 = vadd.f32 %v5901, %v6266
      %v6430 = vadd.f32 %v5906, %v6271
      %v6431 = vadd.f32 %v5909, %v6274
      %v6432 = vadd.f32 %v5914, %v6279
      %v6433 = vadd.f32 %v5917, %v6282
      %v6434 = vadd.f32 %v5922, %v6287
      %v6435 = vadd.f32 %v5925, %v6290
      %v6436 = vadd.f32 %v5930, %v6295
      %v6437 = vadd.f32 %v5933, %v6298
      %v6438 = vadd.f32 %v5938, %v6303
      %v6439 = vadd.f32 %v5941, %v6306
      %v6440 = vadd.f32 %v5946, %v6311
      %v6441 = vadd.f32 %v5949, %v6314
      %v6442 = vadd.f32 %v5954, %v6319
      %v6443 = vadd.f32 %v5957, %v6322
      %v6444 = vadd.f32 %v5962, %v6327
      %v6445 = vadd.f32 %v5965, %v6330
      %v6446 = vadd.f32 %v5970, %v6335
      %v6447 = vadd.f32 %v5973, %v6338
      %v6448 = vadd.f32 %v5978, %v6343
      %v6449 = vadd.f32 %v5981, %v6346
      %v6450 = vadd.f32 %v5986, %v6351
      %v6451 = vadd.f32 %v5989, %v6354
      %v6452 = vadd.f32 %v5994, %v6359
      %v6453 = vadd.f32 %v5997, %v6362
      %v6454 = vadd.f32 %v6002, %v6367
      %v6455 = vadd.f32 %v6005, %v6370
      %v6456 = vadd.f32 %v6010, %v6375
      %v6457 = vadd.f32 %v6013, %v6378
      %v6458 = vadd.f32 %v6018, %v6383
      %v6459 = vadd.f32 %v6021, %v6386
      %v6460 = vadd.f32 %v6026, %v6391
      %v6461 = vadd.f32 %v6029, %v6394
      %v6462 = vadd.f32 %v6034, %v6399
      %v6463 = vadd.f32 %v6037, %v6402
      %v6464 = vadd.f32 %v6042, %v6407
      %v6465 = vadd.f32 %v6045, %v6410
      %v6466 = vadd.f32 %v6050, %v6415
      %v6467 = vadd.f32 %v6053, %v6418
      %v6468 = vadd.f32 %v6058, %v6423
      %v6469 = vld [vmem:[#allocation2 + $0xc] sm:$0x8]
      %v6470 = vld [vmem:[#allocation2 + $0x10] sm:$0xf]
      %v6471 = vld [vmem:[#allocation2 + $0x14] sm:$0xf]
      %v6472 = vld [vmem:[#allocation2 + $0x18] sm:$0xf]
      %v6473 = vld [vmem:[#allocation2 + $0x1c] sm:$0xf]
      %v6474 = vld [vmem:[#allocation2 + $0x20] sm:$0xf]
      %v6475 = vld [vmem:[#allocation2 + $0x24] sm:$0xf]
      %v6476 = vld [vmem:[#allocation2 + $0x28] sm:$0xf]
      %v6477 = vld [vmem:[#allocation2 + $0x2c] sm:$0xf]
      %v6478 = vld [vmem:[#allocation2 + $0x30] sm:$0xf]
      %v6479 = vld [vmem:[#allocation2 + $0x34] sm:$0xf]
      %v6480 = vld [vmem:[#allocation2 + $0x38] sm:$0xf]
      %v6481 = vld [vmem:[#allocation2 + $0x3c] sm:$0xf]
      %v6482 = vld [vmem:[#allocation2 + $0x40] sm:$0xf]
      %v6483 = vld [vmem:[#allocation2 + $0x44] sm:$0xf]
      %v6484 = vld [vmem:[#allocation2 + $0x48] sm:$0xf]
      %v6485 = vld [vmem:[#allocation2 + $0x4c] sm:$0xf]
      %v6486 = vld [vmem:[#allocation2 + $0x50] sm:$0xf]
      %v6487 = vld [vmem:[#allocation2 + $0x54] sm:$0xf]
      %v6488 = vld [vmem:[#allocation2 + $0x58] sm:$0xf]
      %v6489 = vld [vmem:[#allocation2 + $0x5c] sm:$0xf]
      %v6490 = vld [vmem:[#allocation2 + $0x60] sm:$0xf]
      %v6491 = vld [vmem:[#allocation2 + $0x64] sm:$0xf]
      %v6492 = vld [vmem:[#allocation2 + $0x68] sm:$0xf]
      %v6493 = vld [vmem:[#allocation2 + $0x6c] sm:$0xf]
      %v6494 = vld [vmem:[#allocation2 + $0x70] sm:$0xf]
      %v6495 = vld [vmem:[#allocation2 + $0x74] sm:$0xf]
      %v6496 = vld [vmem:[#allocation2 + $0x78] sm:$0xf]
      %v6497 = vld [vmem:[#allocation2 + $0x7c] sm:$0xf]
      %v6498 = vld [vmem:[#allocation2 + $0x80] sm:$0xf]
      %v6499 = vld [vmem:[#allocation2 + $0x84] sm:$0xf]
      %v6500 = vld [vmem:[#allocation2 + $0x88] sm:$0xf]
      %v6501 = vld [vmem:[#allocation2 + $0x8c] sm:$0xf]
      %v6502 = vld [vmem:[#allocation2 + $0x90] sm:$0xf]
      %v6503 = vld [vmem:[#allocation2 + $0x94] sm:$0xf]
      %v6504 = vld [vmem:[#allocation2 + $0x98] sm:$0xf]
      %v6505 = vld [vmem:[#allocation2 + $0x9c] sm:$0xf]
      %v6506 = vld [vmem:[#allocation2 + $0xa0] sm:$0xf]
      %v6507 = vld [vmem:[#allocation2 + $0xa4] sm:$0xf]
      %v6508 = vld [vmem:[#allocation2 + $0xa8] sm:$0xf]
      %v6509 = vld [vmem:[#allocation2 + $0xac] sm:$0xf]
      %v6510 = vld [vmem:[#allocation2 + $0xb0] sm:$0x3]
      %s6511 = scalar_lea.vmem %s5, 12
      %v6512 = vld [vmem:[%s6511] sm:$0xf]
      %v6555 = vunpack.c.l.b16 %v6469
      %v6556 = vunpack.c.l.b16 %v6470
      %v6557 = vunpack.c.l.b16 %v6471
      %v6558 = vunpack.c.l.b16 %v6472
      %v6559 = vunpack.c.l.b16 %v6473
      %v6560 = vunpack.c.l.b16 %v6474
      %v6561 = vunpack.c.l.b16 %v6475
      %v6562 = vunpack.c.l.b16 %v6476
      %v6563 = vunpack.c.l.b16 %v6477
      %v6564 = vunpack.c.l.b16 %v6478
      %v6565 = vunpack.c.l.b16 %v6479
      %v6566 = vunpack.c.l.b16 %v6480
      %v6567 = vunpack.c.l.b16 %v6481
      %v6568 = vunpack.c.l.b16 %v6482
      %v6569 = vunpack.c.l.b16 %v6483
      %v6570 = vunpack.c.l.b16 %v6484
      %v6571 = vunpack.c.l.b16 %v6485
      %v6572 = vunpack.c.l.b16 %v6486
      %v6573 = vunpack.c.l.b16 %v6487
      %v6574 = vunpack.c.l.b16 %v6488
      %v6575 = vunpack.c.l.b16 %v6489
      %v6576 = vunpack.c.l.b16 %v6490
      %v6577 = vunpack.c.l.b16 %v6491
      %v6578 = vunpack.c.l.b16 %v6492
      %v6579 = vunpack.c.l.b16 %v6493
      %v6580 = vunpack.c.l.b16 %v6494
      %v6581 = vunpack.c.l.b16 %v6495
      %v6582 = vunpack.c.l.b16 %v6496
      %v6583 = vunpack.c.l.b16 %v6497
      %v6584 = vunpack.c.l.b16 %v6498
      %v6585 = vunpack.c.l.b16 %v6499
      %v6586 = vunpack.c.l.b16 %v6500
      %v6587 = vunpack.c.l.b16 %v6501
      %v6588 = vunpack.c.l.b16 %v6502
      %v6589 = vunpack.c.l.b16 %v6503
      %v6590 = vunpack.c.l.b16 %v6504
      %v6591 = vunpack.c.l.b16 %v6505
      %v6592 = vunpack.c.l.b16 %v6506
      %v6593 = vunpack.c.l.b16 %v6507
      %v6594 = vunpack.c.l.b16 %v6508
      %v6595 = vunpack.c.l.b16 %v6509
      %v6596 = vunpack.c.l.b16 %v6510
      %v6597 = vpack.c.b16 %v6556, %v6555
      %v6598 = vpack.c.b16 %v6558, %v6557
      %v6599 = vpack.c.b16 %v6560, %v6559
      %v6600 = vpack.c.b16 %v6562, %v6561
      %v6601 = vpack.c.b16 %v6564, %v6563
      %v6602 = vpack.c.b16 %v6566, %v6565
      %v6603 = vpack.c.b16 %v6568, %v6567
      %v6604 = vpack.c.b16 %v6570, %v6569
      %v6605 = vpack.c.b16 %v6572, %v6571
      %v6606 = vpack.c.b16 %v6574, %v6573
      %v6607 = vpack.c.b16 %v6576, %v6575
      %v6608 = vpack.c.b16 %v6578, %v6577
      %v6609 = vpack.c.b16 %v6580, %v6579
      %v6610 = vpack.c.b16 %v6582, %v6581
      %v6611 = vpack.c.b16 %v6584, %v6583
      %v6612 = vpack.c.b16 %v6586, %v6585
      %v6613 = vpack.c.b16 %v6588, %v6587
      %v6614 = vpack.c.b16 %v6590, %v6589
      %v6615 = vpack.c.b16 %v6592, %v6591
      %v6616 = vpack.c.b16 %v6594, %v6593
      %v6617 = vpack.c.b16 %v6596, %v6595
      %v6619 = vshrl.u32 %v6597, 16
      %v6621 = vrot.slane %v6619, 3
      %v6622 = vshll.u32 %v6597, 16
      %v6624 = vrot.slane %v6622, 4
      %v6625 = vor.u32 %v6621, %v6624
      %v6627 = vshrl.u32 %v6598, 16
      %v6629 = vrot.slane %v6627, 3
      %v6630 = vshll.u32 %v6598, 16
      %v6632 = vrot.slane %v6630, 4
      %v6633 = vor.u32 %v6629, %v6632
      %v6634 = vsel %vm1327, %v6625, %v6633
      %v6636 = vshrl.u32 %v6599, 16
      %v6638 = vrot.slane %v6636, 3
      %v6639 = vshll.u32 %v6599, 16
      %v6641 = vrot.slane %v6639, 4
      %v6642 = vor.u32 %v6638, %v6641
      %v6643 = vsel %vm1327, %v6633, %v6642
      %v6645 = vshrl.u32 %v6600, 16
      %v6647 = vrot.slane %v6645, 3
      %v6648 = vshll.u32 %v6600, 16
      %v6650 = vrot.slane %v6648, 4
      %v6651 = vor.u32 %v6647, %v6650
      %v6652 = vsel %vm1327, %v6642, %v6651
      %v6654 = vshrl.u32 %v6601, 16
      %v6656 = vrot.slane %v6654, 3
      %v6657 = vshll.u32 %v6601, 16
      %v6659 = vrot.slane %v6657, 4
      %v6660 = vor.u32 %v6656, %v6659
      %v6661 = vsel %vm1327, %v6651, %v6660
      %v6663 = vshrl.u32 %v6602, 16
      %v6665 = vrot.slane %v6663, 3
      %v6666 = vshll.u32 %v6602, 16
      %v6668 = vrot.slane %v6666, 4
      %v6669 = vor.u32 %v6665, %v6668
      %v6670 = vsel %vm1327, %v6660, %v6669
      %v6672 = vshrl.u32 %v6603, 16
      %v6674 = vrot.slane %v6672, 3
      %v6675 = vshll.u32 %v6603, 16
      %v6677 = vrot.slane %v6675, 4
      %v6678 = vor.u32 %v6674, %v6677
      %v6679 = vsel %vm1327, %v6669, %v6678
      %v6681 = vshrl.u32 %v6604, 16
      %v6683 = vrot.slane %v6681, 3
      %v6684 = vshll.u32 %v6604, 16
      %v6686 = vrot.slane %v6684, 4
      %v6687 = vor.u32 %v6683, %v6686
      %v6688 = vsel %vm1327, %v6678, %v6687
      %v6690 = vshrl.u32 %v6605, 16
      %v6692 = vrot.slane %v6690, 3
      %v6693 = vshll.u32 %v6605, 16
      %v6695 = vrot.slane %v6693, 4
      %v6696 = vor.u32 %v6692, %v6695
      %v6697 = vsel %vm1327, %v6687, %v6696
      %v6699 = vshrl.u32 %v6606, 16
      %v6701 = vrot.slane %v6699, 3
      %v6702 = vshll.u32 %v6606, 16
      %v6704 = vrot.slane %v6702, 4
      %v6705 = vor.u32 %v6701, %v6704
      %v6706 = vsel %vm1327, %v6696, %v6705
      %v6708 = vshrl.u32 %v6607, 16
      %v6710 = vrot.slane %v6708, 3
      %v6711 = vshll.u32 %v6607, 16
      %v6713 = vrot.slane %v6711, 4
      %v6714 = vor.u32 %v6710, %v6713
      %v6715 = vsel %vm1327, %v6705, %v6714
      %v6717 = vshrl.u32 %v6608, 16
      %v6719 = vrot.slane %v6717, 3
      %v6720 = vshll.u32 %v6608, 16
      %v6722 = vrot.slane %v6720, 4
      %v6723 = vor.u32 %v6719, %v6722
      %v6724 = vsel %vm1327, %v6714, %v6723
      %v6726 = vshrl.u32 %v6609, 16
      %v6728 = vrot.slane %v6726, 3
      %v6729 = vshll.u32 %v6609, 16
      %v6731 = vrot.slane %v6729, 4
      %v6732 = vor.u32 %v6728, %v6731
      %v6733 = vsel %vm1327, %v6723, %v6732
      %v6735 = vshrl.u32 %v6610, 16
      %v6737 = vrot.slane %v6735, 3
      %v6738 = vshll.u32 %v6610, 16
      %v6740 = vrot.slane %v6738, 4
      %v6741 = vor.u32 %v6737, %v6740
      %v6742 = vsel %vm1327, %v6732, %v6741
      %v6744 = vshrl.u32 %v6611, 16
      %v6746 = vrot.slane %v6744, 3
      %v6747 = vshll.u32 %v6611, 16
      %v6749 = vrot.slane %v6747, 4
      %v6750 = vor.u32 %v6746, %v6749
      %v6751 = vsel %vm1327, %v6741, %v6750
      %v6753 = vshrl.u32 %v6612, 16
      %v6755 = vrot.slane %v6753, 3
      %v6756 = vshll.u32 %v6612, 16
      %v6758 = vrot.slane %v6756, 4
      %v6759 = vor.u32 %v6755, %v6758
      %v6760 = vsel %vm1327, %v6750, %v6759
      %v6762 = vshrl.u32 %v6613, 16
      %v6764 = vrot.slane %v6762, 3
      %v6765 = vshll.u32 %v6613, 16
      %v6767 = vrot.slane %v6765, 4
      %v6768 = vor.u32 %v6764, %v6767
      %v6769 = vsel %vm1327, %v6759, %v6768
      %v6771 = vshrl.u32 %v6614, 16
      %v6773 = vrot.slane %v6771, 3
      %v6774 = vshll.u32 %v6614, 16
      %v6776 = vrot.slane %v6774, 4
      %v6777 = vor.u32 %v6773, %v6776
      %v6778 = vsel %vm1327, %v6768, %v6777
      %v6780 = vshrl.u32 %v6615, 16
      %v6782 = vrot.slane %v6780, 3
      %v6783 = vshll.u32 %v6615, 16
      %v6785 = vrot.slane %v6783, 4
      %v6786 = vor.u32 %v6782, %v6785
      %v6787 = vsel %vm1327, %v6777, %v6786
      %v6789 = vshrl.u32 %v6616, 16
      %v6791 = vrot.slane %v6789, 3
      %v6792 = vshll.u32 %v6616, 16
      %v6794 = vrot.slane %v6792, 4
      %v6795 = vor.u32 %v6791, %v6794
      %v6796 = vsel %vm1327, %v6786, %v6795
      %v6798 = vshrl.u32 %v6617, 16
      %v6800 = vrot.slane %v6798, 3
      %v6801 = vshll.u32 %v6617, 16
      %v6803 = vrot.slane %v6801, 4
      %v6804 = vor.u32 %v6800, %v6803
      %v6805 = vsel %vm1327, %v6795, %v6804
      %v6807 = vsel %vm5338, %v6634, 0
      %v6810 = vsel %vm5338, %v6643, 0
      %v6813 = vsel %vm5338, %v6652, 0
      %v6816 = vsel %vm5338, %v6661, 0
      %v6819 = vsel %vm5338, %v6670, 0
      %v6822 = vsel %vm5338, %v6679, 0
      %v6825 = vsel %vm5338, %v6688, 0
      %v6828 = vsel %vm5338, %v6697, 0
      %v6831 = vsel %vm5338, %v6706, 0
      %v6834 = vsel %vm5338, %v6715, 0
      %v6837 = vsel %vm5338, %v6724, 0
      %v6840 = vsel %vm5338, %v6733, 0
      %v6843 = vsel %vm5338, %v6742, 0
      %v6846 = vsel %vm5338, %v6751, 0
      %v6849 = vsel %vm5338, %v6760, 0
      %v6852 = vsel %vm5338, %v6769, 0
      %v6855 = vsel %vm5338, %v6778, 0
      %v6858 = vsel %vm5338, %v6787, 0
      %v6861 = vsel %vm5338, %v6796, 0
      %v6864 = vsel %vm5338, %v6805, 0
      %v6867 = vsel %vm5338, %v6804, 0
      %v6870 = vsel %vm5402, %v6512, 0
      %6872 = vmatprep.subr.bf16.mxu0 0
      %6873 = vmatpush1.bf16.msra.mxu0 %v6870
      %6874 = vmatprep.subr.bf16.mxu0 0
      %6875 = vmatpush1.bf16.msra.mxu0 0
      %6876 = vmatprep.subr.bf16.mxu0 0
      %6877 = vmatpush1.bf16.msra.mxu0 0
      %6878 = vmatprep.subr.bf16.mxu0 0
      %6879 = vmatpush1.bf16.msra.mxu0 0
      %6880 = vmatprep.subr.bf16.mxu0 0
      %6881 = vmatpush1.bf16.msra.mxu0 0
      %6882 = vmatprep.subr.bf16.mxu0 0
      %6883 = vmatpush1.bf16.msra.mxu0 0
      %6884 = vmatprep.subr.bf16.mxu0 0
      %6885 = vmatpush1.bf16.msra.mxu0 0
      %6886 = vmatprep.subr.bf16.mxu0 0
      %6887 = vmatpush1.bf16.msra.mxu0 0
      %6888 = vmatprep.subr.bf16.mxu0 0
      %6889 = vmatpush1.bf16.msra.mxu0 0
      %6890 = vmatprep.subr.bf16.mxu0 0
      %6891 = vmatpush1.bf16.msra.mxu0 0
      %6892 = vmatprep.subr.bf16.mxu0 0
      %6893 = vmatpush1.bf16.msra.mxu0 0
      %6894 = vmatprep.subr.bf16.mxu0 0
      %6895 = vmatpush1.bf16.msra.mxu0 0
      %6896 = vmatprep.subr.bf16.mxu0 0
      %6897 = vmatpush1.bf16.msra.mxu0 0
      %6898 = vmatprep.subr.bf16.mxu0 0
      %6899 = vmatpush1.bf16.msra.mxu0 0
      %6900 = vmatprep.subr.bf16.mxu0 0
      %6901 = vmatpush1.bf16.msra.mxu0 0
      %6902 = vmatprep.subr.bf16.mxu0 0
      %6903 = vmatpush1.bf16.msra.mxu0 0
      %6904 = vmatprep.mubr.bf16.mxu0 0
      %6905 = vmatmul.mubr.bf16.gmra.mrb[0].mxu0 %v6807
      %v6906 = vpop.f32.mrb[0].mxu0
      %v6907 = vadd.f32 0.0, %v6906
      %v6908 = vpop.f32.mrb[0].mxu0
      %v6909 = vpop.f32.mrb[0].mxu0
      %v6910 = vadd.f32 0.0, %v6909
      %v6911 = vpop.f32.mrb[0].mxu0
      %6912 = vmatprep.mubr.bf16.mxu0 0
      %6913 = vmatmul.mubr.bf16.gmra.mrb[0].mxu0 %v6810
      %v6914 = vpop.f32.mrb[0].mxu0
      %v6915 = vadd.f32 0.0, %v6914
      %v6916 = vpop.f32.mrb[0].mxu0
      %v6917 = vpop.f32.mrb[0].mxu0
      %v6918 = vadd.f32 0.0, %v6917
      %v6919 = vpop.f32.mrb[0].mxu0
      %6920 = vmatprep.mubr.bf16.mxu0 0
      %6921 = vmatmul.mubr.bf16.gmra.mrb[0].mxu0 %v6813
      %v6922 = vpop.f32.mrb[0].mxu0
      %v6923 = vadd.f32 0.0, %v6922
      %v6924 = vpop.f32.mrb[0].mxu0
      %v6925 = vpop.f32.mrb[0].mxu0
      %v6926 = vadd.f32 0.0, %v6925
      %v6927 = vpop.f32.mrb[0].mxu0
      %6928 = vmatprep.mubr.bf16.mxu0 0
      %6929 = vmatmul.mubr.bf16.gmra.mrb[0].mxu0 %v6816
      %v6930 = vpop.f32.mrb[0].mxu0
      %v6931 = vadd.f32 0.0, %v6930
      %v6932 = vpop.f32.mrb[0].mxu0
      %v6933 = vpop.f32.mrb[0].mxu0
      %v6934 = vadd.f32 0.0, %v6933
      %v6935 = vpop.f32.mrb[0].mxu0
      %6936 = vmatprep.mubr.bf16.mxu0 0
      %6937 = vmatmul.mubr.bf16.gmra.mrb[0].mxu0 %v6819
      %v6938 = vpop.f32.mrb[0].mxu0
      %v6939 = vadd.f32 0.0, %v6938
      %v6940 = vpop.f32.mrb[0].mxu0
      %v6941 = vpop.f32.mrb[0].mxu0
      %v6942 = vadd.f32 0.0, %v6941
      %v6943 = vpop.f32.mrb[0].mxu0
      %6944 = vmatprep.mubr.bf16.mxu0 0
      %6945 = vmatmul.mubr.bf16.gmra.mrb[0].mxu0 %v6822
      %v6946 = vpop.f32.mrb[0].mxu0
      %v6947 = vadd.f32 0.0, %v6946
      %v6948 = vpop.f32.mrb[0].mxu0
      %v6949 = vpop.f32.mrb[0].mxu0
      %v6950 = vadd.f32 0.0, %v6949
      %v6951 = vpop.f32.mrb[0].mxu0
      %6952 = vmatprep.mubr.bf16.mxu0 0
      %6953 = vmatmul.mubr.bf16.gmra.mrb[0].mxu0 %v6825
      %v6954 = vpop.f32.mrb[0].mxu0
      %v6955 = vadd.f32 0.0, %v6954
      %v6956 = vpop.f32.mrb[0].mxu0
      %v6957 = vpop.f32.mrb[0].mxu0
      %v6958 = vadd.f32 0.0, %v6957
      %v6959 = vpop.f32.mrb[0].mxu0
      %6960 = vmatprep.mubr.bf16.mxu0 0
      %6961 = vmatmul.mubr.bf16.gmra.mrb[0].mxu0 %v6828
      %v6962 = vpop.f32.mrb[0].mxu0
      %v6963 = vadd.f32 0.0, %v6962
      %v6964 = vpop.f32.mrb[0].mxu0
      %v6965 = vpop.f32.mrb[0].mxu0
      %v6966 = vadd.f32 0.0, %v6965
      %v6967 = vpop.f32.mrb[0].mxu0
      %6968 = vmatprep.mubr.bf16.mxu0 0
      %6969 = vmatmul.mubr.bf16.gmra.mrb[0].mxu0 %v6831
      %v6970 = vpop.f32.mrb[0].mxu0
      %v6971 = vadd.f32 0.0, %v6970
      %v6972 = vpop.f32.mrb[0].mxu0
      %v6973 = vpop.f32.mrb[0].mxu0
      %v6974 = vadd.f32 0.0, %v6973
      %v6975 = vpop.f32.mrb[0].mxu0
      %6976 = vmatprep.mubr.bf16.mxu0 0
      %6977 = vmatmul.mubr.bf16.gmra.mrb[0].mxu0 %v6834
      %v6978 = vpop.f32.mrb[0].mxu0
      %v6979 = vadd.f32 0.0, %v6978
      %v6980 = vpop.f32.mrb[0].mxu0
      %v6981 = vpop.f32.mrb[0].mxu0
      %v6982 = vadd.f32 0.0, %v6981
      %v6983 = vpop.f32.mrb[0].mxu0
      %6984 = vmatprep.mubr.bf16.mxu0 0
      %6985 = vmatmul.mubr.bf16.gmra.mrb[0].mxu0 %v6837
      %v6986 = vpop.f32.mrb[0].mxu0
      %v6987 = vadd.f32 0.0, %v6986
      %v6988 = vpop.f32.mrb[0].mxu0
      %v6989 = vpop.f32.mrb[0].mxu0
      %v6990 = vadd.f32 0.0, %v6989
      %v6991 = vpop.f32.mrb[0].mxu0
      %6992 = vmatprep.mubr.bf16.mxu0 0
      %6993 = vmatmul.mubr.bf16.gmra.mrb[0].mxu0 %v6840
      %v6994 = vpop.f32.mrb[0].mxu0
      %v6995 = vadd.f32 0.0, %v6994
      %v6996 = vpop.f32.mrb[0].mxu0
      %v6997 = vpop.f32.mrb[0].mxu0
      %v6998 = vadd.f32 0.0, %v6997
      %v6999 = vpop.f32.mrb[0].mxu0
      %7000 = vmatprep.mubr.bf16.mxu0 0
      %7001 = vmatmul.mubr.bf16.gmra.mrb[0].mxu0 %v6843
      %v7002 = vpop.f32.mrb[0].mxu0
      %v7003 = vadd.f32 0.0, %v7002
      %v7004 = vpop.f32.mrb[0].mxu0
      %v7005 = vpop.f32.mrb[0].mxu0
      %v7006 = vadd.f32 0.0, %v7005
      %v7007 = vpop.f32.mrb[0].mxu0
      %7008 = vmatprep.mubr.bf16.mxu0 0
      %7009 = vmatmul.mubr.bf16.gmra.mrb[0].mxu0 %v6846
      %v7010 = vpop.f32.mrb[0].mxu0
      %v7011 = vadd.f32 0.0, %v7010
      %v7012 = vpop.f32.mrb[0].mxu0
      %v7013 = vpop.f32.mrb[0].mxu0
      %v7014 = vadd.f32 0.0, %v7013
      %v7015 = vpop.f32.mrb[0].mxu0
      %7016 = vmatprep.mubr.bf16.mxu0 0
      %7017 = vmatmul.mubr.bf16.gmra.mrb[0].mxu0 %v6849
      %v7018 = vpop.f32.mrb[0].mxu0
      %v7019 = vadd.f32 0.0, %v7018
      %v7020 = vpop.f32.mrb[0].mxu0
      %v7021 = vpop.f32.mrb[0].mxu0
      %v7022 = vadd.f32 0.0, %v7021
      %v7023 = vpop.f32.mrb[0].mxu0
      %7024 = vmatprep.mubr.bf16.mxu0 0
      %7025 = vmatmul.mubr.bf16.gmra.mrb[0].mxu0 %v6852
      %v7026 = vpop.f32.mrb[0].mxu0
      %v7027 = vadd.f32 0.0, %v7026
      %v7028 = vpop.f32.mrb[0].mxu0
      %v7029 = vpop.f32.mrb[0].mxu0
      %v7030 = vadd.f32 0.0, %v7029
      %v7031 = vpop.f32.mrb[0].mxu0
      %7032 = vmatprep.mubr.bf16.mxu0 0
      %7033 = vmatmul.mubr.bf16.gmra.mrb[0].mxu0 %v6855
      %v7034 = vpop.f32.mrb[0].mxu0
      %v7035 = vadd.f32 0.0, %v7034
      %v7036 = vpop.f32.mrb[0].mxu0
      %v7037 = vpop.f32.mrb[0].mxu0
      %v7038 = vadd.f32 0.0, %v7037
      %v7039 = vpop.f32.mrb[0].mxu0
      %7040 = vmatprep.mubr.bf16.mxu0 0
      %7041 = vmatmul.mubr.bf16.gmra.mrb[0].mxu0 %v6858
      %v7042 = vpop.f32.mrb[0].mxu0
      %v7043 = vadd.f32 0.0, %v7042
      %v7044 = vpop.f32.mrb[0].mxu0
      %v7045 = vpop.f32.mrb[0].mxu0
      %v7046 = vadd.f32 0.0, %v7045
      %v7047 = vpop.f32.mrb[0].mxu0
      %7048 = vmatprep.mubr.bf16.mxu0 0
      %7049 = vmatmul.mubr.bf16.gmra.mrb[0].mxu0 %v6861
      %v7050 = vpop.f32.mrb[0].mxu0
      %v7051 = vadd.f32 0.0, %v7050
      %v7052 = vpop.f32.mrb[0].mxu0
      %v7053 = vpop.f32.mrb[0].mxu0
      %v7054 = vadd.f32 0.0, %v7053
      %v7055 = vpop.f32.mrb[0].mxu0
      %7056 = vmatprep.mubr.bf16.mxu0 0
      %7057 = vmatmul.mubr.bf16.gmra.mrb[0].mxu0 %v6864
      %v7058 = vpop.f32.mrb[0].mxu0
      %v7059 = vadd.f32 0.0, %v7058
      %v7060 = vpop.f32.mrb[0].mxu0
      %v7061 = vpop.f32.mrb[0].mxu0
      %v7062 = vadd.f32 0.0, %v7061
      %v7063 = vpop.f32.mrb[0].mxu0
      %7064 = vmatprep.mubr.bf16.mxu0 0
      %7065 = vmatmul.mubr.bf16.gmra.mrb[0].mxu0 %v6867
      %v7066 = vpop.f32.mrb[0].mxu0
      %v7067 = vadd.f32 0.0, %v7066
      %v7068 = vpop.f32.mrb[0].mxu0
      %v7069 = vpop.f32.mrb[0].mxu0
      %v7070 = vpop.f32.mrb[0].mxu0
      %7071 = vdwg.mxu0
      %v7072 = vadd.f32 %v6428, %v6907
      %v7073 = vadd.f32 %v6429, %v6910
      %v7074 = vadd.f32 %v6430, %v6915
      %v7075 = vadd.f32 %v6431, %v6918
      %v7076 = vadd.f32 %v6432, %v6923
      %v7077 = vadd.f32 %v6433, %v6926
      %v7078 = vadd.f32 %v6434, %v6931
      %v7079 = vadd.f32 %v6435, %v6934
      %v7080 = vadd.f32 %v6436, %v6939
      %v7081 = vadd.f32 %v6437, %v6942
      %v7082 = vadd.f32 %v6438, %v6947
      %v7083 = vadd.f32 %v6439, %v6950
      %v7084 = vadd.f32 %v6440, %v6955
      %v7085 = vadd.f32 %v6441, %v6958
      %v7086 = vadd.f32 %v6442, %v6963
      %v7087 = vadd.f32 %v6443, %v6966
      %v7088 = vadd.f32 %v6444, %v6971
      %v7089 = vadd.f32 %v6445, %v6974
      %v7090 = vadd.f32 %v6446, %v6979
      %v7091 = vadd.f32 %v6447, %v6982
      %v7092 = vadd.f32 %v6448, %v6987
      %v7093 = vadd.f32 %v6449, %v6990
      %v7094 = vadd.f32 %v6450, %v6995
      %v7095 = vadd.f32 %v6451, %v6998
      %v7096 = vadd.f32 %v6452, %v7003
      %v7097 = vadd.f32 %v6453, %v7006
      %v7098 = vadd.f32 %v6454, %v7011
      %v7099 = vadd.f32 %v6455, %v7014
      %v7100 = vadd.f32 %v6456, %v7019
      %v7101 = vadd.f32 %v6457, %v7022
      %v7102 = vadd.f32 %v6458, %v7027
      %v7103 = vadd.f32 %v6459, %v7030
      %v7104 = vadd.f32 %v6460, %v7035
      %v7105 = vadd.f32 %v6461, %v7038
      %v7106 = vadd.f32 %v6462, %v7043
      %v7107 = vadd.f32 %v6463, %v7046
      %v7108 = vadd.f32 %v6464, %v7051
      %v7109 = vadd.f32 %v6465, %v7054
      %v7110 = vadd.f32 %v6466, %v7059
      %v7111 = vadd.f32 %v6467, %v7062
      %v7112 = vadd.f32 %v6468, %v7067
      %s7113 = scalar_lea.vmem %s5, 16
      %v7114 = vld [vmem:[%s7113] sm:$0xf]
      %v7115 = vpack.c.b16 %v6557, %v6556
      %v7116 = vpack.c.b16 %v6559, %v6558
      %v7117 = vpack.c.b16 %v6561, %v6560
      %v7118 = vpack.c.b16 %v6563, %v6562
      %v7119 = vpack.c.b16 %v6565, %v6564
      %v7120 = vpack.c.b16 %v6567, %v6566
      %v7121 = vpack.c.b16 %v6569, %v6568
      %v7122 = vpack.c.b16 %v6571, %v6570
      %v7123 = vpack.c.b16 %v6573, %v6572
      %v7124 = vpack.c.b16 %v6575, %v6574
      %v7125 = vpack.c.b16 %v6577, %v6576
      %v7126 = vpack.c.b16 %v6579, %v6578
      %v7127 = vpack.c.b16 %v6581, %v6580
      %v7128 = vpack.c.b16 %v6583, %v6582
      %v7129 = vpack.c.b16 %v6585, %v6584
      %v7130 = vpack.c.b16 %v6587, %v6586
      %v7131 = vpack.c.b16 %v6589, %v6588
      %v7132 = vpack.c.b16 %v6591, %v6590
      %v7133 = vpack.c.b16 %v6593, %v6592
      %v7134 = vpack.c.b16 %v6595, %v6594
      %v7135 = vpack.c.b16 %v6596, %v6596
      %v7137 = vsel %vm5338, %v7115, 0
      %v7140 = vsel %vm5338, %v7116, 0
      %v7143 = vsel %vm5338, %v7117, 0
      %v7146 = vsel %vm5338, %v7118, 0
      %v7149 = vsel %vm5338, %v7119, 0
      %v7152 = vsel %vm5338, %v7120, 0
      %v7155 = vsel %vm5338, %v7121, 0
      %v7158 = vsel %vm5338, %v7122, 0
      %v7161 = vsel %vm5338, %v7123, 0
      %v7164 = vsel %vm5338, %v7124, 0
      %v7167 = vsel %vm5338, %v7125, 0
      %v7170 = vsel %vm5338, %v7126, 0
      %v7173 = vsel %vm5338, %v7127, 0
      %v7176 = vsel %vm5338, %v7128, 0
      %v7179 = vsel %vm5338, %v7129, 0
      %v7182 = vsel %vm5338, %v7130, 0
      %v7185 = vsel %vm5338, %v7131, 0
      %v7188 = vsel %vm5338, %v7132, 0
      %v7191 = vsel %vm5338, %v7133, 0
      %v7194 = vsel %vm5338, %v7134, 0
      %v7197 = vsel %vm5338, %v7135, 0
      %v7200 = vsel %vm5402, %v7114, 0
      %7202 = vmatprep.subr.bf16.mxu0 0
      %7203 = vmatpush1.bf16.msra.mxu0 %v7200
      %7204 = vmatprep.subr.bf16.mxu0 0
      %7205 = vmatpush1.bf16.msra.mxu0 0
      %7206 = vmatprep.subr.bf16.mxu0 0
      %7207 = vmatpush1.bf16.msra.mxu0 0
      %7208 = vmatprep.subr.bf16.mxu0 0
      %7209 = vmatpush1.bf16.msra.mxu0 0
      %7210 = vmatprep.subr.bf16.mxu0 0
      %7211 = vmatpush1.bf16.msra.mxu0 0
      %7212 = vmatprep.subr.bf16.mxu0 0
      %7213 = vmatpush1.bf16.msra.mxu0 0
      %7214 = vmatprep.subr.bf16.mxu0 0
      %7215 = vmatpush1.bf16.msra.mxu0 0
      %7216 = vmatprep.subr.bf16.mxu0 0
      %7217 = vmatpush1.bf16.msra.mxu0 0
      %7218 = vmatprep.subr.bf16.mxu0 0
      %7219 = vmatpush1.bf16.msra.mxu0 0
      %7220 = vmatprep.subr.bf16.mxu0 0
      %7221 = vmatpush1.bf16.msra.mxu0 0
      %7222 = vmatprep.subr.bf16.mxu0 0
      %7223 = vmatpush1.bf16.msra.mxu0 0
      %7224 = vmatprep.subr.bf16.mxu0 0
      %7225 = vmatpush1.bf16.msra.mxu0 0
      %7226 = vmatprep.subr.bf16.mxu0 0
      %7227 = vmatpush1.bf16.msra.mxu0 0
      %7228 = vmatprep.subr.bf16.mxu0 0
      %7229 = vmatpush1.bf16.msra.mxu0 0
      %7230 = vmatprep.subr.bf16.mxu0 0
      %7231 = vmatpush1.bf16.msra.mxu0 0
      %7232 = vmatprep.subr.bf16.mxu0 0
      %7233 = vmatpush1.bf16.msra.mxu0 0
      %7234 = vmatprep.mubr.bf16.mxu0 0
      %7235 = vmatmul.mubr.bf16.gmra.mrb[0].mxu0 %v7137
      %v7236 = vpop.f32.mrb[0].mxu0
      %v7237 = vadd.f32 0.0, %v7236
      %v7238 = vpop.f32.mrb[0].mxu0
      %v7239 = vpop.f32.mrb[0].mxu0
      %v7240 = vadd.f32 0.0, %v7239
      %v7241 = vpop.f32.mrb[0].mxu0
      %7242 = vmatprep.mubr.bf16.mxu0 0
      %7243 = vmatmul.mubr.bf16.gmra.mrb[0].mxu0 %v7140
      %v7244 = vpop.f32.mrb[0].mxu0
      %v7245 = vadd.f32 0.0, %v7244
      %v7246 = vpop.f32.mrb[0].mxu0
      %v7247 = vpop.f32.mrb[0].mxu0
      %v7248 = vadd.f32 0.0, %v7247
      %v7249 = vpop.f32.mrb[0].mxu0
      %7250 = vmatprep.mubr.bf16.mxu0 0
      %7251 = vmatmul.mubr.bf16.gmra.mrb[0].mxu0 %v7143
      %v7252 = vpop.f32.mrb[0].mxu0
      %v7253 = vadd.f32 0.0, %v7252
      %v7254 = vpop.f32.mrb[0].mxu0
      %v7255 = vpop.f32.mrb[0].mxu0
      %v7256 = vadd.f32 0.0, %v7255
      %v7257 = vpop.f32.mrb[0].mxu0
      %7258 = vmatprep.mubr.bf16.mxu0 0
      %7259 = vmatmul.mubr.bf16.gmra.mrb[0].mxu0 %v7146
      %v7260 = vpop.f32.mrb[0].mxu0
      %v7261 = vadd.f32 0.0, %v7260
      %v7262 = vpop.f32.mrb[0].mxu0
      %v7263 = vpop.f32.mrb[0].mxu0
      %v7264 = vadd.f32 0.0, %v7263
      %v7265 = vpop.f32.mrb[0].mxu0
      %7266 = vmatprep.mubr.bf16.mxu0 0
      %7267 = vmatmul.mubr.bf16.gmra.mrb[0].mxu0 %v7149
      %v7268 = vpop.f32.mrb[0].mxu0
      %v7269 = vadd.f32 0.0, %v7268
      %v7270 = vpop.f32.mrb[0].mxu0
      %v7271 = vpop.f32.mrb[0].mxu0
      %v7272 = vadd.f32 0.0, %v7271
      %v7273 = vpop.f32.mrb[0].mxu0
      %7274 = vmatprep.mubr.bf16.mxu0 0
      %7275 = vmatmul.mubr.bf16.gmra.mrb[0].mxu0 %v7152
      %v7276 = vpop.f32.mrb[0].mxu0
      %v7277 = vadd.f32 0.0, %v7276
      %v7278 = vpop.f32.mrb[0].mxu0
      %v7279 = vpop.f32.mrb[0].mxu0
      %v7280 = vadd.f32 0.0, %v7279
      %v7281 = vpop.f32.mrb[0].mxu0
      %7282 = vmatprep.mubr.bf16.mxu0 0
      %7283 = vmatmul.mubr.bf16.gmra.mrb[0].mxu0 %v7155
      %v7284 = vpop.f32.mrb[0].mxu0
      %v7285 = vadd.f32 0.0, %v7284
      %v7286 = vpop.f32.mrb[0].mxu0
      %v7287 = vpop.f32.mrb[0].mxu0
      %v7288 = vadd.f32 0.0, %v7287
      %v7289 = vpop.f32.mrb[0].mxu0
      %7290 = vmatprep.mubr.bf16.mxu0 0
      %7291 = vmatmul.mubr.bf16.gmra.mrb[0].mxu0 %v7158
      %v7292 = vpop.f32.mrb[0].mxu0
      %v7293 = vadd.f32 0.0, %v7292
      %v7294 = vpop.f32.mrb[0].mxu0
      %v7295 = vpop.f32.mrb[0].mxu0
      %v7296 = vadd.f32 0.0, %v7295
      %v7297 = vpop.f32.mrb[0].mxu0
      %7298 = vmatprep.mubr.bf16.mxu0 0
      %7299 = vmatmul.mubr.bf16.gmra.mrb[0].mxu0 %v7161
      %v7300 = vpop.f32.mrb[0].mxu0
      %v7301 = vadd.f32 0.0, %v7300
      %v7302 = vpop.f32.mrb[0].mxu0
      %v7303 = vpop.f32.mrb[0].mxu0
      %v7304 = vadd.f32 0.0, %v7303
      %v7305 = vpop.f32.mrb[0].mxu0
      %7306 = vmatprep.mubr.bf16.mxu0 0
      %7307 = vmatmul.mubr.bf16.gmra.mrb[0].mxu0 %v7164
      %v7308 = vpop.f32.mrb[0].mxu0
      %v7309 = vadd.f32 0.0, %v7308
      %v7310 = vpop.f32.mrb[0].mxu0
      %v7311 = vpop.f32.mrb[0].mxu0
      %v7312 = vadd.f32 0.0, %v7311
      %v7313 = vpop.f32.mrb[0].mxu0
      %7314 = vmatprep.mubr.bf16.mxu0 0
      %7315 = vmatmul.mubr.bf16.gmra.mrb[0].mxu0 %v7167
      %v7316 = vpop.f32.mrb[0].mxu0
      %v7317 = vadd.f32 0.0, %v7316
      %v7318 = vpop.f32.mrb[0].mxu0
      %v7319 = vpop.f32.mrb[0].mxu0
      %v7320 = vadd.f32 0.0, %v7319
      %v7321 = vpop.f32.mrb[0].mxu0
      %7322 = vmatprep.mubr.bf16.mxu0 0
      %7323 = vmatmul.mubr.bf16.gmra.mrb[0].mxu0 %v7170
      %v7324 = vpop.f32.mrb[0].mxu0
      %v7325 = vadd.f32 0.0, %v7324
      %v7326 = vpop.f32.mrb[0].mxu0
      %v7327 = vpop.f32.mrb[0].mxu0
      %v7328 = vadd.f32 0.0, %v7327
      %v7329 = vpop.f32.mrb[0].mxu0
      %7330 = vmatprep.mubr.bf16.mxu0 0
      %7331 = vmatmul.mubr.bf16.gmra.mrb[0].mxu0 %v7173
      %v7332 = vpop.f32.mrb[0].mxu0
      %v7333 = vadd.f32 0.0, %v7332
      %v7334 = vpop.f32.mrb[0].mxu0
      %v7335 = vpop.f32.mrb[0].mxu0
      %v7336 = vadd.f32 0.0, %v7335
      %v7337 = vpop.f32.mrb[0].mxu0
      %7338 = vmatprep.mubr.bf16.mxu0 0
      %7339 = vmatmul.mubr.bf16.gmra.mrb[0].mxu0 %v7176
      %v7340 = vpop.f32.mrb[0].mxu0
      %v7341 = vadd.f32 0.0, %v7340
      %v7342 = vpop.f32.mrb[0].mxu0
      %v7343 = vpop.f32.mrb[0].mxu0
      %v7344 = vadd.f32 0.0, %v7343
      %v7345 = vpop.f32.mrb[0].mxu0
      %7346 = vmatprep.mubr.bf16.mxu0 0
      %7347 = vmatmul.mubr.bf16.gmra.mrb[0].mxu0 %v7179
      %v7348 = vpop.f32.mrb[0].mxu0
      %v7349 = vadd.f32 0.0, %v7348
      %v7350 = vpop.f32.mrb[0].mxu0
      %v7351 = vpop.f32.mrb[0].mxu0
      %v7352 = vadd.f32 0.0, %v7351
      %v7353 = vpop.f32.mrb[0].mxu0
      %7354 = vmatprep.mubr.bf16.mxu0 0
      %7355 = vmatmul.mubr.bf16.gmra.mrb[0].mxu0 %v7182
      %v7356 = vpop.f32.mrb[0].mxu0
      %v7357 = vadd.f32 0.0, %v7356
      %v7358 = vpop.f32.mrb[0].mxu0
      %v7359 = vpop.f32.mrb[0].mxu0
      %v7360 = vadd.f32 0.0, %v7359
      %v7361 = vpop.f32.mrb[0].mxu0
      %7362 = vmatprep.mubr.bf16.mxu0 0
      %7363 = vmatmul.mubr.bf16.gmra.mrb[0].mxu0 %v7185
      %v7364 = vpop.f32.mrb[0].mxu0
      %v7365 = vadd.f32 0.0, %v7364
      %v7366 = vpop.f32.mrb[0].mxu0
      %v7367 = vpop.f32.mrb[0].mxu0
      %v7368 = vadd.f32 0.0, %v7367
      %v7369 = vpop.f32.mrb[0].mxu0
      %7370 = vmatprep.mubr.bf16.mxu0 0
      %7371 = vmatmul.mubr.bf16.gmra.mrb[0].mxu0 %v7188
      %v7372 = vpop.f32.mrb[0].mxu0
      %v7373 = vadd.f32 0.0, %v7372
      %v7374 = vpop.f32.mrb[0].mxu0
      %v7375 = vpop.f32.mrb[0].mxu0
      %v7376 = vadd.f32 0.0, %v7375
      %v7377 = vpop.f32.mrb[0].mxu0
      %7378 = vmatprep.mubr.bf16.mxu0 0
      %7379 = vmatmul.mubr.bf16.gmra.mrb[0].mxu0 %v7191
      %v7380 = vpop.f32.mrb[0].mxu0
      %v7381 = vadd.f32 0.0, %v7380
      %v7382 = vpop.f32.mrb[0].mxu0
      %v7383 = vpop.f32.mrb[0].mxu0
      %v7384 = vadd.f32 0.0, %v7383
      %v7385 = vpop.f32.mrb[0].mxu0
      %7386 = vmatprep.mubr.bf16.mxu0 0
      %7387 = vmatmul.mubr.bf16.gmra.mrb[0].mxu0 %v7194
      %v7388 = vpop.f32.mrb[0].mxu0
      %v7389 = vadd.f32 0.0, %v7388
      %v7390 = vpop.f32.mrb[0].mxu0
      %v7391 = vpop.f32.mrb[0].mxu0
      %v7392 = vadd.f32 0.0, %v7391
      %v7393 = vpop.f32.mrb[0].mxu0
      %7394 = vmatprep.mubr.bf16.mxu0 0
      %7395 = vmatmul.mubr.bf16.gmra.mrb[0].mxu0 %v7197
      %v7396 = vpop.f32.mrb[0].mxu0
      %v7397 = vadd.f32 0.0, %v7396
      %v7398 = vpop.f32.mrb[0].mxu0
      %v7399 = vpop.f32.mrb[0].mxu0
      %v7400 = vpop.f32.mrb[0].mxu0
      %7401 = vdwg.mxu0
      %v7402 = vadd.f32 %v7072, %v7237
      %v7403 = vadd.f32 %v7073, %v7240
      %v7404 = vadd.f32 %v7074, %v7245
      %v7405 = vadd.f32 %v7075, %v7248
      %v7406 = vadd.f32 %v7076, %v7253
      %v7407 = vadd.f32 %v7077, %v7256
      %v7408 = vadd.f32 %v7078, %v7261
      %v7409 = vadd.f32 %v7079, %v7264
      %v7410 = vadd.f32 %v7080, %v7269
      %v7411 = vadd.f32 %v7081, %v7272
      %v7412 = vadd.f32 %v7082, %v7277
      %v7413 = vadd.f32 %v7083, %v7280
      %v7414 = vadd.f32 %v7084, %v7285
      %v7415 = vadd.f32 %v7085, %v7288
      %v7416 = vadd.f32 %v7086, %v7293
      %v7417 = vadd.f32 %v7087, %v7296
      %v7418 = vadd.f32 %v7088, %v7301
      %v7419 = vadd.f32 %v7089, %v7304
      %v7420 = vadd.f32 %v7090, %v7309
      %v7421 = vadd.f32 %v7091, %v7312
      %v7422 = vadd.f32 %v7092, %v7317
      %v7423 = vadd.f32 %v7093, %v7320
      %v7424 = vadd.f32 %v7094, %v7325
      %v7425 = vadd.f32 %v7095, %v7328
      %v7426 = vadd.f32 %v7096, %v7333
      %v7427 = vadd.f32 %v7097, %v7336
      %v7428 = vadd.f32 %v7098, %v7341
      %v7429 = vadd.f32 %v7099, %v7344
      %v7430 = vadd.f32 %v7100, %v7349
      %v7431 = vadd.f32 %v7101, %v7352
      %v7432 = vadd.f32 %v7102, %v7357
      %v7433 = vadd.f32 %v7103, %v7360
      %v7434 = vadd.f32 %v7104, %v7365
      %v7435 = vadd.f32 %v7105, %v7368
      %v7436 = vadd.f32 %v7106, %v7373
      %v7437 = vadd.f32 %v7107, %v7376
      %v7438 = vadd.f32 %v7108, %v7381
      %v7439 = vadd.f32 %v7109, %v7384
      %v7440 = vadd.f32 %v7110, %v7389
      %v7441 = vadd.f32 %v7111, %v7392
      %v7442 = vadd.f32 %v7112, %v7397
      %v7443 = vld [vmem:[#allocation2 + $0xb0] sm:$0x7]
      %s7444 = scalar_lea.vmem %s5, 20
      %v7445 = vld [vmem:[%s7444] sm:$0xf]
      %v7447 = vunpack.c.l.b16 %v7443
      %v7448 = vpack.c.b16 %v7447, %v7447
      %v7449 = vshrl.u32 %v7115, 16
      %v7451 = vshll.u32 %v7115, 16
      %v7453 = vrot.slane %v7451, 1
      %v7454 = vor.u32 %v7449, %v7453
      %v7455 = vshll.u32 %v7116, 16
      %v7457 = vrot.slane %v7455, 1
      %v7458 = vsel %vm2708, %v7454, %v7457
      %v7459 = vshrl.u32 %v7116, 16
      %v7461 = vor.u32 %v7459, %v7457
      %v7462 = vshll.u32 %v7117, 16
      %v7464 = vrot.slane %v7462, 1
      %v7465 = vsel %vm2708, %v7461, %v7464
      %v7466 = vshrl.u32 %v7117, 16
      %v7468 = vor.u32 %v7466, %v7464
      %v7469 = vshll.u32 %v7118, 16
      %v7471 = vrot.slane %v7469, 1
      %v7472 = vsel %vm2708, %v7468, %v7471
      %v7473 = vshrl.u32 %v7118, 16
      %v7475 = vor.u32 %v7473, %v7471
      %v7476 = vshll.u32 %v7119, 16
      %v7478 = vrot.slane %v7476, 1
      %v7479 = vsel %vm2708, %v7475, %v7478
      %v7480 = vshrl.u32 %v7119, 16
      %v7482 = vor.u32 %v7480, %v7478
      %v7483 = vshll.u32 %v7120, 16
      %v7485 = vrot.slane %v7483, 1
      %v7486 = vsel %vm2708, %v7482, %v7485
      %v7487 = vshrl.u32 %v7120, 16
      %v7489 = vor.u32 %v7487, %v7485
      %v7490 = vshll.u32 %v7121, 16
      %v7492 = vrot.slane %v7490, 1
      %v7493 = vsel %vm2708, %v7489, %v7492
      %v7494 = vshrl.u32 %v7121, 16
      %v7496 = vor.u32 %v7494, %v7492
      %v7497 = vshll.u32 %v7122, 16
      %v7499 = vrot.slane %v7497, 1
      %v7500 = vsel %vm2708, %v7496, %v7499
      %v7501 = vshrl.u32 %v7122, 16
      %v7503 = vor.u32 %v7501, %v7499
      %v7504 = vshll.u32 %v7123, 16
      %v7506 = vrot.slane %v7504, 1
      %v7507 = vsel %vm2708, %v7503, %v7506
      %v7508 = vshrl.u32 %v7123, 16
      %v7510 = vor.u32 %v7508, %v7506
      %v7511 = vshll.u32 %v7124, 16
      %v7513 = vrot.slane %v7511, 1
      %v7514 = vsel %vm2708, %v7510, %v7513
      %v7515 = vshrl.u32 %v7124, 16
      %v7517 = vor.u32 %v7515, %v7513
      %v7518 = vshll.u32 %v7125, 16
      %v7520 = vrot.slane %v7518, 1
      %v7521 = vsel %vm2708, %v7517, %v7520
      %v7522 = vshrl.u32 %v7125, 16
      %v7524 = vor.u32 %v7522, %v7520
      %v7525 = vshll.u32 %v7126, 16
      %v7527 = vrot.slane %v7525, 1
      %v7528 = vsel %vm2708, %v7524, %v7527
      %v7529 = vshrl.u32 %v7126, 16
      %v7531 = vor.u32 %v7529, %v7527
      %v7532 = vshll.u32 %v7127, 16
      %v7534 = vrot.slane %v7532, 1
      %v7535 = vsel %vm2708, %v7531, %v7534
      %v7536 = vshrl.u32 %v7127, 16
      %v7538 = vor.u32 %v7536, %v7534
      %v7539 = vshll.u32 %v7128, 16
      %v7541 = vrot.slane %v7539, 1
      %v7542 = vsel %vm2708, %v7538, %v7541
      %v7543 = vshrl.u32 %v7128, 16
      %v7545 = vor.u32 %v7543, %v7541
      %v7546 = vshll.u32 %v7129, 16
      %v7548 = vrot.slane %v7546, 1
      %v7549 = vsel %vm2708, %v7545, %v7548
      %v7550 = vshrl.u32 %v7129, 16
      %v7552 = vor.u32 %v7550, %v7548
      %v7553 = vshll.u32 %v7130, 16
      %v7555 = vrot.slane %v7553, 1
      %v7556 = vsel %vm2708, %v7552, %v7555
      %v7557 = vshrl.u32 %v7130, 16
      %v7559 = vor.u32 %v7557, %v7555
      %v7560 = vshll.u32 %v7131, 16
      %v7562 = vrot.slane %v7560, 1
      %v7563 = vsel %vm2708, %v7559, %v7562
      %v7564 = vshrl.u32 %v7131, 16
      %v7566 = vor.u32 %v7564, %v7562
      %v7567 = vshll.u32 %v7132, 16
      %v7569 = vrot.slane %v7567, 1
      %v7570 = vsel %vm2708, %v7566, %v7569
      %v7571 = vshrl.u32 %v7132, 16
      %v7573 = vor.u32 %v7571, %v7569
      %v7574 = vshll.u32 %v7133, 16
      %v7576 = vrot.slane %v7574, 1
      %v7577 = vsel %vm2708, %v7573, %v7576
      %v7578 = vshrl.u32 %v7133, 16
      %v7580 = vor.u32 %v7578, %v7576
      %v7581 = vshll.u32 %v7134, 16
      %v7583 = vrot.slane %v7581, 1
      %v7584 = vsel %vm2708, %v7580, %v7583
      %v7585 = vshrl.u32 %v7134, 16
      %v7587 = vor.u32 %v7585, %v7583
      %v7589 = vshll.u32 %v7448, 16
      %v7591 = vrot.slane %v7589, 1
      %v7592 = vsel %vm2708, %v7587, %v7591
      %v7593 = vshrl.u32 %v7448, 16
      %v7595 = vor.u32 %v7593, %v7591
      %v7597 = vsel %vm5338, %v7458, 0
      %v7600 = vsel %vm5338, %v7465, 0
      %v7603 = vsel %vm5338, %v7472, 0
      %v7606 = vsel %vm5338, %v7479, 0
      %v7609 = vsel %vm5338, %v7486, 0
      %v7612 = vsel %vm5338, %v7493, 0
      %v7615 = vsel %vm5338, %v7500, 0
      %v7618 = vsel %vm5338, %v7507, 0
      %v7621 = vsel %vm5338, %v7514, 0
      %v7624 = vsel %vm5338, %v7521, 0
      %v7627 = vsel %vm5338, %v7528, 0
      %v7630 = vsel %vm5338, %v7535, 0
      %v7633 = vsel %vm5338, %v7542, 0
      %v7636 = vsel %vm5338, %v7549, 0
      %v7639 = vsel %vm5338, %v7556, 0
      %v7642 = vsel %vm5338, %v7563, 0
      %v7645 = vsel %vm5338, %v7570, 0
      %v7648 = vsel %vm5338, %v7577, 0
      %v7651 = vsel %vm5338, %v7584, 0
      %v7654 = vsel %vm5338, %v7592, 0
      %v7657 = vsel %vm5338, %v7595, 0
      %v7660 = vsel %vm5402, %v7445, 0
      %7662 = vmatprep.subr.bf16.mxu0 0
      %7663 = vmatpush1.bf16.msra.mxu0 %v7660
      %7664 = vmatprep.subr.bf16.mxu0 0
      %7665 = vmatpush1.bf16.msra.mxu0 0
      %7666 = vmatprep.subr.bf16.mxu0 0
      %7667 = vmatpush1.bf16.msra.mxu0 0
      %7668 = vmatprep.subr.bf16.mxu0 0
      %7669 = vmatpush1.bf16.msra.mxu0 0
      %7670 = vmatprep.subr.bf16.mxu0 0
      %7671 = vmatpush1.bf16.msra.mxu0 0
      %7672 = vmatprep.subr.bf16.mxu0 0
      %7673 = vmatpush1.bf16.msra.mxu0 0
      %7674 = vmatprep.subr.bf16.mxu0 0
      %7675 = vmatpush1.bf16.msra.mxu0 0
      %7676 = vmatprep.subr.bf16.mxu0 0
      %7677 = vmatpush1.bf16.msra.mxu0 0
      %7678 = vmatprep.subr.bf16.mxu0 0
      %7679 = vmatpush1.bf16.msra.mxu0 0
      %7680 = vmatprep.subr.bf16.mxu0 0
      %7681 = vmatpush1.bf16.msra.mxu0 0
      %7682 = vmatprep.subr.bf16.mxu0 0
      %7683 = vmatpush1.bf16.msra.mxu0 0
      %7684 = vmatprep.subr.bf16.mxu0 0
      %7685 = vmatpush1.bf16.msra.mxu0 0
      %7686 = vmatprep.subr.bf16.mxu0 0
      %7687 = vmatpush1.bf16.msra.mxu0 0
      %7688 = vmatprep.subr.bf16.mxu0 0
      %7689 = vmatpush1.bf16.msra.mxu0 0
      %7690 = vmatprep.subr.bf16.mxu0 0
      %7691 = vmatpush1.bf16.msra.mxu0 0
      %7692 = vmatprep.subr.bf16.mxu0 0
      %7693 = vmatpush1.bf16.msra.mxu0 0
      %7694 = vmatprep.mubr.bf16.mxu0 0
      %7695 = vmatmul.mubr.bf16.gmra.mrb[0].mxu0 %v7597
      %v7696 = vpop.f32.mrb[0].mxu0
      %v7697 = vadd.f32 0.0, %v7696
      %v7698 = vpop.f32.mrb[0].mxu0
      %v7699 = vpop.f32.mrb[0].mxu0
      %v7700 = vadd.f32 0.0, %v7699
      %v7701 = vpop.f32.mrb[0].mxu0
      %7702 = vmatprep.mubr.bf16.mxu0 0
      %7703 = vmatmul.mubr.bf16.gmra.mrb[0].mxu0 %v7600
      %v7704 = vpop.f32.mrb[0].mxu0
      %v7705 = vadd.f32 0.0, %v7704
      %v7706 = vpop.f32.mrb[0].mxu0
      %v7707 = vpop.f32.mrb[0].mxu0
      %v7708 = vadd.f32 0.0, %v7707
      %v7709 = vpop.f32.mrb[0].mxu0
      %7710 = vmatprep.mubr.bf16.mxu0 0
      %7711 = vmatmul.mubr.bf16.gmra.mrb[0].mxu0 %v7603
      %v7712 = vpop.f32.mrb[0].mxu0
      %v7713 = vadd.f32 0.0, %v7712
      %v7714 = vpop.f32.mrb[0].mxu0
      %v7715 = vpop.f32.mrb[0].mxu0
      %v7716 = vadd.f32 0.0, %v7715
      %v7717 = vpop.f32.mrb[0].mxu0
      %7718 = vmatprep.mubr.bf16.mxu0 0
      %7719 = vmatmul.mubr.bf16.gmra.mrb[0].mxu0 %v7606
      %v7720 = vpop.f32.mrb[0].mxu0
      %v7721 = vadd.f32 0.0, %v7720
      %v7722 = vpop.f32.mrb[0].mxu0
      %v7723 = vpop.f32.mrb[0].mxu0
      %v7724 = vadd.f32 0.0, %v7723
      %v7725 = vpop.f32.mrb[0].mxu0
      %7726 = vmatprep.mubr.bf16.mxu0 0
      %7727 = vmatmul.mubr.bf16.gmra.mrb[0].mxu0 %v7609
      %v7728 = vpop.f32.mrb[0].mxu0
      %v7729 = vadd.f32 0.0, %v7728
      %v7730 = vpop.f32.mrb[0].mxu0
      %v7731 = vpop.f32.mrb[0].mxu0
      %v7732 = vadd.f32 0.0, %v7731
      %v7733 = vpop.f32.mrb[0].mxu0
      %7734 = vmatprep.mubr.bf16.mxu0 0
      %7735 = vmatmul.mubr.bf16.gmra.mrb[0].mxu0 %v7612
      %v7736 = vpop.f32.mrb[0].mxu0
      %v7737 = vadd.f32 0.0, %v7736
      %v7738 = vpop.f32.mrb[0].mxu0
      %v7739 = vpop.f32.mrb[0].mxu0
      %v7740 = vadd.f32 0.0, %v7739
      %v7741 = vpop.f32.mrb[0].mxu0
      %7742 = vmatprep.mubr.bf16.mxu0 0
      %7743 = vmatmul.mubr.bf16.gmra.mrb[0].mxu0 %v7615
      %v7744 = vpop.f32.mrb[0].mxu0
      %v7745 = vadd.f32 0.0, %v7744
      %v7746 = vpop.f32.mrb[0].mxu0
      %v7747 = vpop.f32.mrb[0].mxu0
      %v7748 = vadd.f32 0.0, %v7747
      %v7749 = vpop.f32.mrb[0].mxu0
      %7750 = vmatprep.mubr.bf16.mxu0 0
      %7751 = vmatmul.mubr.bf16.gmra.mrb[0].mxu0 %v7618
      %v7752 = vpop.f32.mrb[0].mxu0
      %v7753 = vadd.f32 0.0, %v7752
      %v7754 = vpop.f32.mrb[0].mxu0
      %v7755 = vpop.f32.mrb[0].mxu0
      %v7756 = vadd.f32 0.0, %v7755
      %v7757 = vpop.f32.mrb[0].mxu0
      %7758 = vmatprep.mubr.bf16.mxu0 0
      %7759 = vmatmul.mubr.bf16.gmra.mrb[0].mxu0 %v7621
      %v7760 = vpop.f32.mrb[0].mxu0
      %v7761 = vadd.f32 0.0, %v7760
      %v7762 = vpop.f32.mrb[0].mxu0
      %v7763 = vpop.f32.mrb[0].mxu0
      %v7764 = vadd.f32 0.0, %v7763
      %v7765 = vpop.f32.mrb[0].mxu0
      %7766 = vmatprep.mubr.bf16.mxu0 0
      %7767 = vmatmul.mubr.bf16.gmra.mrb[0].mxu0 %v7624
      %v7768 = vpop.f32.mrb[0].mxu0
      %v7769 = vadd.f32 0.0, %v7768
      %v7770 = vpop.f32.mrb[0].mxu0
      %v7771 = vpop.f32.mrb[0].mxu0
      %v7772 = vadd.f32 0.0, %v7771
      %v7773 = vpop.f32.mrb[0].mxu0
      %7774 = vmatprep.mubr.bf16.mxu0 0
      %7775 = vmatmul.mubr.bf16.gmra.mrb[0].mxu0 %v7627
      %v7776 = vpop.f32.mrb[0].mxu0
      %v7777 = vadd.f32 0.0, %v7776
      %v7778 = vpop.f32.mrb[0].mxu0
      %v7779 = vpop.f32.mrb[0].mxu0
      %v7780 = vadd.f32 0.0, %v7779
      %v7781 = vpop.f32.mrb[0].mxu0
      %7782 = vmatprep.mubr.bf16.mxu0 0
      %7783 = vmatmul.mubr.bf16.gmra.mrb[0].mxu0 %v7630
      %v7784 = vpop.f32.mrb[0].mxu0
      %v7785 = vadd.f32 0.0, %v7784
      %v7786 = vpop.f32.mrb[0].mxu0
      %v7787 = vpop.f32.mrb[0].mxu0
      %v7788 = vadd.f32 0.0, %v7787
      %v7789 = vpop.f32.mrb[0].mxu0
      %7790 = vmatprep.mubr.bf16.mxu0 0
      %7791 = vmatmul.mubr.bf16.gmra.mrb[0].mxu0 %v7633
      %v7792 = vpop.f32.mrb[0].mxu0
      %v7793 = vadd.f32 0.0, %v7792
      %v7794 = vpop.f32.mrb[0].mxu0
      %v7795 = vpop.f32.mrb[0].mxu0
      %v7796 = vadd.f32 0.0, %v7795
      %v7797 = vpop.f32.mrb[0].mxu0
      %7798 = vmatprep.mubr.bf16.mxu0 0
      %7799 = vmatmul.mubr.bf16.gmra.mrb[0].mxu0 %v7636
      %v7800 = vpop.f32.mrb[0].mxu0
      %v7801 = vadd.f32 0.0, %v7800
      %v7802 = vpop.f32.mrb[0].mxu0
      %v7803 = vpop.f32.mrb[0].mxu0
      %v7804 = vadd.f32 0.0, %v7803
      %v7805 = vpop.f32.mrb[0].mxu0
      %7806 = vmatprep.mubr.bf16.mxu0 0
      %7807 = vmatmul.mubr.bf16.gmra.mrb[0].mxu0 %v7639
      %v7808 = vpop.f32.mrb[0].mxu0
      %v7809 = vadd.f32 0.0, %v7808
      %v7810 = vpop.f32.mrb[0].mxu0
      %v7811 = vpop.f32.mrb[0].mxu0
      %v7812 = vadd.f32 0.0, %v7811
      %v7813 = vpop.f32.mrb[0].mxu0
      %7814 = vmatprep.mubr.bf16.mxu0 0
      %7815 = vmatmul.mubr.bf16.gmra.mrb[0].mxu0 %v7642
      %v7816 = vpop.f32.mrb[0].mxu0
      %v7817 = vadd.f32 0.0, %v7816
      %v7818 = vpop.f32.mrb[0].mxu0
      %v7819 = vpop.f32.mrb[0].mxu0
      %v7820 = vadd.f32 0.0, %v7819
      %v7821 = vpop.f32.mrb[0].mxu0
      %7822 = vmatprep.mubr.bf16.mxu0 0
      %7823 = vmatmul.mubr.bf16.gmra.mrb[0].mxu0 %v7645
      %v7824 = vpop.f32.mrb[0].mxu0
      %v7825 = vadd.f32 0.0, %v7824
      %v7826 = vpop.f32.mrb[0].mxu0
      %v7827 = vpop.f32.mrb[0].mxu0
      %v7828 = vadd.f32 0.0, %v7827
      %v7829 = vpop.f32.mrb[0].mxu0
      %7830 = vmatprep.mubr.bf16.mxu0 0
      %7831 = vmatmul.mubr.bf16.gmra.mrb[0].mxu0 %v7648
      %v7832 = vpop.f32.mrb[0].mxu0
      %v7833 = vadd.f32 0.0, %v7832
      %v7834 = vpop.f32.mrb[0].mxu0
      %v7835 = vpop.f32.mrb[0].mxu0
      %v7836 = vadd.f32 0.0, %v7835
      %v7837 = vpop.f32.mrb[0].mxu0
      %7838 = vmatprep.mubr.bf16.mxu0 0
      %7839 = vmatmul.mubr.bf16.gmra.mrb[0].mxu0 %v7651
      %v7840 = vpop.f32.mrb[0].mxu0
      %v7841 = vadd.f32 0.0, %v7840
      %v7842 = vpop.f32.mrb[0].mxu0
      %v7843 = vpop.f32.mrb[0].mxu0
      %v7844 = vadd.f32 0.0, %v7843
      %v7845 = vpop.f32.mrb[0].mxu0
      %7846 = vmatprep.mubr.bf16.mxu0 0
      %7847 = vmatmul.mubr.bf16.gmra.mrb[0].mxu0 %v7654
      %v7848 = vpop.f32.mrb[0].mxu0
      %v7849 = vadd.f32 0.0, %v7848
      %v7850 = vpop.f32.mrb[0].mxu0
      %v7851 = vpop.f32.mrb[0].mxu0
      %v7852 = vadd.f32 0.0, %v7851
      %v7853 = vpop.f32.mrb[0].mxu0
      %7854 = vmatprep.mubr.bf16.mxu0 0
      %7855 = vmatmul.mubr.bf16.gmra.mrb[0].mxu0 %v7657
      %v7856 = vpop.f32.mrb[0].mxu0
      %v7857 = vadd.f32 0.0, %v7856
      %v7858 = vpop.f32.mrb[0].mxu0
      %v7859 = vpop.f32.mrb[0].mxu0
      %v7860 = vpop.f32.mrb[0].mxu0
      %7861 = vdwg.mxu0
      %v7862 = vadd.f32 %v7402, %v7697
      %v7863 = vadd.f32 %v7403, %v7700
      %v7864 = vadd.f32 %v7404, %v7705
      %v7865 = vadd.f32 %v7405, %v7708
      %v7866 = vadd.f32 %v7406, %v7713
      %v7867 = vadd.f32 %v7407, %v7716
      %v7868 = vadd.f32 %v7408, %v7721
      %v7869 = vadd.f32 %v7409, %v7724
      %v7870 = vadd.f32 %v7410, %v7729
      %v7871 = vadd.f32 %v7411, %v7732
      %v7872 = vadd.f32 %v7412, %v7737
      %v7873 = vadd.f32 %v7413, %v7740
      %v7874 = vadd.f32 %v7414, %v7745
      %v7875 = vadd.f32 %v7415, %v7748
      %v7876 = vadd.f32 %v7416, %v7753
      %v7877 = vadd.f32 %v7417, %v7756
      %v7878 = vadd.f32 %v7418, %v7761
      %v7879 = vadd.f32 %v7419, %v7764
      %v7880 = vadd.f32 %v7420, %v7769
      %v7881 = vadd.f32 %v7421, %v7772
      %v7882 = vadd.f32 %v7422, %v7777
      %v7883 = vadd.f32 %v7423, %v7780
      %v7884 = vadd.f32 %v7424, %v7785
      %v7885 = vadd.f32 %v7425, %v7788
      %v7886 = vadd.f32 %v7426, %v7793
      %v7887 = vadd.f32 %v7427, %v7796
      %v7888 = vadd.f32 %v7428, %v7801
      %v7889 = vadd.f32 %v7429, %v7804
      %v7890 = vadd.f32 %v7430, %v7809
      %v7891 = vadd.f32 %v7431, %v7812
      %v7892 = vadd.f32 %v7432, %v7817
      %v7893 = vadd.f32 %v7433, %v7820
      %v7894 = vadd.f32 %v7434, %v7825
      %v7895 = vadd.f32 %v7435, %v7828
      %v7896 = vadd.f32 %v7436, %v7833
      %v7897 = vadd.f32 %v7437, %v7836
      %v7898 = vadd.f32 %v7438, %v7841
      %v7899 = vadd.f32 %v7439, %v7844
      %v7900 = vadd.f32 %v7440, %v7849
      %v7901 = vadd.f32 %v7441, %v7852
      %v7902 = vadd.f32 %v7442, %v7857
      %v7903 = vld [vmem:[#allocation2 + $0x18] sm:$0xf]
      %v7904 = vld [vmem:[#allocation2 + $0x1c] sm:$0xf]
      %v7905 = vld [vmem:[#allocation2 + $0x20] sm:$0xf]
      %v7906 = vld [vmem:[#allocation2 + $0x24] sm:$0xf]
      %v7907 = vld [vmem:[#allocation2 + $0x28] sm:$0xf]
      %v7908 = vld [vmem:[#allocation2 + $0x2c] sm:$0xf]
      %v7909 = vld [vmem:[#allocation2 + $0x30] sm:$0xf]
      %v7910 = vld [vmem:[#allocation2 + $0x34] sm:$0xf]
      %v7911 = vld [vmem:[#allocation2 + $0x38] sm:$0xf]
      %v7912 = vld [vmem:[#allocation2 + $0x3c] sm:$0xf]
      %v7913 = vld [vmem:[#allocation2 + $0x40] sm:$0xf]
      %v7914 = vld [vmem:[#allocation2 + $0x44] sm:$0xf]
      %v7915 = vld [vmem:[#allocation2 + $0x48] sm:$0xf]
      %v7916 = vld [vmem:[#allocation2 + $0x4c] sm:$0xf]
      %v7917 = vld [vmem:[#allocation2 + $0x50] sm:$0xf]
      %v7918 = vld [vmem:[#allocation2 + $0x54] sm:$0xf]
      %v7919 = vld [vmem:[#allocation2 + $0x58] sm:$0xf]
      %v7920 = vld [vmem:[#allocation2 + $0x5c] sm:$0xf]
      %v7921 = vld [vmem:[#allocation2 + $0x60] sm:$0xf]
      %v7922 = vld [vmem:[#allocation2 + $0x64] sm:$0xf]
      %v7923 = vld [vmem:[#allocation2 + $0x68] sm:$0xf]
      %v7924 = vld [vmem:[#allocation2 + $0x6c] sm:$0xf]
      %v7925 = vld [vmem:[#allocation2 + $0x70] sm:$0xf]
      %v7926 = vld [vmem:[#allocation2 + $0x74] sm:$0xf]
      %v7927 = vld [vmem:[#allocation2 + $0x78] sm:$0xf]
      %v7928 = vld [vmem:[#allocation2 + $0x7c] sm:$0xf]
      %v7929 = vld [vmem:[#allocation2 + $0x80] sm:$0xf]
      %v7930 = vld [vmem:[#allocation2 + $0x84] sm:$0xf]
      %v7931 = vld [vmem:[#allocation2 + $0x88] sm:$0xf]
      %v7932 = vld [vmem:[#allocation2 + $0x8c] sm:$0xf]
      %v7933 = vld [vmem:[#allocation2 + $0x90] sm:$0xf]
      %v7934 = vld [vmem:[#allocation2 + $0x94] sm:$0xf]
      %v7935 = vld [vmem:[#allocation2 + $0x98] sm:$0xf]
      %v7936 = vld [vmem:[#allocation2 + $0x9c] sm:$0xf]
      %v7937 = vld [vmem:[#allocation2 + $0xa0] sm:$0xf]
      %v7938 = vld [vmem:[#allocation2 + $0xa4] sm:$0xf]
      %v7939 = vld [vmem:[#allocation2 + $0xa8] sm:$0xf]
      %v7940 = vld [vmem:[#allocation2 + $0xac] sm:$0xf]
      %v7941 = vld [vmem:[#allocation2 + $0xb0] sm:$0xf]
      %v7942 = vld [vmem:[#allocation2 + $0xb4] sm:$0xf]
      %v7943 = vld [vmem:[#allocation2 + $0xb8] sm:$0x7]
      %s7944 = scalar_lea.vmem %s5, 24
      %v7945 = vld [vmem:[%s7944] sm:$0xf]
      %v7987 = vunpack.c.l.b16 %v7903
      %v7988 = vunpack.c.l.b16 %v7904
      %v7989 = vunpack.c.l.b16 %v7905
      %v7990 = vunpack.c.l.b16 %v7906
      %v7991 = vunpack.c.l.b16 %v7907
      %v7992 = vunpack.c.l.b16 %v7908
      %v7993 = vunpack.c.l.b16 %v7909
      %v7994 = vunpack.c.l.b16 %v7910
      %v7995 = vunpack.c.l.b16 %v7911
      %v7996 = vunpack.c.l.b16 %v7912
      %v7997 = vunpack.c.l.b16 %v7913
      %v7998 = vunpack.c.l.b16 %v7914
      %v7999 = vunpack.c.l.b16 %v7915
      %v8000 = vunpack.c.l.b16 %v7916
      %v8001 = vunpack.c.l.b16 %v7917
      %v8002 = vunpack.c.l.b16 %v7918
      %v8003 = vunpack.c.l.b16 %v7919
      %v8004 = vunpack.c.l.b16 %v7920
      %v8005 = vunpack.c.l.b16 %v7921
      %v8006 = vunpack.c.l.b16 %v7922
      %v8007 = vunpack.c.l.b16 %v7923
      %v8008 = vunpack.c.l.b16 %v7924
      %v8009 = vunpack.c.l.b16 %v7925
      %v8010 = vunpack.c.l.b16 %v7926
      %v8011 = vunpack.c.l.b16 %v7927
      %v8012 = vunpack.c.l.b16 %v7928
      %v8013 = vunpack.c.l.b16 %v7929
      %v8014 = vunpack.c.l.b16 %v7930
      %v8015 = vunpack.c.l.b16 %v7931
      %v8016 = vunpack.c.l.b16 %v7932
      %v8017 = vunpack.c.l.b16 %v7933
      %v8018 = vunpack.c.l.b16 %v7934
      %v8019 = vunpack.c.l.b16 %v7935
      %v8020 = vunpack.c.l.b16 %v7936
      %v8021 = vunpack.c.l.b16 %v7937
      %v8022 = vunpack.c.l.b16 %v7938
      %v8023 = vunpack.c.l.b16 %v7939
      %v8024 = vunpack.c.l.b16 %v7940
      %v8025 = vunpack.c.l.b16 %v7941
      %v8026 = vunpack.c.l.b16 %v7942
      %v8027 = vunpack.c.l.b16 %v7943
      %v8028 = vpack.c.b16 %v7988, %v7987
      %v8029 = vpack.c.b16 %v7990, %v7989
      %v8030 = vpack.c.b16 %v7992, %v7991
      %v8031 = vpack.c.b16 %v7994, %v7993
      %v8032 = vpack.c.b16 %v7996, %v7995
      %v8033 = vpack.c.b16 %v7998, %v7997
      %v8034 = vpack.c.b16 %v8000, %v7999
      %v8035 = vpack.c.b16 %v8002, %v8001
      %v8036 = vpack.c.b16 %v8004, %v8003
      %v8037 = vpack.c.b16 %v8006, %v8005
      %v8038 = vpack.c.b16 %v8008, %v8007
      %v8039 = vpack.c.b16 %v8010, %v8009
      %v8040 = vpack.c.b16 %v8012, %v8011
      %v8041 = vpack.c.b16 %v8014, %v8013
      %v8042 = vpack.c.b16 %v8016, %v8015
      %v8043 = vpack.c.b16 %v8018, %v8017
      %v8044 = vpack.c.b16 %v8020, %v8019
      %v8045 = vpack.c.b16 %v8022, %v8021
      %v8046 = vpack.c.b16 %v8024, %v8023
      %v8047 = vpack.c.b16 %v8026, %v8025
      %v8048 = vpack.c.b16 %v8027, %v8027
      %v8050 = vshrl.u32 %v8028, 16
      %v8052 = vshll.u32 %v8028, 16
      %v8054 = vrot.slane %v8052, 1
      %v8055 = vor.u32 %v8050, %v8054
      %v8057 = vshll.u32 %v8029, 16
      %v8059 = vrot.slane %v8057, 1
      %v8060 = vsel %vm2708, %v8055, %v8059
      %v8061 = vshrl.u32 %v8029, 16
      %v8063 = vor.u32 %v8061, %v8059
      %v8065 = vshll.u32 %v8030, 16
      %v8067 = vrot.slane %v8065, 1
      %v8068 = vsel %vm2708, %v8063, %v8067
      %v8069 = vshrl.u32 %v8030, 16
      %v8071 = vor.u32 %v8069, %v8067
      %v8073 = vshll.u32 %v8031, 16
      %v8075 = vrot.slane %v8073, 1
      %v8076 = vsel %vm2708, %v8071, %v8075
      %v8077 = vshrl.u32 %v8031, 16
      %v8079 = vor.u32 %v8077, %v8075
      %v8081 = vshll.u32 %v8032, 16
      %v8083 = vrot.slane %v8081, 1
      %v8084 = vsel %vm2708, %v8079, %v8083
      %v8085 = vshrl.u32 %v8032, 16
      %v8087 = vor.u32 %v8085, %v8083
      %v8089 = vshll.u32 %v8033, 16
      %v8091 = vrot.slane %v8089, 1
      %v8092 = vsel %vm2708, %v8087, %v8091
      %v8093 = vshrl.u32 %v8033, 16
      %v8095 = vor.u32 %v8093, %v8091
      %v8097 = vshll.u32 %v8034, 16
      %v8099 = vrot.slane %v8097, 1
      %v8100 = vsel %vm2708, %v8095, %v8099
      %v8101 = vshrl.u32 %v8034, 16
      %v8103 = vor.u32 %v8101, %v8099
      %v8105 = vshll.u32 %v8035, 16
      %v8107 = vrot.slane %v8105, 1
      %v8108 = vsel %vm2708, %v8103, %v8107
      %v8109 = vshrl.u32 %v8035, 16
      %v8111 = vor.u32 %v8109, %v8107
      %v8113 = vshll.u32 %v8036, 16
      %v8115 = vrot.slane %v8113, 1
      %v8116 = vsel %vm2708, %v8111, %v8115
      %v8117 = vshrl.u32 %v8036, 16
      %v8119 = vor.u32 %v8117, %v8115
      %v8121 = vshll.u32 %v8037, 16
      %v8123 = vrot.slane %v8121, 1
      %v8124 = vsel %vm2708, %v8119, %v8123
      %v8125 = vshrl.u32 %v8037, 16
      %v8127 = vor.u32 %v8125, %v8123
      %v8129 = vshll.u32 %v8038, 16
      %v8131 = vrot.slane %v8129, 1
      %v8132 = vsel %vm2708, %v8127, %v8131
      %v8133 = vshrl.u32 %v8038, 16
      %v8135 = vor.u32 %v8133, %v8131
      %v8137 = vshll.u32 %v8039, 16
      %v8139 = vrot.slane %v8137, 1
      %v8140 = vsel %vm2708, %v8135, %v8139
      %v8141 = vshrl.u32 %v8039, 16
      %v8143 = vor.u32 %v8141, %v8139
      %v8145 = vshll.u32 %v8040, 16
      %v8147 = vrot.slane %v8145, 1
      %v8148 = vsel %vm2708, %v8143, %v8147
      %v8149 = vshrl.u32 %v8040, 16
      %v8151 = vor.u32 %v8149, %v8147
      %v8153 = vshll.u32 %v8041, 16
      %v8155 = vrot.slane %v8153, 1
      %v8156 = vsel %vm2708, %v8151, %v8155
      %v8157 = vshrl.u32 %v8041, 16
      %v8159 = vor.u32 %v8157, %v8155
      %v8161 = vshll.u32 %v8042, 16
      %v8163 = vrot.slane %v8161, 1
      %v8164 = vsel %vm2708, %v8159, %v8163
      %v8165 = vshrl.u32 %v8042, 16
      %v8167 = vor.u32 %v8165, %v8163
      %v8169 = vshll.u32 %v8043, 16
      %v8171 = vrot.slane %v8169, 1
      %v8172 = vsel %vm2708, %v8167, %v8171
      %v8173 = vshrl.u32 %v8043, 16
      %v8175 = vor.u32 %v8173, %v8171
      %v8177 = vshll.u32 %v8044, 16
      %v8179 = vrot.slane %v8177, 1
      %v8180 = vsel %vm2708, %v8175, %v8179
      %v8181 = vshrl.u32 %v8044, 16
      %v8183 = vor.u32 %v8181, %v8179
      %v8185 = vshll.u32 %v8045, 16
      %v8187 = vrot.slane %v8185, 1
      %v8188 = vsel %vm2708, %v8183, %v8187
      %v8189 = vshrl.u32 %v8045, 16
      %v8191 = vor.u32 %v8189, %v8187
      %v8193 = vshll.u32 %v8046, 16
      %v8195 = vrot.slane %v8193, 1
      %v8196 = vsel %vm2708, %v8191, %v8195
      %v8197 = vshrl.u32 %v8046, 16
      %v8199 = vor.u32 %v8197, %v8195
      %v8201 = vshll.u32 %v8047, 16
      %v8203 = vrot.slane %v8201, 1
      %v8204 = vsel %vm2708, %v8199, %v8203
      %v8205 = vshrl.u32 %v8047, 16
      %v8207 = vor.u32 %v8205, %v8203
      %v8209 = vshll.u32 %v8048, 16
      %v8211 = vrot.slane %v8209, 1
      %v8212 = vsel %vm2708, %v8207, %v8211
      %v8213 = vshrl.u32 %v8048, 16
      %v8215 = vor.u32 %v8213, %v8211
      %v8217 = vsel %vm5338, %v8060, 0
      %v8220 = vsel %vm5338, %v8068, 0
      %v8223 = vsel %vm5338, %v8076, 0
      %v8226 = vsel %vm5338, %v8084, 0
      %v8229 = vsel %vm5338, %v8092, 0
      %v8232 = vsel %vm5338, %v8100, 0
      %v8235 = vsel %vm5338, %v8108, 0
      %v8238 = vsel %vm5338, %v8116, 0
      %v8241 = vsel %vm5338, %v8124, 0
      %v8244 = vsel %vm5338, %v8132, 0
      %v8247 = vsel %vm5338, %v8140, 0
      %v8250 = vsel %vm5338, %v8148, 0
      %v8253 = vsel %vm5338, %v8156, 0
      %v8256 = vsel %vm5338, %v8164, 0
      %v8259 = vsel %vm5338, %v8172, 0
      %v8262 = vsel %vm5338, %v8180, 0
      %v8265 = vsel %vm5338, %v8188, 0
      %v8268 = vsel %vm5338, %v8196, 0
      %v8271 = vsel %vm5338, %v8204, 0
      %v8274 = vsel %vm5338, %v8212, 0
      %v8277 = vsel %vm5338, %v8215, 0
      %v8280 = vsel %vm5402, %v7945, 0
      %8282 = vmatprep.subr.bf16.mxu0 0
      %8283 = vmatpush1.bf16.msra.mxu0 %v8280
      %8284 = vmatprep.subr.bf16.mxu0 0
      %8285 = vmatpush1.bf16.msra.mxu0 0
      %8286 = vmatprep.subr.bf16.mxu0 0
      %8287 = vmatpush1.bf16.msra.mxu0 0
      %8288 = vmatprep.subr.bf16.mxu0 0
      %8289 = vmatpush1.bf16.msra.mxu0 0
      %8290 = vmatprep.subr.bf16.mxu0 0
      %8291 = vmatpush1.bf16.msra.mxu0 0
      %8292 = vmatprep.subr.bf16.mxu0 0
      %8293 = vmatpush1.bf16.msra.mxu0 0
      %8294 = vmatprep.subr.bf16.mxu0 0
      %8295 = vmatpush1.bf16.msra.mxu0 0
      %8296 = vmatprep.subr.bf16.mxu0 0
      %8297 = vmatpush1.bf16.msra.mxu0 0
      %8298 = vmatprep.subr.bf16.mxu0 0
      %8299 = vmatpush1.bf16.msra.mxu0 0
      %8300 = vmatprep.subr.bf16.mxu0 0
      %8301 = vmatpush1.bf16.msra.mxu0 0
      %8302 = vmatprep.subr.bf16.mxu0 0
      %8303 = vmatpush1.bf16.msra.mxu0 0
      %8304 = vmatprep.subr.bf16.mxu0 0
      %8305 = vmatpush1.bf16.msra.mxu0 0
      %8306 = vmatprep.subr.bf16.mxu0 0
      %8307 = vmatpush1.bf16.msra.mxu0 0
      %8308 = vmatprep.subr.bf16.mxu0 0
      %8309 = vmatpush1.bf16.msra.mxu0 0
      %8310 = vmatprep.subr.bf16.mxu0 0
      %8311 = vmatpush1.bf16.msra.mxu0 0
      %8312 = vmatprep.subr.bf16.mxu0 0
      %8313 = vmatpush1.bf16.msra.mxu0 0
      %8314 = vmatprep.mubr.bf16.mxu0 0
      %8315 = vmatmul.mubr.bf16.gmra.mrb[0].mxu0 %v8217
      %v8316 = vpop.f32.mrb[0].mxu0
      %v8317 = vadd.f32 0.0, %v8316
      %v8318 = vpop.f32.mrb[0].mxu0
      %v8319 = vpop.f32.mrb[0].mxu0
      %v8320 = vadd.f32 0.0, %v8319
      %v8321 = vpop.f32.mrb[0].mxu0
      %8322 = vmatprep.mubr.bf16.mxu0 0
      %8323 = vmatmul.mubr.bf16.gmra.mrb[0].mxu0 %v8220
      %v8324 = vpop.f32.mrb[0].mxu0
      %v8325 = vadd.f32 0.0, %v8324
      %v8326 = vpop.f32.mrb[0].mxu0
      %v8327 = vpop.f32.mrb[0].mxu0
      %v8328 = vadd.f32 0.0, %v8327
      %v8329 = vpop.f32.mrb[0].mxu0
      %8330 = vmatprep.mubr.bf16.mxu0 0
      %8331 = vmatmul.mubr.bf16.gmra.mrb[0].mxu0 %v8223
      %v8332 = vpop.f32.mrb[0].mxu0
      %v8333 = vadd.f32 0.0, %v8332
      %v8334 = vpop.f32.mrb[0].mxu0
      %v8335 = vpop.f32.mrb[0].mxu0
      %v8336 = vadd.f32 0.0, %v8335
      %v8337 = vpop.f32.mrb[0].mxu0
      %8338 = vmatprep.mubr.bf16.mxu0 0
      %8339 = vmatmul.mubr.bf16.gmra.mrb[0].mxu0 %v8226
      %v8340 = vpop.f32.mrb[0].mxu0
      %v8341 = vadd.f32 0.0, %v8340
      %v8342 = vpop.f32.mrb[0].mxu0
      %v8343 = vpop.f32.mrb[0].mxu0
      %v8344 = vadd.f32 0.0, %v8343
      %v8345 = vpop.f32.mrb[0].mxu0
      %8346 = vmatprep.mubr.bf16.mxu0 0
      %8347 = vmatmul.mubr.bf16.gmra.mrb[0].mxu0 %v8229
      %v8348 = vpop.f32.mrb[0].mxu0
      %v8349 = vadd.f32 0.0, %v8348
      %v8350 = vpop.f32.mrb[0].mxu0
      %v8351 = vpop.f32.mrb[0].mxu0
      %v8352 = vadd.f32 0.0, %v8351
      %v8353 = vpop.f32.mrb[0].mxu0
      %8354 = vmatprep.mubr.bf16.mxu0 0
      %8355 = vmatmul.mubr.bf16.gmra.mrb[0].mxu0 %v8232
      %v8356 = vpop.f32.mrb[0].mxu0
      %v8357 = vadd.f32 0.0, %v8356
      %v8358 = vpop.f32.mrb[0].mxu0
      %v8359 = vpop.f32.mrb[0].mxu0
      %v8360 = vadd.f32 0.0, %v8359
      %v8361 = vpop.f32.mrb[0].mxu0
      %8362 = vmatprep.mubr.bf16.mxu0 0
      %8363 = vmatmul.mubr.bf16.gmra.mrb[0].mxu0 %v8235
      %v8364 = vpop.f32.mrb[0].mxu0
      %v8365 = vadd.f32 0.0, %v8364
      %v8366 = vpop.f32.mrb[0].mxu0
      %v8367 = vpop.f32.mrb[0].mxu0
      %v8368 = vadd.f32 0.0, %v8367
      %v8369 = vpop.f32.mrb[0].mxu0
      %8370 = vmatprep.mubr.bf16.mxu0 0
      %8371 = vmatmul.mubr.bf16.gmra.mrb[0].mxu0 %v8238
      %v8372 = vpop.f32.mrb[0].mxu0
      %v8373 = vadd.f32 0.0, %v8372
      %v8374 = vpop.f32.mrb[0].mxu0
      %v8375 = vpop.f32.mrb[0].mxu0
      %v8376 = vadd.f32 0.0, %v8375
      %v8377 = vpop.f32.mrb[0].mxu0
      %8378 = vmatprep.mubr.bf16.mxu0 0
      %8379 = vmatmul.mubr.bf16.gmra.mrb[0].mxu0 %v8241
      %v8380 = vpop.f32.mrb[0].mxu0
      %v8381 = vadd.f32 0.0, %v8380
      %v8382 = vpop.f32.mrb[0].mxu0
      %v8383 = vpop.f32.mrb[0].mxu0
      %v8384 = vadd.f32 0.0, %v8383
      %v8385 = vpop.f32.mrb[0].mxu0
      %8386 = vmatprep.mubr.bf16.mxu0 0
      %8387 = vmatmul.mubr.bf16.gmra.mrb[0].mxu0 %v8244
      %v8388 = vpop.f32.mrb[0].mxu0
      %v8389 = vadd.f32 0.0, %v8388
      %v8390 = vpop.f32.mrb[0].mxu0
      %v8391 = vpop.f32.mrb[0].mxu0
      %v8392 = vadd.f32 0.0, %v8391
      %v8393 = vpop.f32.mrb[0].mxu0
      %8394 = vmatprep.mubr.bf16.mxu0 0
      %8395 = vmatmul.mubr.bf16.gmra.mrb[0].mxu0 %v8247
      %v8396 = vpop.f32.mrb[0].mxu0
      %v8397 = vadd.f32 0.0, %v8396
      %v8398 = vpop.f32.mrb[0].mxu0
      %v8399 = vpop.f32.mrb[0].mxu0
      %v8400 = vadd.f32 0.0, %v8399
      %v8401 = vpop.f32.mrb[0].mxu0
      %8402 = vmatprep.mubr.bf16.mxu0 0
      %8403 = vmatmul.mubr.bf16.gmra.mrb[0].mxu0 %v8250
      %v8404 = vpop.f32.mrb[0].mxu0
      %v8405 = vadd.f32 0.0, %v8404
      %v8406 = vpop.f32.mrb[0].mxu0
      %v8407 = vpop.f32.mrb[0].mxu0
      %v8408 = vadd.f32 0.0, %v8407
      %v8409 = vpop.f32.mrb[0].mxu0
      %8410 = vmatprep.mubr.bf16.mxu0 0
      %8411 = vmatmul.mubr.bf16.gmra.mrb[0].mxu0 %v8253
      %v8412 = vpop.f32.mrb[0].mxu0
      %v8413 = vadd.f32 0.0, %v8412
      %v8414 = vpop.f32.mrb[0].mxu0
      %v8415 = vpop.f32.mrb[0].mxu0
      %v8416 = vadd.f32 0.0, %v8415
      %v8417 = vpop.f32.mrb[0].mxu0
      %8418 = vmatprep.mubr.bf16.mxu0 0
      %8419 = vmatmul.mubr.bf16.gmra.mrb[0].mxu0 %v8256
      %v8420 = vpop.f32.mrb[0].mxu0
      %v8421 = vadd.f32 0.0, %v8420
      %v8422 = vpop.f32.mrb[0].mxu0
      %v8423 = vpop.f32.mrb[0].mxu0
      %v8424 = vadd.f32 0.0, %v8423
      %v8425 = vpop.f32.mrb[0].mxu0
      %8426 = vmatprep.mubr.bf16.mxu0 0
      %8427 = vmatmul.mubr.bf16.gmra.mrb[0].mxu0 %v8259
      %v8428 = vpop.f32.mrb[0].mxu0
      %v8429 = vadd.f32 0.0, %v8428
      %v8430 = vpop.f32.mrb[0].mxu0
      %v8431 = vpop.f32.mrb[0].mxu0
      %v8432 = vadd.f32 0.0, %v8431
      %v8433 = vpop.f32.mrb[0].mxu0
      %8434 = vmatprep.mubr.bf16.mxu0 0
      %8435 = vmatmul.mubr.bf16.gmra.mrb[0].mxu0 %v8262
      %v8436 = vpop.f32.mrb[0].mxu0
      %v8437 = vadd.f32 0.0, %v8436
      %v8438 = vpop.f32.mrb[0].mxu0
      %v8439 = vpop.f32.mrb[0].mxu0
      %v8440 = vadd.f32 0.0, %v8439
      %v8441 = vpop.f32.mrb[0].mxu0
      %8442 = vmatprep.mubr.bf16.mxu0 0
      %8443 = vmatmul.mubr.bf16.gmra.mrb[0].mxu0 %v8265
      %v8444 = vpop.f32.mrb[0].mxu0
      %v8445 = vadd.f32 0.0, %v8444
      %v8446 = vpop.f32.mrb[0].mxu0
      %v8447 = vpop.f32.mrb[0].mxu0
      %v8448 = vadd.f32 0.0, %v8447
      %v8449 = vpop.f32.mrb[0].mxu0
      %8450 = vmatprep.mubr.bf16.mxu0 0
      %8451 = vmatmul.mubr.bf16.gmra.mrb[0].mxu0 %v8268
      %v8452 = vpop.f32.mrb[0].mxu0
      %v8453 = vadd.f32 0.0, %v8452
      %v8454 = vpop.f32.mrb[0].mxu0
      %v8455 = vpop.f32.mrb[0].mxu0
      %v8456 = vadd.f32 0.0, %v8455
      %v8457 = vpop.f32.mrb[0].mxu0
      %8458 = vmatprep.mubr.bf16.mxu0 0
      %8459 = vmatmul.mubr.bf16.gmra.mrb[0].mxu0 %v8271
      %v8460 = vpop.f32.mrb[0].mxu0
      %v8461 = vadd.f32 0.0, %v8460
      %v8462 = vpop.f32.mrb[0].mxu0
      %v8463 = vpop.f32.mrb[0].mxu0
      %v8464 = vadd.f32 0.0, %v8463
      %v8465 = vpop.f32.mrb[0].mxu0
      %8466 = vmatprep.mubr.bf16.mxu0 0
      %8467 = vmatmul.mubr.bf16.gmra.mrb[0].mxu0 %v8274
      %v8468 = vpop.f32.mrb[0].mxu0
      %v8469 = vadd.f32 0.0, %v8468
      %v8470 = vpop.f32.mrb[0].mxu0
      %v8471 = vpop.f32.mrb[0].mxu0
      %v8472 = vadd.f32 0.0, %v8471
      %v8473 = vpop.f32.mrb[0].mxu0
      %8474 = vmatprep.mubr.bf16.mxu0 0
      %8475 = vmatmul.mubr.bf16.gmra.mrb[0].mxu0 %v8277
      %v8476 = vpop.f32.mrb[0].mxu0
      %v8477 = vadd.f32 0.0, %v8476
      %v8478 = vpop.f32.mrb[0].mxu0
      %v8479 = vpop.f32.mrb[0].mxu0
      %v8480 = vpop.f32.mrb[0].mxu0
      %8481 = vdwg.mxu0
      %v8482 = vadd.f32 %v7862, %v8317
      %v8483 = vadd.f32 %v7863, %v8320
      %v8484 = vadd.f32 %v7864, %v8325
      %v8485 = vadd.f32 %v7865, %v8328
      %v8486 = vadd.f32 %v7866, %v8333
      %v8487 = vadd.f32 %v7867, %v8336
      %v8488 = vadd.f32 %v7868, %v8341
      %v8489 = vadd.f32 %v7869, %v8344
      %v8490 = vadd.f32 %v7870, %v8349
      %v8491 = vadd.f32 %v7871, %v8352
      %v8492 = vadd.f32 %v7872, %v8357
      %v8493 = vadd.f32 %v7873, %v8360
      %v8494 = vadd.f32 %v7874, %v8365
      %v8495 = vadd.f32 %v7875, %v8368
      %v8496 = vadd.f32 %v7876, %v8373
      %v8497 = vadd.f32 %v7877, %v8376
      %v8498 = vadd.f32 %v7878, %v8381
      %v8499 = vadd.f32 %v7879, %v8384
      %v8500 = vadd.f32 %v7880, %v8389
      %v8501 = vadd.f32 %v7881, %v8392
      %v8502 = vadd.f32 %v7882, %v8397
      %v8503 = vadd.f32 %v7883, %v8400
      %v8504 = vadd.f32 %v7884, %v8405
      %v8505 = vadd.f32 %v7885, %v8408
      %v8506 = vadd.f32 %v7886, %v8413
      %v8507 = vadd.f32 %v7887, %v8416
      %v8508 = vadd.f32 %v7888, %v8421
      %v8509 = vadd.f32 %v7889, %v8424
      %v8510 = vadd.f32 %v7890, %v8429
      %v8511 = vadd.f32 %v7891, %v8432
      %v8512 = vadd.f32 %v7892, %v8437
      %v8513 = vadd.f32 %v7893, %v8440
      %v8514 = vadd.f32 %v7894, %v8445
      %v8515 = vadd.f32 %v7895, %v8448
      %v8516 = vadd.f32 %v7896, %v8453
      %v8517 = vadd.f32 %v7897, %v8456
      %v8518 = vadd.f32 %v7898, %v8461
      %v8519 = vadd.f32 %v7899, %v8464
      %v8520 = vadd.f32 %v7900, %v8469
      %v8521 = vadd.f32 %v7901, %v8472
      %v8522 = vadd.f32 %v7902, %v8477
      %v8523 = vld [vmem:[#allocation2 + $0x18] sm:$0xe]
      %s8524 = scalar_lea.vmem %s5, 28
      %v8525 = vld [vmem:[%s8524] sm:$0xf]
      %v8527 = vunpack.c.l.b16 %v8523
      %v8528 = vpack.c.b16 %v7988, %v8527
      %v8529 = vrot.slane %v8528, 1
      %v8530 = vrot.slane %v8029, 1
      %v8531 = vsel %vm3789, %v8529, %v8530
      %v8532 = vrot.slane %v8030, 1
      %v8533 = vsel %vm3789, %v8530, %v8532
      %v8534 = vrot.slane %v8031, 1
      %v8535 = vsel %vm3789, %v8532, %v8534
      %v8536 = vrot.slane %v8032, 1
      %v8537 = vsel %vm3789, %v8534, %v8536
      %v8538 = vrot.slane %v8033, 1
      %v8539 = vsel %vm3789, %v8536, %v8538
      %v8540 = vrot.slane %v8034, 1
      %v8541 = vsel %vm3789, %v8538, %v8540
      %v8542 = vrot.slane %v8035, 1
      %v8543 = vsel %vm3789, %v8540, %v8542
      %v8544 = vrot.slane %v8036, 1
      %v8545 = vsel %vm3789, %v8542, %v8544
      %v8546 = vrot.slane %v8037, 1
      %v8547 = vsel %vm3789, %v8544, %v8546
      %v8548 = vrot.slane %v8038, 1
      %v8549 = vsel %vm3789, %v8546, %v8548
      %v8550 = vrot.slane %v8039, 1
      %v8551 = vsel %vm3789, %v8548, %v8550
      %v8552 = vrot.slane %v8040, 1
      %v8553 = vsel %vm3789, %v8550, %v8552
      %v8554 = vrot.slane %v8041, 1
      %v8555 = vsel %vm3789, %v8552, %v8554
      %v8556 = vrot.slane %v8042, 1
      %v8557 = vsel %vm3789, %v8554, %v8556
      %v8558 = vrot.slane %v8043, 1
      %v8559 = vsel %vm3789, %v8556, %v8558
      %v8560 = vrot.slane %v8044, 1
      %v8561 = vsel %vm3789, %v8558, %v8560
      %v8562 = vrot.slane %v8045, 1
      %v8563 = vsel %vm3789, %v8560, %v8562
      %v8564 = vrot.slane %v8046, 1
      %v8565 = vsel %vm3789, %v8562, %v8564
      %v8566 = vrot.slane %v8047, 1
      %v8567 = vsel %vm3789, %v8564, %v8566
      %v8568 = vrot.slane %v8048, 1
      %v8569 = vsel %vm3789, %v8566, %v8568
      %v8571 = vsel %vm5338, %v8531, 0
      %v8574 = vsel %vm5338, %v8533, 0
      %v8577 = vsel %vm5338, %v8535, 0
      %v8580 = vsel %vm5338, %v8537, 0
      %v8583 = vsel %vm5338, %v8539, 0
      %v8586 = vsel %vm5338, %v8541, 0
      %v8589 = vsel %vm5338, %v8543, 0
      %v8592 = vsel %vm5338, %v8545, 0
      %v8595 = vsel %vm5338, %v8547, 0
      %v8598 = vsel %vm5338, %v8549, 0
      %v8601 = vsel %vm5338, %v8551, 0
      %v8604 = vsel %vm5338, %v8553, 0
      %v8607 = vsel %vm5338, %v8555, 0
      %v8610 = vsel %vm5338, %v8557, 0
      %v8613 = vsel %vm5338, %v8559, 0
      %v8616 = vsel %vm5338, %v8561, 0
      %v8619 = vsel %vm5338, %v8563, 0
      %v8622 = vsel %vm5338, %v8565, 0
      %v8625 = vsel %vm5338, %v8567, 0
      %v8628 = vsel %vm5338, %v8569, 0
      %v8631 = vsel %vm5338, %v8568, 0
      %v8634 = vsel %vm5402, %v8525, 0
      %8636 = vmatprep.subr.bf16.mxu0 0
      %8637 = vmatpush1.bf16.msra.mxu0 %v8634
      %8638 = vmatprep.subr.bf16.mxu0 0
      %8639 = vmatpush1.bf16.msra.mxu0 0
      %8640 = vmatprep.subr.bf16.mxu0 0
      %8641 = vmatpush1.bf16.msra.mxu0 0
      %8642 = vmatprep.subr.bf16.mxu0 0
      %8643 = vmatpush1.bf16.msra.mxu0 0
      %8644 = vmatprep.subr.bf16.mxu0 0
      %8645 = vmatpush1.bf16.msra.mxu0 0
      %8646 = vmatprep.subr.bf16.mxu0 0
      %8647 = vmatpush1.bf16.msra.mxu0 0
      %8648 = vmatprep.subr.bf16.mxu0 0
      %8649 = vmatpush1.bf16.msra.mxu0 0
      %8650 = vmatprep.subr.bf16.mxu0 0
      %8651 = vmatpush1.bf16.msra.mxu0 0
      %8652 = vmatprep.subr.bf16.mxu0 0
      %8653 = vmatpush1.bf16.msra.mxu0 0
      %8654 = vmatprep.subr.bf16.mxu0 0
      %8655 = vmatpush1.bf16.msra.mxu0 0
      %8656 = vmatprep.subr.bf16.mxu0 0
      %8657 = vmatpush1.bf16.msra.mxu0 0
      %8658 = vmatprep.subr.bf16.mxu0 0
      %8659 = vmatpush1.bf16.msra.mxu0 0
      %8660 = vmatprep.subr.bf16.mxu0 0
      %8661 = vmatpush1.bf16.msra.mxu0 0
      %8662 = vmatprep.subr.bf16.mxu0 0
      %8663 = vmatpush1.bf16.msra.mxu0 0
      %8664 = vmatprep.subr.bf16.mxu0 0
      %8665 = vmatpush1.bf16.msra.mxu0 0
      %8666 = vmatprep.subr.bf16.mxu0 0
      %8667 = vmatpush1.bf16.msra.mxu0 0
      %8668 = vmatprep.mubr.bf16.mxu0 0
      %8669 = vmatmul.mubr.bf16.gmra.mrb[0].mxu0 %v8571
      %v8670 = vpop.f32.mrb[0].mxu0
      %v8671 = vadd.f32 0.0, %v8670
      %v8672 = vpop.f32.mrb[0].mxu0
      %v8673 = vpop.f32.mrb[0].mxu0
      %v8674 = vadd.f32 0.0, %v8673
      %v8675 = vpop.f32.mrb[0].mxu0
      %8676 = vmatprep.mubr.bf16.mxu0 0
      %8677 = vmatmul.mubr.bf16.gmra.mrb[0].mxu0 %v8574
      %v8678 = vpop.f32.mrb[0].mxu0
      %v8679 = vadd.f32 0.0, %v8678
      %v8680 = vpop.f32.mrb[0].mxu0
      %v8681 = vpop.f32.mrb[0].mxu0
      %v8682 = vadd.f32 0.0, %v8681
      %v8683 = vpop.f32.mrb[0].mxu0
      %8684 = vmatprep.mubr.bf16.mxu0 0
      %8685 = vmatmul.mubr.bf16.gmra.mrb[0].mxu0 %v8577
      %v8686 = vpop.f32.mrb[0].mxu0
      %v8687 = vadd.f32 0.0, %v8686
      %v8688 = vpop.f32.mrb[0].mxu0
      %v8689 = vpop.f32.mrb[0].mxu0
      %v8690 = vadd.f32 0.0, %v8689
      %v8691 = vpop.f32.mrb[0].mxu0
      %8692 = vmatprep.mubr.bf16.mxu0 0
      %8693 = vmatmul.mubr.bf16.gmra.mrb[0].mxu0 %v8580
      %v8694 = vpop.f32.mrb[0].mxu0
      %v8695 = vadd.f32 0.0, %v8694
      %v8696 = vpop.f32.mrb[0].mxu0
      %v8697 = vpop.f32.mrb[0].mxu0
      %v8698 = vadd.f32 0.0, %v8697
      %v8699 = vpop.f32.mrb[0].mxu0
      %8700 = vmatprep.mubr.bf16.mxu0 0
      %8701 = vmatmul.mubr.bf16.gmra.mrb[0].mxu0 %v8583
      %v8702 = vpop.f32.mrb[0].mxu0
      %v8703 = vadd.f32 0.0, %v8702
      %v8704 = vpop.f32.mrb[0].mxu0
      %v8705 = vpop.f32.mrb[0].mxu0
      %v8706 = vadd.f32 0.0, %v8705
      %v8707 = vpop.f32.mrb[0].mxu0
      %8708 = vmatprep.mubr.bf16.mxu0 0
      %8709 = vmatmul.mubr.bf16.gmra.mrb[0].mxu0 %v8586
      %v8710 = vpop.f32.mrb[0].mxu0
      %v8711 = vadd.f32 0.0, %v8710
      %v8712 = vpop.f32.mrb[0].mxu0
      %v8713 = vpop.f32.mrb[0].mxu0
      %v8714 = vadd.f32 0.0, %v8713
      %v8715 = vpop.f32.mrb[0].mxu0
      %8716 = vmatprep.mubr.bf16.mxu0 0
      %8717 = vmatmul.mubr.bf16.gmra.mrb[0].mxu0 %v8589
      %v8718 = vpop.f32.mrb[0].mxu0
      %v8719 = vadd.f32 0.0, %v8718
      %v8720 = vpop.f32.mrb[0].mxu0
      %v8721 = vpop.f32.mrb[0].mxu0
      %v8722 = vadd.f32 0.0, %v8721
      %v8723 = vpop.f32.mrb[0].mxu0
      %8724 = vmatprep.mubr.bf16.mxu0 0
      %8725 = vmatmul.mubr.bf16.gmra.mrb[0].mxu0 %v8592
      %v8726 = vpop.f32.mrb[0].mxu0
      %v8727 = vadd.f32 0.0, %v8726
      %v8728 = vpop.f32.mrb[0].mxu0
      %v8729 = vpop.f32.mrb[0].mxu0
      %v8730 = vadd.f32 0.0, %v8729
      %v8731 = vpop.f32.mrb[0].mxu0
      %8732 = vmatprep.mubr.bf16.mxu0 0
      %8733 = vmatmul.mubr.bf16.gmra.mrb[0].mxu0 %v8595
      %v8734 = vpop.f32.mrb[0].mxu0
      %v8735 = vadd.f32 0.0, %v8734
      %v8736 = vpop.f32.mrb[0].mxu0
      %v8737 = vpop.f32.mrb[0].mxu0
      %v8738 = vadd.f32 0.0, %v8737
      %v8739 = vpop.f32.mrb[0].mxu0
      %8740 = vmatprep.mubr.bf16.mxu0 0
      %8741 = vmatmul.mubr.bf16.gmra.mrb[0].mxu0 %v8598
      %v8742 = vpop.f32.mrb[0].mxu0
      %v8743 = vadd.f32 0.0, %v8742
      %v8744 = vpop.f32.mrb[0].mxu0
      %v8745 = vpop.f32.mrb[0].mxu0
      %v8746 = vadd.f32 0.0, %v8745
      %v8747 = vpop.f32.mrb[0].mxu0
      %8748 = vmatprep.mubr.bf16.mxu0 0
      %8749 = vmatmul.mubr.bf16.gmra.mrb[0].mxu0 %v8601
      %v8750 = vpop.f32.mrb[0].mxu0
      %v8751 = vadd.f32 0.0, %v8750
      %v8752 = vpop.f32.mrb[0].mxu0
      %v8753 = vpop.f32.mrb[0].mxu0
      %v8754 = vadd.f32 0.0, %v8753
      %v8755 = vpop.f32.mrb[0].mxu0
      %8756 = vmatprep.mubr.bf16.mxu0 0
      %8757 = vmatmul.mubr.bf16.gmra.mrb[0].mxu0 %v8604
      %v8758 = vpop.f32.mrb[0].mxu0
      %v8759 = vadd.f32 0.0, %v8758
      %v8760 = vpop.f32.mrb[0].mxu0
      %v8761 = vpop.f32.mrb[0].mxu0
      %v8762 = vadd.f32 0.0, %v8761
      %v8763 = vpop.f32.mrb[0].mxu0
      %8764 = vmatprep.mubr.bf16.mxu0 0
      %8765 = vmatmul.mubr.bf16.gmra.mrb[0].mxu0 %v8607
      %v8766 = vpop.f32.mrb[0].mxu0
      %v8767 = vadd.f32 0.0, %v8766
      %v8768 = vpop.f32.mrb[0].mxu0
      %v8769 = vpop.f32.mrb[0].mxu0
      %v8770 = vadd.f32 0.0, %v8769
      %v8771 = vpop.f32.mrb[0].mxu0
      %8772 = vmatprep.mubr.bf16.mxu0 0
      %8773 = vmatmul.mubr.bf16.gmra.mrb[0].mxu0 %v8610
      %v8774 = vpop.f32.mrb[0].mxu0
      %v8775 = vadd.f32 0.0, %v8774
      %v8776 = vpop.f32.mrb[0].mxu0
      %v8777 = vpop.f32.mrb[0].mxu0
      %v8778 = vadd.f32 0.0, %v8777
      %v8779 = vpop.f32.mrb[0].mxu0
      %8780 = vmatprep.mubr.bf16.mxu0 0
      %8781 = vmatmul.mubr.bf16.gmra.mrb[0].mxu0 %v8613
      %v8782 = vpop.f32.mrb[0].mxu0
      %v8783 = vadd.f32 0.0, %v8782
      %v8784 = vpop.f32.mrb[0].mxu0
      %v8785 = vpop.f32.mrb[0].mxu0
      %v8786 = vadd.f32 0.0, %v8785
      %v8787 = vpop.f32.mrb[0].mxu0
      %8788 = vmatprep.mubr.bf16.mxu0 0
      %8789 = vmatmul.mubr.bf16.gmra.mrb[0].mxu0 %v8616
      %v8790 = vpop.f32.mrb[0].mxu0
      %v8791 = vadd.f32 0.0, %v8790
      %v8792 = vpop.f32.mrb[0].mxu0
      %v8793 = vpop.f32.mrb[0].mxu0
      %v8794 = vadd.f32 0.0, %v8793
      %v8795 = vpop.f32.mrb[0].mxu0
      %8796 = vmatprep.mubr.bf16.mxu0 0
      %8797 = vmatmul.mubr.bf16.gmra.mrb[0].mxu0 %v8619
      %v8798 = vpop.f32.mrb[0].mxu0
      %v8799 = vadd.f32 0.0, %v8798
      %v8800 = vpop.f32.mrb[0].mxu0
      %v8801 = vpop.f32.mrb[0].mxu0
      %v8802 = vadd.f32 0.0, %v8801
      %v8803 = vpop.f32.mrb[0].mxu0
      %8804 = vmatprep.mubr.bf16.mxu0 0
      %8805 = vmatmul.mubr.bf16.gmra.mrb[0].mxu0 %v8622
      %v8806 = vpop.f32.mrb[0].mxu0
      %v8807 = vadd.f32 0.0, %v8806
      %v8808 = vpop.f32.mrb[0].mxu0
      %v8809 = vpop.f32.mrb[0].mxu0
      %v8810 = vadd.f32 0.0, %v8809
      %v8811 = vpop.f32.mrb[0].mxu0
      %8812 = vmatprep.mubr.bf16.mxu0 0
      %8813 = vmatmul.mubr.bf16.gmra.mrb[0].mxu0 %v8625
      %v8814 = vpop.f32.mrb[0].mxu0
      %v8815 = vadd.f32 0.0, %v8814
      %v8816 = vpop.f32.mrb[0].mxu0
      %v8817 = vpop.f32.mrb[0].mxu0
      %v8818 = vadd.f32 0.0, %v8817
      %v8819 = vpop.f32.mrb[0].mxu0
      %8820 = vmatprep.mubr.bf16.mxu0 0
      %8821 = vmatmul.mubr.bf16.gmra.mrb[0].mxu0 %v8628
      %v8822 = vpop.f32.mrb[0].mxu0
      %v8823 = vadd.f32 0.0, %v8822
      %v8824 = vpop.f32.mrb[0].mxu0
      %v8825 = vpop.f32.mrb[0].mxu0
      %v8826 = vadd.f32 0.0, %v8825
      %v8827 = vpop.f32.mrb[0].mxu0
      %8828 = vmatprep.mubr.bf16.mxu0 0
      %8829 = vmatmul.mubr.bf16.gmra.mrb[0].mxu0 %v8631
      %v8830 = vpop.f32.mrb[0].mxu0
      %v8831 = vadd.f32 0.0, %v8830
      %v8832 = vpop.f32.mrb[0].mxu0
      %v8833 = vpop.f32.mrb[0].mxu0
      %v8834 = vpop.f32.mrb[0].mxu0
      %8835 = vdwg.mxu0
      %v8836 = vadd.f32 %v8482, %v8671
      %v8837 = vadd.f32 %v8483, %v8674
      %v8838 = vadd.f32 %v8484, %v8679
      %v8839 = vadd.f32 %v8485, %v8682
      %v8840 = vadd.f32 %v8486, %v8687
      %v8841 = vadd.f32 %v8487, %v8690
      %v8842 = vadd.f32 %v8488, %v8695
      %v8843 = vadd.f32 %v8489, %v8698
      %v8844 = vadd.f32 %v8490, %v8703
      %v8845 = vadd.f32 %v8491, %v8706
      %v8846 = vadd.f32 %v8492, %v8711
      %v8847 = vadd.f32 %v8493, %v8714
      %v8848 = vadd.f32 %v8494, %v8719
      %v8849 = vadd.f32 %v8495, %v8722
      %v8850 = vadd.f32 %v8496, %v8727
      %v8851 = vadd.f32 %v8497, %v8730
      %v8852 = vadd.f32 %v8498, %v8735
      %v8853 = vadd.f32 %v8499, %v8738
      %v8854 = vadd.f32 %v8500, %v8743
      %v8855 = vadd.f32 %v8501, %v8746
      %v8856 = vadd.f32 %v8502, %v8751
      %v8857 = vadd.f32 %v8503, %v8754
      %v8858 = vadd.f32 %v8504, %v8759
      %v8859 = vadd.f32 %v8505, %v8762
      %v8860 = vadd.f32 %v8506, %v8767
      %v8861 = vadd.f32 %v8507, %v8770
      %v8862 = vadd.f32 %v8508, %v8775
      %v8863 = vadd.f32 %v8509, %v8778
      %v8864 = vadd.f32 %v8510, %v8783
      %v8865 = vadd.f32 %v8511, %v8786
      %v8866 = vadd.f32 %v8512, %v8791
      %v8867 = vadd.f32 %v8513, %v8794
      %v8868 = vadd.f32 %v8514, %v8799
      %v8869 = vadd.f32 %v8515, %v8802
      %v8870 = vadd.f32 %v8516, %v8807
      %v8871 = vadd.f32 %v8517, %v8810
      %v8872 = vadd.f32 %v8518, %v8815
      %v8873 = vadd.f32 %v8519, %v8818
      %v8874 = vadd.f32 %v8520, %v8823
      %v8875 = vadd.f32 %v8521, %v8826
      %v8876 = vadd.f32 %v8522, %v8831
      %v8877 = vld [vmem:[#allocation2 + $0xb8] sm:$0xf]
      %s8878 = scalar_lea.vmem %s5, 32
      %v8879 = vld [vmem:[%s8878] sm:$0xf]
      %v8881 = vunpack.c.l.b16 %v8877
      %v8882 = vpack.c.b16 %v8881, %v8881
      %v8884 = vshrl.u32 %v8528, 16
      %v8886 = vrot.slane %v8884, 1
      %v8887 = vshll.u32 %v8528, 16
      %v8889 = vrot.slane %v8887, 2
      %v8890 = vor.u32 %v8886, %v8889
      %v8891 = vrot.slane %v8061, 1
      %v8892 = vrot.slane %v8057, 2
      %v8893 = vor.u32 %v8891, %v8892
      %v8894 = vsel %vm4144, %v8890, %v8893
      %v8895 = vrot.slane %v8069, 1
      %v8896 = vrot.slane %v8065, 2
      %v8897 = vor.u32 %v8895, %v8896
      %v8898 = vsel %vm4144, %v8893, %v8897
      %v8899 = vrot.slane %v8077, 1
      %v8900 = vrot.slane %v8073, 2
      %v8901 = vor.u32 %v8899, %v8900
      %v8902 = vsel %vm4144, %v8897, %v8901
      %v8903 = vrot.slane %v8085, 1
      %v8904 = vrot.slane %v8081, 2
      %v8905 = vor.u32 %v8903, %v8904
      %v8906 = vsel %vm4144, %v8901, %v8905
      %v8907 = vrot.slane %v8093, 1
      %v8908 = vrot.slane %v8089, 2
      %v8909 = vor.u32 %v8907, %v8908
      %v8910 = vsel %vm4144, %v8905, %v8909
      %v8911 = vrot.slane %v8101, 1
      %v8912 = vrot.slane %v8097, 2
      %v8913 = vor.u32 %v8911, %v8912
      %v8914 = vsel %vm4144, %v8909, %v8913
      %v8915 = vrot.slane %v8109, 1
      %v8916 = vrot.slane %v8105, 2
      %v8917 = vor.u32 %v8915, %v8916
      %v8918 = vsel %vm4144, %v8913, %v8917
      %v8919 = vrot.slane %v8117, 1
      %v8920 = vrot.slane %v8113, 2
      %v8921 = vor.u32 %v8919, %v8920
      %v8922 = vsel %vm4144, %v8917, %v8921
      %v8923 = vrot.slane %v8125, 1
      %v8924 = vrot.slane %v8121, 2
      %v8925 = vor.u32 %v8923, %v8924
      %v8926 = vsel %vm4144, %v8921, %v8925
      %v8927 = vrot.slane %v8133, 1
      %v8928 = vrot.slane %v8129, 2
      %v8929 = vor.u32 %v8927, %v8928
      %v8930 = vsel %vm4144, %v8925, %v8929
      %v8931 = vrot.slane %v8141, 1
      %v8932 = vrot.slane %v8137, 2
      %v8933 = vor.u32 %v8931, %v8932
      %v8934 = vsel %vm4144, %v8929, %v8933
      %v8935 = vrot.slane %v8149, 1
      %v8936 = vrot.slane %v8145, 2
      %v8937 = vor.u32 %v8935, %v8936
      %v8938 = vsel %vm4144, %v8933, %v8937
      %v8939 = vrot.slane %v8157, 1
      %v8940 = vrot.slane %v8153, 2
      %v8941 = vor.u32 %v8939, %v8940
      %v8942 = vsel %vm4144, %v8937, %v8941
      %v8943 = vrot.slane %v8165, 1
      %v8944 = vrot.slane %v8161, 2
      %v8945 = vor.u32 %v8943, %v8944
      %v8946 = vsel %vm4144, %v8941, %v8945
      %v8947 = vrot.slane %v8173, 1
      %v8948 = vrot.slane %v8169, 2
      %v8949 = vor.u32 %v8947, %v8948
      %v8950 = vsel %vm4144, %v8945, %v8949
      %v8951 = vrot.slane %v8181, 1
      %v8952 = vrot.slane %v8177, 2
      %v8953 = vor.u32 %v8951, %v8952
      %v8954 = vsel %vm4144, %v8949, %v8953
      %v8955 = vrot.slane %v8189, 1
      %v8956 = vrot.slane %v8185, 2
      %v8957 = vor.u32 %v8955, %v8956
      %v8958 = vsel %vm4144, %v8953, %v8957
      %v8959 = vrot.slane %v8197, 1
      %v8960 = vrot.slane %v8193, 2
      %v8961 = vor.u32 %v8959, %v8960
      %v8962 = vsel %vm4144, %v8957, %v8961
      %v8963 = vrot.slane %v8205, 1
      %v8964 = vrot.slane %v8201, 2
      %v8965 = vor.u32 %v8963, %v8964
      %v8966 = vsel %vm4144, %v8961, %v8965
      %v8968 = vshrl.u32 %v8882, 16
      %v8970 = vrot.slane %v8968, 1
      %v8971 = vshll.u32 %v8882, 16
      %v8973 = vrot.slane %v8971, 2
      %v8974 = vor.u32 %v8970, %v8973
      %v8975 = vsel %vm4144, %v8965, %v8974
      %v8977 = vsel %vm5338, %v8894, 0
      %v8980 = vsel %vm5338, %v8898, 0
      %v8983 = vsel %vm5338, %v8902, 0
      %v8986 = vsel %vm5338, %v8906, 0
      %v8989 = vsel %vm5338, %v8910, 0
      %v8992 = vsel %vm5338, %v8914, 0
      %v8995 = vsel %vm5338, %v8918, 0
      %v8998 = vsel %vm5338, %v8922, 0
      %v9001 = vsel %vm5338, %v8926, 0
      %v9004 = vsel %vm5338, %v8930, 0
      %v9007 = vsel %vm5338, %v8934, 0
      %v9010 = vsel %vm5338, %v8938, 0
      %v9013 = vsel %vm5338, %v8942, 0
      %v9016 = vsel %vm5338, %v8946, 0
      %v9019 = vsel %vm5338, %v8950, 0
      %v9022 = vsel %vm5338, %v8954, 0
      %v9025 = vsel %vm5338, %v8958, 0
      %v9028 = vsel %vm5338, %v8962, 0
      %v9031 = vsel %vm5338, %v8966, 0
      %v9034 = vsel %vm5338, %v8975, 0
      %v9037 = vsel %vm5338, %v8974, 0
      %v9040 = vsel %vm5402, %v8879, 0
      %9042 = vmatprep.subr.bf16.mxu0 0
      %9043 = vmatpush1.bf16.msra.mxu0 %v9040
      %9044 = vmatprep.subr.bf16.mxu0 0
      %9045 = vmatpush1.bf16.msra.mxu0 0
      %9046 = vmatprep.subr.bf16.mxu0 0
      %9047 = vmatpush1.bf16.msra.mxu0 0
      %9048 = vmatprep.subr.bf16.mxu0 0
      %9049 = vmatpush1.bf16.msra.mxu0 0
      %9050 = vmatprep.subr.bf16.mxu0 0
      %9051 = vmatpush1.bf16.msra.mxu0 0
      %9052 = vmatprep.subr.bf16.mxu0 0
      %9053 = vmatpush1.bf16.msra.mxu0 0
      %9054 = vmatprep.subr.bf16.mxu0 0
      %9055 = vmatpush1.bf16.msra.mxu0 0
      %9056 = vmatprep.subr.bf16.mxu0 0
      %9057 = vmatpush1.bf16.msra.mxu0 0
      %9058 = vmatprep.subr.bf16.mxu0 0
      %9059 = vmatpush1.bf16.msra.mxu0 0
      %9060 = vmatprep.subr.bf16.mxu0 0
      %9061 = vmatpush1.bf16.msra.mxu0 0
      %9062 = vmatprep.subr.bf16.mxu0 0
      %9063 = vmatpush1.bf16.msra.mxu0 0
      %9064 = vmatprep.subr.bf16.mxu0 0
      %9065 = vmatpush1.bf16.msra.mxu0 0
      %9066 = vmatprep.subr.bf16.mxu0 0
      %9067 = vmatpush1.bf16.msra.mxu0 0
      %9068 = vmatprep.subr.bf16.mxu0 0
      %9069 = vmatpush1.bf16.msra.mxu0 0
      %9070 = vmatprep.subr.bf16.mxu0 0
      %9071 = vmatpush1.bf16.msra.mxu0 0
      %9072 = vmatprep.subr.bf16.mxu0 0
      %9073 = vmatpush1.bf16.msra.mxu0 0
      %9074 = vmatprep.mubr.bf16.mxu0 0
      %9075 = vmatmul.mubr.bf16.gmra.mrb[0].mxu0 %v8977
      %v9076 = vpop.f32.mrb[0].mxu0
      %v9077 = vadd.f32 0.0, %v9076
      %v9078 = vpop.f32.mrb[0].mxu0
      %v9079 = vpop.f32.mrb[0].mxu0
      %v9080 = vadd.f32 0.0, %v9079
      %v9081 = vpop.f32.mrb[0].mxu0
      %9082 = vmatprep.mubr.bf16.mxu0 0
      %9083 = vmatmul.mubr.bf16.gmra.mrb[0].mxu0 %v8980
      %v9084 = vpop.f32.mrb[0].mxu0
      %v9085 = vadd.f32 0.0, %v9084
      %v9086 = vpop.f32.mrb[0].mxu0
      %v9087 = vpop.f32.mrb[0].mxu0
      %v9088 = vadd.f32 0.0, %v9087
      %v9089 = vpop.f32.mrb[0].mxu0
      %9090 = vmatprep.mubr.bf16.mxu0 0
      %9091 = vmatmul.mubr.bf16.gmra.mrb[0].mxu0 %v8983
      %v9092 = vpop.f32.mrb[0].mxu0
      %v9093 = vadd.f32 0.0, %v9092
      %v9094 = vpop.f32.mrb[0].mxu0
      %v9095 = vpop.f32.mrb[0].mxu0
      %v9096 = vadd.f32 0.0, %v9095
      %v9097 = vpop.f32.mrb[0].mxu0
      %9098 = vmatprep.mubr.bf16.mxu0 0
      %9099 = vmatmul.mubr.bf16.gmra.mrb[0].mxu0 %v8986
      %v9100 = vpop.f32.mrb[0].mxu0
      %v9101 = vadd.f32 0.0, %v9100
      %v9102 = vpop.f32.mrb[0].mxu0
      %v9103 = vpop.f32.mrb[0].mxu0
      %v9104 = vadd.f32 0.0, %v9103
      %v9105 = vpop.f32.mrb[0].mxu0
      %9106 = vmatprep.mubr.bf16.mxu0 0
      %9107 = vmatmul.mubr.bf16.gmra.mrb[0].mxu0 %v8989
      %v9108 = vpop.f32.mrb[0].mxu0
      %v9109 = vadd.f32 0.0, %v9108
      %v9110 = vpop.f32.mrb[0].mxu0
      %v9111 = vpop.f32.mrb[0].mxu0
      %v9112 = vadd.f32 0.0, %v9111
      %v9113 = vpop.f32.mrb[0].mxu0
      %9114 = vmatprep.mubr.bf16.mxu0 0
      %9115 = vmatmul.mubr.bf16.gmra.mrb[0].mxu0 %v8992
      %v9116 = vpop.f32.mrb[0].mxu0
      %v9117 = vadd.f32 0.0, %v9116
      %v9118 = vpop.f32.mrb[0].mxu0
      %v9119 = vpop.f32.mrb[0].mxu0
      %v9120 = vadd.f32 0.0, %v9119
      %v9121 = vpop.f32.mrb[0].mxu0
      %9122 = vmatprep.mubr.bf16.mxu0 0
      %9123 = vmatmul.mubr.bf16.gmra.mrb[0].mxu0 %v8995
      %v9124 = vpop.f32.mrb[0].mxu0
      %v9125 = vadd.f32 0.0, %v9124
      %v9126 = vpop.f32.mrb[0].mxu0
      %v9127 = vpop.f32.mrb[0].mxu0
      %v9128 = vadd.f32 0.0, %v9127
      %v9129 = vpop.f32.mrb[0].mxu0
      %9130 = vmatprep.mubr.bf16.mxu0 0
      %9131 = vmatmul.mubr.bf16.gmra.mrb[0].mxu0 %v8998
      %v9132 = vpop.f32.mrb[0].mxu0
      %v9133 = vadd.f32 0.0, %v9132
      %v9134 = vpop.f32.mrb[0].mxu0
      %v9135 = vpop.f32.mrb[0].mxu0
      %v9136 = vadd.f32 0.0, %v9135
      %v9137 = vpop.f32.mrb[0].mxu0
      %9138 = vmatprep.mubr.bf16.mxu0 0
      %9139 = vmatmul.mubr.bf16.gmra.mrb[0].mxu0 %v9001
      %v9140 = vpop.f32.mrb[0].mxu0
      %v9141 = vadd.f32 0.0, %v9140
      %v9142 = vpop.f32.mrb[0].mxu0
      %v9143 = vpop.f32.mrb[0].mxu0
      %v9144 = vadd.f32 0.0, %v9143
      %v9145 = vpop.f32.mrb[0].mxu0
      %9146 = vmatprep.mubr.bf16.mxu0 0
      %9147 = vmatmul.mubr.bf16.gmra.mrb[0].mxu0 %v9004
      %v9148 = vpop.f32.mrb[0].mxu0
      %v9149 = vadd.f32 0.0, %v9148
      %v9150 = vpop.f32.mrb[0].mxu0
      %v9151 = vpop.f32.mrb[0].mxu0
      %v9152 = vadd.f32 0.0, %v9151
      %v9153 = vpop.f32.mrb[0].mxu0
      %9154 = vmatprep.mubr.bf16.mxu0 0
      %9155 = vmatmul.mubr.bf16.gmra.mrb[0].mxu0 %v9007
      %v9156 = vpop.f32.mrb[0].mxu0
      %v9157 = vadd.f32 0.0, %v9156
      %v9158 = vpop.f32.mrb[0].mxu0
      %v9159 = vpop.f32.mrb[0].mxu0
      %v9160 = vadd.f32 0.0, %v9159
      %v9161 = vpop.f32.mrb[0].mxu0
      %9162 = vmatprep.mubr.bf16.mxu0 0
      %9163 = vmatmul.mubr.bf16.gmra.mrb[0].mxu0 %v9010
      %v9164 = vpop.f32.mrb[0].mxu0
      %v9165 = vadd.f32 0.0, %v9164
      %v9166 = vpop.f32.mrb[0].mxu0
      %v9167 = vpop.f32.mrb[0].mxu0
      %v9168 = vadd.f32 0.0, %v9167
      %v9169 = vpop.f32.mrb[0].mxu0
      %9170 = vmatprep.mubr.bf16.mxu0 0
      %9171 = vmatmul.mubr.bf16.gmra.mrb[0].mxu0 %v9013
      %v9172 = vpop.f32.mrb[0].mxu0
      %v9173 = vadd.f32 0.0, %v9172
      %v9174 = vpop.f32.mrb[0].mxu0
      %v9175 = vpop.f32.mrb[0].mxu0
      %v9176 = vadd.f32 0.0, %v9175
      %v9177 = vpop.f32.mrb[0].mxu0
      %9178 = vmatprep.mubr.bf16.mxu0 0
      %9179 = vmatmul.mubr.bf16.gmra.mrb[0].mxu0 %v9016
      %v9180 = vpop.f32.mrb[0].mxu0
      %v9181 = vadd.f32 0.0, %v9180
      %v9182 = vpop.f32.mrb[0].mxu0
      %v9183 = vpop.f32.mrb[0].mxu0
      %v9184 = vadd.f32 0.0, %v9183
      %v9185 = vpop.f32.mrb[0].mxu0
      %9186 = vmatprep.mubr.bf16.mxu0 0
      %9187 = vmatmul.mubr.bf16.gmra.mrb[0].mxu0 %v9019
      %v9188 = vpop.f32.mrb[0].mxu0
      %v9189 = vadd.f32 0.0, %v9188
      %v9190 = vpop.f32.mrb[0].mxu0
      %v9191 = vpop.f32.mrb[0].mxu0
      %v9192 = vadd.f32 0.0, %v9191
      %v9193 = vpop.f32.mrb[0].mxu0
      %9194 = vmatprep.mubr.bf16.mxu0 0
      %9195 = vmatmul.mubr.bf16.gmra.mrb[0].mxu0 %v9022
      %v9196 = vpop.f32.mrb[0].mxu0
      %v9197 = vadd.f32 0.0, %v9196
      %v9198 = vpop.f32.mrb[0].mxu0
      %v9199 = vpop.f32.mrb[0].mxu0
      %v9200 = vadd.f32 0.0, %v9199
      %v9201 = vpop.f32.mrb[0].mxu0
      %9202 = vmatprep.mubr.bf16.mxu0 0
      %9203 = vmatmul.mubr.bf16.gmra.mrb[0].mxu0 %v9025
      %v9204 = vpop.f32.mrb[0].mxu0
      %v9205 = vadd.f32 0.0, %v9204
      %v9206 = vpop.f32.mrb[0].mxu0
      %v9207 = vpop.f32.mrb[0].mxu0
      %v9208 = vadd.f32 0.0, %v9207
      %v9209 = vpop.f32.mrb[0].mxu0
      %9210 = vmatprep.mubr.bf16.mxu0 0
      %9211 = vmatmul.mubr.bf16.gmra.mrb[0].mxu0 %v9028
      %v9212 = vpop.f32.mrb[0].mxu0
      %v9213 = vadd.f32 0.0, %v9212
      %v9214 = vpop.f32.mrb[0].mxu0
      %v9215 = vpop.f32.mrb[0].mxu0
      %v9216 = vadd.f32 0.0, %v9215
      %v9217 = vpop.f32.mrb[0].mxu0
      %9218 = vmatprep.mubr.bf16.mxu0 0
      %9219 = vmatmul.mubr.bf16.gmra.mrb[0].mxu0 %v9031
      %v9220 = vpop.f32.mrb[0].mxu0
      %v9221 = vadd.f32 0.0, %v9220
      %v9222 = vpop.f32.mrb[0].mxu0
      %v9223 = vpop.f32.mrb[0].mxu0
      %v9224 = vadd.f32 0.0, %v9223
      %v9225 = vpop.f32.mrb[0].mxu0
      %9226 = vmatprep.mubr.bf16.mxu0 0
      %9227 = vmatmul.mubr.bf16.gmra.mrb[0].mxu0 %v9034
      %v9228 = vpop.f32.mrb[0].mxu0
      %v9229 = vadd.f32 0.0, %v9228
      %v9230 = vpop.f32.mrb[0].mxu0
      %v9231 = vpop.f32.mrb[0].mxu0
      %v9232 = vadd.f32 0.0, %v9231
      %v9233 = vpop.f32.mrb[0].mxu0
      %9234 = vmatprep.mubr.bf16.mxu0 0
      %9235 = vmatmul.mubr.bf16.gmra.mrb[0].mxu0 %v9037
      %v9236 = vpop.f32.mrb[0].mxu0
      %v9237 = vadd.f32 0.0, %v9236
      %v9238 = vpop.f32.mrb[0].mxu0
      %v9239 = vpop.f32.mrb[0].mxu0
      %v9240 = vpop.f32.mrb[0].mxu0
      %9241 = vdwg.mxu0
      %v9242 = vadd.f32 %v8836, %v9077
      %v9243 = vadd.f32 %v8837, %v9080
      %v9244 = vadd.f32 %v8838, %v9085
      %v9245 = vadd.f32 %v8839, %v9088
      %v9246 = vadd.f32 %v8840, %v9093
      %v9247 = vadd.f32 %v8841, %v9096
      %v9248 = vadd.f32 %v8842, %v9101
      %v9249 = vadd.f32 %v8843, %v9104
      %v9250 = vadd.f32 %v8844, %v9109
      %v9251 = vadd.f32 %v8845, %v9112
      %v9252 = vadd.f32 %v8846, %v9117
      %v9253 = vadd.f32 %v8847, %v9120
      %v9254 = vadd.f32 %v8848, %v9125
      %v9255 = vadd.f32 %v8849, %v9128
      %v9256 = vadd.f32 %v8850, %v9133
      %v9257 = vadd.f32 %v8851, %v9136
      %v9258 = vadd.f32 %v8852, %v9141
      %v9259 = vadd.f32 %v8853, %v9144
      %v9260 = vadd.f32 %v8854, %v9149
      %v9261 = vadd.f32 %v8855, %v9152
      %v9262 = vadd.f32 %v8856, %v9157
      %v9263 = vadd.f32 %v8857, %v9160
      %v9264 = vadd.f32 %v8858, %v9165
      %v9265 = vadd.f32 %v8859, %v9168
      %v9266 = vadd.f32 %v8860, %v9173
      %v9267 = vadd.f32 %v8861, %v9176
      %v9268 = vadd.f32 %v8862, %v9181
      %v9269 = vadd.f32 %v8863, %v9184
      %v9270 = vadd.f32 %v8864, %v9189
      %v9271 = vadd.f32 %v8865, %v9192
      %v9272 = vadd.f32 %v8866, %v9197
      %v9273 = vadd.f32 %v8867, %v9200
      %v9274 = vadd.f32 %v8868, %v9205
      %v9275 = vadd.f32 %v8869, %v9208
      %v9276 = vadd.f32 %v8870, %v9213
      %v9277 = vadd.f32 %v8871, %v9216
      %v9278 = vadd.f32 %v8872, %v9221
      %v9279 = vadd.f32 %v8873, %v9224
      %v9280 = vadd.f32 %v8874, %v9229
      %v9281 = vadd.f32 %v8875, %v9232
      %v9282 = vadd.f32 %v8876, %v9237
      %v9283 = vld [vmem:[%s6] sm:$0x1]
      %v9285 = vlaneseq
      %v9286 = vshrl.u32 %v9285, 7
      %v9287 = vsub.s32 0, %v9286
      %v9288 = vrot.slane %v9283, %v9287
      %v9290 = vmul.f32 %v9242, %v9288
      %v9291 = vmul.f32 %v9243, %v9288
      %v9292 = vmul.f32 %v9244, %v9288
      %v9293 = vmul.f32 %v9245, %v9288
      %v9294 = vmul.f32 %v9246, %v9288
      %v9295 = vmul.f32 %v9247, %v9288
      %v9296 = vmul.f32 %v9248, %v9288
      %v9297 = vmul.f32 %v9249, %v9288
      %v9298 = vmul.f32 %v9250, %v9288
      %v9299 = vmul.f32 %v9251, %v9288
      %v9300 = vmul.f32 %v9252, %v9288
      %v9301 = vmul.f32 %v9253, %v9288
      %v9302 = vmul.f32 %v9254, %v9288
      %v9303 = vmul.f32 %v9255, %v9288
      %v9304 = vmul.f32 %v9256, %v9288
      %v9305 = vmul.f32 %v9257, %v9288
      %v9306 = vmul.f32 %v9258, %v9288
      %v9307 = vmul.f32 %v9259, %v9288
      %v9308 = vmul.f32 %v9260, %v9288
      %v9309 = vmul.f32 %v9261, %v9288
      %v9310 = vmul.f32 %v9262, %v9288
      %v9311 = vmul.f32 %v9263, %v9288
      %v9312 = vmul.f32 %v9264, %v9288
      %v9313 = vmul.f32 %v9265, %v9288
      %v9314 = vmul.f32 %v9266, %v9288
      %v9315 = vmul.f32 %v9267, %v9288
      %v9316 = vmul.f32 %v9268, %v9288
      %v9317 = vmul.f32 %v9269, %v9288
      %v9318 = vmul.f32 %v9270, %v9288
      %v9319 = vmul.f32 %v9271, %v9288
      %v9320 = vmul.f32 %v9272, %v9288
      %v9321 = vmul.f32 %v9273, %v9288
      %v9322 = vmul.f32 %v9274, %v9288
      %v9323 = vmul.f32 %v9275, %v9288
      %v9324 = vmul.f32 %v9276, %v9288
      %v9325 = vmul.f32 %v9277, %v9288
      %v9326 = vmul.f32 %v9278, %v9288
      %v9327 = vmul.f32 %v9279, %v9288
      %v9328 = vmul.f32 %v9280, %v9288
      %v9329 = vmul.f32 %v9281, %v9288
      %v9330 = vmul.f32 %v9282, %v9288
      %v9331 = vld [vmem:[%s7] sm:$0x1]
      %v9333 = vlaneseq
      %v9334 = vshrl.u32 %v9333, 7
      %v9335 = vsub.s32 0, %v9334
      %v9336 = vrot.slane %v9331, %v9335
      %v9338 = vadd.f32 %v9290, %v9336
      %v9339 = vadd.f32 %v9291, %v9336
      %v9340 = vadd.f32 %v9292, %v9336
      %v9341 = vadd.f32 %v9293, %v9336
      %v9342 = vadd.f32 %v9294, %v9336
      %v9343 = vadd.f32 %v9295, %v9336
      %v9344 = vadd.f32 %v9296, %v9336
      %v9345 = vadd.f32 %v9297, %v9336
      %v9346 = vadd.f32 %v9298, %v9336
      %v9347 = vadd.f32 %v9299, %v9336
      %v9348 = vadd.f32 %v9300, %v9336
      %v9349 = vadd.f32 %v9301, %v9336
      %v9350 = vadd.f32 %v9302, %v9336
      %v9351 = vadd.f32 %v9303, %v9336
      %v9352 = vadd.f32 %v9304, %v9336
      %v9353 = vadd.f32 %v9305, %v9336
      %v9354 = vadd.f32 %v9306, %v9336
      %v9355 = vadd.f32 %v9307, %v9336
      %v9356 = vadd.f32 %v9308, %v9336
      %v9357 = vadd.f32 %v9309, %v9336
      %v9358 = vadd.f32 %v9310, %v9336
      %v9359 = vadd.f32 %v9311, %v9336
      %v9360 = vadd.f32 %v9312, %v9336
      %v9361 = vadd.f32 %v9313, %v9336
      %v9362 = vadd.f32 %v9314, %v9336
      %v9363 = vadd.f32 %v9315, %v9336
      %v9364 = vadd.f32 %v9316, %v9336
      %v9365 = vadd.f32 %v9317, %v9336
      %v9366 = vadd.f32 %v9318, %v9336
      %v9367 = vadd.f32 %v9319, %v9336
      %v9368 = vadd.f32 %v9320, %v9336
      %v9369 = vadd.f32 %v9321, %v9336
      %v9370 = vadd.f32 %v9322, %v9336
      %v9371 = vadd.f32 %v9323, %v9336
      %v9372 = vadd.f32 %v9324, %v9336
      %v9373 = vadd.f32 %v9325, %v9336
      %v9374 = vadd.f32 %v9326, %v9336
      %v9375 = vadd.f32 %v9327, %v9336
      %v9376 = vadd.f32 %v9328, %v9336
      %v9377 = vadd.f32 %v9329, %v9336
      %v9378 = vadd.f32 %v9330, %v9336
      %v9379 = vmax.f32 %v9338, 0.0
      %v9380 = vmax.f32 %v9339, 0.0
      %v9381 = vmax.f32 %v9340, 0.0
      %v9382 = vmax.f32 %v9341, 0.0
      %v9383 = vmax.f32 %v9342, 0.0
      %v9384 = vmax.f32 %v9343, 0.0
      %v9385 = vmax.f32 %v9344, 0.0
      %v9386 = vmax.f32 %v9345, 0.0
      %v9387 = vmax.f32 %v9346, 0.0
      %v9388 = vmax.f32 %v9347, 0.0
      %v9389 = vmax.f32 %v9348, 0.0
      %v9390 = vmax.f32 %v9349, 0.0
      %v9391 = vmax.f32 %v9350, 0.0
      %v9392 = vmax.f32 %v9351, 0.0
      %v9393 = vmax.f32 %v9352, 0.0
      %v9394 = vmax.f32 %v9353, 0.0
      %v9395 = vmax.f32 %v9354, 0.0
      %v9396 = vmax.f32 %v9355, 0.0
      %v9397 = vmax.f32 %v9356, 0.0
      %v9398 = vmax.f32 %v9357, 0.0
      %v9399 = vmax.f32 %v9358, 0.0
      %v9400 = vmax.f32 %v9359, 0.0
      %v9401 = vmax.f32 %v9360, 0.0
      %v9402 = vmax.f32 %v9361, 0.0
      %v9403 = vmax.f32 %v9362, 0.0
      %v9404 = vmax.f32 %v9363, 0.0
      %v9405 = vmax.f32 %v9364, 0.0
      %v9406 = vmax.f32 %v9365, 0.0
      %v9407 = vmax.f32 %v9366, 0.0
      %v9408 = vmax.f32 %v9367, 0.0
      %v9409 = vmax.f32 %v9368, 0.0
      %v9410 = vmax.f32 %v9369, 0.0
      %v9411 = vmax.f32 %v9370, 0.0
      %v9412 = vmax.f32 %v9371, 0.0
      %v9413 = vmax.f32 %v9372, 0.0
      %v9414 = vmax.f32 %v9373, 0.0
      %v9415 = vmax.f32 %v9374, 0.0
      %v9416 = vmax.f32 %v9375, 0.0
      %v9417 = vmax.f32 %v9376, 0.0
      %v9418 = vmax.f32 %v9377, 0.0
      %v9419 = vmax.f32 %v9378, 0.0
      %v9420 = vld [vmem:[%s354 + $0x10] sm:$0xf]
      %v9421 = vld [vmem:[%s354 + $0x14] sm:$0xf]
      %v9422 = vld [vmem:[%s354 + $0x18] sm:$0xf]
      %v9423 = vld [vmem:[%s354 + $0x1c] sm:$0xf]
      %v9424 = vld [vmem:[%s354 + $0x20] sm:$0xf]
      %v9425 = vld [vmem:[%s354 + $0x24] sm:$0xf]
      %v9426 = vld [vmem:[%s354 + $0x28] sm:$0xf]
      %v9427 = vld [vmem:[%s354 + $0x2c] sm:$0xf]
      %v9428 = vld [vmem:[%s354 + $0x30] sm:$0xf]
      %v9429 = vld [vmem:[%s354 + $0x34] sm:$0xf]
      %v9430 = vld [vmem:[%s354 + $0x38] sm:$0xf]
      %v9431 = vld [vmem:[%s354 + $0x3c] sm:$0xf]
      %v9432 = vld [vmem:[%s354 + $0x40] sm:$0xf]
      %v9433 = vld [vmem:[%s354 + $0x44] sm:$0xf]
      %v9434 = vld [vmem:[%s354 + $0x48] sm:$0xf]
      %v9435 = vld [vmem:[%s354 + $0x4c] sm:$0xf]
      %v9436 = vld [vmem:[%s354 + $0x50] sm:$0xf]
      %v9437 = vld [vmem:[%s354 + $0x54] sm:$0xf]
      %v9438 = vld [vmem:[%s354 + $0x58] sm:$0xf]
      %v9439 = vld [vmem:[%s354 + $0x5c] sm:$0xf]
      %v9440 = vld [vmem:[%s354 + $0x60] sm:$0xf]
      %v9441 = vld [vmem:[%s354 + $0x64] sm:$0xf]
      %v9442 = vld [vmem:[%s354 + $0x68] sm:$0xf]
      %v9443 = vld [vmem:[%s354 + $0x6c] sm:$0xf]
      %v9444 = vld [vmem:[%s354 + $0x70] sm:$0xf]
      %v9445 = vld [vmem:[%s354 + $0x74] sm:$0xf]
      %v9446 = vld [vmem:[%s354 + $0x78] sm:$0xf]
      %v9447 = vld [vmem:[%s354 + $0x7c] sm:$0xf]
      %v9448 = vld [vmem:[%s354 + $0x80] sm:$0xf]
      %v9449 = vld [vmem:[%s354 + $0x84] sm:$0xf]
      %v9450 = vld [vmem:[%s354 + $0x88] sm:$0xf]
      %v9451 = vld [vmem:[%s354 + $0x8c] sm:$0xf]
      %v9452 = vld [vmem:[%s354 + $0x90] sm:$0xf]
      %v9453 = vld [vmem:[%s354 + $0x94] sm:$0xf]
      %v9454 = vld [vmem:[%s354 + $0x98] sm:$0xf]
      %v9455 = vld [vmem:[%s354 + $0x9c] sm:$0xf]
      %v9456 = vld [vmem:[%s354 + $0xa0] sm:$0xf]
      %v9457 = vld [vmem:[%s354 + $0xa4] sm:$0xf]
      %v9458 = vld [vmem:[%s354 + $0xa8] sm:$0xf]
      %v9459 = vld [vmem:[%s354 + $0xac] sm:$0xf]
      %v9460 = vld [vmem:[%s354 + $0xb0] sm:$0x3]
      %v9461 = vld [vmem:[%s8] sm:$0x3]
      %v9462 = vld [vmem:[%s9] sm:$0x1]
      %v9464 = vlaneseq
      %v9465 = vshrl.u32 %v9464, 7
      %v9466 = vsub.s32 0, %v9465
      %v9467 = vrot.slane %v9462, %v9466
      %v9510 = vunpack.c.l.b16 %v9420
      %v9511 = vunpack.c.l.b16 %v9421
      %v9512 = vunpack.c.l.b16 %v9422
      %v9513 = vunpack.c.l.b16 %v9423
      %v9514 = vunpack.c.l.b16 %v9424
      %v9515 = vunpack.c.l.b16 %v9425
      %v9516 = vunpack.c.l.b16 %v9426
      %v9517 = vunpack.c.l.b16 %v9427
      %v9518 = vunpack.c.l.b16 %v9428
      %v9519 = vunpack.c.l.b16 %v9429
      %v9520 = vunpack.c.l.b16 %v9430
      %v9521 = vunpack.c.l.b16 %v9431
      %v9522 = vunpack.c.l.b16 %v9432
      %v9523 = vunpack.c.l.b16 %v9433
      %v9524 = vunpack.c.l.b16 %v9434
      %v9525 = vunpack.c.l.b16 %v9435
      %v9526 = vunpack.c.l.b16 %v9436
      %v9527 = vunpack.c.l.b16 %v9437
      %v9528 = vunpack.c.l.b16 %v9438
      %v9529 = vunpack.c.l.b16 %v9439
      %v9530 = vunpack.c.l.b16 %v9440
      %v9531 = vunpack.c.l.b16 %v9441
      %v9532 = vunpack.c.l.b16 %v9442
      %v9533 = vunpack.c.l.b16 %v9443
      %v9534 = vunpack.c.l.b16 %v9444
      %v9535 = vunpack.c.l.b16 %v9445
      %v9536 = vunpack.c.l.b16 %v9446
      %v9537 = vunpack.c.l.b16 %v9447
      %v9538 = vunpack.c.l.b16 %v9448
      %v9539 = vunpack.c.l.b16 %v9449
      %v9540 = vunpack.c.l.b16 %v9450
      %v9541 = vunpack.c.l.b16 %v9451
      %v9542 = vunpack.c.l.b16 %v9452
      %v9543 = vunpack.c.l.b16 %v9453
      %v9544 = vunpack.c.l.b16 %v9454
      %v9545 = vunpack.c.l.b16 %v9455
      %v9546 = vunpack.c.l.b16 %v9456
      %v9547 = vunpack.c.l.b16 %v9457
      %v9548 = vunpack.c.l.b16 %v9458
      %v9549 = vunpack.c.l.b16 %v9459
      %v9550 = vunpack.c.l.b16 %v9460
      %v9551 = vpack.c.b16 %v9511, %v9510
      %v9552 = vpack.c.b16 %v9513, %v9512
      %v9553 = vpack.c.b16 %v9515, %v9514
      %v9554 = vpack.c.b16 %v9517, %v9516
      %v9555 = vpack.c.b16 %v9519, %v9518
      %v9556 = vpack.c.b16 %v9521, %v9520
      %v9557 = vpack.c.b16 %v9523, %v9522
      %v9558 = vpack.c.b16 %v9525, %v9524
      %v9559 = vpack.c.b16 %v9527, %v9526
      %v9560 = vpack.c.b16 %v9529, %v9528
      %v9561 = vpack.c.b16 %v9531, %v9530
      %v9562 = vpack.c.b16 %v9533, %v9532
      %v9563 = vpack.c.b16 %v9535, %v9534
      %v9564 = vpack.c.b16 %v9537, %v9536
      %v9565 = vpack.c.b16 %v9539, %v9538
      %v9566 = vpack.c.b16 %v9541, %v9540
      %v9567 = vpack.c.b16 %v9543, %v9542
      %v9568 = vpack.c.b16 %v9545, %v9544
      %v9569 = vpack.c.b16 %v9547, %v9546
      %v9570 = vpack.c.b16 %v9549, %v9548
      %v9571 = vpack.c.b16 %v9550, %v9550
      %v9573 = vsel %vm595, %v9551, 0
      %v9576 = vsel %vm595, %v9552, 0
      %v9579 = vsel %vm595, %v9553, 0
      %v9582 = vsel %vm595, %v9554, 0
      %v9585 = vsel %vm595, %v9555, 0
      %v9588 = vsel %vm595, %v9556, 0
      %v9591 = vsel %vm595, %v9557, 0
      %v9594 = vsel %vm595, %v9558, 0
      %v9597 = vsel %vm595, %v9559, 0
      %v9600 = vsel %vm595, %v9560, 0
      %v9603 = vsel %vm595, %v9561, 0
      %v9606 = vsel %vm595, %v9562, 0
      %v9609 = vsel %vm595, %v9563, 0
      %v9612 = vsel %vm595, %v9564, 0
      %v9615 = vsel %vm595, %v9565, 0
      %v9618 = vsel %vm595, %v9566, 0
      %v9621 = vsel %vm595, %v9567, 0
      %v9624 = vsel %vm595, %v9568, 0
      %v9627 = vsel %vm595, %v9569, 0
      %v9630 = vsel %vm595, %v9570, 0
      %v9633 = vsel %vm595, %v9571, 0
      %v9636 = vsel %vm659, %v9461, 0
      %9638 = vmatprep.subr.bf16.mxu0 0
      %9639 = vmatpush1.bf16.msra.mxu0 %v9636
      %9640 = vmatprep.subr.bf16.mxu0 0
      %9641 = vmatpush1.bf16.msra.mxu0 0
      %9642 = vmatprep.subr.bf16.mxu0 0
      %9643 = vmatpush1.bf16.msra.mxu0 0
      %9644 = vmatprep.subr.bf16.mxu0 0
      %9645 = vmatpush1.bf16.msra.mxu0 0
      %9646 = vmatprep.subr.bf16.mxu0 0
      %9647 = vmatpush1.bf16.msra.mxu0 0
      %9648 = vmatprep.subr.bf16.mxu0 0
      %9649 = vmatpush1.bf16.msra.mxu0 0
      %9650 = vmatprep.subr.bf16.mxu0 0
      %9651 = vmatpush1.bf16.msra.mxu0 0
      %9652 = vmatprep.subr.bf16.mxu0 0
      %9653 = vmatpush1.bf16.msra.mxu0 0
      %9654 = vmatprep.subr.bf16.mxu0 0
      %9655 = vmatpush1.bf16.msra.mxu0 0
      %9656 = vmatprep.subr.bf16.mxu0 0
      %9657 = vmatpush1.bf16.msra.mxu0 0
      %9658 = vmatprep.subr.bf16.mxu0 0
      %9659 = vmatpush1.bf16.msra.mxu0 0
      %9660 = vmatprep.subr.bf16.mxu0 0
      %9661 = vmatpush1.bf16.msra.mxu0 0
      %9662 = vmatprep.subr.bf16.mxu0 0
      %9663 = vmatpush1.bf16.msra.mxu0 0
      %9664 = vmatprep.subr.bf16.mxu0 0
      %9665 = vmatpush1.bf16.msra.mxu0 0
      %9666 = vmatprep.subr.bf16.mxu0 0
      %9667 = vmatpush1.bf16.msra.mxu0 0
      %9668 = vmatprep.subr.bf16.mxu0 0
      %9669 = vmatpush1.bf16.msra.mxu0 0
      %9670 = vmatprep.mubr.bf16.mxu0 0
      %9671 = vmatmul.mubr.bf16.gmra.mrb[0].mxu0 %v9573
      %v9672 = vpop.f32.mrb[0].mxu0
      %v9673 = vadd.f32 %v9467, %v9672
      %v9674 = vpop.f32.mrb[0].mxu0
      %v9675 = vpop.f32.mrb[0].mxu0
      %v9676 = vadd.f32 %v9467, %v9675
      %v9677 = vpop.f32.mrb[0].mxu0
      %9678 = vmatprep.mubr.bf16.mxu0 0
      %9679 = vmatmul.mubr.bf16.gmra.mrb[0].mxu0 %v9576
      %v9680 = vpop.f32.mrb[0].mxu0
      %v9681 = vadd.f32 %v9467, %v9680
      %v9682 = vpop.f32.mrb[0].mxu0
      %v9683 = vpop.f32.mrb[0].mxu0
      %v9684 = vadd.f32 %v9467, %v9683
      %v9685 = vpop.f32.mrb[0].mxu0
      %9686 = vmatprep.mubr.bf16.mxu0 0
      %9687 = vmatmul.mubr.bf16.gmra.mrb[0].mxu0 %v9579
      %v9688 = vpop.f32.mrb[0].mxu0
      %v9689 = vadd.f32 %v9467, %v9688
      %v9690 = vpop.f32.mrb[0].mxu0
      %v9691 = vpop.f32.mrb[0].mxu0
      %v9692 = vadd.f32 %v9467, %v9691
      %v9693 = vpop.f32.mrb[0].mxu0
      %9694 = vmatprep.mubr.bf16.mxu0 0
      %9695 = vmatmul.mubr.bf16.gmra.mrb[0].mxu0 %v9582
      %v9696 = vpop.f32.mrb[0].mxu0
      %v9697 = vadd.f32 %v9467, %v9696
      %v9698 = vpop.f32.mrb[0].mxu0
      %v9699 = vpop.f32.mrb[0].mxu0
      %v9700 = vadd.f32 %v9467, %v9699
      %v9701 = vpop.f32.mrb[0].mxu0
      %9702 = vmatprep.mubr.bf16.mxu0 0
      %9703 = vmatmul.mubr.bf16.gmra.mrb[0].mxu0 %v9585
      %v9704 = vpop.f32.mrb[0].mxu0
      %v9705 = vadd.f32 %v9467, %v9704
      %v9706 = vpop.f32.mrb[0].mxu0
      %v9707 = vpop.f32.mrb[0].mxu0
      %v9708 = vadd.f32 %v9467, %v9707
      %v9709 = vpop.f32.mrb[0].mxu0
      %9710 = vmatprep.mubr.bf16.mxu0 0
      %9711 = vmatmul.mubr.bf16.gmra.mrb[0].mxu0 %v9588
      %v9712 = vpop.f32.mrb[0].mxu0
      %v9713 = vadd.f32 %v9467, %v9712
      %v9714 = vpop.f32.mrb[0].mxu0
      %v9715 = vpop.f32.mrb[0].mxu0
      %v9716 = vadd.f32 %v9467, %v9715
      %v9717 = vpop.f32.mrb[0].mxu0
      %9718 = vmatprep.mubr.bf16.mxu0 0
      %9719 = vmatmul.mubr.bf16.gmra.mrb[0].mxu0 %v9591
      %v9720 = vpop.f32.mrb[0].mxu0
      %v9721 = vadd.f32 %v9467, %v9720
      %v9722 = vpop.f32.mrb[0].mxu0
      %v9723 = vpop.f32.mrb[0].mxu0
      %v9724 = vadd.f32 %v9467, %v9723
      %v9725 = vpop.f32.mrb[0].mxu0
      %9726 = vmatprep.mubr.bf16.mxu0 0
      %9727 = vmatmul.mubr.bf16.gmra.mrb[0].mxu0 %v9594
      %v9728 = vpop.f32.mrb[0].mxu0
      %v9729 = vadd.f32 %v9467, %v9728
      %v9730 = vpop.f32.mrb[0].mxu0
      %v9731 = vpop.f32.mrb[0].mxu0
      %v9732 = vadd.f32 %v9467, %v9731
      %v9733 = vpop.f32.mrb[0].mxu0
      %9734 = vmatprep.mubr.bf16.mxu0 0
      %9735 = vmatmul.mubr.bf16.gmra.mrb[0].mxu0 %v9597
      %v9736 = vpop.f32.mrb[0].mxu0
      %v9737 = vadd.f32 %v9467, %v9736
      %v9738 = vpop.f32.mrb[0].mxu0
      %v9739 = vpop.f32.mrb[0].mxu0
      %v9740 = vadd.f32 %v9467, %v9739
      %v9741 = vpop.f32.mrb[0].mxu0
      %9742 = vmatprep.mubr.bf16.mxu0 0
      %9743 = vmatmul.mubr.bf16.gmra.mrb[0].mxu0 %v9600
      %v9744 = vpop.f32.mrb[0].mxu0
      %v9745 = vadd.f32 %v9467, %v9744
      %v9746 = vpop.f32.mrb[0].mxu0
      %v9747 = vpop.f32.mrb[0].mxu0
      %v9748 = vadd.f32 %v9467, %v9747
      %v9749 = vpop.f32.mrb[0].mxu0
      %9750 = vmatprep.mubr.bf16.mxu0 0
      %9751 = vmatmul.mubr.bf16.gmra.mrb[0].mxu0 %v9603
      %v9752 = vpop.f32.mrb[0].mxu0
      %v9753 = vadd.f32 %v9467, %v9752
      %v9754 = vpop.f32.mrb[0].mxu0
      %v9755 = vpop.f32.mrb[0].mxu0
      %v9756 = vadd.f32 %v9467, %v9755
      %v9757 = vpop.f32.mrb[0].mxu0
      %9758 = vmatprep.mubr.bf16.mxu0 0
      %9759 = vmatmul.mubr.bf16.gmra.mrb[0].mxu0 %v9606
      %v9760 = vpop.f32.mrb[0].mxu0
      %v9761 = vadd.f32 %v9467, %v9760
      %v9762 = vpop.f32.mrb[0].mxu0
      %v9763 = vpop.f32.mrb[0].mxu0
      %v9764 = vadd.f32 %v9467, %v9763
      %v9765 = vpop.f32.mrb[0].mxu0
      %9766 = vmatprep.mubr.bf16.mxu0 0
      %9767 = vmatmul.mubr.bf16.gmra.mrb[0].mxu0 %v9609
      %v9768 = vpop.f32.mrb[0].mxu0
      %v9769 = vadd.f32 %v9467, %v9768
      %v9770 = vpop.f32.mrb[0].mxu0
      %v9771 = vpop.f32.mrb[0].mxu0
      %v9772 = vadd.f32 %v9467, %v9771
      %v9773 = vpop.f32.mrb[0].mxu0
      %9774 = vmatprep.mubr.bf16.mxu0 0
      %9775 = vmatmul.mubr.bf16.gmra.mrb[0].mxu0 %v9612
      %v9776 = vpop.f32.mrb[0].mxu0
      %v9777 = vadd.f32 %v9467, %v9776
      %v9778 = vpop.f32.mrb[0].mxu0
      %v9779 = vpop.f32.mrb[0].mxu0
      %v9780 = vadd.f32 %v9467, %v9779
      %v9781 = vpop.f32.mrb[0].mxu0
      %9782 = vmatprep.mubr.bf16.mxu0 0
      %9783 = vmatmul.mubr.bf16.gmra.mrb[0].mxu0 %v9615
      %v9784 = vpop.f32.mrb[0].mxu0
      %v9785 = vadd.f32 %v9467, %v9784
      %v9786 = vpop.f32.mrb[0].mxu0
      %v9787 = vpop.f32.mrb[0].mxu0
      %v9788 = vadd.f32 %v9467, %v9787
      %v9789 = vpop.f32.mrb[0].mxu0
      %9790 = vmatprep.mubr.bf16.mxu0 0
      %9791 = vmatmul.mubr.bf16.gmra.mrb[0].mxu0 %v9618
      %v9792 = vpop.f32.mrb[0].mxu0
      %v9793 = vadd.f32 %v9467, %v9792
      %v9794 = vpop.f32.mrb[0].mxu0
      %v9795 = vpop.f32.mrb[0].mxu0
      %v9796 = vadd.f32 %v9467, %v9795
      %v9797 = vpop.f32.mrb[0].mxu0
      %9798 = vmatprep.mubr.bf16.mxu0 0
      %9799 = vmatmul.mubr.bf16.gmra.mrb[0].mxu0 %v9621
      %v9800 = vpop.f32.mrb[0].mxu0
      %v9801 = vadd.f32 %v9467, %v9800
      %v9802 = vpop.f32.mrb[0].mxu0
      %v9803 = vpop.f32.mrb[0].mxu0
      %v9804 = vadd.f32 %v9467, %v9803
      %v9805 = vpop.f32.mrb[0].mxu0
      %9806 = vmatprep.mubr.bf16.mxu0 0
      %9807 = vmatmul.mubr.bf16.gmra.mrb[0].mxu0 %v9624
      %v9808 = vpop.f32.mrb[0].mxu0
      %v9809 = vadd.f32 %v9467, %v9808
      %v9810 = vpop.f32.mrb[0].mxu0
      %v9811 = vpop.f32.mrb[0].mxu0
      %v9812 = vadd.f32 %v9467, %v9811
      %v9813 = vpop.f32.mrb[0].mxu0
      %9814 = vmatprep.mubr.bf16.mxu0 0
      %9815 = vmatmul.mubr.bf16.gmra.mrb[0].mxu0 %v9627
      %v9816 = vpop.f32.mrb[0].mxu0
      %v9817 = vadd.f32 %v9467, %v9816
      %v9818 = vpop.f32.mrb[0].mxu0
      %v9819 = vpop.f32.mrb[0].mxu0
      %v9820 = vadd.f32 %v9467, %v9819
      %v9821 = vpop.f32.mrb[0].mxu0
      %9822 = vmatprep.mubr.bf16.mxu0 0
      %9823 = vmatmul.mubr.bf16.gmra.mrb[0].mxu0 %v9630
      %v9824 = vpop.f32.mrb[0].mxu0
      %v9825 = vadd.f32 %v9467, %v9824
      %v9826 = vpop.f32.mrb[0].mxu0
      %v9827 = vpop.f32.mrb[0].mxu0
      %v9828 = vadd.f32 %v9467, %v9827
      %v9829 = vpop.f32.mrb[0].mxu0
      %9830 = vmatprep.mubr.bf16.mxu0 0
      %9831 = vmatmul.mubr.bf16.gmra.mrb[0].mxu0 %v9633
      %v9832 = vpop.f32.mrb[0].mxu0
      %v9833 = vadd.f32 %v9467, %v9832
      %v9834 = vpop.f32.mrb[0].mxu0
      %v9835 = vpop.f32.mrb[0].mxu0
      %v9836 = vpop.f32.mrb[0].mxu0
      %9837 = vdwg.mxu0
      %v9838 = vadd.f32 %v9379, %v9673
      %v9839 = vadd.f32 %v9380, %v9676
      %v9840 = vadd.f32 %v9381, %v9681
      %v9841 = vadd.f32 %v9382, %v9684
      %v9842 = vadd.f32 %v9383, %v9689
      %v9843 = vadd.f32 %v9384, %v9692
      %v9844 = vadd.f32 %v9385, %v9697
      %v9845 = vadd.f32 %v9386, %v9700
      %v9846 = vadd.f32 %v9387, %v9705
      %v9847 = vadd.f32 %v9388, %v9708
      %v9848 = vadd.f32 %v9389, %v9713
      %v9849 = vadd.f32 %v9390, %v9716
      %v9850 = vadd.f32 %v9391, %v9721
      %v9851 = vadd.f32 %v9392, %v9724
      %v9852 = vadd.f32 %v9393, %v9729
      %v9853 = vadd.f32 %v9394, %v9732
      %v9854 = vadd.f32 %v9395, %v9737
      %v9855 = vadd.f32 %v9396, %v9740
      %v9856 = vadd.f32 %v9397, %v9745
      %v9857 = vadd.f32 %v9398, %v9748
      %v9858 = vadd.f32 %v9399, %v9753
      %v9859 = vadd.f32 %v9400, %v9756
      %v9860 = vadd.f32 %v9401, %v9761
      %v9861 = vadd.f32 %v9402, %v9764
      %v9862 = vadd.f32 %v9403, %v9769
      %v9863 = vadd.f32 %v9404, %v9772
      %v9864 = vadd.f32 %v9405, %v9777
      %v9865 = vadd.f32 %v9406, %v9780
      %v9866 = vadd.f32 %v9407, %v9785
      %v9867 = vadd.f32 %v9408, %v9788
      %v9868 = vadd.f32 %v9409, %v9793
      %v9869 = vadd.f32 %v9410, %v9796
      %v9870 = vadd.f32 %v9411, %v9801
      %v9871 = vadd.f32 %v9412, %v9804
      %v9872 = vadd.f32 %v9413, %v9809
      %v9873 = vadd.f32 %v9414, %v9812
      %v9874 = vadd.f32 %v9415, %v9817
      %v9875 = vadd.f32 %v9416, %v9820
      %v9876 = vadd.f32 %v9417, %v9825
      %v9877 = vadd.f32 %v9418, %v9828
      %v9878 = vadd.f32 %v9419, %v9833
      %9879 = vst.msk [vmem:[%s359] sm:$0xff] %vm5338, %v9838
      %9880 = vst.msk [vmem:[%s359 + $0x8] sm:$0xff] %vm5338, %v9839
      %9881 = vst.msk [vmem:[%s359 + $0x10] sm:$0xff] %vm5338, %v9840
      %9882 = vst.msk [vmem:[%s359 + $0x18] sm:$0xff] %vm5338, %v9841
      %9883 = vst.msk [vmem:[%s359 + $0x20] sm:$0xff] %vm5338, %v9842
      %9884 = vst.msk [vmem:[%s359 + $0x28] sm:$0xff] %vm5338, %v9843
      %9885 = vst.msk [vmem:[%s359 + $0x30] sm:$0xff] %vm5338, %v9844
      %9886 = vst.msk [vmem:[%s359 + $0x38] sm:$0xff] %vm5338, %v9845
      %9887 = vst.msk [vmem:[%s359 + $0x40] sm:$0xff] %vm5338, %v9846
      %9888 = vst.msk [vmem:[%s359 + $0x48] sm:$0xff] %vm5338, %v9847
      %9889 = vst.msk [vmem:[%s359 + $0x50] sm:$0xff] %vm5338, %v9848
      %9890 = vst.msk [vmem:[%s359 + $0x58] sm:$0xff] %vm5338, %v9849
      %9891 = vst.msk [vmem:[%s359 + $0x60] sm:$0xff] %vm5338, %v9850
      %9892 = vst.msk [vmem:[%s359 + $0x68] sm:$0xff] %vm5338, %v9851
      %9893 = vst.msk [vmem:[%s359 + $0x70] sm:$0xff] %vm5338, %v9852
      %9894 = vst.msk [vmem:[%s359 + $0x78] sm:$0xff] %vm5338, %v9853
      %9895 = vst.msk [vmem:[%s359 + $0x80] sm:$0xff] %vm5338, %v9854
      %9896 = vst.msk [vmem:[%s359 + $0x88] sm:$0xff] %vm5338, %v9855
      %9897 = vst.msk [vmem:[%s359 + $0x90] sm:$0xff] %vm5338, %v9856
      %9898 = vst.msk [vmem:[%s359 + $0x98] sm:$0xff] %vm5338, %v9857
      %9899 = vst.msk [vmem:[%s359 + $0xa0] sm:$0xff] %vm5338, %v9858
      %9900 = vst.msk [vmem:[%s359 + $0xa8] sm:$0xff] %vm5338, %v9859
      %9901 = vst.msk [vmem:[%s359 + $0xb0] sm:$0xff] %vm5338, %v9860
      %9902 = vst.msk [vmem:[%s359 + $0xb8] sm:$0xff] %vm5338, %v9861
      %9903 = vst.msk [vmem:[%s359 + $0xc0] sm:$0xff] %vm5338, %v9862
      %9904 = vst.msk [vmem:[%s359 + $0xc8] sm:$0xff] %vm5338, %v9863
      %9905 = vst.msk [vmem:[%s359 + $0xd0] sm:$0xff] %vm5338, %v9864
      %9906 = vst.msk [vmem:[%s359 + $0xd8] sm:$0xff] %vm5338, %v9865
      %9907 = vst.msk [vmem:[%s359 + $0xe0] sm:$0xff] %vm5338, %v9866
      %9908 = vst.msk [vmem:[%s359 + $0xe8] sm:$0xff] %vm5338, %v9867
      %9909 = vst.msk [vmem:[%s359 + $0xf0] sm:$0xff] %vm5338, %v9868
      %9910 = vst.msk [vmem:[%s359 + $0xf8] sm:$0xff] %vm5338, %v9869
      %9911 = vst.msk [vmem:[%s359 + $0x100] sm:$0xff] %vm5338, %v9870
      %9912 = vst.msk [vmem:[%s359 + $0x108] sm:$0xff] %vm5338, %v9871
      %9913 = vst.msk [vmem:[%s359 + $0x110] sm:$0xff] %vm5338, %v9872
      %9914 = vst.msk [vmem:[%s359 + $0x118] sm:$0xff] %vm5338, %v9873
      %9915 = vst.msk [vmem:[%s359 + $0x120] sm:$0xff] %vm5338, %v9874
      %9916 = vst.msk [vmem:[%s359 + $0x128] sm:$0xff] %vm5338, %v9875
      %9917 = vst.msk [vmem:[%s359 + $0x130] sm:$0xff] %vm5338, %v9876
      %9918 = vst.msk [vmem:[%s359 + $0x138] sm:$0xff] %vm5338, %v9877
      %9919 = vst.msk [vmem:[%s359 + $0x140] sm:$0xf] %vm4928, %v9878
      %p9920 = scmp.lt.s32.totalorder %s21, 1
      %s9921 = scalar_select %p9920, %s21, 1
      %s9922 = smul.addr %s9921, 41
      %s9923 = smul.addr %s9922, 8
      %s9924 = scalar_lea.vmem %s10, %s9923
      // Predicated region
      $region61: #{tpu_custom_call.1} parent=59 // pred_check
        %p9925 = pneg %p254
      $region62: #{tpu_custom_call.1} parent=59 // pred_check_branch
        %9927 = sbr.rel (%p9925) target = $region64
      $region63: #{tpu_custom_call.1} parent=59 // pred_region
        _
      $region64: #{tpu_custom_call.1} parent=59 // pred_fallthru
        _
    $region60: #{tpu_custom_call.1} parent=5 // pred_fallthru
      _
    %p9928 = scmp.le.s32.totalorder 2, %s16
    // Predicated region
    $region65: #{tpu_custom_call.1} parent=5 // pred_check
      %p9929 = pneg %p9928
    $region66: #{tpu_custom_call.1} parent=5 // pred_check_branch
      %9931 = sbr.rel (%p9929) target = $region68
    $region67: #{tpu_custom_call.1} parent=5 // pred_region
      %s9932 = ssub.s32 %s16, 2
      // Predicated region
      $region69: #{tpu_custom_call.1} parent=67 // pred_check
        %p9933 = pneg %p260
      $region70: #{tpu_custom_call.1} parent=67 // pred_check_branch
        %9935 = sbr.rel (%p9933) target = $region72
      $region71: #{tpu_custom_call.1} parent=67 // pred_region
        %p9936 = scmp.lt.s32.totalorder %s22, 1
        %s9937 = scalar_select %p9936, %s22, 1
        %s9938 = smul.addr %s9937, 41
        %s9939 = smul.addr %s9938, 8
        %s9940 = scalar_lea.vmem %s10, %s9939
      $region72: #{tpu_custom_call.1} parent=67 // pred_fallthru
        _
    $region68: #{tpu_custom_call.1} parent=5 // pred_fallthru
      _
  $region6: #{tpu_custom_call.1} parent=0 // loop_footer
    %s20 = sadd.s32 1, %s16
  $region7: #{tpu_custom_call.1} parent=0 // loop_footer_branch
    %15 = sbr.rel target = $region3
  $region8: #{tpu_custom_call.1} parent=0 // loop_exit
    _

</llo_original>
